<compile_context>
chip_gen: v7x
topology: tpu7x:2x2x1
jax: 0.10.0
libtpu: 0.0.40
codegen_flags: <defaults>
</compile_context>

<pallas_src>
from functools import partial

import jax
import jax.numpy as jnp
from jax.experimental import pallas as pl
from jax.experimental.pallas import tpu as pltpu


def decoder_forward(x, params, reshape_dim, channels, block_b=16):
    """x: (B, embedding_dim) -> (B, channels, 8 * reshape_dim[1]) (PyTorch NCL layout)."""
    f32, bf16 = jnp.float32, jnp.bfloat16
    B, E = x.shape
    C0, L0 = reshape_dim
    assert C0 == 128, "deconv1 expects 128 input channels (shape_before_flattening[0])"
    P = 8                         # total upsampling factor (3 x stride-2 deconvs)
    L3 = P * L0
    C8 = 8                        # output channels padded to one sublane tile
    CP = 128                      # lane-padded hidden channel width

    # ---- batch blocking (review item 1: fatten M, keep >=2 grid steps) ----------
    Bblk = max(1, min(block_b, B))
    n_blk = -(-B // Bblk)
    Bp = n_blk * Bblk
    xp = jnp.zeros((Bp, E), f32).at[:B].set(x.astype(f32))
    BL = Bblk * L0                # rows (M) of every matmul inside the kernel

    # ---- fc: nn.Linear(E, C0*L0); columns ordered so lane chunk m holds position m
    #      (h0[b, m*C0 + c] == fc(x)[b, c*L0 + m]) --------------------------------
    wf = params["fc_w"].reshape(C0, L0, E).transpose(2, 1, 0).reshape(E, L0 * C0).astype(bf16)
    bf = params["fc_b"].reshape(C0, L0).T.reshape(1, L0 * C0).astype(f32)

    # ---- deconv weights: PyTorch (Cin, Cout, 3) -> [W1 | W2 | W0], each tap padded
    #      to 128 output lanes (padded lanes stay exactly 0 through bias+ReLU) -----
    def deconv_w(w):
        cin, cout, _ = w.shape
        taps = []
        for k in (1, 2, 0):
            t = jnp.zeros((CP, CP), f32).at[:cin, :cout].set(w[:, :, k].astype(f32))
            taps.append(t)
        return jnp.concatenate(taps, axis=1).astype(bf16)          # (128, 384)

    def deconv_b(b):
        return jnp.zeros((1, CP), f32).at[0, :b.shape[0]].set(b.astype(f32))

    w1, b1 = deconv_w(params["deconv1_w"]), deconv_b(params["deconv1_b"])
    w2, b2 = deconv_w(params["deconv2_w"]), deconv_b(params["deconv2_b"])
    w3, b3 = deconv_w(params["deconv3_w"]), deconv_b(params["deconv3_b"])

    # ---- final Conv1d(32, channels, k=3, s=1, p=1): tap k pairs with x[t + k - 1] --
    cw = params["conv1_w"]                                          # (channels, 32, 3)
    cin_c = cw.shape[1]
    vc = jnp.zeros((3, CP, C8), f32).at[:, :cin_c, :channels].set(
        jnp.transpose(cw, (2, 1, 0)).astype(f32)).astype(bf16)
    bc = jnp.zeros((1, C8), f32).at[0, :channels].set(params["conv1_b"].astype(f32))

    operands = (wf, bf, w1, b1, w2, b2, w3, b3, vc, bc)

    # --------------------------- fused decoder kernel ----------------------------
    def kernel(x_ref, wf_ref, bf_ref, w1_ref, b1_ref, w2_ref, b2_ref,
               w3_ref, b3_ref, vc_ref, bc_ref, out_ref, buf):
        # buf layout: [0:Bblk] zero guard | [Bblk:Bblk+BL] data | [Bblk+BL:] zero guard.
        # Row index inside the data region is m*Bblk + b (position-major), so a
        # +/-1 temporal shift is an aligned +/-Bblk row shift through the guards.
        zguard = jnp.zeros((Bblk, CP), jnp.float32)
        buf[0:Bblk, :] = zguard
        buf[Bblk + BL:2 * Bblk + BL, :] = zguard

        def shift_up(z):          # out[m] <- z[m+1] within each sample, 0 at the end
            buf[Bblk:Bblk + BL, :] = z
            return buf[2 * Bblk:2 * Bblk + BL, :]

        def shift_dn(z):          # out[m] <- z[m-1] within each sample, 0 at the start
            buf[Bblk:Bblk + BL, :] = z
            return buf[0:BL, :]

        # ---- fc: one (Bblk, E) @ (E, L0*C0) matmul; assemble (BL, C0) via aligned
        #      128-lane chunk stores (position-major rows) -------------------------
        h0 = (jnp.dot(x_ref[...].astype(jnp.bfloat16), wf_ref[...],
                      preferred_element_type=jnp.float32) + bf_ref[...])
        for m in range(L0):
            buf[Bblk + m * Bblk:Bblk + (m + 1) * Bblk, :] = h0[:, m * C0:(m + 1) * C0]
        phases = [buf[Bblk:Bblk + BL, :]]        # polyphase repr: position = P_cur*m + p

        # ---- ConvTranspose1d(k=3, s=2, p=1, op=1) + ReLU, polyphase:
        #        out[2t]   = in[t] @ W1
        #        out[2t+1] = in[t] @ W2 + in[t+1] @ W0
        def deconv(phases, w_ref, b_ref):
            nP = len(phases)
            b = b_ref[...]
            zs = [jnp.dot(f.astype(jnp.bfloat16), w_ref[...],
                          preferred_element_type=jnp.float32)
                  for f in phases]               # (BL, 384) = [W1 | W2 | W0] blocks
            new = []
            for q in range(nP):
                z1 = zs[q][:, 0:CP]
                z2 = zs[q][:, CP:2 * CP]
                z0n = (zs[q + 1][:, 2 * CP:3 * CP] if q < nP - 1
                       else shift_up(zs[0][:, 2 * CP:3 * CP]))
                new.append(jnp.maximum(z1 + b, 0.0))
                new.append(jnp.maximum(z2 + z0n + b, 0.0))
            return new

        phases = deconv(phases, w1_ref, b1_ref)  # 2 phases, 128 ch
        phases = deconv(phases, w2_ref, b2_ref)  # 4 phases,  64 ch (lane-padded)
        phases = deconv(phases, w3_ref, b3_ref)  # 8 phases,  32 ch (lane-padded)

        # ---- Conv1d(k=3, s=1, p=1) + sigmoid, still polyphase ---------------------
        bcv = bc_ref[...]
        prv0 = shift_dn(phases[P - 1])
        nxt7 = shift_up(phases[0])
        for p in range(P):
            prv = phases[p - 1] if p > 0 else prv0
            nxt = phases[p + 1] if p < P - 1 else nxt7
            pre = (jnp.dot(prv.astype(jnp.bfloat16), vc_ref[0],
                           preferred_element_type=jnp.float32)
                   + jnp.dot(phases[p].astype(jnp.bfloat16), vc_ref[1],
                             preferred_element_type=jnp.float32)
                   + jnp.dot(nxt.astype(jnp.bfloat16), vc_ref[2],
                             preferred_element_type=jnp.float32)
                   + bcv)
            # sigmoid via exp (EUP) + approx reciprocal (EUP) - no VPU divide.
            out_ref[p] = pl.reciprocal(1.0 + jnp.exp(-pre), approx=True).astype(out_ref.dtype)

    def full_spec(a):
        return pl.BlockSpec(a.shape, lambda i, nd=a.ndim: (0,) * nd)

    out = pl.pallas_call(
        kernel,
        out_shape=jax.ShapeDtypeStruct((P, Bp * L0, C8), f32),
        grid=(n_blk,),
        in_specs=[pl.BlockSpec((Bblk, E), lambda i: (i, 0))]
                 + [full_spec(o) for o in operands],
        out_specs=pl.BlockSpec((P, BL, C8), lambda i: (0, i, 0)),
        scratch_shapes=[pltpu.VMEM((2 * Bblk + BL, CP), jnp.float32)],
        compiler_params=pltpu.CompilerParams(
            dimension_semantics=("parallel",),
            vmem_limit_bytes=32 * 1024 * 1024),
    )(xp, *operands)

    # (P, Bp*L0, 8), rows = m*Bblk + b -> PyTorch (B, channels, L3) with t = P*m + p.
    out = out.reshape(P, n_blk, L0, Bblk, C8)
    out = jnp.transpose(out, (1, 3, 4, 2, 0)).reshape(Bp, C8, L3)
    return out[:B, :channels, :]


# ----------------------------------------------------------------------------
# Pure-JAX f32 reference (direct definition of the PyTorch ops) for validation.
# ----------------------------------------------------------------------------
def _ref_deconv(x, w, b):
    """ConvTranspose1d(k=3, s=2, p=1, output_padding=1); x: (B, Cin, L), w: (Cin, Cout, 3)."""
    Bn, Cin, L = x.shape
    Cout = w.shape[1]
    y = jnp.zeros((Bn, Cout, 2 * L), jnp.float32)
    for j in range(L):
        for k in range(3):
            t = 2 * j - 1 + k
            if 0 <= t < 2 * L:
                y = y.at[:, :, t].add(jnp.einsum("bi,io->bo", x[:, :, j], w[:, :, k]))
    return y + b[None, :, None]


def _ref_conv(x, w, b):
    """Conv1d(k=3, s=1, p=1); x: (B, Cin, L), w: (Cout, Cin, 3)."""
    L = x.shape[2]
    xpad = jnp.pad(x, ((0, 0), (0, 0), (1, 1)))
    y = sum(jnp.einsum("bil,oi->bol", xpad[:, :, k:k + L], w[:, :, k]) for k in range(3))
    return y + b[None, :, None]


def decoder_reference(x, params, reshape_dim, channels):
    C0, L0 = reshape_dim
    h = x @ params["fc_w"].T + params["fc_b"]
    h = h.reshape(x.shape[0], C0, L0)
    h = jax.nn.relu(_ref_deconv(h, params["deconv1_w"], params["deconv1_b"]))
    h = jax.nn.relu(_ref_deconv(h, params["deconv2_w"], params["deconv2_b"]))
    h = jax.nn.relu(_ref_deconv(h, params["deconv3_w"], params["deconv3_b"]))
    return jax.nn.sigmoid(_ref_conv(h, params["conv1_w"], params["conv1_b"]))


# ----------------------------------------------------------------------------
# Parameter init (PyTorch default layouts / fan-in uniform init)
# ----------------------------------------------------------------------------
def init_params(key, embedding_dim, reshape_dim, channels):
    C0, L0 = reshape_dim
    flat = C0 * L0
    keys = jax.random.split(key, 10)

    def u(k, shape, fan_in):
        bound = 1.0 / jnp.sqrt(float(fan_in))
        return jax.random.uniform(k, shape, jnp.float32, -bound, bound)

    return {
        "fc_w": u(keys[0], (flat, embedding_dim), embedding_dim),   # (out, in) like nn.Linear
        "fc_b": u(keys[1], (flat,), embedding_dim),
        "deconv1_w": u(keys[2], (128, 128, 3), 128 * 3),            # (Cin, Cout, k)
        "deconv1_b": u(keys[3], (128,), 128 * 3),
        "deconv2_w": u(keys[4], (128, 64, 3), 128 * 3),
        "deconv2_b": u(keys[5], (64,), 128 * 3),
        "deconv3_w": u(keys[6], (64, 32, 3), 64 * 3),
        "deconv3_b": u(keys[7], (32,), 64 * 3),
        "conv1_w": u(keys[8], (channels, 32, 3), 32 * 3),           # (Cout, Cin, k)
        "conv1_b": u(keys[9], (channels,), 32 * 3),
    }


if __name__ == "__main__":
    # Small, forward-consistent shapes: view_as_real gives 2 channels.
    batch = 32               # >= 2 batch blocks of 16 -> M = 128 per matmul, 2 grid steps
    embedding_dim = 32
    reshape_dim = (128, 8)   # shape_before_flattening -> (B, 128, 8) after fc + view
    channels = 2

    key = jax.random.PRNGKey(0)
    k_x, k_p = jax.random.split(key)
    x = jax.random.normal(k_x, (batch, embedding_dim), jnp.float32)
    params = init_params(k_p, embedding_dim, reshape_dim, channels)

    fwd = jax.jit(partial(decoder_forward, reshape_dim=reshape_dim,
                          channels=channels, block_b=16))
    out = jax.block_until_ready(fwd(x, params))

    expected_shape = (batch, channels, 8 * reshape_dim[1])
    assert out.shape == expected_shape, (out.shape, expected_shape)
    assert bool(jnp.all(jnp.isfinite(out)))

    # bf16 weights / approx-reciprocal sigmoid => small, bounded deviation from f32.
    ref = jax.jit(partial(decoder_reference, reshape_dim=reshape_dim,
                          channels=channels))(x, params)
    err = float(jnp.max(jnp.abs(out - ref)))
    assert err < 3e-2, f"max abs error vs f32 reference: {err}"
    print("KERNEL_OK")
</pallas_src>

<mosaic_0001>
module attributes {stable_mosaic.version = 11 : i64} {
  func.func @kernel(%arg0: i32, %arg1: memref<16x32xf32, #tpu.memory_space<vmem>>, %arg2: memref<32x1024xbf16, #tpu.memory_space<vmem>>, %arg3: memref<1x1024xf32, #tpu.memory_space<vmem>>, %arg4: memref<128x384xbf16, #tpu.memory_space<vmem>>, %arg5: memref<1x128xf32, #tpu.memory_space<vmem>>, %arg6: memref<128x384xbf16, #tpu.memory_space<vmem>>, %arg7: memref<1x128xf32, #tpu.memory_space<vmem>>, %arg8: memref<128x384xbf16, #tpu.memory_space<vmem>>, %arg9: memref<1x128xf32, #tpu.memory_space<vmem>>, %arg10: memref<3x128x8xbf16, #tpu.memory_space<vmem>>, %arg11: memref<1x8xf32, #tpu.memory_space<vmem>>, %arg12: memref<8x128x8xf32, #tpu.memory_space<vmem>>, %arg13: memref<160x128xf32, #tpu.memory_space<vmem>>) attributes {dimension_semantics = [#tpu.dimension_semantics<parallel>], iteration_bounds = array<i64: 2>, scalar_prefetch = 0 : i64, scratch_operands = 1 : i64, tpu.core_type = #tpu.core_type<tc>, window_params = [{transform_indices = @transform_0, window_bounds = array<i64: 16, 32>}, {pipeline_mode = #tpu.pipeline_mode<synchronous>, transform_indices = @transform_1, window_bounds = array<i64: 32, 1024>}, {pipeline_mode = #tpu.pipeline_mode<synchronous>, transform_indices = @transform_2, window_bounds = array<i64: 1, 1024>}, {pipeline_mode = #tpu.pipeline_mode<synchronous>, transform_indices = @transform_3, window_bounds = array<i64: 128, 384>}, {pipeline_mode = #tpu.pipeline_mode<synchronous>, transform_indices = @transform_4, window_bounds = array<i64: 1, 128>}, {pipeline_mode = #tpu.pipeline_mode<synchronous>, transform_indices = @transform_5, window_bounds = array<i64: 128, 384>}, {pipeline_mode = #tpu.pipeline_mode<synchronous>, transform_indices = @transform_6, window_bounds = array<i64: 1, 128>}, {pipeline_mode = #tpu.pipeline_mode<synchronous>, transform_indices = @transform_7, window_bounds = array<i64: 128, 384>}, {pipeline_mode = #tpu.pipeline_mode<synchronous>, transform_indices = @transform_8, window_bounds = array<i64: 1, 128>}, {pipeline_mode = #tpu.pipeline_mode<synchronous>, transform_indices = @transform_9, window_bounds = array<i64: 3, 128, 8>}, {pipeline_mode = #tpu.pipeline_mode<synchronous>, transform_indices = @transform_10, window_bounds = array<i64: 1, 8>}, {transform_indices = @transform_11, window_bounds = array<i64: 8, 128, 8>}]} {
    %cst = arith.constant 0.000000e+00 : f32
    %0 = vector.broadcast %cst : f32 to vector<16x128xf32>
    %c0 = arith.constant 0 : index
    %c0_0 = arith.constant 0 : index
    %1 = vector.load %arg13[%c0, %c0_0] : memref<160x128xf32, #tpu.memory_space<vmem>>, vector<16x128xf32>
    tpu.vector_store %arg13[%c0, %c0_0], %0 {strides = array<i32>} : memref<160x128xf32, #tpu.memory_space<vmem>>, vector<16x128xf32>,
    %c144 = arith.constant 144 : index
    %c0_1 = arith.constant 0 : index
    %2 = vector.load %arg13[%c144, %c0_1] : memref<160x128xf32, #tpu.memory_space<vmem>>, vector<16x128xf32>
    tpu.vector_store %arg13[%c144, %c0_1], %0 {strides = array<i32>} : memref<160x128xf32, #tpu.memory_space<vmem>>, vector<16x128xf32>,
    %c0_2 = arith.constant 0 : index
    %c0_3 = arith.constant 0 : index
    %3 = vector.load %arg1[%c0_2, %c0_3] : memref<16x32xf32, #tpu.memory_space<vmem>>, vector<16x32xf32>
    %4 = arith.truncf %3 : vector<16x32xf32> to vector<16x32xbf16>
    %c0_4 = arith.constant 0 : index
    %c0_5 = arith.constant 0 : index
    %5 = vector.load %arg2[%c0_4, %c0_5] : memref<32x1024xbf16, #tpu.memory_space<vmem>>, vector<32x1024xbf16>
    %cst_6 = arith.constant dense<0.000000e+00> : vector<16x1024xf32>
    %6 = tpu.matmul %4, %5, %cst_6 {dimension_numbers = #tpu.dot_dimension_numbers<[1], [0], [0], [1], [0, 0, 1, 1], [], []>} : vector<16x32xbf16>, vector<32x1024xbf16>, vector<16x1024xf32> -> vector<16x1024xf32>
    %c0_7 = arith.constant 0 : index
    %c0_8 = arith.constant 0 : index
    %7 = vector.load %arg3[%c0_7, %c0_8] : memref<1x1024xf32, #tpu.memory_space<vmem>>, vector<1x1024xf32>
    %8 = vector.broadcast %7 : vector<1x1024xf32> to vector<16x1024xf32>
    %9 = arith.addf %6, %8 : vector<16x1024xf32>
    %10 = vector.extract_strided_slice %9 {offsets = [0, 0], sizes = [16, 128], strides = [1, 1]} : vector<16x1024xf32> to vector<16x128xf32>
    %c16 = arith.constant 16 : index
    %c0_9 = arith.constant 0 : index
    %11 = vector.load %arg13[%c16, %c0_9] : memref<160x128xf32, #tpu.memory_space<vmem>>, vector<16x128xf32>
    tpu.vector_store %arg13[%c16, %c0_9], %10 {strides = array<i32>} : memref<160x128xf32, #tpu.memory_space<vmem>>, vector<16x128xf32>,
    %12 = vector.extract_strided_slice %9 {offsets = [0, 128], sizes = [16, 128], strides = [1, 1]} : vector<16x1024xf32> to vector<16x128xf32>
    %c32 = arith.constant 32 : index
    %c0_10 = arith.constant 0 : index
    %13 = vector.load %arg13[%c32, %c0_10] : memref<160x128xf32, #tpu.memory_space<vmem>>, vector<16x128xf32>
    tpu.vector_store %arg13[%c32, %c0_10], %12 {strides = array<i32>} : memref<160x128xf32, #tpu.memory_space<vmem>>, vector<16x128xf32>,
    %14 = vector.extract_strided_slice %9 {offsets = [0, 256], sizes = [16, 128], strides = [1, 1]} : vector<16x1024xf32> to vector<16x128xf32>
    %c48 = arith.constant 48 : index
    %c0_11 = arith.constant 0 : index
    %15 = vector.load %arg13[%c48, %c0_11] : memref<160x128xf32, #tpu.memory_space<vmem>>, vector<16x128xf32>
    tpu.vector_store %arg13[%c48, %c0_11], %14 {strides = array<i32>} : memref<160x128xf32, #tpu.memory_space<vmem>>, vector<16x128xf32>,
    %16 = vector.extract_strided_slice %9 {offsets = [0, 384], sizes = [16, 128], strides = [1, 1]} : vector<16x1024xf32> to vector<16x128xf32>
    %c64 = arith.constant 64 : index
    %c0_12 = arith.constant 0 : index
    %17 = vector.load %arg13[%c64, %c0_12] : memref<160x128xf32, #tpu.memory_space<vmem>>, vector<16x128xf32>
    tpu.vector_store %arg13[%c64, %c0_12], %16 {strides = array<i32>} : memref<160x128xf32, #tpu.memory_space<vmem>>, vector<16x128xf32>,
    %18 = vector.extract_strided_slice %9 {offsets = [0, 512], sizes = [16, 128], strides = [1, 1]} : vector<16x1024xf32> to vector<16x128xf32>
    %c80 = arith.constant 80 : index
    %c0_13 = arith.constant 0 : index
    %19 = vector.load %arg13[%c80, %c0_13] : memref<160x128xf32, #tpu.memory_space<vmem>>, vector<16x128xf32>
    tpu.vector_store %arg13[%c80, %c0_13], %18 {strides = array<i32>} : memref<160x128xf32, #tpu.memory_space<vmem>>, vector<16x128xf32>,
    %20 = vector.extract_strided_slice %9 {offsets = [0, 640], sizes = [16, 128], strides = [1, 1]} : vector<16x1024xf32> to vector<16x128xf32>
    %c96 = arith.constant 96 : index
    %c0_14 = arith.constant 0 : index
    %21 = vector.load %arg13[%c96, %c0_14] : memref<160x128xf32, #tpu.memory_space<vmem>>, vector<16x128xf32>
    tpu.vector_store %arg13[%c96, %c0_14], %20 {strides = array<i32>} : memref<160x128xf32, #tpu.memory_space<vmem>>, vector<16x128xf32>,
    %22 = vector.extract_strided_slice %9 {offsets = [0, 768], sizes = [16, 128], strides = [1, 1]} : vector<16x1024xf32> to vector<16x128xf32>
    %c112 = arith.constant 112 : index
    %c0_15 = arith.constant 0 : index
    %23 = vector.load %arg13[%c112, %c0_15] : memref<160x128xf32, #tpu.memory_space<vmem>>, vector<16x128xf32>
    tpu.vector_store %arg13[%c112, %c0_15], %22 {strides = array<i32>} : memref<160x128xf32, #tpu.memory_space<vmem>>, vector<16x128xf32>,
    %24 = vector.extract_strided_slice %9 {offsets = [0, 896], sizes = [16, 128], strides = [1, 1]} : vector<16x1024xf32> to vector<16x128xf32>
    %c128 = arith.constant 128 : index
    %c0_16 = arith.constant 0 : index
    %25 = vector.load %arg13[%c128, %c0_16] : memref<160x128xf32, #tpu.memory_space<vmem>>, vector<16x128xf32>
    tpu.vector_store %arg13[%c128, %c0_16], %24 {strides = array<i32>} : memref<160x128xf32, #tpu.memory_space<vmem>>, vector<16x128xf32>,
    %c16_17 = arith.constant 16 : index
    %c0_18 = arith.constant 0 : index
    %26 = vector.load %arg13[%c16_17, %c0_18] : memref<160x128xf32, #tpu.memory_space<vmem>>, vector<128x128xf32>
    %c0_19 = arith.constant 0 : index
    %c0_20 = arith.constant 0 : index
    %27 = vector.load %arg5[%c0_19, %c0_20] : memref<1x128xf32, #tpu.memory_space<vmem>>, vector<1x128xf32>
    %28 = arith.truncf %26 : vector<128x128xf32> to vector<128x128xbf16>
    %c0_21 = arith.constant 0 : index
    %c0_22 = arith.constant 0 : index
    %29 = vector.load %arg4[%c0_21, %c0_22] : memref<128x384xbf16, #tpu.memory_space<vmem>>, vector<128x384xbf16>
    %cst_23 = arith.constant dense<0.000000e+00> : vector<128x384xf32>
    %30 = tpu.matmul %28, %29, %cst_23 {dimension_numbers = #tpu.dot_dimension_numbers<[1], [0], [0], [1], [0, 0, 1, 1], [], []>} : vector<128x128xbf16>, vector<128x384xbf16>, vector<128x384xf32> -> vector<128x384xf32>
    %31 = vector.extract_strided_slice %30 {offsets = [0, 0], sizes = [128, 128], strides = [1, 1]} : vector<128x384xf32> to vector<128x128xf32>
    %32 = vector.extract_strided_slice %30 {offsets = [0, 128], sizes = [128, 128], strides = [1, 1]} : vector<128x384xf32> to vector<128x128xf32>
    %33 = vector.extract_strided_slice %30 {offsets = [0, 256], sizes = [128, 128], strides = [1, 1]} : vector<128x384xf32> to vector<128x128xf32>
    %c16_24 = arith.constant 16 : index
    %c0_25 = arith.constant 0 : index
    %34 = vector.load %arg13[%c16_24, %c0_25] : memref<160x128xf32, #tpu.memory_space<vmem>>, vector<128x128xf32>
    tpu.vector_store %arg13[%c16_24, %c0_25], %33 {strides = array<i32>} : memref<160x128xf32, #tpu.memory_space<vmem>>, vector<128x128xf32>,
    %c32_26 = arith.constant 32 : index
    %c0_27 = arith.constant 0 : index
    %35 = vector.load %arg13[%c32_26, %c0_27] : memref<160x128xf32, #tpu.memory_space<vmem>>, vector<128x128xf32>
    %36 = vector.broadcast %27 : vector<1x128xf32> to vector<128x128xf32>
    %37 = arith.addf %31, %36 : vector<128x128xf32>
    %cst_28 = arith.constant 0.000000e+00 : f32
    %38 = vector.broadcast %cst_28 : f32 to vector<128x128xf32>
    %39 = arith.maximumf %37, %38 : vector<128x128xf32>
    %40 = arith.addf %32, %35 : vector<128x128xf32>
    %41 = vector.broadcast %27 : vector<1x128xf32> to vector<128x128xf32>
    %42 = arith.addf %40, %41 : vector<128x128xf32>
    %cst_29 = arith.constant 0.000000e+00 : f32
    %43 = vector.broadcast %cst_29 : f32 to vector<128x128xf32>
    %44 = arith.maximumf %42, %43 : vector<128x128xf32>
    %c0_30 = arith.constant 0 : index
    %c0_31 = arith.constant 0 : index
    %45 = vector.load %arg7[%c0_30, %c0_31] : memref<1x128xf32, #tpu.memory_space<vmem>>, vector<1x128xf32>
    %46 = arith.truncf %39 : vector<128x128xf32> to vector<128x128xbf16>
    %c0_32 = arith.constant 0 : index
    %c0_33 = arith.constant 0 : index
    %47 = vector.load %arg6[%c0_32, %c0_33] : memref<128x384xbf16, #tpu.memory_space<vmem>>, vector<128x384xbf16>
    %cst_34 = arith.constant dense<0.000000e+00> : vector<128x384xf32>
    %48 = tpu.matmul %46, %47, %cst_34 {dimension_numbers = #tpu.dot_dimension_numbers<[1], [0], [0], [1], [0, 0, 1, 1], [], []>} : vector<128x128xbf16>, vector<128x384xbf16>, vector<128x384xf32> -> vector<128x384xf32>
    %49 = arith.truncf %44 : vector<128x128xf32> to vector<128x128xbf16>
    %c0_35 = arith.constant 0 : index
    %c0_36 = arith.constant 0 : index
    %50 = vector.load %arg6[%c0_35, %c0_36] : memref<128x384xbf16, #tpu.memory_space<vmem>>, vector<128x384xbf16>
    %cst_37 = arith.constant dense<0.000000e+00> : vector<128x384xf32>
    %51 = tpu.matmul %49, %50, %cst_37 {dimension_numbers = #tpu.dot_dimension_numbers<[1], [0], [0], [1], [0, 0, 1, 1], [], []>} : vector<128x128xbf16>, vector<128x384xbf16>, vector<128x384xf32> -> vector<128x384xf32>
    %52 = vector.extract_strided_slice %48 {offsets = [0, 0], sizes = [128, 128], strides = [1, 1]} : vector<128x384xf32> to vector<128x128xf32>
    %53 = vector.extract_strided_slice %48 {offsets = [0, 128], sizes = [128, 128], strides = [1, 1]} : vector<128x384xf32> to vector<128x128xf32>
    %54 = vector.extract_strided_slice %51 {offsets = [0, 256], sizes = [128, 128], strides = [1, 1]} : vector<128x384xf32> to vector<128x128xf32>
    %55 = vector.broadcast %45 : vector<1x128xf32> to vector<128x128xf32>
    %56 = arith.addf %52, %55 : vector<128x128xf32>
    %cst_38 = arith.constant 0.000000e+00 : f32
    %57 = vector.broadcast %cst_38 : f32 to vector<128x128xf32>
    %58 = arith.maximumf %56, %57 : vector<128x128xf32>
    %59 = arith.addf %53, %54 : vector<128x128xf32>
    %60 = vector.broadcast %45 : vector<1x128xf32> to vector<128x128xf32>
    %61 = arith.addf %59, %60 : vector<128x128xf32>
    %cst_39 = arith.constant 0.000000e+00 : f32
    %62 = vector.broadcast %cst_39 : f32 to vector<128x128xf32>
    %63 = arith.maximumf %61, %62 : vector<128x128xf32>
    %64 = vector.extract_strided_slice %51 {offsets = [0, 0], sizes = [128, 128], strides = [1, 1]} : vector<128x384xf32> to vector<128x128xf32>
    %65 = vector.extract_strided_slice %51 {offsets = [0, 128], sizes = [128, 128], strides = [1, 1]} : vector<128x384xf32> to vector<128x128xf32>
    %66 = vector.extract_strided_slice %48 {offsets = [0, 256], sizes = [128, 128], strides = [1, 1]} : vector<128x384xf32> to vector<128x128xf32>
    %c16_40 = arith.constant 16 : index
    %c0_41 = arith.constant 0 : index
    %67 = vector.load %arg13[%c16_40, %c0_41] : memref<160x128xf32, #tpu.memory_space<vmem>>, vector<128x128xf32>
    tpu.vector_store %arg13[%c16_40, %c0_41], %66 {strides = array<i32>} : memref<160x128xf32, #tpu.memory_space<vmem>>, vector<128x128xf32>,
    %c32_42 = arith.constant 32 : index
    %c0_43 = arith.constant 0 : index
    %68 = vector.load %arg13[%c32_42, %c0_43] : memref<160x128xf32, #tpu.memory_space<vmem>>, vector<128x128xf32>
    %69 = vector.broadcast %45 : vector<1x128xf32> to vector<128x128xf32>
    %70 = arith.addf %64, %69 : vector<128x128xf32>
    %cst_44 = arith.constant 0.000000e+00 : f32
    %71 = vector.broadcast %cst_44 : f32 to vector<128x128xf32>
    %72 = arith.maximumf %70, %71 : vector<128x128xf32>
    %73 = arith.addf %65, %68 : vector<128x128xf32>
    %74 = vector.broadcast %45 : vector<1x128xf32> to vector<128x128xf32>
    %75 = arith.addf %73, %74 : vector<128x128xf32>
    %cst_45 = arith.constant 0.000000e+00 : f32
    %76 = vector.broadcast %cst_45 : f32 to vector<128x128xf32>
    %77 = arith.maximumf %75, %76 : vector<128x128xf32>
    %c0_46 = arith.constant 0 : index
    %c0_47 = arith.constant 0 : index
    %78 = vector.load %arg9[%c0_46, %c0_47] : memref<1x128xf32, #tpu.memory_space<vmem>>, vector<1x128xf32>
    %79 = arith.truncf %58 : vector<128x128xf32> to vector<128x128xbf16>
    %c0_48 = arith.constant 0 : index
    %c0_49 = arith.constant 0 : index
    %80 = vector.load %arg8[%c0_48, %c0_49] : memref<128x384xbf16, #tpu.memory_space<vmem>>, vector<128x384xbf16>
    %cst_50 = arith.constant dense<0.000000e+00> : vector<128x384xf32>
    %81 = tpu.matmul %79, %80, %cst_50 {dimension_numbers = #tpu.dot_dimension_numbers<[1], [0], [0], [1], [0, 0, 1, 1], [], []>} : vector<128x128xbf16>, vector<128x384xbf16>, vector<128x384xf32> -> vector<128x384xf32>
    %82 = arith.truncf %63 : vector<128x128xf32> to vector<128x128xbf16>
    %c0_51 = arith.constant 0 : index
    %c0_52 = arith.constant 0 : index
    %83 = vector.load %arg8[%c0_51, %c0_52] : memref<128x384xbf16, #tpu.memory_space<vmem>>, vector<128x384xbf16>
    %cst_53 = arith.constant dense<0.000000e+00> : vector<128x384xf32>
    %84 = tpu.matmul %82, %83, %cst_53 {dimension_numbers = #tpu.dot_dimension_numbers<[1], [0], [0], [1], [0, 0, 1, 1], [], []>} : vector<128x128xbf16>, vector<128x384xbf16>, vector<128x384xf32> -> vector<128x384xf32>
    %85 = arith.truncf %72 : vector<128x128xf32> to vector<128x128xbf16>
    %c0_54 = arith.constant 0 : index
    %c0_55 = arith.constant 0 : index
    %86 = vector.load %arg8[%c0_54, %c0_55] : memref<128x384xbf16, #tpu.memory_space<vmem>>, vector<128x384xbf16>
    %cst_56 = arith.constant dense<0.000000e+00> : vector<128x384xf32>
    %87 = tpu.matmul %85, %86, %cst_56 {dimension_numbers = #tpu.dot_dimension_numbers<[1], [0], [0], [1], [0, 0, 1, 1], [], []>} : vector<128x128xbf16>, vector<128x384xbf16>, vector<128x384xf32> -> vector<128x384xf32>
    %88 = arith.truncf %77 : vector<128x128xf32> to vector<128x128xbf16>
    %c0_57 = arith.constant 0 : index
    %c0_58 = arith.constant 0 : index
    %89 = vector.load %arg8[%c0_57, %c0_58] : memref<128x384xbf16, #tpu.memory_space<vmem>>, vector<128x384xbf16>
    %cst_59 = arith.constant dense<0.000000e+00> : vector<128x384xf32>
    %90 = tpu.matmul %88, %89, %cst_59 {dimension_numbers = #tpu.dot_dimension_numbers<[1], [0], [0], [1], [0, 0, 1, 1], [], []>} : vector<128x128xbf16>, vector<128x384xbf16>, vector<128x384xf32> -> vector<128x384xf32>
    %91 = vector.extract_strided_slice %81 {offsets = [0, 0], sizes = [128, 128], strides = [1, 1]} : vector<128x384xf32> to vector<128x128xf32>
    %92 = vector.extract_strided_slice %81 {offsets = [0, 128], sizes = [128, 128], strides = [1, 1]} : vector<128x384xf32> to vector<128x128xf32>
    %93 = vector.extract_strided_slice %84 {offsets = [0, 256], sizes = [128, 128], strides = [1, 1]} : vector<128x384xf32> to vector<128x128xf32>
    %94 = vector.broadcast %78 : vector<1x128xf32> to vector<128x128xf32>
    %95 = arith.addf %91, %94 : vector<128x128xf32>
    %cst_60 = arith.constant 0.000000e+00 : f32
    %96 = vector.broadcast %cst_60 : f32 to vector<128x128xf32>
    %97 = arith.maximumf %95, %96 : vector<128x128xf32>
    %98 = arith.addf %92, %93 : vector<128x128xf32>
    %99 = vector.broadcast %78 : vector<1x128xf32> to vector<128x128xf32>
    %100 = arith.addf %98, %99 : vector<128x128xf32>
    %cst_61 = arith.constant 0.000000e+00 : f32
    %101 = vector.broadcast %cst_61 : f32 to vector<128x128xf32>
    %102 = arith.maximumf %100, %101 : vector<128x128xf32>
    %103 = vector.extract_strided_slice %84 {offsets = [0, 0], sizes = [128, 128], strides = [1, 1]} : vector<128x384xf32> to vector<128x128xf32>
    %104 = vector.extract_strided_slice %84 {offsets = [0, 128], sizes = [128, 128], strides = [1, 1]} : vector<128x384xf32> to vector<128x128xf32>
    %105 = vector.extract_strided_slice %87 {offsets = [0, 256], sizes = [128, 128], strides = [1, 1]} : vector<128x384xf32> to vector<128x128xf32>
    %106 = vector.broadcast %78 : vector<1x128xf32> to vector<128x128xf32>
    %107 = arith.addf %103, %106 : vector<128x128xf32>
    %cst_62 = arith.constant 0.000000e+00 : f32
    %108 = vector.broadcast %cst_62 : f32 to vector<128x128xf32>
    %109 = arith.maximumf %107, %108 : vector<128x128xf32>
    %110 = arith.addf %104, %105 : vector<128x128xf32>
    %111 = vector.broadcast %78 : vector<1x128xf32> to vector<128x128xf32>
    %112 = arith.addf %110, %111 : vector<128x128xf32>
    %cst_63 = arith.constant 0.000000e+00 : f32
    %113 = vector.broadcast %cst_63 : f32 to vector<128x128xf32>
    %114 = arith.maximumf %112, %113 : vector<128x128xf32>
    %115 = vector.extract_strided_slice %87 {offsets = [0, 0], sizes = [128, 128], strides = [1, 1]} : vector<128x384xf32> to vector<128x128xf32>
    %116 = vector.extract_strided_slice %87 {offsets = [0, 128], sizes = [128, 128], strides = [1, 1]} : vector<128x384xf32> to vector<128x128xf32>
    %117 = vector.extract_strided_slice %90 {offsets = [0, 256], sizes = [128, 128], strides = [1, 1]} : vector<128x384xf32> to vector<128x128xf32>
    %118 = vector.broadcast %78 : vector<1x128xf32> to vector<128x128xf32>
    %119 = arith.addf %115, %118 : vector<128x128xf32>
    %cst_64 = arith.constant 0.000000e+00 : f32
    %120 = vector.broadcast %cst_64 : f32 to vector<128x128xf32>
    %121 = arith.maximumf %119, %120 : vector<128x128xf32>
    %122 = arith.addf %116, %117 : vector<128x128xf32>
    %123 = vector.broadcast %78 : vector<1x128xf32> to vector<128x128xf32>
    %124 = arith.addf %122, %123 : vector<128x128xf32>
    %cst_65 = arith.constant 0.000000e+00 : f32
    %125 = vector.broadcast %cst_65 : f32 to vector<128x128xf32>
    %126 = arith.maximumf %124, %125 : vector<128x128xf32>
    %127 = vector.extract_strided_slice %90 {offsets = [0, 0], sizes = [128, 128], strides = [1, 1]} : vector<128x384xf32> to vector<128x128xf32>
    %128 = vector.extract_strided_slice %90 {offsets = [0, 128], sizes = [128, 128], strides = [1, 1]} : vector<128x384xf32> to vector<128x128xf32>
    %129 = vector.extract_strided_slice %81 {offsets = [0, 256], sizes = [128, 128], strides = [1, 1]} : vector<128x384xf32> to vector<128x128xf32>
    %c16_66 = arith.constant 16 : index
    %c0_67 = arith.constant 0 : index
    %130 = vector.load %arg13[%c16_66, %c0_67] : memref<160x128xf32, #tpu.memory_space<vmem>>, vector<128x128xf32>
    tpu.vector_store %arg13[%c16_66, %c0_67], %129 {strides = array<i32>} : memref<160x128xf32, #tpu.memory_space<vmem>>, vector<128x128xf32>,
    %c32_68 = arith.constant 32 : index
    %c0_69 = arith.constant 0 : index
    %131 = vector.load %arg13[%c32_68, %c0_69] : memref<160x128xf32, #tpu.memory_space<vmem>>, vector<128x128xf32>
    %132 = vector.broadcast %78 : vector<1x128xf32> to vector<128x128xf32>
    %133 = arith.addf %127, %132 : vector<128x128xf32>
    %cst_70 = arith.constant 0.000000e+00 : f32
    %134 = vector.broadcast %cst_70 : f32 to vector<128x128xf32>
    %135 = arith.maximumf %133, %134 : vector<128x128xf32>
    %136 = arith.addf %128, %131 : vector<128x128xf32>
    %137 = vector.broadcast %78 : vector<1x128xf32> to vector<128x128xf32>
    %138 = arith.addf %136, %137 : vector<128x128xf32>
    %cst_71 = arith.constant 0.000000e+00 : f32
    %139 = vector.broadcast %cst_71 : f32 to vector<128x128xf32>
    %140 = arith.maximumf %138, %139 : vector<128x128xf32>
    %c0_72 = arith.constant 0 : index
    %c0_73 = arith.constant 0 : index
    %141 = vector.load %arg11[%c0_72, %c0_73] : memref<1x8xf32, #tpu.memory_space<vmem>>, vector<1x8xf32>
    %c16_74 = arith.constant 16 : index
    %c0_75 = arith.constant 0 : index
    %142 = vector.load %arg13[%c16_74, %c0_75] : memref<160x128xf32, #tpu.memory_space<vmem>>, vector<128x128xf32>
    tpu.vector_store %arg13[%c16_74, %c0_75], %140 {strides = array<i32>} : memref<160x128xf32, #tpu.memory_space<vmem>>, vector<128x128xf32>,
    %c0_76 = arith.constant 0 : index
    %c0_77 = arith.constant 0 : index
    %143 = vector.load %arg13[%c0_76, %c0_77] : memref<160x128xf32, #tpu.memory_space<vmem>>, vector<128x128xf32>
    %c16_78 = arith.constant 16 : index
    %c0_79 = arith.constant 0 : index
    %144 = vector.load %arg13[%c16_78, %c0_79] : memref<160x128xf32, #tpu.memory_space<vmem>>, vector<128x128xf32>
    tpu.vector_store %arg13[%c16_78, %c0_79], %97 {strides = array<i32>} : memref<160x128xf32, #tpu.memory_space<vmem>>, vector<128x128xf32>,
    %c32_80 = arith.constant 32 : index
    %c0_81 = arith.constant 0 : index
    %145 = vector.load %arg13[%c32_80, %c0_81] : memref<160x128xf32, #tpu.memory_space<vmem>>, vector<128x128xf32>
    %146 = arith.truncf %143 : vector<128x128xf32> to vector<128x128xbf16>
    %c0_82 = arith.constant 0 : index
    %c0_83 = arith.constant 0 : index
    %c0_84 = arith.constant 0 : index
    %147 = vector.load %arg10[%c0_82, %c0_83, %c0_84] : memref<3x128x8xbf16, #tpu.memory_space<vmem>>, vector<1x128x8xbf16>
    %148 = vector.shape_cast %147 : vector<1x128x8xbf16> to vector<128x8xbf16>
    %cst_85 = arith.constant dense<0.000000e+00> : vector<128x8xf32>
    %149 = tpu.matmul %146, %148, %cst_85 {dimension_numbers = #tpu.dot_dimension_numbers<[1], [0], [0], [1], [0, 0, 1, 1], [], []>} : vector<128x128xbf16>, vector<128x8xbf16>, vector<128x8xf32> -> vector<128x8xf32>
    %150 = arith.truncf %97 : vector<128x128xf32> to vector<128x128xbf16>
    %c1 = arith.constant 1 : index
    %c0_86 = arith.constant 0 : index
    %c0_87 = arith.constant 0 : index
    %151 = vector.load %arg10[%c1, %c0_86, %c0_87] : memref<3x128x8xbf16, #tpu.memory_space<vmem>>, vector<1x128x8xbf16>
    %152 = vector.shape_cast %151 : vector<1x128x8xbf16> to vector<128x8xbf16>
    %cst_88 = arith.constant dense<0.000000e+00> : vector<128x8xf32>
    %153 = tpu.matmul %150, %152, %cst_88 {dimension_numbers = #tpu.dot_dimension_numbers<[1], [0], [0], [1], [0, 0, 1, 1], [], []>} : vector<128x128xbf16>, vector<128x8xbf16>, vector<128x8xf32> -> vector<128x8xf32>
    %154 = arith.addf %149, %153 : vector<128x8xf32>
    %155 = arith.truncf %102 : vector<128x128xf32> to vector<128x128xbf16>
    %c2 = arith.constant 2 : index
    %c0_89 = arith.constant 0 : index
    %c0_90 = arith.constant 0 : index
    %156 = vector.load %arg10[%c2, %c0_89, %c0_90] : memref<3x128x8xbf16, #tpu.memory_space<vmem>>, vector<1x128x8xbf16>
    %157 = vector.shape_cast %156 : vector<1x128x8xbf16> to vector<128x8xbf16>
    %cst_91 = arith.constant dense<0.000000e+00> : vector<128x8xf32>
    %158 = tpu.matmul %155, %157, %cst_91 {dimension_numbers = #tpu.dot_dimension_numbers<[1], [0], [0], [1], [0, 0, 1, 1], [], []>} : vector<128x128xbf16>, vector<128x8xbf16>, vector<128x8xf32> -> vector<128x8xf32>
    %159 = arith.addf %154, %158 : vector<128x8xf32>
    %160 = vector.broadcast %141 : vector<1x8xf32> to vector<128x8xf32>
    %161 = arith.addf %159, %160 : vector<128x8xf32>
    %cst_92 = arith.constant 0.000000e+00 : f32
    %162 = vector.broadcast %cst_92 : f32 to vector<128x8xf32>
    %163 = arith.subf %162, %161 : vector<128x8xf32>
    %164 = math.exp %163 : vector<128x8xf32>
    %cst_93 = arith.constant 1.000000e+00 : f32
    %165 = vector.broadcast %cst_93 : f32 to vector<128x8xf32>
    %166 = arith.addf %165, %164 : vector<128x8xf32>
    %167 = tpu.reciprocal %166 {approx = true} : vector<128x8xf32> -> vector<128x8xf32>
    %c0_94 = arith.constant 0 : index
    %c0_95 = arith.constant 0 : index
    %c0_96 = arith.constant 0 : index
    %168 = vector.load %arg12[%c0_94, %c0_95, %c0_96] : memref<8x128x8xf32, #tpu.memory_space<vmem>>, vector<1x128x8xf32>
    %169 = vector.shape_cast %168 : vector<1x128x8xf32> to vector<128x8xf32>
    %170 = vector.shape_cast %167 : vector<128x8xf32> to vector<1x128x8xf32>
    tpu.vector_store %arg12[%c0_94, %c0_95, %c0_96], %170 {strides = array<i32>} : memref<8x128x8xf32, #tpu.memory_space<vmem>>, vector<1x128x8xf32>,
    %171 = arith.truncf %97 : vector<128x128xf32> to vector<128x128xbf16>
    %c0_97 = arith.constant 0 : index
    %c0_98 = arith.constant 0 : index
    %c0_99 = arith.constant 0 : index
    %172 = vector.load %arg10[%c0_97, %c0_98, %c0_99] : memref<3x128x8xbf16, #tpu.memory_space<vmem>>, vector<1x128x8xbf16>
    %173 = vector.shape_cast %172 : vector<1x128x8xbf16> to vector<128x8xbf16>
    %cst_100 = arith.constant dense<0.000000e+00> : vector<128x8xf32>
    %174 = tpu.matmul %171, %173, %cst_100 {dimension_numbers = #tpu.dot_dimension_numbers<[1], [0], [0], [1], [0, 0, 1, 1], [], []>} : vector<128x128xbf16>, vector<128x8xbf16>, vector<128x8xf32> -> vector<128x8xf32>
    %175 = arith.truncf %102 : vector<128x128xf32> to vector<128x128xbf16>
    %c1_101 = arith.constant 1 : index
    %c0_102 = arith.constant 0 : index
    %c0_103 = arith.constant 0 : index
    %176 = vector.load %arg10[%c1_101, %c0_102, %c0_103] : memref<3x128x8xbf16, #tpu.memory_space<vmem>>, vector<1x128x8xbf16>
    %177 = vector.shape_cast %176 : vector<1x128x8xbf16> to vector<128x8xbf16>
    %cst_104 = arith.constant dense<0.000000e+00> : vector<128x8xf32>
    %178 = tpu.matmul %175, %177, %cst_104 {dimension_numbers = #tpu.dot_dimension_numbers<[1], [0], [0], [1], [0, 0, 1, 1], [], []>} : vector<128x128xbf16>, vector<128x8xbf16>, vector<128x8xf32> -> vector<128x8xf32>
    %179 = arith.addf %174, %178 : vector<128x8xf32>
    %180 = arith.truncf %109 : vector<128x128xf32> to vector<128x128xbf16>
    %c2_105 = arith.constant 2 : index
    %c0_106 = arith.constant 0 : index
    %c0_107 = arith.constant 0 : index
    %181 = vector.load %arg10[%c2_105, %c0_106, %c0_107] : memref<3x128x8xbf16, #tpu.memory_space<vmem>>, vector<1x128x8xbf16>
    %182 = vector.shape_cast %181 : vector<1x128x8xbf16> to vector<128x8xbf16>
    %cst_108 = arith.constant dense<0.000000e+00> : vector<128x8xf32>
    %183 = tpu.matmul %180, %182, %cst_108 {dimension_numbers = #tpu.dot_dimension_numbers<[1], [0], [0], [1], [0, 0, 1, 1], [], []>} : vector<128x128xbf16>, vector<128x8xbf16>, vector<128x8xf32> -> vector<128x8xf32>
    %184 = arith.addf %179, %183 : vector<128x8xf32>
    %185 = vector.broadcast %141 : vector<1x8xf32> to vector<128x8xf32>
    %186 = arith.addf %184, %185 : vector<128x8xf32>
    %cst_109 = arith.constant 0.000000e+00 : f32
    %187 = vector.broadcast %cst_109 : f32 to vector<128x8xf32>
    %188 = arith.subf %187, %186 : vector<128x8xf32>
    %189 = math.exp %188 : vector<128x8xf32>
    %cst_110 = arith.constant 1.000000e+00 : f32
    %190 = vector.broadcast %cst_110 : f32 to vector<128x8xf32>
    %191 = arith.addf %190, %189 : vector<128x8xf32>
    %192 = tpu.reciprocal %191 {approx = true} : vector<128x8xf32> -> vector<128x8xf32>
    %c1_111 = arith.constant 1 : index
    %c0_112 = arith.constant 0 : index
    %c0_113 = arith.constant 0 : index
    %193 = vector.load %arg12[%c1_111, %c0_112, %c0_113] : memref<8x128x8xf32, #tpu.memory_space<vmem>>, vector<1x128x8xf32>
    %194 = vector.shape_cast %193 : vector<1x128x8xf32> to vector<128x8xf32>
    %195 = vector.shape_cast %192 : vector<128x8xf32> to vector<1x128x8xf32>
    tpu.vector_store %arg12[%c1_111, %c0_112, %c0_113], %195 {strides = array<i32>} : memref<8x128x8xf32, #tpu.memory_space<vmem>>, vector<1x128x8xf32>,
    %196 = arith.truncf %102 : vector<128x128xf32> to vector<128x128xbf16>
    %c0_114 = arith.constant 0 : index
    %c0_115 = arith.constant 0 : index
    %c0_116 = arith.constant 0 : index
    %197 = vector.load %arg10[%c0_114, %c0_115, %c0_116] : memref<3x128x8xbf16, #tpu.memory_space<vmem>>, vector<1x128x8xbf16>
    %198 = vector.shape_cast %197 : vector<1x128x8xbf16> to vector<128x8xbf16>
    %cst_117 = arith.constant dense<0.000000e+00> : vector<128x8xf32>
    %199 = tpu.matmul %196, %198, %cst_117 {dimension_numbers = #tpu.dot_dimension_numbers<[1], [0], [0], [1], [0, 0, 1, 1], [], []>} : vector<128x128xbf16>, vector<128x8xbf16>, vector<128x8xf32> -> vector<128x8xf32>
    %200 = arith.truncf %109 : vector<128x128xf32> to vector<128x128xbf16>
    %c1_118 = arith.constant 1 : index
    %c0_119 = arith.constant 0 : index
    %c0_120 = arith.constant 0 : index
    %201 = vector.load %arg10[%c1_118, %c0_119, %c0_120] : memref<3x128x8xbf16, #tpu.memory_space<vmem>>, vector<1x128x8xbf16>
    %202 = vector.shape_cast %201 : vector<1x128x8xbf16> to vector<128x8xbf16>
    %cst_121 = arith.constant dense<0.000000e+00> : vector<128x8xf32>
    %203 = tpu.matmul %200, %202, %cst_121 {dimension_numbers = #tpu.dot_dimension_numbers<[1], [0], [0], [1], [0, 0, 1, 1], [], []>} : vector<128x128xbf16>, vector<128x8xbf16>, vector<128x8xf32> -> vector<128x8xf32>
    %204 = arith.addf %199, %203 : vector<128x8xf32>
    %205 = arith.truncf %114 : vector<128x128xf32> to vector<128x128xbf16>
    %c2_122 = arith.constant 2 : index
    %c0_123 = arith.constant 0 : index
    %c0_124 = arith.constant 0 : index
    %206 = vector.load %arg10[%c2_122, %c0_123, %c0_124] : memref<3x128x8xbf16, #tpu.memory_space<vmem>>, vector<1x128x8xbf16>
    %207 = vector.shape_cast %206 : vector<1x128x8xbf16> to vector<128x8xbf16>
    %cst_125 = arith.constant dense<0.000000e+00> : vector<128x8xf32>
    %208 = tpu.matmul %205, %207, %cst_125 {dimension_numbers = #tpu.dot_dimension_numbers<[1], [0], [0], [1], [0, 0, 1, 1], [], []>} : vector<128x128xbf16>, vector<128x8xbf16>, vector<128x8xf32> -> vector<128x8xf32>
    %209 = arith.addf %204, %208 : vector<128x8xf32>
    %210 = vector.broadcast %141 : vector<1x8xf32> to vector<128x8xf32>
    %211 = arith.addf %209, %210 : vector<128x8xf32>
    %cst_126 = arith.constant 0.000000e+00 : f32
    %212 = vector.broadcast %cst_126 : f32 to vector<128x8xf32>
    %213 = arith.subf %212, %211 : vector<128x8xf32>
    %214 = math.exp %213 : vector<128x8xf32>
    %cst_127 = arith.constant 1.000000e+00 : f32
    %215 = vector.broadcast %cst_127 : f32 to vector<128x8xf32>
    %216 = arith.addf %215, %214 : vector<128x8xf32>
    %217 = tpu.reciprocal %216 {approx = true} : vector<128x8xf32> -> vector<128x8xf32>
    %c2_128 = arith.constant 2 : index
    %c0_129 = arith.constant 0 : index
    %c0_130 = arith.constant 0 : index
    %218 = vector.load %arg12[%c2_128, %c0_129, %c0_130] : memref<8x128x8xf32, #tpu.memory_space<vmem>>, vector<1x128x8xf32>
    %219 = vector.shape_cast %218 : vector<1x128x8xf32> to vector<128x8xf32>
    %220 = vector.shape_cast %217 : vector<128x8xf32> to vector<1x128x8xf32>
    tpu.vector_store %arg12[%c2_128, %c0_129, %c0_130], %220 {strides = array<i32>} : memref<8x128x8xf32, #tpu.memory_space<vmem>>, vector<1x128x8xf32>,
    %221 = arith.truncf %109 : vector<128x128xf32> to vector<128x128xbf16>
    %c0_131 = arith.constant 0 : index
    %c0_132 = arith.constant 0 : index
    %c0_133 = arith.constant 0 : index
    %222 = vector.load %arg10[%c0_131, %c0_132, %c0_133] : memref<3x128x8xbf16, #tpu.memory_space<vmem>>, vector<1x128x8xbf16>
    %223 = vector.shape_cast %222 : vector<1x128x8xbf16> to vector<128x8xbf16>
    %cst_134 = arith.constant dense<0.000000e+00> : vector<128x8xf32>
    %224 = tpu.matmul %221, %223, %cst_134 {dimension_numbers = #tpu.dot_dimension_numbers<[1], [0], [0], [1], [0, 0, 1, 1], [], []>} : vector<128x128xbf16>, vector<128x8xbf16>, vector<128x8xf32> -> vector<128x8xf32>
    %225 = arith.truncf %114 : vector<128x128xf32> to vector<128x128xbf16>
    %c1_135 = arith.constant 1 : index
    %c0_136 = arith.constant 0 : index
    %c0_137 = arith.constant 0 : index
    %226 = vector.load %arg10[%c1_135, %c0_136, %c0_137] : memref<3x128x8xbf16, #tpu.memory_space<vmem>>, vector<1x128x8xbf16>
    %227 = vector.shape_cast %226 : vector<1x128x8xbf16> to vector<128x8xbf16>
    %cst_138 = arith.constant dense<0.000000e+00> : vector<128x8xf32>
    %228 = tpu.matmul %225, %227, %cst_138 {dimension_numbers = #tpu.dot_dimension_numbers<[1], [0], [0], [1], [0, 0, 1, 1], [], []>} : vector<128x128xbf16>, vector<128x8xbf16>, vector<128x8xf32> -> vector<128x8xf32>
    %229 = arith.addf %224, %228 : vector<128x8xf32>
    %230 = arith.truncf %121 : vector<128x128xf32> to vector<128x128xbf16>
    %c2_139 = arith.constant 2 : index
    %c0_140 = arith.constant 0 : index
    %c0_141 = arith.constant 0 : index
    %231 = vector.load %arg10[%c2_139, %c0_140, %c0_141] : memref<3x128x8xbf16, #tpu.memory_space<vmem>>, vector<1x128x8xbf16>
    %232 = vector.shape_cast %231 : vector<1x128x8xbf16> to vector<128x8xbf16>
    %cst_142 = arith.constant dense<0.000000e+00> : vector<128x8xf32>
    %233 = tpu.matmul %230, %232, %cst_142 {dimension_numbers = #tpu.dot_dimension_numbers<[1], [0], [0], [1], [0, 0, 1, 1], [], []>} : vector<128x128xbf16>, vector<128x8xbf16>, vector<128x8xf32> -> vector<128x8xf32>
    %234 = arith.addf %229, %233 : vector<128x8xf32>
    %235 = vector.broadcast %141 : vector<1x8xf32> to vector<128x8xf32>
    %236 = arith.addf %234, %235 : vector<128x8xf32>
    %cst_143 = arith.constant 0.000000e+00 : f32
    %237 = vector.broadcast %cst_143 : f32 to vector<128x8xf32>
    %238 = arith.subf %237, %236 : vector<128x8xf32>
    %239 = math.exp %238 : vector<128x8xf32>
    %cst_144 = arith.constant 1.000000e+00 : f32
    %240 = vector.broadcast %cst_144 : f32 to vector<128x8xf32>
    %241 = arith.addf %240, %239 : vector<128x8xf32>
    %242 = tpu.reciprocal %241 {approx = true} : vector<128x8xf32> -> vector<128x8xf32>
    %c3 = arith.constant 3 : index
    %c0_145 = arith.constant 0 : index
    %c0_146 = arith.constant 0 : index
    %243 = vector.load %arg12[%c3, %c0_145, %c0_146] : memref<8x128x8xf32, #tpu.memory_space<vmem>>, vector<1x128x8xf32>
    %244 = vector.shape_cast %243 : vector<1x128x8xf32> to vector<128x8xf32>
    %245 = vector.shape_cast %242 : vector<128x8xf32> to vector<1x128x8xf32>
    tpu.vector_store %arg12[%c3, %c0_145, %c0_146], %245 {strides = array<i32>} : memref<8x128x8xf32, #tpu.memory_space<vmem>>, vector<1x128x8xf32>,
    %246 = arith.truncf %114 : vector<128x128xf32> to vector<128x128xbf16>
    %c0_147 = arith.constant 0 : index
    %c0_148 = arith.constant 0 : index
    %c0_149 = arith.constant 0 : index
    %247 = vector.load %arg10[%c0_147, %c0_148, %c0_149] : memref<3x128x8xbf16, #tpu.memory_space<vmem>>, vector<1x128x8xbf16>
    %248 = vector.shape_cast %247 : vector<1x128x8xbf16> to vector<128x8xbf16>
    %cst_150 = arith.constant dense<0.000000e+00> : vector<128x8xf32>
    %249 = tpu.matmul %246, %248, %cst_150 {dimension_numbers = #tpu.dot_dimension_numbers<[1], [0], [0], [1], [0, 0, 1, 1], [], []>} : vector<128x128xbf16>, vector<128x8xbf16>, vector<128x8xf32> -> vector<128x8xf32>
    %250 = arith.truncf %121 : vector<128x128xf32> to vector<128x128xbf16>
    %c1_151 = arith.constant 1 : index
    %c0_152 = arith.constant 0 : index
    %c0_153 = arith.constant 0 : index
    %251 = vector.load %arg10[%c1_151, %c0_152, %c0_153] : memref<3x128x8xbf16, #tpu.memory_space<vmem>>, vector<1x128x8xbf16>
    %252 = vector.shape_cast %251 : vector<1x128x8xbf16> to vector<128x8xbf16>
    %cst_154 = arith.constant dense<0.000000e+00> : vector<128x8xf32>
    %253 = tpu.matmul %250, %252, %cst_154 {dimension_numbers = #tpu.dot_dimension_numbers<[1], [0], [0], [1], [0, 0, 1, 1], [], []>} : vector<128x128xbf16>, vector<128x8xbf16>, vector<128x8xf32> -> vector<128x8xf32>
    %254 = arith.addf %249, %253 : vector<128x8xf32>
    %255 = arith.truncf %126 : vector<128x128xf32> to vector<128x128xbf16>
    %c2_155 = arith.constant 2 : index
    %c0_156 = arith.constant 0 : index
    %c0_157 = arith.constant 0 : index
    %256 = vector.load %arg10[%c2_155, %c0_156, %c0_157] : memref<3x128x8xbf16, #tpu.memory_space<vmem>>, vector<1x128x8xbf16>
    %257 = vector.shape_cast %256 : vector<1x128x8xbf16> to vector<128x8xbf16>
    %cst_158 = arith.constant dense<0.000000e+00> : vector<128x8xf32>
    %258 = tpu.matmul %255, %257, %cst_158 {dimension_numbers = #tpu.dot_dimension_numbers<[1], [0], [0], [1], [0, 0, 1, 1], [], []>} : vector<128x128xbf16>, vector<128x8xbf16>, vector<128x8xf32> -> vector<128x8xf32>
    %259 = arith.addf %254, %258 : vector<128x8xf32>
    %260 = vector.broadcast %141 : vector<1x8xf32> to vector<128x8xf32>
    %261 = arith.addf %259, %260 : vector<128x8xf32>
    %cst_159 = arith.constant 0.000000e+00 : f32
    %262 = vector.broadcast %cst_159 : f32 to vector<128x8xf32>
    %263 = arith.subf %262, %261 : vector<128x8xf32>
    %264 = math.exp %263 : vector<128x8xf32>
    %cst_160 = arith.constant 1.000000e+00 : f32
    %265 = vector.broadcast %cst_160 : f32 to vector<128x8xf32>
    %266 = arith.addf %265, %264 : vector<128x8xf32>
    %267 = tpu.reciprocal %266 {approx = true} : vector<128x8xf32> -> vector<128x8xf32>
    %c4 = arith.constant 4 : index
    %c0_161 = arith.constant 0 : index
    %c0_162 = arith.constant 0 : index
    %268 = vector.load %arg12[%c4, %c0_161, %c0_162] : memref<8x128x8xf32, #tpu.memory_space<vmem>>, vector<1x128x8xf32>
    %269 = vector.shape_cast %268 : vector<1x128x8xf32> to vector<128x8xf32>
    %270 = vector.shape_cast %267 : vector<128x8xf32> to vector<1x128x8xf32>
    tpu.vector_store %arg12[%c4, %c0_161, %c0_162], %270 {strides = array<i32>} : memref<8x128x8xf32, #tpu.memory_space<vmem>>, vector<1x128x8xf32>,
    %271 = arith.truncf %121 : vector<128x128xf32> to vector<128x128xbf16>
    %c0_163 = arith.constant 0 : index
    %c0_164 = arith.constant 0 : index
    %c0_165 = arith.constant 0 : index
    %272 = vector.load %arg10[%c0_163, %c0_164, %c0_165] : memref<3x128x8xbf16, #tpu.memory_space<vmem>>, vector<1x128x8xbf16>
    %273 = vector.shape_cast %272 : vector<1x128x8xbf16> to vector<128x8xbf16>
    %cst_166 = arith.constant dense<0.000000e+00> : vector<128x8xf32>
    %274 = tpu.matmul %271, %273, %cst_166 {dimension_numbers = #tpu.dot_dimension_numbers<[1], [0], [0], [1], [0, 0, 1, 1], [], []>} : vector<128x128xbf16>, vector<128x8xbf16>, vector<128x8xf32> -> vector<128x8xf32>
    %275 = arith.truncf %126 : vector<128x128xf32> to vector<128x128xbf16>
    %c1_167 = arith.constant 1 : index
    %c0_168 = arith.constant 0 : index
    %c0_169 = arith.constant 0 : index
    %276 = vector.load %arg10[%c1_167, %c0_168, %c0_169] : memref<3x128x8xbf16, #tpu.memory_space<vmem>>, vector<1x128x8xbf16>
    %277 = vector.shape_cast %276 : vector<1x128x8xbf16> to vector<128x8xbf16>
    %cst_170 = arith.constant dense<0.000000e+00> : vector<128x8xf32>
    %278 = tpu.matmul %275, %277, %cst_170 {dimension_numbers = #tpu.dot_dimension_numbers<[1], [0], [0], [1], [0, 0, 1, 1], [], []>} : vector<128x128xbf16>, vector<128x8xbf16>, vector<128x8xf32> -> vector<128x8xf32>
    %279 = arith.addf %274, %278 : vector<128x8xf32>
    %280 = arith.truncf %135 : vector<128x128xf32> to vector<128x128xbf16>
    %c2_171 = arith.constant 2 : index
    %c0_172 = arith.constant 0 : index
    %c0_173 = arith.constant 0 : index
    %281 = vector.load %arg10[%c2_171, %c0_172, %c0_173] : memref<3x128x8xbf16, #tpu.memory_space<vmem>>, vector<1x128x8xbf16>
    %282 = vector.shape_cast %281 : vector<1x128x8xbf16> to vector<128x8xbf16>
    %cst_174 = arith.constant dense<0.000000e+00> : vector<128x8xf32>
    %283 = tpu.matmul %280, %282, %cst_174 {dimension_numbers = #tpu.dot_dimension_numbers<[1], [0], [0], [1], [0, 0, 1, 1], [], []>} : vector<128x128xbf16>, vector<128x8xbf16>, vector<128x8xf32> -> vector<128x8xf32>
    %284 = arith.addf %279, %283 : vector<128x8xf32>
    %285 = vector.broadcast %141 : vector<1x8xf32> to vector<128x8xf32>
    %286 = arith.addf %284, %285 : vector<128x8xf32>
    %cst_175 = arith.constant 0.000000e+00 : f32
    %287 = vector.broadcast %cst_175 : f32 to vector<128x8xf32>
    %288 = arith.subf %287, %286 : vector<128x8xf32>
    %289 = math.exp %288 : vector<128x8xf32>
    %cst_176 = arith.constant 1.000000e+00 : f32
    %290 = vector.broadcast %cst_176 : f32 to vector<128x8xf32>
    %291 = arith.addf %290, %289 : vector<128x8xf32>
    %292 = tpu.reciprocal %291 {approx = true} : vector<128x8xf32> -> vector<128x8xf32>
    %c5 = arith.constant 5 : index
    %c0_177 = arith.constant 0 : index
    %c0_178 = arith.constant 0 : index
    %293 = vector.load %arg12[%c5, %c0_177, %c0_178] : memref<8x128x8xf32, #tpu.memory_space<vmem>>, vector<1x128x8xf32>
    %294 = vector.shape_cast %293 : vector<1x128x8xf32> to vector<128x8xf32>
    %295 = vector.shape_cast %292 : vector<128x8xf32> to vector<1x128x8xf32>
    tpu.vector_store %arg12[%c5, %c0_177, %c0_178], %295 {strides = array<i32>} : memref<8x128x8xf32, #tpu.memory_space<vmem>>, vector<1x128x8xf32>,
    %296 = arith.truncf %126 : vector<128x128xf32> to vector<128x128xbf16>
    %c0_179 = arith.constant 0 : index
    %c0_180 = arith.constant 0 : index
    %c0_181 = arith.constant 0 : index
    %297 = vector.load %arg10[%c0_179, %c0_180, %c0_181] : memref<3x128x8xbf16, #tpu.memory_space<vmem>>, vector<1x128x8xbf16>
    %298 = vector.shape_cast %297 : vector<1x128x8xbf16> to vector<128x8xbf16>
    %cst_182 = arith.constant dense<0.000000e+00> : vector<128x8xf32>
    %299 = tpu.matmul %296, %298, %cst_182 {dimension_numbers = #tpu.dot_dimension_numbers<[1], [0], [0], [1], [0, 0, 1, 1], [], []>} : vector<128x128xbf16>, vector<128x8xbf16>, vector<128x8xf32> -> vector<128x8xf32>
    %300 = arith.truncf %135 : vector<128x128xf32> to vector<128x128xbf16>
    %c1_183 = arith.constant 1 : index
    %c0_184 = arith.constant 0 : index
    %c0_185 = arith.constant 0 : index
    %301 = vector.load %arg10[%c1_183, %c0_184, %c0_185] : memref<3x128x8xbf16, #tpu.memory_space<vmem>>, vector<1x128x8xbf16>
    %302 = vector.shape_cast %301 : vector<1x128x8xbf16> to vector<128x8xbf16>
    %cst_186 = arith.constant dense<0.000000e+00> : vector<128x8xf32>
    %303 = tpu.matmul %300, %302, %cst_186 {dimension_numbers = #tpu.dot_dimension_numbers<[1], [0], [0], [1], [0, 0, 1, 1], [], []>} : vector<128x128xbf16>, vector<128x8xbf16>, vector<128x8xf32> -> vector<128x8xf32>
    %304 = arith.addf %299, %303 : vector<128x8xf32>
    %305 = arith.truncf %140 : vector<128x128xf32> to vector<128x128xbf16>
    %c2_187 = arith.constant 2 : index
    %c0_188 = arith.constant 0 : index
    %c0_189 = arith.constant 0 : index
    %306 = vector.load %arg10[%c2_187, %c0_188, %c0_189] : memref<3x128x8xbf16, #tpu.memory_space<vmem>>, vector<1x128x8xbf16>
    %307 = vector.shape_cast %306 : vector<1x128x8xbf16> to vector<128x8xbf16>
    %cst_190 = arith.constant dense<0.000000e+00> : vector<128x8xf32>
    %308 = tpu.matmul %305, %307, %cst_190 {dimension_numbers = #tpu.dot_dimension_numbers<[1], [0], [0], [1], [0, 0, 1, 1], [], []>} : vector<128x128xbf16>, vector<128x8xbf16>, vector<128x8xf32> -> vector<128x8xf32>
    %309 = arith.addf %304, %308 : vector<128x8xf32>
    %310 = vector.broadcast %141 : vector<1x8xf32> to vector<128x8xf32>
    %311 = arith.addf %309, %310 : vector<128x8xf32>
    %cst_191 = arith.constant 0.000000e+00 : f32
    %312 = vector.broadcast %cst_191 : f32 to vector<128x8xf32>
    %313 = arith.subf %312, %311 : vector<128x8xf32>
    %314 = math.exp %313 : vector<128x8xf32>
    %cst_192 = arith.constant 1.000000e+00 : f32
    %315 = vector.broadcast %cst_192 : f32 to vector<128x8xf32>
    %316 = arith.addf %315, %314 : vector<128x8xf32>
    %317 = tpu.reciprocal %316 {approx = true} : vector<128x8xf32> -> vector<128x8xf32>
    %c6 = arith.constant 6 : index
    %c0_193 = arith.constant 0 : index
    %c0_194 = arith.constant 0 : index
    %318 = vector.load %arg12[%c6, %c0_193, %c0_194] : memref<8x128x8xf32, #tpu.memory_space<vmem>>, vector<1x128x8xf32>
    %319 = vector.shape_cast %318 : vector<1x128x8xf32> to vector<128x8xf32>
    %320 = vector.shape_cast %317 : vector<128x8xf32> to vector<1x128x8xf32>
    tpu.vector_store %arg12[%c6, %c0_193, %c0_194], %320 {strides = array<i32>} : memref<8x128x8xf32, #tpu.memory_space<vmem>>, vector<1x128x8xf32>,
    %321 = arith.truncf %135 : vector<128x128xf32> to vector<128x128xbf16>
    %c0_195 = arith.constant 0 : index
    %c0_196 = arith.constant 0 : index
    %c0_197 = arith.constant 0 : index
    %322 = vector.load %arg10[%c0_195, %c0_196, %c0_197] : memref<3x128x8xbf16, #tpu.memory_space<vmem>>, vector<1x128x8xbf16>
    %323 = vector.shape_cast %322 : vector<1x128x8xbf16> to vector<128x8xbf16>
    %cst_198 = arith.constant dense<0.000000e+00> : vector<128x8xf32>
    %324 = tpu.matmul %321, %323, %cst_198 {dimension_numbers = #tpu.dot_dimension_numbers<[1], [0], [0], [1], [0, 0, 1, 1], [], []>} : vector<128x128xbf16>, vector<128x8xbf16>, vector<128x8xf32> -> vector<128x8xf32>
    %325 = arith.truncf %140 : vector<128x128xf32> to vector<128x128xbf16>
    %c1_199 = arith.constant 1 : index
    %c0_200 = arith.constant 0 : index
    %c0_201 = arith.constant 0 : index
    %326 = vector.load %arg10[%c1_199, %c0_200, %c0_201] : memref<3x128x8xbf16, #tpu.memory_space<vmem>>, vector<1x128x8xbf16>
    %327 = vector.shape_cast %326 : vector<1x128x8xbf16> to vector<128x8xbf16>
    %cst_202 = arith.constant dense<0.000000e+00> : vector<128x8xf32>
    %328 = tpu.matmul %325, %327, %cst_202 {dimension_numbers = #tpu.dot_dimension_numbers<[1], [0], [0], [1], [0, 0, 1, 1], [], []>} : vector<128x128xbf16>, vector<128x8xbf16>, vector<128x8xf32> -> vector<128x8xf32>
    %329 = arith.addf %324, %328 : vector<128x8xf32>
    %330 = arith.truncf %145 : vector<128x128xf32> to vector<128x128xbf16>
    %c2_203 = arith.constant 2 : index
    %c0_204 = arith.constant 0 : index
    %c0_205 = arith.constant 0 : index
    %331 = vector.load %arg10[%c2_203, %c0_204, %c0_205] : memref<3x128x8xbf16, #tpu.memory_space<vmem>>, vector<1x128x8xbf16>
    %332 = vector.shape_cast %331 : vector<1x128x8xbf16> to vector<128x8xbf16>
    %cst_206 = arith.constant dense<0.000000e+00> : vector<128x8xf32>
    %333 = tpu.matmul %330, %332, %cst_206 {dimension_numbers = #tpu.dot_dimension_numbers<[1], [0], [0], [1], [0, 0, 1, 1], [], []>} : vector<128x128xbf16>, vector<128x8xbf16>, vector<128x8xf32> -> vector<128x8xf32>
    %334 = arith.addf %329, %333 : vector<128x8xf32>
    %335 = vector.broadcast %141 : vector<1x8xf32> to vector<128x8xf32>
    %336 = arith.addf %334, %335 : vector<128x8xf32>
    %cst_207 = arith.constant 0.000000e+00 : f32
    %337 = vector.broadcast %cst_207 : f32 to vector<128x8xf32>
    %338 = arith.subf %337, %336 : vector<128x8xf32>
    %339 = math.exp %338 : vector<128x8xf32>
    %cst_208 = arith.constant 1.000000e+00 : f32
    %340 = vector.broadcast %cst_208 : f32 to vector<128x8xf32>
    %341 = arith.addf %340, %339 : vector<128x8xf32>
    %342 = tpu.reciprocal %341 {approx = true} : vector<128x8xf32> -> vector<128x8xf32>
    %c7 = arith.constant 7 : index
    %c0_209 = arith.constant 0 : index
    %c0_210 = arith.constant 0 : index
    %343 = vector.load %arg12[%c7, %c0_209, %c0_210] : memref<8x128x8xf32, #tpu.memory_space<vmem>>, vector<1x128x8xf32>
    %344 = vector.shape_cast %343 : vector<1x128x8xf32> to vector<128x8xf32>
    %345 = vector.shape_cast %342 : vector<128x8xf32> to vector<1x128x8xf32>
    tpu.vector_store %arg12[%c7, %c0_209, %c0_210], %345 {strides = array<i32>} : memref<8x128x8xf32, #tpu.memory_space<vmem>>, vector<1x128x8xf32>,
    return
  }
  func.func @transform_0(%arg0: i32) -> (i32, i32) {
    %c0_i32 = arith.constant 0 : i32
    %c0_i32_0 = arith.constant 0 : i32
    return %arg0, %c0_i32 : i32, i32
  }
  func.func @transform_1(%arg0: i32) -> (i32, i32) {
    %c0_i32 = arith.constant 0 : i32
    %c0_i32_0 = arith.constant 0 : i32
    %c0_i32_1 = arith.constant 0 : i32
    return %c0_i32, %c0_i32_0 : i32, i32
  }
  func.func @transform_2(%arg0: i32) -> (i32, i32) {
    %c0_i32 = arith.constant 0 : i32
    %c0_i32_0 = arith.constant 0 : i32
    %c0_i32_1 = arith.constant 0 : i32
    return %c0_i32, %c0_i32_0 : i32, i32
  }
  func.func @transform_3(%arg0: i32) -> (i32, i32) {
    %c0_i32 = arith.constant 0 : i32
    %c0_i32_0 = arith.constant 0 : i32
    %c0_i32_1 = arith.constant 0 : i32
    return %c0_i32, %c0_i32_0 : i32, i32
  }
  func.func @transform_4(%arg0: i32) -> (i32, i32) {
    %c0_i32 = arith.constant 0 : i32
    %c0_i32_0 = arith.constant 0 : i32
    %c0_i32_1 = arith.constant 0 : i32
    return %c0_i32, %c0_i32_0 : i32, i32
  }
  func.func @transform_5(%arg0: i32) -> (i32, i32) {
    %c0_i32 = arith.constant 0 : i32
    %c0_i32_0 = arith.constant 0 : i32
    %c0_i32_1 = arith.constant 0 : i32
    return %c0_i32, %c0_i32_0 : i32, i32
  }
  func.func @transform_6(%arg0: i32) -> (i32, i32) {
    %c0_i32 = arith.constant 0 : i32
    %c0_i32_0 = arith.constant 0 : i32
    %c0_i32_1 = arith.constant 0 : i32
    return %c0_i32, %c0_i32_0 : i32, i32
  }
  func.func @transform_7(%arg0: i32) -> (i32, i32) {
    %c0_i32 = arith.constant 0 : i32
    %c0_i32_0 = arith.constant 0 : i32
    %c0_i32_1 = arith.constant 0 : i32
    return %c0_i32, %c0_i32_0 : i32, i32
  }
  func.func @transform_8(%arg0: i32) -> (i32, i32) {
    %c0_i32 = arith.constant 0 : i32
    %c0_i32_0 = arith.constant 0 : i32
    %c0_i32_1 = arith.constant 0 : i32
    return %c0_i32, %c0_i32_0 : i32, i32
  }
  func.func @transform_9(%arg0: i32) -> (i32, i32, i32) {
    %c0_i32 = arith.constant 0 : i32
    %c0_i32_0 = arith.constant 0 : i32
    %c0_i32_1 = arith.constant 0 : i32
    %c0_i32_2 = arith.constant 0 : i32
    return %c0_i32, %c0_i32_0, %c0_i32_1 : i32, i32, i32
  }
  func.func @transform_10(%arg0: i32) -> (i32, i32) {
    %c0_i32 = arith.constant 0 : i32
    %c0_i32_0 = arith.constant 0 : i32
    %c0_i32_1 = arith.constant 0 : i32
    return %c0_i32, %c0_i32_0 : i32, i32
  }
  func.func @transform_11(%arg0: i32) -> (i32, i32, i32) {
    %c0_i32 = arith.constant 0 : i32
    %c0_i32_0 = arith.constant 0 : i32
    %c0_i32_1 = arith.constant 0 : i32
    return %c0_i32, %arg0, %c0_i32_0 : i32, i32, i32
  }
}

</mosaic_0001>

<llo_original>
// kernel: decoder_forward.1
$region0: #{decoder_forward.1}
  #allocation0 [shape = 'u32[]', space=smem, size = 0x4, offset = 0x4, fixed_abs, tag = 'smem constant byte address 0x4 - core index']
  #allocation1 [shape = 'u32[144,128]{1,0:T(1,128)}', space=vmem, size = 0x12000, scoped, tag = 'internal scratch']
  #allocation2 [shape = 'f32[160,128]{1,0:T(8,128)}', space=vmem, size = 0x14000, scoped, tag = 'scratch operand']
  %s0 = inlined_call_operand.vmem [shape: f32[32,32], index: 0, kind: input, shape index: {}]
  %s1 = inlined_call_operand.vmem [shape: bf16[32,1024], index: 1, kind: input, shape index: {}]
  %s2 = inlined_call_operand.vmem [shape: f32[1,1024], index: 2, kind: input, shape index: {}]
  %s3 = inlined_call_operand.vmem [shape: bf16[128,384], index: 3, kind: input, shape index: {}]
  %s4 = inlined_call_operand.vmem [shape: f32[1,128], index: 4, kind: input, shape index: {}]
  %s5 = inlined_call_operand.vmem [shape: bf16[128,384], index: 5, kind: input, shape index: {}]
  %s6 = inlined_call_operand.vmem [shape: f32[1,128], index: 6, kind: input, shape index: {}]
  %s7 = inlined_call_operand.vmem [shape: bf16[128,384], index: 7, kind: input, shape index: {}]
  %s8 = inlined_call_operand.vmem [shape: f32[1,128], index: 8, kind: input, shape index: {}]
  %s9 = inlined_call_operand.vmem [shape: bf16[3,128,8], index: 9, kind: input, shape index: {}]
  %s10 = inlined_call_operand.vmem [shape: f32[1,8], index: 10, kind: input, shape index: {}]
  %s11 = inlined_call_operand.vmem [shape: f32[8,256,8], index: 11, kind: output, shape index: {}]
  %s12 = sld [smem:[#allocation0]]
  $region111: #{decoder_forward.1} parent=0
    _
  %s14 = ssub.s32 1, %s12
  %s15 = scalar_select 0, %s14, %s12
  $region1: #{decoder_forward.1} parent=0
    #allocation3 [shape = 'u8[1048576]{0}', space=vmem, size = 0x100000, scoped, tag = 'output window, operand 0']
    loop: start=0, step=1, limit=4
    $region2: #{decoder_forward.1} parent=1 // loop_pre_header
      _
    $region3: #{decoder_forward.1} parent=1 // loop_header
      %s17 = sphi 0, %s21
      %p18 = scmp.ge.s32.totalorder %s17, 4
      %s27 = sphi 0, %s29
      %s30 = sphi 0, %s27
      %s31 = sphi 0, %s30
      %s47 = sphi 0, %s31
      %s51 = sphi 0, %s51
      %s53 = sphi 0, %s51
      %s54 = sphi 0, %s53
      %s68 = sphi 0, %s54
      %s72 = sphi 0, %s72
      %s74 = sphi 0, %s72
      %s75 = sphi 0, %s74
      %s89 = sphi 0, %s75
      %s93 = sphi 0, %s93
      %s95 = sphi 0, %s93
      %s96 = sphi 0, %s95
      %s110 = sphi 0, %s96
      %s114 = sphi 0, %s114
      %s116 = sphi 0, %s114
      %s117 = sphi 0, %s116
      %s131 = sphi 0, %s117
      %s135 = sphi 0, %s135
      %s137 = sphi 0, %s135
      %s138 = sphi 0, %s137
      %s152 = sphi 0, %s138
      %s156 = sphi 0, %s156
      %s158 = sphi 0, %s156
      %s159 = sphi 0, %s158
      %s173 = sphi 0, %s159
      %s177 = sphi 0, %s177
      %s179 = sphi 0, %s177
      %s180 = sphi 0, %s179
      %s194 = sphi 0, %s180
      %s198 = sphi 0, %s198
      %s200 = sphi 0, %s198
      %s201 = sphi 0, %s200
      %s215 = sphi 0, %s201
      %s219 = sphi 0, %s219
      %s221 = sphi 0, %s219
      %s222 = sphi 0, %s221
      %s236 = sphi 0, %s222
      %s240 = sphi 0, %s240
      %s242 = sphi 0, %s240
      %s243 = sphi 0, %s242
      %s257 = sphi 0, %s243
      %s263 = sphi 0, %s265
      %s266 = sphi 0, %s263
      %s267 = sphi 0, %s266
      %s283 = sphi 0, %s267
    $region4: #{decoder_forward.1} parent=1 // loop_header_branch
      %20 = sbr.rel (%p18) target = $region8
    $region5: #{decoder_forward.1} parent=1 // loop_body
      %s22 = ssub.s32 %s17, 1
      %s23 = ssub.s32 %s17, 2
      %s24 = sadd.s32 %s17, 1
      %s25 = ssub.s32 %s17, %s24
      %p26 = scmp.eq.s32.totalorder %s25, 0
      %s28 = sadd.s32 %s27, 1
      %s29 = scalar_select %p26, %s27, %s28
      %p32 = pneg %p26
      %p33 = scmp.eq.s32.totalorder %s17, 1
      %p34 = por %p32, %p33
      %p35 = scmp.ne.s32.totalorder %s27, %s30
      %p36 = scmp.eq.s32.totalorder %s17, 0
      %p37 = por %p35, %p36
      %p38 = scmp.ne.s32.totalorder %s27, %s30
      %p39 = scmp.eq.s32.totalorder %s22, 1
      %p40 = por %p38, %p39
      %p41 = scmp.ne.s32.totalorder %s30, %s31
      %p42 = scmp.eq.s32.totalorder %s22, 0
      %p43 = por %p41, %p42
      %p44 = scmp.ne.s32.totalorder %s30, %s31
      %p45 = scmp.eq.s32.totalorder %s23, 1
      %p46 = por %p44, %p45
      %p48 = scmp.ne.s32.totalorder %s31, %s47
      %p49 = scmp.eq.s32.totalorder %s23, 0
      %p50 = por %p48, %p49
      %s52 = sadd.s32 %s51, 1
      %p55 = scmp.eq.s32.totalorder %s17, 1
      %p56 = scmp.ne.s32.totalorder %s51, %s53
      %p57 = scmp.eq.s32.totalorder %s17, 0
      %p58 = por %p56, %p57
      %p59 = scmp.ne.s32.totalorder %s51, %s53
      %p60 = scmp.eq.s32.totalorder %s22, 1
      %p61 = por %p59, %p60
      %p62 = scmp.ne.s32.totalorder %s53, %s54
      %p63 = scmp.eq.s32.totalorder %s22, 0
      %p64 = por %p62, %p63
      %p65 = scmp.ne.s32.totalorder %s53, %s54
      %p66 = scmp.eq.s32.totalorder %s23, 1
      %p67 = por %p65, %p66
      %p69 = scmp.ne.s32.totalorder %s54, %s68
      %p70 = scmp.eq.s32.totalorder %s23, 0
      %p71 = por %p69, %p70
      %s73 = sadd.s32 %s72, 1
      %p76 = scmp.eq.s32.totalorder %s17, 1
      %p77 = scmp.ne.s32.totalorder %s72, %s74
      %p78 = scmp.eq.s32.totalorder %s17, 0
      %p79 = por %p77, %p78
      %p80 = scmp.ne.s32.totalorder %s72, %s74
      %p81 = scmp.eq.s32.totalorder %s22, 1
      %p82 = por %p80, %p81
      %p83 = scmp.ne.s32.totalorder %s74, %s75
      %p84 = scmp.eq.s32.totalorder %s22, 0
      %p85 = por %p83, %p84
      %p86 = scmp.ne.s32.totalorder %s74, %s75
      %p87 = scmp.eq.s32.totalorder %s23, 1
      %p88 = por %p86, %p87
      %p90 = scmp.ne.s32.totalorder %s75, %s89
      %p91 = scmp.eq.s32.totalorder %s23, 0
      %p92 = por %p90, %p91
      %s94 = sadd.s32 %s93, 1
      %p97 = scmp.eq.s32.totalorder %s17, 1
      %p98 = scmp.ne.s32.totalorder %s93, %s95
      %p99 = scmp.eq.s32.totalorder %s17, 0
      %p100 = por %p98, %p99
      %p101 = scmp.ne.s32.totalorder %s93, %s95
      %p102 = scmp.eq.s32.totalorder %s22, 1
      %p103 = por %p101, %p102
      %p104 = scmp.ne.s32.totalorder %s95, %s96
      %p105 = scmp.eq.s32.totalorder %s22, 0
      %p106 = por %p104, %p105
      %p107 = scmp.ne.s32.totalorder %s95, %s96
      %p108 = scmp.eq.s32.totalorder %s23, 1
      %p109 = por %p107, %p108
      %p111 = scmp.ne.s32.totalorder %s96, %s110
      %p112 = scmp.eq.s32.totalorder %s23, 0
      %p113 = por %p111, %p112
      %s115 = sadd.s32 %s114, 1
      %p118 = scmp.eq.s32.totalorder %s17, 1
      %p119 = scmp.ne.s32.totalorder %s114, %s116
      %p120 = scmp.eq.s32.totalorder %s17, 0
      %p121 = por %p119, %p120
      %p122 = scmp.ne.s32.totalorder %s114, %s116
      %p123 = scmp.eq.s32.totalorder %s22, 1
      %p124 = por %p122, %p123
      %p125 = scmp.ne.s32.totalorder %s116, %s117
      %p126 = scmp.eq.s32.totalorder %s22, 0
      %p127 = por %p125, %p126
      %p128 = scmp.ne.s32.totalorder %s116, %s117
      %p129 = scmp.eq.s32.totalorder %s23, 1
      %p130 = por %p128, %p129
      %p132 = scmp.ne.s32.totalorder %s117, %s131
      %p133 = scmp.eq.s32.totalorder %s23, 0
      %p134 = por %p132, %p133
      %s136 = sadd.s32 %s135, 1
      %p139 = scmp.eq.s32.totalorder %s17, 1
      %p140 = scmp.ne.s32.totalorder %s135, %s137
      %p141 = scmp.eq.s32.totalorder %s17, 0
      %p142 = por %p140, %p141
      %p143 = scmp.ne.s32.totalorder %s135, %s137
      %p144 = scmp.eq.s32.totalorder %s22, 1
      %p145 = por %p143, %p144
      %p146 = scmp.ne.s32.totalorder %s137, %s138
      %p147 = scmp.eq.s32.totalorder %s22, 0
      %p148 = por %p146, %p147
      %p149 = scmp.ne.s32.totalorder %s137, %s138
      %p150 = scmp.eq.s32.totalorder %s23, 1
      %p151 = por %p149, %p150
      %p153 = scmp.ne.s32.totalorder %s138, %s152
      %p154 = scmp.eq.s32.totalorder %s23, 0
      %p155 = por %p153, %p154
      %s157 = sadd.s32 %s156, 1
      %p160 = scmp.eq.s32.totalorder %s17, 1
      %p161 = scmp.ne.s32.totalorder %s156, %s158
      %p162 = scmp.eq.s32.totalorder %s17, 0
      %p163 = por %p161, %p162
      %p164 = scmp.ne.s32.totalorder %s156, %s158
      %p165 = scmp.eq.s32.totalorder %s22, 1
      %p166 = por %p164, %p165
      %p167 = scmp.ne.s32.totalorder %s158, %s159
      %p168 = scmp.eq.s32.totalorder %s22, 0
      %p169 = por %p167, %p168
      %p170 = scmp.ne.s32.totalorder %s158, %s159
      %p171 = scmp.eq.s32.totalorder %s23, 1
      %p172 = por %p170, %p171
      %p174 = scmp.ne.s32.totalorder %s159, %s173
      %p175 = scmp.eq.s32.totalorder %s23, 0
      %p176 = por %p174, %p175
      %s178 = sadd.s32 %s177, 1
      %p181 = scmp.eq.s32.totalorder %s17, 1
      %p182 = scmp.ne.s32.totalorder %s177, %s179
      %p183 = scmp.eq.s32.totalorder %s17, 0
      %p184 = por %p182, %p183
      %p185 = scmp.ne.s32.totalorder %s177, %s179
      %p186 = scmp.eq.s32.totalorder %s22, 1
      %p187 = por %p185, %p186
      %p188 = scmp.ne.s32.totalorder %s179, %s180
      %p189 = scmp.eq.s32.totalorder %s22, 0
      %p190 = por %p188, %p189
      %p191 = scmp.ne.s32.totalorder %s179, %s180
      %p192 = scmp.eq.s32.totalorder %s23, 1
      %p193 = por %p191, %p192
      %p195 = scmp.ne.s32.totalorder %s180, %s194
      %p196 = scmp.eq.s32.totalorder %s23, 0
      %p197 = por %p195, %p196
      %s199 = sadd.s32 %s198, 1
      %p202 = scmp.eq.s32.totalorder %s17, 1
      %p203 = scmp.ne.s32.totalorder %s198, %s200
      %p204 = scmp.eq.s32.totalorder %s17, 0
      %p205 = por %p203, %p204
      %p206 = scmp.ne.s32.totalorder %s198, %s200
      %p207 = scmp.eq.s32.totalorder %s22, 1
      %p208 = por %p206, %p207
      %p209 = scmp.ne.s32.totalorder %s200, %s201
      %p210 = scmp.eq.s32.totalorder %s22, 0
      %p211 = por %p209, %p210
      %p212 = scmp.ne.s32.totalorder %s200, %s201
      %p213 = scmp.eq.s32.totalorder %s23, 1
      %p214 = por %p212, %p213
      %p216 = scmp.ne.s32.totalorder %s201, %s215
      %p217 = scmp.eq.s32.totalorder %s23, 0
      %p218 = por %p216, %p217
      %s220 = sadd.s32 %s219, 1
      %p223 = scmp.eq.s32.totalorder %s17, 1
      %p224 = scmp.ne.s32.totalorder %s219, %s221
      %p225 = scmp.eq.s32.totalorder %s17, 0
      %p226 = por %p224, %p225
      %p227 = scmp.ne.s32.totalorder %s219, %s221
      %p228 = scmp.eq.s32.totalorder %s22, 1
      %p229 = por %p227, %p228
      %p230 = scmp.ne.s32.totalorder %s221, %s222
      %p231 = scmp.eq.s32.totalorder %s22, 0
      %p232 = por %p230, %p231
      %p233 = scmp.ne.s32.totalorder %s221, %s222
      %p234 = scmp.eq.s32.totalorder %s23, 1
      %p235 = por %p233, %p234
      %p237 = scmp.ne.s32.totalorder %s222, %s236
      %p238 = scmp.eq.s32.totalorder %s23, 0
      %p239 = por %p237, %p238
      %s241 = sadd.s32 %s240, 1
      %p244 = scmp.eq.s32.totalorder %s17, 1
      %p245 = scmp.ne.s32.totalorder %s240, %s242
      %p246 = scmp.eq.s32.totalorder %s17, 0
      %p247 = por %p245, %p246
      %p248 = scmp.ne.s32.totalorder %s240, %s242
      %p249 = scmp.eq.s32.totalorder %s22, 1
      %p250 = por %p248, %p249
      %p251 = scmp.ne.s32.totalorder %s242, %s243
      %p252 = scmp.eq.s32.totalorder %s22, 0
      %p253 = por %p251, %p252
      %p254 = scmp.ne.s32.totalorder %s242, %s243
      %p255 = scmp.eq.s32.totalorder %s23, 1
      %p256 = por %p254, %p255
      %p258 = scmp.ne.s32.totalorder %s243, %s257
      %p259 = scmp.eq.s32.totalorder %s23, 0
      %p260 = por %p258, %p259
      %s261 = ssub.s32 %s17, %s24
      %p262 = scmp.eq.s32.totalorder %s261, 0
      %s264 = sadd.s32 %s263, 1
      %s265 = scalar_select %p262, %s263, %s264
      %p268 = pneg %p262
      %p269 = scmp.eq.s32.totalorder %s17, 1
      %p270 = por %p268, %p269
      %p271 = scmp.ne.s32.totalorder %s263, %s266
      %p272 = scmp.eq.s32.totalorder %s17, 0
      %p273 = por %p271, %p272
      %p274 = scmp.ne.s32.totalorder %s263, %s266
      %p275 = scmp.eq.s32.totalorder %s22, 1
      %p276 = por %p274, %p275
      %p277 = scmp.ne.s32.totalorder %s266, %s267
      %p278 = scmp.eq.s32.totalorder %s22, 0
      %p279 = por %p277, %p278
      %p280 = scmp.ne.s32.totalorder %s266, %s267
      %p281 = scmp.eq.s32.totalorder %s23, 1
      %p282 = por %p280, %p281
      %p284 = scmp.ne.s32.totalorder %s267, %s283
      %p285 = scmp.eq.s32.totalorder %s23, 0
      %p286 = por %p284, %p285
      %p287 = scmp.le.s32.totalorder 1, %s17
      %p288 = scmp.lt.s32.totalorder %s17, 3
      %p289 = pnand %p287, %p288
      %p290 = pneg %p289
      // Predicated region
      $region9: #{decoder_forward.1} parent=5 // pred_check
        _
      $region10: #{decoder_forward.1} parent=5 // pred_check_branch
        %292 = sbr.rel (%p289) target = $region12
      $region11: #{decoder_forward.1} parent=5 // pred_region
        %s293 = ssub.s32 %s17, 1
        // Predicated region
        $region13: #{decoder_forward.1} parent=11 // pred_check
          %p294 = pneg %p64
        $region14: #{decoder_forward.1} parent=11 // pred_check_branch
          %296 = sbr.rel (%p294) target = $region16
        $region15: #{decoder_forward.1} parent=11 // pred_region
          _
        $region16: #{decoder_forward.1} parent=11 // pred_fallthru
          _
        // Predicated region
        $region17: #{decoder_forward.1} parent=11 // pred_check
          %p297 = pneg %p85
        $region18: #{decoder_forward.1} parent=11 // pred_check_branch
          %299 = sbr.rel (%p297) target = $region20
        $region19: #{decoder_forward.1} parent=11 // pred_region
          _
        $region20: #{decoder_forward.1} parent=11 // pred_fallthru
          _
        // Predicated region
        $region21: #{decoder_forward.1} parent=11 // pred_check
          %p300 = pneg %p106
        $region22: #{decoder_forward.1} parent=11 // pred_check_branch
          %302 = sbr.rel (%p300) target = $region24
        $region23: #{decoder_forward.1} parent=11 // pred_region
          _
        $region24: #{decoder_forward.1} parent=11 // pred_fallthru
          _
        // Predicated region
        $region25: #{decoder_forward.1} parent=11 // pred_check
          %p303 = pneg %p127
        $region26: #{decoder_forward.1} parent=11 // pred_check_branch
          %305 = sbr.rel (%p303) target = $region28
        $region27: #{decoder_forward.1} parent=11 // pred_region
          _
        $region28: #{decoder_forward.1} parent=11 // pred_fallthru
          _
        // Predicated region
        $region29: #{decoder_forward.1} parent=11 // pred_check
          %p306 = pneg %p148
        $region30: #{decoder_forward.1} parent=11 // pred_check_branch
          %308 = sbr.rel (%p306) target = $region32
        $region31: #{decoder_forward.1} parent=11 // pred_region
          _
        $region32: #{decoder_forward.1} parent=11 // pred_fallthru
          _
        // Predicated region
        $region33: #{decoder_forward.1} parent=11 // pred_check
          %p309 = pneg %p169
        $region34: #{decoder_forward.1} parent=11 // pred_check_branch
          %311 = sbr.rel (%p309) target = $region36
        $region35: #{decoder_forward.1} parent=11 // pred_region
          _
        $region36: #{decoder_forward.1} parent=11 // pred_fallthru
          _
        // Predicated region
        $region37: #{decoder_forward.1} parent=11 // pred_check
          %p312 = pneg %p190
        $region38: #{decoder_forward.1} parent=11 // pred_check_branch
          %314 = sbr.rel (%p312) target = $region40
        $region39: #{decoder_forward.1} parent=11 // pred_region
          _
        $region40: #{decoder_forward.1} parent=11 // pred_fallthru
          _
        // Predicated region
        $region41: #{decoder_forward.1} parent=11 // pred_check
          %p315 = pneg %p211
        $region42: #{decoder_forward.1} parent=11 // pred_check_branch
          %317 = sbr.rel (%p315) target = $region44
        $region43: #{decoder_forward.1} parent=11 // pred_region
          _
        $region44: #{decoder_forward.1} parent=11 // pred_fallthru
          _
        // Predicated region
        $region45: #{decoder_forward.1} parent=11 // pred_check
          %p318 = pneg %p232
        $region46: #{decoder_forward.1} parent=11 // pred_check_branch
          %320 = sbr.rel (%p318) target = $region48
        $region47: #{decoder_forward.1} parent=11 // pred_region
          _
        $region48: #{decoder_forward.1} parent=11 // pred_fallthru
          _
        // Predicated region
        $region49: #{decoder_forward.1} parent=11 // pred_check
          %p321 = pneg %p253
        $region50: #{decoder_forward.1} parent=11 // pred_check_branch
          %323 = sbr.rel (%p321) target = $region52
        $region51: #{decoder_forward.1} parent=11 // pred_region
          _
        $region52: #{decoder_forward.1} parent=11 // pred_fallthru
          _
      $region12: #{decoder_forward.1} parent=5 // pred_fallthru
        _
      %p324 = scmp.lt.s32.totalorder %s17, 2
      // Predicated region
      $region53: #{decoder_forward.1} parent=5 // pred_check
        %p325 = pneg %p324
      $region54: #{decoder_forward.1} parent=5 // pred_check_branch
        %327 = sbr.rel (%p325) target = $region56
      $region55: #{decoder_forward.1} parent=5 // pred_region
        // Predicated region
        $region57: #{decoder_forward.1} parent=55 // pred_check
          %p328 = pneg %p37
        $region58: #{decoder_forward.1} parent=55 // pred_check_branch
          %330 = sbr.rel (%p328) target = $region60
        $region59: #{decoder_forward.1} parent=55 // pred_region
          %s331 = smul.u32 2, %s17
          %p332 = scmp.lt.s32.totalorder %s331, 3
          %s333 = scalar_select %p332, %s331, 3
          %s334 = smul.addr %s333, 8
          %s335 = scalar_lea.vmem %s0, %s334
          %s336 = smul.u32 2, %s17
        $region60: #{decoder_forward.1} parent=55 // pred_fallthru
          _
      $region56: #{decoder_forward.1} parent=5 // pred_fallthru
        _
      %p337 = scmp.le.s32.totalorder 1, %s17
      %p338 = scmp.lt.s32.totalorder %s17, 3
      %p339 = pnand %p337, %p338
      %p340 = pneg %p339
      // Predicated region
      $region61: #{decoder_forward.1} parent=5 // pred_check
        _
      $region62: #{decoder_forward.1} parent=5 // pred_check_branch
        %342 = sbr.rel (%p339) target = $region64
      $region63: #{decoder_forward.1} parent=5 // pred_region
        %s343 = ssub.s32 %s17, 1
        %s344 = smul.u32 2, %s22
        %p345 = scmp.lt.s32.totalorder %s344, 3
        %s346 = scalar_select %p345, %s344, 3
        %s347 = smul.addr %s346, 8
        %s348 = scalar_lea.vmem %s0, %s347
        %p349 = pneg %p43
        %p350 = pneg %p40
        %p351 = pneg %p64
        %p352 = pneg %p61
        %p353 = pneg %p85
        %p354 = pneg %p82
        %p355 = pneg %p106
        %p356 = pneg %p103
        %p357 = pneg %p127
        %p358 = pneg %p124
        %p359 = pneg %p148
        %p360 = pneg %p145
        %p361 = pneg %p169
        %p362 = pneg %p166
        %p363 = pneg %p190
        %p364 = pneg %p187
        %p365 = pneg %p211
        %p366 = pneg %p208
        %p367 = pneg %p232
        %p368 = pneg %p229
        %p369 = pneg %p253
        %p370 = pneg %p250
        %p371 = pneg %p279
        %p372 = pneg %p276
        %s373 = sand.u32 %s266, 1
        %s374 = sand.u32 %s266, 1
        %s375 = smul.addr %s374, 1024
        %s376 = scalar_lea.vmem [#allocation3], %s375
        %s377 = smul.u32 2, %s22
        %p378 = scmp.lt.s32.totalorder %s377, 3
        %s379 = scalar_select %p378, %s377, 3
        %s380 = smul.addr %s379, 8
        %s381 = scalar_lea.vmem %s0, %s380
        %s382 = smul.u32 2, %s22
        %s383 = smul.u32 16, %s22
        %385 = vst [vmem:[#allocation2] sm:$0xff] 0.0
        %386 = vst [vmem:[#allocation2 + $0x8] sm:$0xff] 0.0
        %387 = vst [vmem:[#allocation2 + $0x90] sm:$0xff] 0.0
        %388 = vst [vmem:[#allocation2 + $0x98] sm:$0xff] 0.0
        %v389 = vld [vmem:[%s381] sm:$0xff]
        %v390 = vld [vmem:[%s381 + $0x8] sm:$0xff]
        %v391 = vpack.c.bf16 %v390, %v389
        %v392 = vld [vmem:[%s1] sm:$0xff]
        %v393 = vld [vmem:[%s1 + $0x8] sm:$0xff]
        %v394 = vld [vmem:[%s1 + $0x10] sm:$0xff]
        %v395 = vld [vmem:[%s1 + $0x18] sm:$0xff]
        %v396 = vld [vmem:[%s1 + $0x20] sm:$0xff]
        %v397 = vld [vmem:[%s1 + $0x28] sm:$0xff]
        %v398 = vld [vmem:[%s1 + $0x30] sm:$0xff]
        %v399 = vld [vmem:[%s1 + $0x38] sm:$0xff]
        %v400 = vld [vmem:[%s1 + $0x40] sm:$0xff]
        %v401 = vld [vmem:[%s1 + $0x48] sm:$0xff]
        %v402 = vld [vmem:[%s1 + $0x50] sm:$0xff]
        %v403 = vld [vmem:[%s1 + $0x58] sm:$0xff]
        %v404 = vld [vmem:[%s1 + $0x60] sm:$0xff]
        %v405 = vld [vmem:[%s1 + $0x68] sm:$0xff]
        %v406 = vld [vmem:[%s1 + $0x70] sm:$0xff]
        %v407 = vld [vmem:[%s1 + $0x78] sm:$0xff]
        %v408 = vld [vmem:[%s2] sm:$0xff]
        %v410 = vlaneseq
        %v411 = vshrl.u32 %v410, 7
        %v412 = vsub.s32 0, %v411
        %v413 = vrot.slane %v408, %v412
        %v414 = vlaneseq
        %v415 = vshrl.u32 %v414, 7
        %v416 = vsub.s32 1, %v415
        %v417 = vrot.slane %v408, %v416
        %v418 = vlaneseq
        %v419 = vshrl.u32 %v418, 7
        %v420 = vsub.s32 2, %v419
        %v421 = vrot.slane %v408, %v420
        %v422 = vlaneseq
        %v423 = vshrl.u32 %v422, 7
        %v424 = vsub.s32 3, %v423
        %v425 = vrot.slane %v408, %v424
        %v426 = vlaneseq
        %v427 = vshrl.u32 %v426, 7
        %v428 = vsub.s32 4, %v427
        %v429 = vrot.slane %v408, %v428
        %v430 = vlaneseq
        %v431 = vshrl.u32 %v430, 7
        %v432 = vsub.s32 5, %v431
        %v433 = vrot.slane %v408, %v432
        %v434 = vlaneseq
        %v435 = vshrl.u32 %v434, 7
        %v436 = vsub.s32 6, %v435
        %v437 = vrot.slane %v408, %v436
        %v438 = vlaneseq
        %v439 = vshrl.u32 %v438, 7
        %v440 = vsub.s32 7, %v439
        %v441 = vrot.slane %v408, %v440
        %v466 = vunpack.c.l.b16 %v392
        %v467 = vunpack.c.h.b16 %v392
        %v468 = vunpack.c.l.b16 %v393
        %v469 = vunpack.c.h.b16 %v393
        %v470 = vunpack.c.l.b16 %v394
        %v471 = vunpack.c.h.b16 %v394
        %v472 = vunpack.c.l.b16 %v395
        %v473 = vunpack.c.h.b16 %v395
        %v474 = vunpack.c.l.b16 %v396
        %v475 = vunpack.c.h.b16 %v396
        %v476 = vunpack.c.l.b16 %v397
        %v477 = vunpack.c.h.b16 %v397
        %v478 = vunpack.c.l.b16 %v398
        %v479 = vunpack.c.h.b16 %v398
        %v480 = vunpack.c.l.b16 %v399
        %v481 = vunpack.c.h.b16 %v399
        %v482 = vunpack.c.l.b16 %v400
        %v483 = vunpack.c.h.b16 %v400
        %v484 = vunpack.c.l.b16 %v401
        %v485 = vunpack.c.h.b16 %v401
        %v486 = vunpack.c.l.b16 %v402
        %v487 = vunpack.c.h.b16 %v402
        %v488 = vunpack.c.l.b16 %v403
        %v489 = vunpack.c.h.b16 %v403
        %v490 = vunpack.c.l.b16 %v404
        %v491 = vunpack.c.h.b16 %v404
        %v492 = vunpack.c.l.b16 %v405
        %v493 = vunpack.c.h.b16 %v405
        %v494 = vunpack.c.l.b16 %v406
        %v495 = vunpack.c.h.b16 %v406
        %v496 = vunpack.c.l.b16 %v407
        %v497 = vunpack.c.h.b16 %v407
        %v498 = vpack.c.b16 %v474, %v466
        %v499 = vpack.c.b16 %v475, %v467
        %v500 = vpack.c.b16 %v476, %v468
        %v501 = vpack.c.b16 %v477, %v469
        %v502 = vpack.c.b16 %v478, %v470
        %v503 = vpack.c.b16 %v479, %v471
        %v504 = vpack.c.b16 %v480, %v472
        %v505 = vpack.c.b16 %v481, %v473
        %v506 = vpack.c.b16 %v490, %v482
        %v507 = vpack.c.b16 %v491, %v483
        %v508 = vpack.c.b16 %v492, %v484
        %v509 = vpack.c.b16 %v493, %v485
        %v510 = vpack.c.b16 %v494, %v486
        %v511 = vpack.c.b16 %v495, %v487
        %v512 = vpack.c.b16 %v496, %v488
        %v513 = vpack.c.b16 %v497, %v489
        %vm530 = vcmask 261120
        %v532 = vsel %vm530, %v391, 0
        %534 = vmatprep.subr.bf16.mxu0 %v499
        %535 = vmatpush1.bf16.msra.mxu0 %v498
        %536 = vmatprep.subr.bf16.mxu0 %v507
        %537 = vmatpush1.bf16.msra.mxu0 %v506
        %538 = vmatprep.subr.bf16.mxu0 0
        %539 = vmatpush1.bf16.msra.mxu0 0
        %540 = vmatprep.subr.bf16.mxu0 0
        %541 = vmatpush1.bf16.msra.mxu0 0
        %542 = vmatprep.subr.bf16.mxu0 0
        %543 = vmatpush1.bf16.msra.mxu0 0
        %544 = vmatprep.subr.bf16.mxu0 0
        %545 = vmatpush1.bf16.msra.mxu0 0
        %546 = vmatprep.subr.bf16.mxu0 0
        %547 = vmatpush1.bf16.msra.mxu0 0
        %548 = vmatprep.subr.bf16.mxu0 0
        %549 = vmatpush1.bf16.msra.mxu0 0
        %550 = vmatprep.subr.bf16.mxu0 0
        %551 = vmatpush1.bf16.msra.mxu0 0
        %552 = vmatprep.subr.bf16.mxu0 0
        %553 = vmatpush1.bf16.msra.mxu0 0
        %554 = vmatprep.subr.bf16.mxu0 0
        %555 = vmatpush1.bf16.msra.mxu0 0
        %556 = vmatprep.subr.bf16.mxu0 0
        %557 = vmatpush1.bf16.msra.mxu0 0
        %558 = vmatprep.subr.bf16.mxu0 0
        %559 = vmatpush1.bf16.msra.mxu0 0
        %560 = vmatprep.subr.bf16.mxu0 0
        %561 = vmatpush1.bf16.msra.mxu0 0
        %562 = vmatprep.subr.bf16.mxu0 0
        %563 = vmatpush1.bf16.msra.mxu0 0
        %564 = vmatprep.subr.bf16.mxu0 0
        %565 = vmatpush1.bf16.msra.mxu0 0
        %566 = vmatprep.mubr.bf16.mxu0 0
        %567 = vmatmul.mubr.bf16.gmra.mrb[0].mxu0 %v532
        %v568 = vpop.f32.mrb[0].mxu0
        %v569 = vadd.f32 %v413, %v568
        %v570 = vpop.f32.mrb[0].mxu0
        %v571 = vadd.f32 %v417, %v570
        %v572 = vpop.f32.mrb[0].mxu0
        %v573 = vadd.f32 %v413, %v572
        %v574 = vpop.f32.mrb[0].mxu0
        %v575 = vadd.f32 %v417, %v574
        %576 = vdwg.mxu0
        %577 = vmatprep.subr.bf16.mxu0 %v501
        %578 = vmatpush1.bf16.msra.mxu0 %v500
        %579 = vmatprep.subr.bf16.mxu0 %v509
        %580 = vmatpush1.bf16.msra.mxu0 %v508
        %581 = vmatprep.subr.bf16.mxu0 0
        %582 = vmatpush1.bf16.msra.mxu0 0
        %583 = vmatprep.subr.bf16.mxu0 0
        %584 = vmatpush1.bf16.msra.mxu0 0
        %585 = vmatprep.subr.bf16.mxu0 0
        %586 = vmatpush1.bf16.msra.mxu0 0
        %587 = vmatprep.subr.bf16.mxu0 0
        %588 = vmatpush1.bf16.msra.mxu0 0
        %589 = vmatprep.subr.bf16.mxu0 0
        %590 = vmatpush1.bf16.msra.mxu0 0
        %591 = vmatprep.subr.bf16.mxu0 0
        %592 = vmatpush1.bf16.msra.mxu0 0
        %593 = vmatprep.subr.bf16.mxu0 0
        %594 = vmatpush1.bf16.msra.mxu0 0
        %595 = vmatprep.subr.bf16.mxu0 0
        %596 = vmatpush1.bf16.msra.mxu0 0
        %597 = vmatprep.subr.bf16.mxu0 0
        %598 = vmatpush1.bf16.msra.mxu0 0
        %599 = vmatprep.subr.bf16.mxu0 0
        %600 = vmatpush1.bf16.msra.mxu0 0
        %601 = vmatprep.subr.bf16.mxu0 0
        %602 = vmatpush1.bf16.msra.mxu0 0
        %603 = vmatprep.subr.bf16.mxu0 0
        %604 = vmatpush1.bf16.msra.mxu0 0
        %605 = vmatprep.subr.bf16.mxu0 0
        %606 = vmatpush1.bf16.msra.mxu0 0
        %607 = vmatprep.subr.bf16.mxu0 0
        %608 = vmatpush1.bf16.msra.mxu0 0
        %609 = vmatprep.mubr.bf16.mxu0 0
        %610 = vmatmul.mubr.bf16.gmra.mrb[0].mxu0 %v532
        %v611 = vpop.f32.mrb[0].mxu0
        %v612 = vadd.f32 %v421, %v611
        %v613 = vpop.f32.mrb[0].mxu0
        %v614 = vadd.f32 %v425, %v613
        %v615 = vpop.f32.mrb[0].mxu0
        %v616 = vadd.f32 %v421, %v615
        %v617 = vpop.f32.mrb[0].mxu0
        %v618 = vadd.f32 %v425, %v617
        %619 = vdwg.mxu0
        %620 = vmatprep.subr.bf16.mxu0 %v503
        %621 = vmatpush1.bf16.msra.mxu0 %v502
        %622 = vmatprep.subr.bf16.mxu0 %v511
        %623 = vmatpush1.bf16.msra.mxu0 %v510
        %624 = vmatprep.subr.bf16.mxu0 0
        %625 = vmatpush1.bf16.msra.mxu0 0
        %626 = vmatprep.subr.bf16.mxu0 0
        %627 = vmatpush1.bf16.msra.mxu0 0
        %628 = vmatprep.subr.bf16.mxu0 0
        %629 = vmatpush1.bf16.msra.mxu0 0
        %630 = vmatprep.subr.bf16.mxu0 0
        %631 = vmatpush1.bf16.msra.mxu0 0
        %632 = vmatprep.subr.bf16.mxu0 0
        %633 = vmatpush1.bf16.msra.mxu0 0
        %634 = vmatprep.subr.bf16.mxu0 0
        %635 = vmatpush1.bf16.msra.mxu0 0
        %636 = vmatprep.subr.bf16.mxu0 0
        %637 = vmatpush1.bf16.msra.mxu0 0
        %638 = vmatprep.subr.bf16.mxu0 0
        %639 = vmatpush1.bf16.msra.mxu0 0
        %640 = vmatprep.subr.bf16.mxu0 0
        %641 = vmatpush1.bf16.msra.mxu0 0
        %642 = vmatprep.subr.bf16.mxu0 0
        %643 = vmatpush1.bf16.msra.mxu0 0
        %644 = vmatprep.subr.bf16.mxu0 0
        %645 = vmatpush1.bf16.msra.mxu0 0
        %646 = vmatprep.subr.bf16.mxu0 0
        %647 = vmatpush1.bf16.msra.mxu0 0
        %648 = vmatprep.subr.bf16.mxu0 0
        %649 = vmatpush1.bf16.msra.mxu0 0
        %650 = vmatprep.subr.bf16.mxu0 0
        %651 = vmatpush1.bf16.msra.mxu0 0
        %652 = vmatprep.mubr.bf16.mxu0 0
        %653 = vmatmul.mubr.bf16.gmra.mrb[0].mxu0 %v532
        %v654 = vpop.f32.mrb[0].mxu0
        %v655 = vadd.f32 %v429, %v654
        %v656 = vpop.f32.mrb[0].mxu0
        %v657 = vadd.f32 %v433, %v656
        %v658 = vpop.f32.mrb[0].mxu0
        %v659 = vadd.f32 %v429, %v658
        %v660 = vpop.f32.mrb[0].mxu0
        %v661 = vadd.f32 %v433, %v660
        %662 = vdwg.mxu0
        %663 = vmatprep.subr.bf16.mxu0 %v505
        %664 = vmatpush1.bf16.msra.mxu0 %v504
        %665 = vmatprep.subr.bf16.mxu0 %v513
        %666 = vmatpush1.bf16.msra.mxu0 %v512
        %667 = vmatprep.subr.bf16.mxu0 0
        %668 = vmatpush1.bf16.msra.mxu0 0
        %669 = vmatprep.subr.bf16.mxu0 0
        %670 = vmatpush1.bf16.msra.mxu0 0
        %671 = vmatprep.subr.bf16.mxu0 0
        %672 = vmatpush1.bf16.msra.mxu0 0
        %673 = vmatprep.subr.bf16.mxu0 0
        %674 = vmatpush1.bf16.msra.mxu0 0
        %675 = vmatprep.subr.bf16.mxu0 0
        %676 = vmatpush1.bf16.msra.mxu0 0
        %677 = vmatprep.subr.bf16.mxu0 0
        %678 = vmatpush1.bf16.msra.mxu0 0
        %679 = vmatprep.subr.bf16.mxu0 0
        %680 = vmatpush1.bf16.msra.mxu0 0
        %681 = vmatprep.subr.bf16.mxu0 0
        %682 = vmatpush1.bf16.msra.mxu0 0
        %683 = vmatprep.subr.bf16.mxu0 0
        %684 = vmatpush1.bf16.msra.mxu0 0
        %685 = vmatprep.subr.bf16.mxu0 0
        %686 = vmatpush1.bf16.msra.mxu0 0
        %687 = vmatprep.subr.bf16.mxu0 0
        %688 = vmatpush1.bf16.msra.mxu0 0
        %689 = vmatprep.subr.bf16.mxu0 0
        %690 = vmatpush1.bf16.msra.mxu0 0
        %691 = vmatprep.subr.bf16.mxu0 0
        %692 = vmatpush1.bf16.msra.mxu0 0
        %693 = vmatprep.subr.bf16.mxu0 0
        %694 = vmatpush1.bf16.msra.mxu0 0
        %695 = vmatprep.mubr.bf16.mxu0 0
        %696 = vmatmul.mubr.bf16.gmra.mrb[0].mxu0 %v532
        %v697 = vpop.f32.mrb[0].mxu0
        %v698 = vadd.f32 %v437, %v697
        %v699 = vpop.f32.mrb[0].mxu0
        %v700 = vadd.f32 %v441, %v699
        %v701 = vpop.f32.mrb[0].mxu0
        %v702 = vadd.f32 %v437, %v701
        %v703 = vpop.f32.mrb[0].mxu0
        %v704 = vadd.f32 %v441, %v703
        %705 = vdwg.mxu0
        %706 = vst [vmem:[#allocation2 + $0x10] sm:$0xff] %v569
        %707 = vst [vmem:[#allocation2 + $0x18] sm:$0xff] %v573
        %708 = vst [vmem:[#allocation2 + $0x20] sm:$0xff] %v571
        %709 = vst [vmem:[#allocation2 + $0x28] sm:$0xff] %v575
        %710 = vst [vmem:[#allocation2 + $0x30] sm:$0xff] %v612
        %711 = vst [vmem:[#allocation2 + $0x38] sm:$0xff] %v616
        %712 = vst [vmem:[#allocation2 + $0x40] sm:$0xff] %v614
        %713 = vst [vmem:[#allocation2 + $0x48] sm:$0xff] %v618
        %714 = vst [vmem:[#allocation2 + $0x50] sm:$0xff] %v655
        %715 = vst [vmem:[#allocation2 + $0x58] sm:$0xff] %v659
        %716 = vst [vmem:[#allocation2 + $0x60] sm:$0xff] %v657
        %717 = vst [vmem:[#allocation2 + $0x68] sm:$0xff] %v661
        %718 = vst [vmem:[#allocation2 + $0x70] sm:$0xff] %v698
        %719 = vst [vmem:[#allocation2 + $0x78] sm:$0xff] %v702
        %720 = vst [vmem:[#allocation2 + $0x80] sm:$0xff] %v700
        %721 = vst [vmem:[#allocation2 + $0x88] sm:$0xff] %v704
        %v722 = vld [vmem:[#allocation2 + $0x10] sm:$0xff]
        %v723 = vld [vmem:[#allocation2 + $0x18] sm:$0xff]
        %v724 = vld [vmem:[#allocation2 + $0x20] sm:$0xff]
        %v725 = vld [vmem:[#allocation2 + $0x28] sm:$0xff]
        %v726 = vld [vmem:[#allocation2 + $0x30] sm:$0xff]
        %v727 = vld [vmem:[#allocation2 + $0x38] sm:$0xff]
        %v728 = vld [vmem:[#allocation2 + $0x40] sm:$0xff]
        %v729 = vld [vmem:[#allocation2 + $0x48] sm:$0xff]
        %v730 = vld [vmem:[#allocation2 + $0x50] sm:$0xff]
        %v731 = vld [vmem:[#allocation2 + $0x58] sm:$0xff]
        %v732 = vld [vmem:[#allocation2 + $0x60] sm:$0xff]
        %v733 = vld [vmem:[#allocation2 + $0x68] sm:$0xff]
        %v734 = vld [vmem:[#allocation2 + $0x70] sm:$0xff]
        %v735 = vld [vmem:[#allocation2 + $0x78] sm:$0xff]
        %v736 = vld [vmem:[#allocation2 + $0x80] sm:$0xff]
        %v737 = vld [vmem:[#allocation2 + $0x88] sm:$0xff]
        %v738 = vld [vmem:[%s4] sm:$0x1]
        %v739 = vpack.c.bf16 %v723, %v722
        %v740 = vpack.c.bf16 %v725, %v724
        %v741 = vpack.c.bf16 %v727, %v726
        %v742 = vpack.c.bf16 %v729, %v728
        %v743 = vpack.c.bf16 %v731, %v730
        %v744 = vpack.c.bf16 %v733, %v732
        %v745 = vpack.c.bf16 %v735, %v734
        %v746 = vpack.c.bf16 %v737, %v736
        %v747 = vld [vmem:[%s3] sm:$0xff]
        %v748 = vld [vmem:[%s3 + $0x8] sm:$0xf]
        %v749 = vld [vmem:[%s3 + $0xc] sm:$0xff]
        %v750 = vld [vmem:[%s3 + $0x14] sm:$0xf]
        %v751 = vld [vmem:[%s3 + $0x18] sm:$0xff]
        %v752 = vld [vmem:[%s3 + $0x20] sm:$0xf]
        %v753 = vld [vmem:[%s3 + $0x24] sm:$0xff]
        %v754 = vld [vmem:[%s3 + $0x2c] sm:$0xf]
        %v755 = vld [vmem:[%s3 + $0x30] sm:$0xff]
        %v756 = vld [vmem:[%s3 + $0x38] sm:$0xf]
        %v757 = vld [vmem:[%s3 + $0x3c] sm:$0xff]
        %v758 = vld [vmem:[%s3 + $0x44] sm:$0xf]
        %v759 = vld [vmem:[%s3 + $0x48] sm:$0xff]
        %v760 = vld [vmem:[%s3 + $0x50] sm:$0xf]
        %v761 = vld [vmem:[%s3 + $0x54] sm:$0xff]
        %v762 = vld [vmem:[%s3 + $0x5c] sm:$0xf]
        %v763 = vld [vmem:[%s3 + $0x60] sm:$0xff]
        %v764 = vld [vmem:[%s3 + $0x68] sm:$0xf]
        %v765 = vld [vmem:[%s3 + $0x6c] sm:$0xff]
        %v766 = vld [vmem:[%s3 + $0x74] sm:$0xf]
        %v767 = vld [vmem:[%s3 + $0x78] sm:$0xff]
        %v768 = vld [vmem:[%s3 + $0x80] sm:$0xf]
        %v769 = vld [vmem:[%s3 + $0x84] sm:$0xff]
        %v770 = vld [vmem:[%s3 + $0x8c] sm:$0xf]
        %v771 = vld [vmem:[%s3 + $0x90] sm:$0xff]
        %v772 = vld [vmem:[%s3 + $0x98] sm:$0xf]
        %v773 = vld [vmem:[%s3 + $0x9c] sm:$0xff]
        %v774 = vld [vmem:[%s3 + $0xa4] sm:$0xf]
        %v775 = vld [vmem:[%s3 + $0xa8] sm:$0xff]
        %v776 = vld [vmem:[%s3 + $0xb0] sm:$0xf]
        %v777 = vld [vmem:[%s3 + $0xb4] sm:$0xff]
        %v778 = vld [vmem:[%s3 + $0xbc] sm:$0xf]
        %v811 = vunpack.c.l.b16 %v747
        %v812 = vunpack.c.h.b16 %v747
        %v813 = vunpack.c.l.b16 %v748
        %v814 = vunpack.c.l.b16 %v749
        %v815 = vunpack.c.h.b16 %v749
        %v816 = vunpack.c.l.b16 %v750
        %v817 = vunpack.c.l.b16 %v751
        %v818 = vunpack.c.h.b16 %v751
        %v819 = vunpack.c.l.b16 %v752
        %v820 = vunpack.c.l.b16 %v753
        %v821 = vunpack.c.h.b16 %v753
        %v822 = vunpack.c.l.b16 %v754
        %v823 = vunpack.c.l.b16 %v755
        %v824 = vunpack.c.h.b16 %v755
        %v825 = vunpack.c.l.b16 %v756
        %v826 = vunpack.c.l.b16 %v757
        %v827 = vunpack.c.h.b16 %v757
        %v828 = vunpack.c.l.b16 %v758
        %v829 = vunpack.c.l.b16 %v759
        %v830 = vunpack.c.h.b16 %v759
        %v831 = vunpack.c.l.b16 %v760
        %v832 = vunpack.c.l.b16 %v761
        %v833 = vunpack.c.h.b16 %v761
        %v834 = vunpack.c.l.b16 %v762
        %v835 = vunpack.c.l.b16 %v763
        %v836 = vunpack.c.h.b16 %v763
        %v837 = vunpack.c.l.b16 %v764
        %v838 = vunpack.c.l.b16 %v765
        %v839 = vunpack.c.h.b16 %v765
        %v840 = vunpack.c.l.b16 %v766
        %v841 = vunpack.c.l.b16 %v767
        %v842 = vunpack.c.h.b16 %v767
        %v843 = vunpack.c.l.b16 %v768
        %v844 = vunpack.c.l.b16 %v769
        %v845 = vunpack.c.h.b16 %v769
        %v846 = vunpack.c.l.b16 %v770
        %v847 = vunpack.c.l.b16 %v771
        %v848 = vunpack.c.h.b16 %v771
        %v849 = vunpack.c.l.b16 %v772
        %v850 = vunpack.c.l.b16 %v773
        %v851 = vunpack.c.h.b16 %v773
        %v852 = vunpack.c.l.b16 %v774
        %v853 = vunpack.c.l.b16 %v775
        %v854 = vunpack.c.h.b16 %v775
        %v855 = vunpack.c.l.b16 %v776
        %v856 = vunpack.c.l.b16 %v777
        %v857 = vunpack.c.h.b16 %v777
        %v858 = vunpack.c.l.b16 %v778
        %v859 = vpack.c.b16 %v814, %v811
        %v860 = vpack.c.b16 %v815, %v812
        %v861 = vpack.c.b16 %v816, %v813
        %v862 = vpack.c.b16 %v820, %v817
        %v863 = vpack.c.b16 %v821, %v818
        %v864 = vpack.c.b16 %v822, %v819
        %v865 = vpack.c.b16 %v826, %v823
        %v866 = vpack.c.b16 %v827, %v824
        %v867 = vpack.c.b16 %v828, %v825
        %v868 = vpack.c.b16 %v832, %v829
        %v869 = vpack.c.b16 %v833, %v830
        %v870 = vpack.c.b16 %v834, %v831
        %v871 = vpack.c.b16 %v838, %v835
        %v872 = vpack.c.b16 %v839, %v836
        %v873 = vpack.c.b16 %v840, %v837
        %v874 = vpack.c.b16 %v844, %v841
        %v875 = vpack.c.b16 %v845, %v842
        %v876 = vpack.c.b16 %v846, %v843
        %v877 = vpack.c.b16 %v850, %v847
        %v878 = vpack.c.b16 %v851, %v848
        %v879 = vpack.c.b16 %v852, %v849
        %v880 = vpack.c.b16 %v856, %v853
        %v881 = vpack.c.b16 %v857, %v854
        %v882 = vpack.c.b16 %v858, %v855
        %907 = vmatprep.subr.bf16.mxu0 %v860
        %908 = vmatpush1.bf16.msra.mxu0 %v859
        %909 = vmatprep.subr.bf16.mxu0 %v863
        %910 = vmatpush1.bf16.msra.mxu0 %v862
        %911 = vmatprep.subr.bf16.mxu0 %v866
        %912 = vmatpush1.bf16.msra.mxu0 %v865
        %913 = vmatprep.subr.bf16.mxu0 %v869
        %914 = vmatpush1.bf16.msra.mxu0 %v868
        %915 = vmatprep.subr.bf16.mxu0 %v872
        %916 = vmatpush1.bf16.msra.mxu0 %v871
        %917 = vmatprep.subr.bf16.mxu0 %v875
        %918 = vmatpush1.bf16.msra.mxu0 %v874
        %919 = vmatprep.subr.bf16.mxu0 %v878
        %920 = vmatpush1.bf16.msra.mxu0 %v877
        %921 = vmatprep.subr.bf16.mxu0 %v881
        %922 = vmatpush1.bf16.msra.mxu0 %v880
        %923 = vmatprep.subr.bf16.mxu0 0
        %924 = vmatpush1.bf16.msra.mxu0 0
        %925 = vmatprep.subr.bf16.mxu0 0
        %926 = vmatpush1.bf16.msra.mxu0 0
        %927 = vmatprep.subr.bf16.mxu0 0
        %928 = vmatpush1.bf16.msra.mxu0 0
        %929 = vmatprep.subr.bf16.mxu0 0
        %930 = vmatpush1.bf16.msra.mxu0 0
        %931 = vmatprep.subr.bf16.mxu0 0
        %932 = vmatpush1.bf16.msra.mxu0 0
        %933 = vmatprep.subr.bf16.mxu0 0
        %934 = vmatpush1.bf16.msra.mxu0 0
        %935 = vmatprep.subr.bf16.mxu0 0
        %936 = vmatpush1.bf16.msra.mxu0 0
        %937 = vmatprep.subr.bf16.mxu0 0
        %938 = vmatpush1.bf16.msra.mxu0 0
        %939 = vmatprep.mubr.bf16.mxu0 0
        %940 = vmatmul.mubr.bf16.gmra.mrb[0].mxu0 %v739
        %v941 = vpop.f32.mrb[0].mxu0
        %v942 = vadd.f32 0.0, %v941
        %v943 = vpop.f32.mrb[0].mxu0
        %v944 = vadd.f32 0.0, %v943
        %v945 = vpop.f32.mrb[0].mxu0
        %v946 = vadd.f32 0.0, %v945
        %v947 = vpop.f32.mrb[0].mxu0
        %v948 = vadd.f32 0.0, %v947
        %949 = vmatprep.mubr.bf16.mxu0 0
        %950 = vmatmul.mubr.bf16.gmra.mrb[0].mxu0 %v740
        %v951 = vpop.f32.mrb[0].mxu0
        %v952 = vadd.f32 0.0, %v951
        %v953 = vpop.f32.mrb[0].mxu0
        %v954 = vadd.f32 0.0, %v953
        %v955 = vpop.f32.mrb[0].mxu0
        %v956 = vadd.f32 0.0, %v955
        %v957 = vpop.f32.mrb[0].mxu0
        %v958 = vadd.f32 0.0, %v957
        %959 = vmatprep.mubr.bf16.mxu0 0
        %960 = vmatmul.mubr.bf16.gmra.mrb[0].mxu0 %v741
        %v961 = vpop.f32.mrb[0].mxu0
        %v962 = vadd.f32 0.0, %v961
        %v963 = vpop.f32.mrb[0].mxu0
        %v964 = vadd.f32 0.0, %v963
        %v965 = vpop.f32.mrb[0].mxu0
        %v966 = vadd.f32 0.0, %v965
        %v967 = vpop.f32.mrb[0].mxu0
        %v968 = vadd.f32 0.0, %v967
        %969 = vmatprep.mubr.bf16.mxu0 0
        %970 = vmatmul.mubr.bf16.gmra.mrb[0].mxu0 %v742
        %v971 = vpop.f32.mrb[0].mxu0
        %v972 = vadd.f32 0.0, %v971
        %v973 = vpop.f32.mrb[0].mxu0
        %v974 = vadd.f32 0.0, %v973
        %v975 = vpop.f32.mrb[0].mxu0
        %v976 = vadd.f32 0.0, %v975
        %v977 = vpop.f32.mrb[0].mxu0
        %v978 = vadd.f32 0.0, %v977
        %979 = vmatprep.mubr.bf16.mxu0 0
        %980 = vmatmul.mubr.bf16.gmra.mrb[0].mxu0 %v743
        %v981 = vpop.f32.mrb[0].mxu0
        %v982 = vadd.f32 0.0, %v981
        %v983 = vpop.f32.mrb[0].mxu0
        %v984 = vadd.f32 0.0, %v983
        %v985 = vpop.f32.mrb[0].mxu0
        %v986 = vadd.f32 0.0, %v985
        %v987 = vpop.f32.mrb[0].mxu0
        %v988 = vadd.f32 0.0, %v987
        %989 = vmatprep.mubr.bf16.mxu0 0
        %990 = vmatmul.mubr.bf16.gmra.mrb[0].mxu0 %v744
        %v991 = vpop.f32.mrb[0].mxu0
        %v992 = vadd.f32 0.0, %v991
        %v993 = vpop.f32.mrb[0].mxu0
        %v994 = vadd.f32 0.0, %v993
        %v995 = vpop.f32.mrb[0].mxu0
        %v996 = vadd.f32 0.0, %v995
        %v997 = vpop.f32.mrb[0].mxu0
        %v998 = vadd.f32 0.0, %v997
        %999 = vmatprep.mubr.bf16.mxu0 0
        %1000 = vmatmul.mubr.bf16.gmra.mrb[0].mxu0 %v745
        %v1001 = vpop.f32.mrb[0].mxu0
        %v1002 = vadd.f32 0.0, %v1001
        %v1003 = vpop.f32.mrb[0].mxu0
        %v1004 = vadd.f32 0.0, %v1003
        %v1005 = vpop.f32.mrb[0].mxu0
        %v1006 = vadd.f32 0.0, %v1005
        %v1007 = vpop.f32.mrb[0].mxu0
        %v1008 = vadd.f32 0.0, %v1007
        %1009 = vmatprep.mubr.bf16.mxu0 0
        %1010 = vmatmul.mubr.bf16.gmra.mrb[0].mxu0 %v746
        %v1011 = vpop.f32.mrb[0].mxu0
        %v1012 = vadd.f32 0.0, %v1011
        %v1013 = vpop.f32.mrb[0].mxu0
        %v1014 = vadd.f32 0.0, %v1013
        %v1015 = vpop.f32.mrb[0].mxu0
        %v1016 = vadd.f32 0.0, %v1015
        %v1017 = vpop.f32.mrb[0].mxu0
        %v1018 = vadd.f32 0.0, %v1017
        %1019 = vdwg.mxu0
        %1020 = vmatprep.subr.bf16.mxu0 0
        %1021 = vmatpush1.bf16.msra.mxu0 %v861
        %1022 = vmatprep.subr.bf16.mxu0 0
        %1023 = vmatpush1.bf16.msra.mxu0 %v864
        %1024 = vmatprep.subr.bf16.mxu0 0
        %1025 = vmatpush1.bf16.msra.mxu0 %v867
        %1026 = vmatprep.subr.bf16.mxu0 0
        %1027 = vmatpush1.bf16.msra.mxu0 %v870
        %1028 = vmatprep.subr.bf16.mxu0 0
        %1029 = vmatpush1.bf16.msra.mxu0 %v873
        %1030 = vmatprep.subr.bf16.mxu0 0
        %1031 = vmatpush1.bf16.msra.mxu0 %v876
        %1032 = vmatprep.subr.bf16.mxu0 0
        %1033 = vmatpush1.bf16.msra.mxu0 %v879
        %1034 = vmatprep.subr.bf16.mxu0 0
        %1035 = vmatpush1.bf16.msra.mxu0 %v882
        %1036 = vmatprep.subr.bf16.mxu0 0
        %1037 = vmatpush1.bf16.msra.mxu0 0
        %1038 = vmatprep.subr.bf16.mxu0 0
        %1039 = vmatpush1.bf16.msra.mxu0 0
        %1040 = vmatprep.subr.bf16.mxu0 0
        %1041 = vmatpush1.bf16.msra.mxu0 0
        %1042 = vmatprep.subr.bf16.mxu0 0
        %1043 = vmatpush1.bf16.msra.mxu0 0
        %1044 = vmatprep.subr.bf16.mxu0 0
        %1045 = vmatpush1.bf16.msra.mxu0 0
        %1046 = vmatprep.subr.bf16.mxu0 0
        %1047 = vmatpush1.bf16.msra.mxu0 0
        %1048 = vmatprep.subr.bf16.mxu0 0
        %1049 = vmatpush1.bf16.msra.mxu0 0
        %1050 = vmatprep.subr.bf16.mxu0 0
        %1051 = vmatpush1.bf16.msra.mxu0 0
        %1052 = vmatprep.mubr.bf16.mxu0 0
        %1053 = vmatmul.mubr.bf16.gmra.mrb[0].mxu0 %v739
        %v1054 = vpop.f32.mrb[0].mxu0
        %v1055 = vadd.f32 0.0, %v1054
        %v1056 = vpop.f32.mrb[0].mxu0
        %v1057 = vpop.f32.mrb[0].mxu0
        %v1058 = vadd.f32 0.0, %v1057
        %v1059 = vpop.f32.mrb[0].mxu0
        %1060 = vmatprep.mubr.bf16.mxu0 0
        %1061 = vmatmul.mubr.bf16.gmra.mrb[0].mxu0 %v740
        %v1062 = vpop.f32.mrb[0].mxu0
        %v1063 = vadd.f32 0.0, %v1062
        %v1064 = vpop.f32.mrb[0].mxu0
        %v1065 = vpop.f32.mrb[0].mxu0
        %v1066 = vadd.f32 0.0, %v1065
        %v1067 = vpop.f32.mrb[0].mxu0
        %1068 = vmatprep.mubr.bf16.mxu0 0
        %1069 = vmatmul.mubr.bf16.gmra.mrb[0].mxu0 %v741
        %v1070 = vpop.f32.mrb[0].mxu0
        %v1071 = vadd.f32 0.0, %v1070
        %v1072 = vpop.f32.mrb[0].mxu0
        %v1073 = vpop.f32.mrb[0].mxu0
        %v1074 = vadd.f32 0.0, %v1073
        %v1075 = vpop.f32.mrb[0].mxu0
        %1076 = vmatprep.mubr.bf16.mxu0 0
        %1077 = vmatmul.mubr.bf16.gmra.mrb[0].mxu0 %v742
        %v1078 = vpop.f32.mrb[0].mxu0
        %v1079 = vadd.f32 0.0, %v1078
        %v1080 = vpop.f32.mrb[0].mxu0
        %v1081 = vpop.f32.mrb[0].mxu0
        %v1082 = vadd.f32 0.0, %v1081
        %v1083 = vpop.f32.mrb[0].mxu0
        %1084 = vmatprep.mubr.bf16.mxu0 0
        %1085 = vmatmul.mubr.bf16.gmra.mrb[0].mxu0 %v743
        %v1086 = vpop.f32.mrb[0].mxu0
        %v1087 = vadd.f32 0.0, %v1086
        %v1088 = vpop.f32.mrb[0].mxu0
        %v1089 = vpop.f32.mrb[0].mxu0
        %v1090 = vadd.f32 0.0, %v1089
        %v1091 = vpop.f32.mrb[0].mxu0
        %1092 = vmatprep.mubr.bf16.mxu0 0
        %1093 = vmatmul.mubr.bf16.gmra.mrb[0].mxu0 %v744
        %v1094 = vpop.f32.mrb[0].mxu0
        %v1095 = vadd.f32 0.0, %v1094
        %v1096 = vpop.f32.mrb[0].mxu0
        %v1097 = vpop.f32.mrb[0].mxu0
        %v1098 = vadd.f32 0.0, %v1097
        %v1099 = vpop.f32.mrb[0].mxu0
        %1100 = vmatprep.mubr.bf16.mxu0 0
        %1101 = vmatmul.mubr.bf16.gmra.mrb[0].mxu0 %v745
        %v1102 = vpop.f32.mrb[0].mxu0
        %v1103 = vadd.f32 0.0, %v1102
        %v1104 = vpop.f32.mrb[0].mxu0
        %v1105 = vpop.f32.mrb[0].mxu0
        %v1106 = vadd.f32 0.0, %v1105
        %v1107 = vpop.f32.mrb[0].mxu0
        %1108 = vmatprep.mubr.bf16.mxu0 0
        %1109 = vmatmul.mubr.bf16.gmra.mrb[0].mxu0 %v746
        %v1110 = vpop.f32.mrb[0].mxu0
        %v1111 = vadd.f32 0.0, %v1110
        %v1112 = vpop.f32.mrb[0].mxu0
        %v1113 = vpop.f32.mrb[0].mxu0
        %v1114 = vadd.f32 0.0, %v1113
        %v1115 = vpop.f32.mrb[0].mxu0
        %1116 = vdwg.mxu0
        %1117 = vst [vmem:[#allocation2 + $0x10] sm:$0xff] %v1055
        %1118 = vst [vmem:[#allocation2 + $0x18] sm:$0xff] %v1058
        %1119 = vst [vmem:[#allocation2 + $0x20] sm:$0xff] %v1063
        %1120 = vst [vmem:[#allocation2 + $0x28] sm:$0xff] %v1066
        %1121 = vst [vmem:[#allocation2 + $0x30] sm:$0xff] %v1071
        %1122 = vst [vmem:[#allocation2 + $0x38] sm:$0xff] %v1074
        %1123 = vst [vmem:[#allocation2 + $0x40] sm:$0xff] %v1079
        %1124 = vst [vmem:[#allocation2 + $0x48] sm:$0xff] %v1082
        %1125 = vst [vmem:[#allocation2 + $0x50] sm:$0xff] %v1087
        %1126 = vst [vmem:[#allocation2 + $0x58] sm:$0xff] %v1090
        %1127 = vst [vmem:[#allocation2 + $0x60] sm:$0xff] %v1095
        %1128 = vst [vmem:[#allocation2 + $0x68] sm:$0xff] %v1098
        %1129 = vst [vmem:[#allocation2 + $0x70] sm:$0xff] %v1103
        %1130 = vst [vmem:[#allocation2 + $0x78] sm:$0xff] %v1106
        %1131 = vst [vmem:[#allocation2 + $0x80] sm:$0xff] %v1111
        %1132 = vst [vmem:[#allocation2 + $0x88] sm:$0xff] %v1114
        %v1133 = vld [vmem:[#allocation2 + $0x20] sm:$0xff]
        %v1134 = vld [vmem:[#allocation2 + $0x28] sm:$0xff]
        %v1135 = vld [vmem:[#allocation2 + $0x30] sm:$0xff]
        %v1136 = vld [vmem:[#allocation2 + $0x38] sm:$0xff]
        %v1137 = vld [vmem:[#allocation2 + $0x40] sm:$0xff]
        %v1138 = vld [vmem:[#allocation2 + $0x48] sm:$0xff]
        %v1139 = vld [vmem:[#allocation2 + $0x50] sm:$0xff]
        %v1140 = vld [vmem:[#allocation2 + $0x58] sm:$0xff]
        %v1141 = vld [vmem:[#allocation2 + $0x60] sm:$0xff]
        %v1142 = vld [vmem:[#allocation2 + $0x68] sm:$0xff]
        %v1143 = vld [vmem:[#allocation2 + $0x70] sm:$0xff]
        %v1144 = vld [vmem:[#allocation2 + $0x78] sm:$0xff]
        %v1145 = vld [vmem:[#allocation2 + $0x80] sm:$0xff]
        %v1146 = vld [vmem:[#allocation2 + $0x88] sm:$0xff]
        %v1147 = vld [vmem:[#allocation2 + $0x90] sm:$0xff]
        %v1148 = vld [vmem:[#allocation2 + $0x98] sm:$0xff]
        %v1150 = vlaneseq
        %v1151 = vshrl.u32 %v1150, 7
        %v1152 = vsub.s32 0, %v1151
        %v1153 = vrot.slane %v738, %v1152
        %v1155 = vadd.f32 %v942, %v1153
        %v1156 = vadd.f32 %v946, %v1153
        %v1157 = vadd.f32 %v952, %v1153
        %v1158 = vadd.f32 %v956, %v1153
        %v1159 = vadd.f32 %v962, %v1153
        %v1160 = vadd.f32 %v966, %v1153
        %v1161 = vadd.f32 %v972, %v1153
        %v1162 = vadd.f32 %v976, %v1153
        %v1163 = vadd.f32 %v982, %v1153
        %v1164 = vadd.f32 %v986, %v1153
        %v1165 = vadd.f32 %v992, %v1153
        %v1166 = vadd.f32 %v996, %v1153
        %v1167 = vadd.f32 %v1002, %v1153
        %v1168 = vadd.f32 %v1006, %v1153
        %v1169 = vadd.f32 %v1012, %v1153
        %v1170 = vadd.f32 %v1016, %v1153
        %v1171 = vmax.f32 %v1155, 0.0
        %v1172 = vmax.f32 %v1156, 0.0
        %v1173 = vmax.f32 %v1157, 0.0
        %v1174 = vmax.f32 %v1158, 0.0
        %v1175 = vmax.f32 %v1159, 0.0
        %v1176 = vmax.f32 %v1160, 0.0
        %v1177 = vmax.f32 %v1161, 0.0
        %v1178 = vmax.f32 %v1162, 0.0
        %v1179 = vmax.f32 %v1163, 0.0
        %v1180 = vmax.f32 %v1164, 0.0
        %v1181 = vmax.f32 %v1165, 0.0
        %v1182 = vmax.f32 %v1166, 0.0
        %v1183 = vmax.f32 %v1167, 0.0
        %v1184 = vmax.f32 %v1168, 0.0
        %v1185 = vmax.f32 %v1169, 0.0
        %v1186 = vmax.f32 %v1170, 0.0
        %v1187 = vadd.f32 %v944, %v1133
        %v1188 = vadd.f32 %v948, %v1134
        %v1189 = vadd.f32 %v954, %v1135
        %v1190 = vadd.f32 %v958, %v1136
        %v1191 = vadd.f32 %v964, %v1137
        %v1192 = vadd.f32 %v968, %v1138
        %v1193 = vadd.f32 %v974, %v1139
        %v1194 = vadd.f32 %v978, %v1140
        %v1195 = vadd.f32 %v984, %v1141
        %v1196 = vadd.f32 %v988, %v1142
        %v1197 = vadd.f32 %v994, %v1143
        %v1198 = vadd.f32 %v998, %v1144
        %v1199 = vadd.f32 %v1004, %v1145
        %v1200 = vadd.f32 %v1008, %v1146
        %v1201 = vadd.f32 %v1014, %v1147
        %v1202 = vadd.f32 %v1018, %v1148
        %v1203 = vadd.f32 %v1187, %v1153
        %v1204 = vadd.f32 %v1188, %v1153
        %v1205 = vadd.f32 %v1189, %v1153
        %v1206 = vadd.f32 %v1190, %v1153
        %v1207 = vadd.f32 %v1191, %v1153
        %v1208 = vadd.f32 %v1192, %v1153
        %v1209 = vadd.f32 %v1193, %v1153
        %v1210 = vadd.f32 %v1194, %v1153
        %v1211 = vadd.f32 %v1195, %v1153
        %v1212 = vadd.f32 %v1196, %v1153
        %v1213 = vadd.f32 %v1197, %v1153
        %v1214 = vadd.f32 %v1198, %v1153
        %v1215 = vadd.f32 %v1199, %v1153
        %v1216 = vadd.f32 %v1200, %v1153
        %v1217 = vadd.f32 %v1201, %v1153
        %v1218 = vadd.f32 %v1202, %v1153
        %v1219 = vmax.f32 %v1203, 0.0
        %v1220 = vmax.f32 %v1204, 0.0
        %v1221 = vmax.f32 %v1205, 0.0
        %v1222 = vmax.f32 %v1206, 0.0
        %v1223 = vmax.f32 %v1207, 0.0
        %v1224 = vmax.f32 %v1208, 0.0
        %v1225 = vmax.f32 %v1209, 0.0
        %v1226 = vmax.f32 %v1210, 0.0
        %v1227 = vmax.f32 %v1211, 0.0
        %v1228 = vmax.f32 %v1212, 0.0
        %v1229 = vmax.f32 %v1213, 0.0
        %v1230 = vmax.f32 %v1214, 0.0
        %v1231 = vmax.f32 %v1215, 0.0
        %v1232 = vmax.f32 %v1216, 0.0
        %v1233 = vmax.f32 %v1217, 0.0
        %v1234 = vmax.f32 %v1218, 0.0
        %v1235 = vld [vmem:[%s6] sm:$0x1]
        %v1236 = vpack.c.bf16 %v1172, %v1171
        %v1237 = vpack.c.bf16 %v1174, %v1173
        %v1238 = vpack.c.bf16 %v1176, %v1175
        %v1239 = vpack.c.bf16 %v1178, %v1177
        %v1240 = vpack.c.bf16 %v1180, %v1179
        %v1241 = vpack.c.bf16 %v1182, %v1181
        %v1242 = vpack.c.bf16 %v1184, %v1183
        %v1243 = vpack.c.bf16 %v1186, %v1185
        %v1244 = vld [vmem:[%s5] sm:$0xff]
        %v1245 = vld [vmem:[%s5 + $0x8] sm:$0xf]
        %v1246 = vld [vmem:[%s5 + $0xc] sm:$0xff]
        %v1247 = vld [vmem:[%s5 + $0x14] sm:$0xf]
        %v1248 = vld [vmem:[%s5 + $0x18] sm:$0xff]
        %v1249 = vld [vmem:[%s5 + $0x20] sm:$0xf]
        %v1250 = vld [vmem:[%s5 + $0x24] sm:$0xff]
        %v1251 = vld [vmem:[%s5 + $0x2c] sm:$0xf]
        %v1252 = vld [vmem:[%s5 + $0x30] sm:$0xff]
        %v1253 = vld [vmem:[%s5 + $0x38] sm:$0xf]
        %v1254 = vld [vmem:[%s5 + $0x3c] sm:$0xff]
        %v1255 = vld [vmem:[%s5 + $0x44] sm:$0xf]
        %v1256 = vld [vmem:[%s5 + $0x48] sm:$0xff]
        %v1257 = vld [vmem:[%s5 + $0x50] sm:$0xf]
        %v1258 = vld [vmem:[%s5 + $0x54] sm:$0xff]
        %v1259 = vld [vmem:[%s5 + $0x5c] sm:$0xf]
        %v1260 = vld [vmem:[%s5 + $0x60] sm:$0xff]
        %v1261 = vld [vmem:[%s5 + $0x68] sm:$0xf]
        %v1262 = vld [vmem:[%s5 + $0x6c] sm:$0xff]
        %v1263 = vld [vmem:[%s5 + $0x74] sm:$0xf]
        %v1264 = vld [vmem:[%s5 + $0x78] sm:$0xff]
        %v1265 = vld [vmem:[%s5 + $0x80] sm:$0xf]
        %v1266 = vld [vmem:[%s5 + $0x84] sm:$0xff]
        %v1267 = vld [vmem:[%s5 + $0x8c] sm:$0xf]
        %v1268 = vld [vmem:[%s5 + $0x90] sm:$0xff]
        %v1269 = vld [vmem:[%s5 + $0x98] sm:$0xf]
        %v1270 = vld [vmem:[%s5 + $0x9c] sm:$0xff]
        %v1271 = vld [vmem:[%s5 + $0xa4] sm:$0xf]
        %v1272 = vld [vmem:[%s5 + $0xa8] sm:$0xff]
        %v1273 = vld [vmem:[%s5 + $0xb0] sm:$0xf]
        %v1274 = vld [vmem:[%s5 + $0xb4] sm:$0xff]
        %v1275 = vld [vmem:[%s5 + $0xbc] sm:$0xf]
        %v1308 = vunpack.c.l.b16 %v1244
        %v1309 = vunpack.c.h.b16 %v1244
        %v1310 = vunpack.c.l.b16 %v1245
        %v1311 = vunpack.c.l.b16 %v1246
        %v1312 = vunpack.c.h.b16 %v1246
        %v1313 = vunpack.c.l.b16 %v1247
        %v1314 = vunpack.c.l.b16 %v1248
        %v1315 = vunpack.c.h.b16 %v1248
        %v1316 = vunpack.c.l.b16 %v1249
        %v1317 = vunpack.c.l.b16 %v1250
        %v1318 = vunpack.c.h.b16 %v1250
        %v1319 = vunpack.c.l.b16 %v1251
        %v1320 = vunpack.c.l.b16 %v1252
        %v1321 = vunpack.c.h.b16 %v1252
        %v1322 = vunpack.c.l.b16 %v1253
        %v1323 = vunpack.c.l.b16 %v1254
        %v1324 = vunpack.c.h.b16 %v1254
        %v1325 = vunpack.c.l.b16 %v1255
        %v1326 = vunpack.c.l.b16 %v1256
        %v1327 = vunpack.c.h.b16 %v1256
        %v1328 = vunpack.c.l.b16 %v1257
        %v1329 = vunpack.c.l.b16 %v1258
        %v1330 = vunpack.c.h.b16 %v1258
        %v1331 = vunpack.c.l.b16 %v1259
        %v1332 = vunpack.c.l.b16 %v1260
        %v1333 = vunpack.c.h.b16 %v1260
        %v1334 = vunpack.c.l.b16 %v1261
        %v1335 = vunpack.c.l.b16 %v1262
        %v1336 = vunpack.c.h.b16 %v1262
        %v1337 = vunpack.c.l.b16 %v1263
        %v1338 = vunpack.c.l.b16 %v1264
        %v1339 = vunpack.c.h.b16 %v1264
        %v1340 = vunpack.c.l.b16 %v1265
        %v1341 = vunpack.c.l.b16 %v1266
        %v1342 = vunpack.c.h.b16 %v1266
        %v1343 = vunpack.c.l.b16 %v1267
        %v1344 = vunpack.c.l.b16 %v1268
        %v1345 = vunpack.c.h.b16 %v1268
        %v1346 = vunpack.c.l.b16 %v1269
        %v1347 = vunpack.c.l.b16 %v1270
        %v1348 = vunpack.c.h.b16 %v1270
        %v1349 = vunpack.c.l.b16 %v1271
        %v1350 = vunpack.c.l.b16 %v1272
        %v1351 = vunpack.c.h.b16 %v1272
        %v1352 = vunpack.c.l.b16 %v1273
        %v1353 = vunpack.c.l.b16 %v1274
        %v1354 = vunpack.c.h.b16 %v1274
        %v1355 = vunpack.c.l.b16 %v1275
        %v1356 = vpack.c.b16 %v1311, %v1308
        %v1357 = vpack.c.b16 %v1312, %v1309
        %v1358 = vpack.c.b16 %v1313, %v1310
        %v1359 = vpack.c.b16 %v1317, %v1314
        %v1360 = vpack.c.b16 %v1318, %v1315
        %v1361 = vpack.c.b16 %v1319, %v1316
        %v1362 = vpack.c.b16 %v1323, %v1320
        %v1363 = vpack.c.b16 %v1324, %v1321
        %v1364 = vpack.c.b16 %v1325, %v1322
        %v1365 = vpack.c.b16 %v1329, %v1326
        %v1366 = vpack.c.b16 %v1330, %v1327
        %v1367 = vpack.c.b16 %v1331, %v1328
        %v1368 = vpack.c.b16 %v1335, %v1332
        %v1369 = vpack.c.b16 %v1336, %v1333
        %v1370 = vpack.c.b16 %v1337, %v1334
        %v1371 = vpack.c.b16 %v1341, %v1338
        %v1372 = vpack.c.b16 %v1342, %v1339
        %v1373 = vpack.c.b16 %v1343, %v1340
        %v1374 = vpack.c.b16 %v1347, %v1344
        %v1375 = vpack.c.b16 %v1348, %v1345
        %v1376 = vpack.c.b16 %v1349, %v1346
        %v1377 = vpack.c.b16 %v1353, %v1350
        %v1378 = vpack.c.b16 %v1354, %v1351
        %v1379 = vpack.c.b16 %v1355, %v1352
        %1404 = vmatprep.subr.bf16.mxu0 %v1357
        %1405 = vmatpush1.bf16.msra.mxu0 %v1356
        %1406 = vmatprep.subr.bf16.mxu0 %v1360
        %1407 = vmatpush1.bf16.msra.mxu0 %v1359
        %1408 = vmatprep.subr.bf16.mxu0 %v1363
        %1409 = vmatpush1.bf16.msra.mxu0 %v1362
        %1410 = vmatprep.subr.bf16.mxu0 %v1366
        %1411 = vmatpush1.bf16.msra.mxu0 %v1365
        %1412 = vmatprep.subr.bf16.mxu0 %v1369
        %1413 = vmatpush1.bf16.msra.mxu0 %v1368
        %1414 = vmatprep.subr.bf16.mxu0 %v1372
        %1415 = vmatpush1.bf16.msra.mxu0 %v1371
        %1416 = vmatprep.subr.bf16.mxu0 %v1375
        %1417 = vmatpush1.bf16.msra.mxu0 %v1374
        %1418 = vmatprep.subr.bf16.mxu0 %v1378
        %1419 = vmatpush1.bf16.msra.mxu0 %v1377
        %1420 = vmatprep.subr.bf16.mxu0 0
        %1421 = vmatpush1.bf16.msra.mxu0 0
        %1422 = vmatprep.subr.bf16.mxu0 0
        %1423 = vmatpush1.bf16.msra.mxu0 0
        %1424 = vmatprep.subr.bf16.mxu0 0
        %1425 = vmatpush1.bf16.msra.mxu0 0
        %1426 = vmatprep.subr.bf16.mxu0 0
        %1427 = vmatpush1.bf16.msra.mxu0 0
        %1428 = vmatprep.subr.bf16.mxu0 0
        %1429 = vmatpush1.bf16.msra.mxu0 0
        %1430 = vmatprep.subr.bf16.mxu0 0
        %1431 = vmatpush1.bf16.msra.mxu0 0
        %1432 = vmatprep.subr.bf16.mxu0 0
        %1433 = vmatpush1.bf16.msra.mxu0 0
        %1434 = vmatprep.subr.bf16.mxu0 0
        %1435 = vmatpush1.bf16.msra.mxu0 0
        %1436 = vmatprep.mubr.bf16.mxu0 0
        %1437 = vmatmul.mubr.bf16.gmra.mrb[0].mxu0 %v1236
        %v1438 = vpop.f32.mrb[0].mxu0
        %v1439 = vadd.f32 0.0, %v1438
        %v1440 = vpop.f32.mrb[0].mxu0
        %v1441 = vadd.f32 0.0, %v1440
        %v1442 = vpop.f32.mrb[0].mxu0
        %v1443 = vadd.f32 0.0, %v1442
        %v1444 = vpop.f32.mrb[0].mxu0
        %v1445 = vadd.f32 0.0, %v1444
        %1446 = vmatprep.mubr.bf16.mxu0 0
        %1447 = vmatmul.mubr.bf16.gmra.mrb[0].mxu0 %v1237
        %v1448 = vpop.f32.mrb[0].mxu0
        %v1449 = vadd.f32 0.0, %v1448
        %v1450 = vpop.f32.mrb[0].mxu0
        %v1451 = vadd.f32 0.0, %v1450
        %v1452 = vpop.f32.mrb[0].mxu0
        %v1453 = vadd.f32 0.0, %v1452
        %v1454 = vpop.f32.mrb[0].mxu0
        %v1455 = vadd.f32 0.0, %v1454
        %1456 = vmatprep.mubr.bf16.mxu0 0
        %1457 = vmatmul.mubr.bf16.gmra.mrb[0].mxu0 %v1238
        %v1458 = vpop.f32.mrb[0].mxu0
        %v1459 = vadd.f32 0.0, %v1458
        %v1460 = vpop.f32.mrb[0].mxu0
        %v1461 = vadd.f32 0.0, %v1460
        %v1462 = vpop.f32.mrb[0].mxu0
        %v1463 = vadd.f32 0.0, %v1462
        %v1464 = vpop.f32.mrb[0].mxu0
        %v1465 = vadd.f32 0.0, %v1464
        %1466 = vmatprep.mubr.bf16.mxu0 0
        %1467 = vmatmul.mubr.bf16.gmra.mrb[0].mxu0 %v1239
        %v1468 = vpop.f32.mrb[0].mxu0
        %v1469 = vadd.f32 0.0, %v1468
        %v1470 = vpop.f32.mrb[0].mxu0
        %v1471 = vadd.f32 0.0, %v1470
        %v1472 = vpop.f32.mrb[0].mxu0
        %v1473 = vadd.f32 0.0, %v1472
        %v1474 = vpop.f32.mrb[0].mxu0
        %v1475 = vadd.f32 0.0, %v1474
        %1476 = vmatprep.mubr.bf16.mxu0 0
        %1477 = vmatmul.mubr.bf16.gmra.mrb[0].mxu0 %v1240
        %v1478 = vpop.f32.mrb[0].mxu0
        %v1479 = vadd.f32 0.0, %v1478
        %v1480 = vpop.f32.mrb[0].mxu0
        %v1481 = vadd.f32 0.0, %v1480
        %v1482 = vpop.f32.mrb[0].mxu0
        %v1483 = vadd.f32 0.0, %v1482
        %v1484 = vpop.f32.mrb[0].mxu0
        %v1485 = vadd.f32 0.0, %v1484
        %1486 = vmatprep.mubr.bf16.mxu0 0
        %1487 = vmatmul.mubr.bf16.gmra.mrb[0].mxu0 %v1241
        %v1488 = vpop.f32.mrb[0].mxu0
        %v1489 = vadd.f32 0.0, %v1488
        %v1490 = vpop.f32.mrb[0].mxu0
        %v1491 = vadd.f32 0.0, %v1490
        %v1492 = vpop.f32.mrb[0].mxu0
        %v1493 = vadd.f32 0.0, %v1492
        %v1494 = vpop.f32.mrb[0].mxu0
        %v1495 = vadd.f32 0.0, %v1494
        %1496 = vmatprep.mubr.bf16.mxu0 0
        %1497 = vmatmul.mubr.bf16.gmra.mrb[0].mxu0 %v1242
        %v1498 = vpop.f32.mrb[0].mxu0
        %v1499 = vadd.f32 0.0, %v1498
        %v1500 = vpop.f32.mrb[0].mxu0
        %v1501 = vadd.f32 0.0, %v1500
        %v1502 = vpop.f32.mrb[0].mxu0
        %v1503 = vadd.f32 0.0, %v1502
        %v1504 = vpop.f32.mrb[0].mxu0
        %v1505 = vadd.f32 0.0, %v1504
        %1506 = vmatprep.mubr.bf16.mxu0 0
        %1507 = vmatmul.mubr.bf16.gmra.mrb[0].mxu0 %v1243
        %v1508 = vpop.f32.mrb[0].mxu0
        %v1509 = vadd.f32 0.0, %v1508
        %v1510 = vpop.f32.mrb[0].mxu0
        %v1511 = vadd.f32 0.0, %v1510
        %v1512 = vpop.f32.mrb[0].mxu0
        %v1513 = vadd.f32 0.0, %v1512
        %v1514 = vpop.f32.mrb[0].mxu0
        %v1515 = vadd.f32 0.0, %v1514
        %1516 = vdwg.mxu0
        %1517 = vmatprep.subr.bf16.mxu0 0
        %1518 = vmatpush1.bf16.msra.mxu0 %v1358
        %1519 = vmatprep.subr.bf16.mxu0 0
        %1520 = vmatpush1.bf16.msra.mxu0 %v1361
        %1521 = vmatprep.subr.bf16.mxu0 0
        %1522 = vmatpush1.bf16.msra.mxu0 %v1364
        %1523 = vmatprep.subr.bf16.mxu0 0
        %1524 = vmatpush1.bf16.msra.mxu0 %v1367
        %1525 = vmatprep.subr.bf16.mxu0 0
        %1526 = vmatpush1.bf16.msra.mxu0 %v1370
        %1527 = vmatprep.subr.bf16.mxu0 0
        %1528 = vmatpush1.bf16.msra.mxu0 %v1373
        %1529 = vmatprep.subr.bf16.mxu0 0
        %1530 = vmatpush1.bf16.msra.mxu0 %v1376
        %1531 = vmatprep.subr.bf16.mxu0 0
        %1532 = vmatpush1.bf16.msra.mxu0 %v1379
        %1533 = vmatprep.subr.bf16.mxu0 0
        %1534 = vmatpush1.bf16.msra.mxu0 0
        %1535 = vmatprep.subr.bf16.mxu0 0
        %1536 = vmatpush1.bf16.msra.mxu0 0
        %1537 = vmatprep.subr.bf16.mxu0 0
        %1538 = vmatpush1.bf16.msra.mxu0 0
        %1539 = vmatprep.subr.bf16.mxu0 0
        %1540 = vmatpush1.bf16.msra.mxu0 0
        %1541 = vmatprep.subr.bf16.mxu0 0
        %1542 = vmatpush1.bf16.msra.mxu0 0
        %1543 = vmatprep.subr.bf16.mxu0 0
        %1544 = vmatpush1.bf16.msra.mxu0 0
        %1545 = vmatprep.subr.bf16.mxu0 0
        %1546 = vmatpush1.bf16.msra.mxu0 0
        %1547 = vmatprep.subr.bf16.mxu0 0
        %1548 = vmatpush1.bf16.msra.mxu0 0
        %1549 = vmatprep.mubr.bf16.mxu0 0
        %1550 = vmatmul.mubr.bf16.gmra.mrb[0].mxu0 %v1236
        %v1551 = vpop.f32.mrb[0].mxu0
        %v1552 = vadd.f32 0.0, %v1551
        %v1553 = vpop.f32.mrb[0].mxu0
        %v1554 = vpop.f32.mrb[0].mxu0
        %v1555 = vadd.f32 0.0, %v1554
        %v1556 = vpop.f32.mrb[0].mxu0
        %1557 = vmatprep.mubr.bf16.mxu0 0
        %1558 = vmatmul.mubr.bf16.gmra.mrb[0].mxu0 %v1237
        %v1559 = vpop.f32.mrb[0].mxu0
        %v1560 = vadd.f32 0.0, %v1559
        %v1561 = vpop.f32.mrb[0].mxu0
        %v1562 = vpop.f32.mrb[0].mxu0
        %v1563 = vadd.f32 0.0, %v1562
        %v1564 = vpop.f32.mrb[0].mxu0
        %1565 = vmatprep.mubr.bf16.mxu0 0
        %1566 = vmatmul.mubr.bf16.gmra.mrb[0].mxu0 %v1238
        %v1567 = vpop.f32.mrb[0].mxu0
        %v1568 = vadd.f32 0.0, %v1567
        %v1569 = vpop.f32.mrb[0].mxu0
        %v1570 = vpop.f32.mrb[0].mxu0
        %v1571 = vadd.f32 0.0, %v1570
        %v1572 = vpop.f32.mrb[0].mxu0
        %1573 = vmatprep.mubr.bf16.mxu0 0
        %1574 = vmatmul.mubr.bf16.gmra.mrb[0].mxu0 %v1239
        %v1575 = vpop.f32.mrb[0].mxu0
        %v1576 = vadd.f32 0.0, %v1575
        %v1577 = vpop.f32.mrb[0].mxu0
        %v1578 = vpop.f32.mrb[0].mxu0
        %v1579 = vadd.f32 0.0, %v1578
        %v1580 = vpop.f32.mrb[0].mxu0
        %1581 = vmatprep.mubr.bf16.mxu0 0
        %1582 = vmatmul.mubr.bf16.gmra.mrb[0].mxu0 %v1240
        %v1583 = vpop.f32.mrb[0].mxu0
        %v1584 = vadd.f32 0.0, %v1583
        %v1585 = vpop.f32.mrb[0].mxu0
        %v1586 = vpop.f32.mrb[0].mxu0
        %v1587 = vadd.f32 0.0, %v1586
        %v1588 = vpop.f32.mrb[0].mxu0
        %1589 = vmatprep.mubr.bf16.mxu0 0
        %1590 = vmatmul.mubr.bf16.gmra.mrb[0].mxu0 %v1241
        %v1591 = vpop.f32.mrb[0].mxu0
        %v1592 = vadd.f32 0.0, %v1591
        %v1593 = vpop.f32.mrb[0].mxu0
        %v1594 = vpop.f32.mrb[0].mxu0
        %v1595 = vadd.f32 0.0, %v1594
        %v1596 = vpop.f32.mrb[0].mxu0
        %1597 = vmatprep.mubr.bf16.mxu0 0
        %1598 = vmatmul.mubr.bf16.gmra.mrb[0].mxu0 %v1242
        %v1599 = vpop.f32.mrb[0].mxu0
        %v1600 = vadd.f32 0.0, %v1599
        %v1601 = vpop.f32.mrb[0].mxu0
        %v1602 = vpop.f32.mrb[0].mxu0
        %v1603 = vadd.f32 0.0, %v1602
        %v1604 = vpop.f32.mrb[0].mxu0
        %1605 = vmatprep.mubr.bf16.mxu0 0
        %1606 = vmatmul.mubr.bf16.gmra.mrb[0].mxu0 %v1243
        %v1607 = vpop.f32.mrb[0].mxu0
        %v1608 = vadd.f32 0.0, %v1607
        %v1609 = vpop.f32.mrb[0].mxu0
        %v1610 = vpop.f32.mrb[0].mxu0
        %v1611 = vadd.f32 0.0, %v1610
        %v1612 = vpop.f32.mrb[0].mxu0
        %1613 = vdwg.mxu0
        %v1614 = vpack.c.bf16 %v1220, %v1219
        %v1615 = vpack.c.bf16 %v1222, %v1221
        %v1616 = vpack.c.bf16 %v1224, %v1223
        %v1617 = vpack.c.bf16 %v1226, %v1225
        %v1618 = vpack.c.bf16 %v1228, %v1227
        %v1619 = vpack.c.bf16 %v1230, %v1229
        %v1620 = vpack.c.bf16 %v1232, %v1231
        %v1621 = vpack.c.bf16 %v1234, %v1233
        %1622 = vmatprep.subr.bf16.mxu0 %v1357
        %1623 = vmatpush1.bf16.msra.mxu0 %v1356
        %1624 = vmatprep.subr.bf16.mxu0 %v1360
        %1625 = vmatpush1.bf16.msra.mxu0 %v1359
        %1626 = vmatprep.subr.bf16.mxu0 %v1363
        %1627 = vmatpush1.bf16.msra.mxu0 %v1362
        %1628 = vmatprep.subr.bf16.mxu0 %v1366
        %1629 = vmatpush1.bf16.msra.mxu0 %v1365
        %1630 = vmatprep.subr.bf16.mxu0 %v1369
        %1631 = vmatpush1.bf16.msra.mxu0 %v1368
        %1632 = vmatprep.subr.bf16.mxu0 %v1372
        %1633 = vmatpush1.bf16.msra.mxu0 %v1371
        %1634 = vmatprep.subr.bf16.mxu0 %v1375
        %1635 = vmatpush1.bf16.msra.mxu0 %v1374
        %1636 = vmatprep.subr.bf16.mxu0 %v1378
        %1637 = vmatpush1.bf16.msra.mxu0 %v1377
        %1638 = vmatprep.subr.bf16.mxu0 0
        %1639 = vmatpush1.bf16.msra.mxu0 0
        %1640 = vmatprep.subr.bf16.mxu0 0
        %1641 = vmatpush1.bf16.msra.mxu0 0
        %1642 = vmatprep.subr.bf16.mxu0 0
        %1643 = vmatpush1.bf16.msra.mxu0 0
        %1644 = vmatprep.subr.bf16.mxu0 0
        %1645 = vmatpush1.bf16.msra.mxu0 0
        %1646 = vmatprep.subr.bf16.mxu0 0
        %1647 = vmatpush1.bf16.msra.mxu0 0
        %1648 = vmatprep.subr.bf16.mxu0 0
        %1649 = vmatpush1.bf16.msra.mxu0 0
        %1650 = vmatprep.subr.bf16.mxu0 0
        %1651 = vmatpush1.bf16.msra.mxu0 0
        %1652 = vmatprep.subr.bf16.mxu0 0
        %1653 = vmatpush1.bf16.msra.mxu0 0
        %1654 = vmatprep.mubr.bf16.mxu0 0
        %1655 = vmatmul.mubr.bf16.gmra.mrb[0].mxu0 %v1614
        %v1656 = vpop.f32.mrb[0].mxu0
        %v1657 = vadd.f32 0.0, %v1656
        %v1658 = vpop.f32.mrb[0].mxu0
        %v1659 = vadd.f32 0.0, %v1658
        %v1660 = vpop.f32.mrb[0].mxu0
        %v1661 = vadd.f32 0.0, %v1660
        %v1662 = vpop.f32.mrb[0].mxu0
        %v1663 = vadd.f32 0.0, %v1662
        %1664 = vmatprep.mubr.bf16.mxu0 0
        %1665 = vmatmul.mubr.bf16.gmra.mrb[0].mxu0 %v1615
        %v1666 = vpop.f32.mrb[0].mxu0
        %v1667 = vadd.f32 0.0, %v1666
        %v1668 = vpop.f32.mrb[0].mxu0
        %v1669 = vadd.f32 0.0, %v1668
        %v1670 = vpop.f32.mrb[0].mxu0
        %v1671 = vadd.f32 0.0, %v1670
        %v1672 = vpop.f32.mrb[0].mxu0
        %v1673 = vadd.f32 0.0, %v1672
        %1674 = vmatprep.mubr.bf16.mxu0 0
        %1675 = vmatmul.mubr.bf16.gmra.mrb[0].mxu0 %v1616
        %v1676 = vpop.f32.mrb[0].mxu0
        %v1677 = vadd.f32 0.0, %v1676
        %v1678 = vpop.f32.mrb[0].mxu0
        %v1679 = vadd.f32 0.0, %v1678
        %v1680 = vpop.f32.mrb[0].mxu0
        %v1681 = vadd.f32 0.0, %v1680
        %v1682 = vpop.f32.mrb[0].mxu0
        %v1683 = vadd.f32 0.0, %v1682
        %1684 = vmatprep.mubr.bf16.mxu0 0
        %1685 = vmatmul.mubr.bf16.gmra.mrb[0].mxu0 %v1617
        %v1686 = vpop.f32.mrb[0].mxu0
        %v1687 = vadd.f32 0.0, %v1686
        %v1688 = vpop.f32.mrb[0].mxu0
        %v1689 = vadd.f32 0.0, %v1688
        %v1690 = vpop.f32.mrb[0].mxu0
        %v1691 = vadd.f32 0.0, %v1690
        %v1692 = vpop.f32.mrb[0].mxu0
        %v1693 = vadd.f32 0.0, %v1692
        %1694 = vmatprep.mubr.bf16.mxu0 0
        %1695 = vmatmul.mubr.bf16.gmra.mrb[0].mxu0 %v1618
        %v1696 = vpop.f32.mrb[0].mxu0
        %v1697 = vadd.f32 0.0, %v1696
        %v1698 = vpop.f32.mrb[0].mxu0
        %v1699 = vadd.f32 0.0, %v1698
        %v1700 = vpop.f32.mrb[0].mxu0
        %v1701 = vadd.f32 0.0, %v1700
        %v1702 = vpop.f32.mrb[0].mxu0
        %v1703 = vadd.f32 0.0, %v1702
        %1704 = vmatprep.mubr.bf16.mxu0 0
        %1705 = vmatmul.mubr.bf16.gmra.mrb[0].mxu0 %v1619
        %v1706 = vpop.f32.mrb[0].mxu0
        %v1707 = vadd.f32 0.0, %v1706
        %v1708 = vpop.f32.mrb[0].mxu0
        %v1709 = vadd.f32 0.0, %v1708
        %v1710 = vpop.f32.mrb[0].mxu0
        %v1711 = vadd.f32 0.0, %v1710
        %v1712 = vpop.f32.mrb[0].mxu0
        %v1713 = vadd.f32 0.0, %v1712
        %1714 = vmatprep.mubr.bf16.mxu0 0
        %1715 = vmatmul.mubr.bf16.gmra.mrb[0].mxu0 %v1620
        %v1716 = vpop.f32.mrb[0].mxu0
        %v1717 = vadd.f32 0.0, %v1716
        %v1718 = vpop.f32.mrb[0].mxu0
        %v1719 = vadd.f32 0.0, %v1718
        %v1720 = vpop.f32.mrb[0].mxu0
        %v1721 = vadd.f32 0.0, %v1720
        %v1722 = vpop.f32.mrb[0].mxu0
        %v1723 = vadd.f32 0.0, %v1722
        %1724 = vmatprep.mubr.bf16.mxu0 0
        %1725 = vmatmul.mubr.bf16.gmra.mrb[0].mxu0 %v1621
        %v1726 = vpop.f32.mrb[0].mxu0
        %v1727 = vadd.f32 0.0, %v1726
        %v1728 = vpop.f32.mrb[0].mxu0
        %v1729 = vadd.f32 0.0, %v1728
        %v1730 = vpop.f32.mrb[0].mxu0
        %v1731 = vadd.f32 0.0, %v1730
        %v1732 = vpop.f32.mrb[0].mxu0
        %v1733 = vadd.f32 0.0, %v1732
        %1734 = vdwg.mxu0
        %1735 = vmatprep.subr.bf16.mxu0 0
        %1736 = vmatpush1.bf16.msra.mxu0 %v1358
        %1737 = vmatprep.subr.bf16.mxu0 0
        %1738 = vmatpush1.bf16.msra.mxu0 %v1361
        %1739 = vmatprep.subr.bf16.mxu0 0
        %1740 = vmatpush1.bf16.msra.mxu0 %v1364
        %1741 = vmatprep.subr.bf16.mxu0 0
        %1742 = vmatpush1.bf16.msra.mxu0 %v1367
        %1743 = vmatprep.subr.bf16.mxu0 0
        %1744 = vmatpush1.bf16.msra.mxu0 %v1370
        %1745 = vmatprep.subr.bf16.mxu0 0
        %1746 = vmatpush1.bf16.msra.mxu0 %v1373
        %1747 = vmatprep.subr.bf16.mxu0 0
        %1748 = vmatpush1.bf16.msra.mxu0 %v1376
        %1749 = vmatprep.subr.bf16.mxu0 0
        %1750 = vmatpush1.bf16.msra.mxu0 %v1379
        %1751 = vmatprep.subr.bf16.mxu0 0
        %1752 = vmatpush1.bf16.msra.mxu0 0
        %1753 = vmatprep.subr.bf16.mxu0 0
        %1754 = vmatpush1.bf16.msra.mxu0 0
        %1755 = vmatprep.subr.bf16.mxu0 0
        %1756 = vmatpush1.bf16.msra.mxu0 0
        %1757 = vmatprep.subr.bf16.mxu0 0
        %1758 = vmatpush1.bf16.msra.mxu0 0
        %1759 = vmatprep.subr.bf16.mxu0 0
        %1760 = vmatpush1.bf16.msra.mxu0 0
        %1761 = vmatprep.subr.bf16.mxu0 0
        %1762 = vmatpush1.bf16.msra.mxu0 0
        %1763 = vmatprep.subr.bf16.mxu0 0
        %1764 = vmatpush1.bf16.msra.mxu0 0
        %1765 = vmatprep.subr.bf16.mxu0 0
        %1766 = vmatpush1.bf16.msra.mxu0 0
        %1767 = vmatprep.mubr.bf16.mxu0 0
        %1768 = vmatmul.mubr.bf16.gmra.mrb[0].mxu0 %v1614
        %v1769 = vpop.f32.mrb[0].mxu0
        %v1770 = vadd.f32 0.0, %v1769
        %v1771 = vpop.f32.mrb[0].mxu0
        %v1772 = vpop.f32.mrb[0].mxu0
        %v1773 = vadd.f32 0.0, %v1772
        %v1774 = vpop.f32.mrb[0].mxu0
        %1775 = vmatprep.mubr.bf16.mxu0 0
        %1776 = vmatmul.mubr.bf16.gmra.mrb[0].mxu0 %v1615
        %v1777 = vpop.f32.mrb[0].mxu0
        %v1778 = vadd.f32 0.0, %v1777
        %v1779 = vpop.f32.mrb[0].mxu0
        %v1780 = vpop.f32.mrb[0].mxu0
        %v1781 = vadd.f32 0.0, %v1780
        %v1782 = vpop.f32.mrb[0].mxu0
        %1783 = vmatprep.mubr.bf16.mxu0 0
        %1784 = vmatmul.mubr.bf16.gmra.mrb[0].mxu0 %v1616
        %v1785 = vpop.f32.mrb[0].mxu0
        %v1786 = vadd.f32 0.0, %v1785
        %v1787 = vpop.f32.mrb[0].mxu0
        %v1788 = vpop.f32.mrb[0].mxu0
        %v1789 = vadd.f32 0.0, %v1788
        %v1790 = vpop.f32.mrb[0].mxu0
        %1791 = vmatprep.mubr.bf16.mxu0 0
        %1792 = vmatmul.mubr.bf16.gmra.mrb[0].mxu0 %v1617
        %v1793 = vpop.f32.mrb[0].mxu0
        %v1794 = vadd.f32 0.0, %v1793
        %v1795 = vpop.f32.mrb[0].mxu0
        %v1796 = vpop.f32.mrb[0].mxu0
        %v1797 = vadd.f32 0.0, %v1796
        %v1798 = vpop.f32.mrb[0].mxu0
        %1799 = vmatprep.mubr.bf16.mxu0 0
        %1800 = vmatmul.mubr.bf16.gmra.mrb[0].mxu0 %v1618
        %v1801 = vpop.f32.mrb[0].mxu0
        %v1802 = vadd.f32 0.0, %v1801
        %v1803 = vpop.f32.mrb[0].mxu0
        %v1804 = vpop.f32.mrb[0].mxu0
        %v1805 = vadd.f32 0.0, %v1804
        %v1806 = vpop.f32.mrb[0].mxu0
        %1807 = vmatprep.mubr.bf16.mxu0 0
        %1808 = vmatmul.mubr.bf16.gmra.mrb[0].mxu0 %v1619
        %v1809 = vpop.f32.mrb[0].mxu0
        %v1810 = vadd.f32 0.0, %v1809
        %v1811 = vpop.f32.mrb[0].mxu0
        %v1812 = vpop.f32.mrb[0].mxu0
        %v1813 = vadd.f32 0.0, %v1812
        %v1814 = vpop.f32.mrb[0].mxu0
        %1815 = vmatprep.mubr.bf16.mxu0 0
        %1816 = vmatmul.mubr.bf16.gmra.mrb[0].mxu0 %v1620
        %v1817 = vpop.f32.mrb[0].mxu0
        %v1818 = vadd.f32 0.0, %v1817
        %v1819 = vpop.f32.mrb[0].mxu0
        %v1820 = vpop.f32.mrb[0].mxu0
        %v1821 = vadd.f32 0.0, %v1820
        %v1822 = vpop.f32.mrb[0].mxu0
        %1823 = vmatprep.mubr.bf16.mxu0 0
        %1824 = vmatmul.mubr.bf16.gmra.mrb[0].mxu0 %v1621
        %v1825 = vpop.f32.mrb[0].mxu0
        %v1826 = vadd.f32 0.0, %v1825
        %v1827 = vpop.f32.mrb[0].mxu0
        %v1828 = vpop.f32.mrb[0].mxu0
        %v1829 = vadd.f32 0.0, %v1828
        %v1830 = vpop.f32.mrb[0].mxu0
        %1831 = vdwg.mxu0
        %v1833 = vlaneseq
        %v1834 = vshrl.u32 %v1833, 7
        %v1835 = vsub.s32 0, %v1834
        %v1836 = vrot.slane %v1235, %v1835
        %v1838 = vadd.f32 %v1439, %v1836
        %v1839 = vadd.f32 %v1443, %v1836
        %v1840 = vadd.f32 %v1449, %v1836
        %v1841 = vadd.f32 %v1453, %v1836
        %v1842 = vadd.f32 %v1459, %v1836
        %v1843 = vadd.f32 %v1463, %v1836
        %v1844 = vadd.f32 %v1469, %v1836
        %v1845 = vadd.f32 %v1473, %v1836
        %v1846 = vadd.f32 %v1479, %v1836
        %v1847 = vadd.f32 %v1483, %v1836
        %v1848 = vadd.f32 %v1489, %v1836
        %v1849 = vadd.f32 %v1493, %v1836
        %v1850 = vadd.f32 %v1499, %v1836
        %v1851 = vadd.f32 %v1503, %v1836
        %v1852 = vadd.f32 %v1509, %v1836
        %v1853 = vadd.f32 %v1513, %v1836
        %v1854 = vmax.f32 %v1838, 0.0
        %v1855 = vmax.f32 %v1839, 0.0
        %v1856 = vmax.f32 %v1840, 0.0
        %v1857 = vmax.f32 %v1841, 0.0
        %v1858 = vmax.f32 %v1842, 0.0
        %v1859 = vmax.f32 %v1843, 0.0
        %v1860 = vmax.f32 %v1844, 0.0
        %v1861 = vmax.f32 %v1845, 0.0
        %v1862 = vmax.f32 %v1846, 0.0
        %v1863 = vmax.f32 %v1847, 0.0
        %v1864 = vmax.f32 %v1848, 0.0
        %v1865 = vmax.f32 %v1849, 0.0
        %v1866 = vmax.f32 %v1850, 0.0
        %v1867 = vmax.f32 %v1851, 0.0
        %v1868 = vmax.f32 %v1852, 0.0
        %v1869 = vmax.f32 %v1853, 0.0
        %v1870 = vadd.f32 %v1441, %v1770
        %v1871 = vadd.f32 %v1445, %v1773
        %v1872 = vadd.f32 %v1451, %v1778
        %v1873 = vadd.f32 %v1455, %v1781
        %v1874 = vadd.f32 %v1461, %v1786
        %v1875 = vadd.f32 %v1465, %v1789
        %v1876 = vadd.f32 %v1471, %v1794
        %v1877 = vadd.f32 %v1475, %v1797
        %v1878 = vadd.f32 %v1481, %v1802
        %v1879 = vadd.f32 %v1485, %v1805
        %v1880 = vadd.f32 %v1491, %v1810
        %v1881 = vadd.f32 %v1495, %v1813
        %v1882 = vadd.f32 %v1501, %v1818
        %v1883 = vadd.f32 %v1505, %v1821
        %v1884 = vadd.f32 %v1511, %v1826
        %v1885 = vadd.f32 %v1515, %v1829
        %v1886 = vadd.f32 %v1870, %v1836
        %v1887 = vadd.f32 %v1871, %v1836
        %v1888 = vadd.f32 %v1872, %v1836
        %v1889 = vadd.f32 %v1873, %v1836
        %v1890 = vadd.f32 %v1874, %v1836
        %v1891 = vadd.f32 %v1875, %v1836
        %v1892 = vadd.f32 %v1876, %v1836
        %v1893 = vadd.f32 %v1877, %v1836
        %v1894 = vadd.f32 %v1878, %v1836
        %v1895 = vadd.f32 %v1879, %v1836
        %v1896 = vadd.f32 %v1880, %v1836
        %v1897 = vadd.f32 %v1881, %v1836
        %v1898 = vadd.f32 %v1882, %v1836
        %v1899 = vadd.f32 %v1883, %v1836
        %v1900 = vadd.f32 %v1884, %v1836
        %v1901 = vadd.f32 %v1885, %v1836
        %v1902 = vmax.f32 %v1886, 0.0
        %v1903 = vmax.f32 %v1887, 0.0
        %v1904 = vmax.f32 %v1888, 0.0
        %v1905 = vmax.f32 %v1889, 0.0
        %v1906 = vmax.f32 %v1890, 0.0
        %v1907 = vmax.f32 %v1891, 0.0
        %v1908 = vmax.f32 %v1892, 0.0
        %v1909 = vmax.f32 %v1893, 0.0
        %v1910 = vmax.f32 %v1894, 0.0
        %v1911 = vmax.f32 %v1895, 0.0
        %v1912 = vmax.f32 %v1896, 0.0
        %v1913 = vmax.f32 %v1897, 0.0
        %v1914 = vmax.f32 %v1898, 0.0
        %v1915 = vmax.f32 %v1899, 0.0
        %v1916 = vmax.f32 %v1900, 0.0
        %v1917 = vmax.f32 %v1901, 0.0
        %1918 = vst [vmem:[#allocation2 + $0x10] sm:$0xff] %v1552
        %1919 = vst [vmem:[#allocation2 + $0x18] sm:$0xff] %v1555
        %1920 = vst [vmem:[#allocation2 + $0x20] sm:$0xff] %v1560
        %1921 = vst [vmem:[#allocation2 + $0x28] sm:$0xff] %v1563
        %1922 = vst [vmem:[#allocation2 + $0x30] sm:$0xff] %v1568
        %1923 = vst [vmem:[#allocation2 + $0x38] sm:$0xff] %v1571
        %1924 = vst [vmem:[#allocation2 + $0x40] sm:$0xff] %v1576
        %1925 = vst [vmem:[#allocation2 + $0x48] sm:$0xff] %v1579
        %1926 = vst [vmem:[#allocation2 + $0x50] sm:$0xff] %v1584
        %1927 = vst [vmem:[#allocation2 + $0x58] sm:$0xff] %v1587
        %1928 = vst [vmem:[#allocation2 + $0x60] sm:$0xff] %v1592
        %1929 = vst [vmem:[#allocation2 + $0x68] sm:$0xff] %v1595
        %1930 = vst [vmem:[#allocation2 + $0x70] sm:$0xff] %v1600
        %1931 = vst [vmem:[#allocation2 + $0x78] sm:$0xff] %v1603
        %1932 = vst [vmem:[#allocation2 + $0x80] sm:$0xff] %v1608
        %1933 = vst [vmem:[#allocation2 + $0x88] sm:$0xff] %v1611
        %v1934 = vld [vmem:[#allocation2 + $0x20] sm:$0xff]
        %v1935 = vld [vmem:[#allocation2 + $0x28] sm:$0xff]
        %v1936 = vld [vmem:[#allocation2 + $0x30] sm:$0xff]
        %v1937 = vld [vmem:[#allocation2 + $0x38] sm:$0xff]
        %v1938 = vld [vmem:[#allocation2 + $0x40] sm:$0xff]
        %v1939 = vld [vmem:[#allocation2 + $0x48] sm:$0xff]
        %v1940 = vld [vmem:[#allocation2 + $0x50] sm:$0xff]
        %v1941 = vld [vmem:[#allocation2 + $0x58] sm:$0xff]
        %v1942 = vld [vmem:[#allocation2 + $0x60] sm:$0xff]
        %v1943 = vld [vmem:[#allocation2 + $0x68] sm:$0xff]
        %v1944 = vld [vmem:[#allocation2 + $0x70] sm:$0xff]
        %v1945 = vld [vmem:[#allocation2 + $0x78] sm:$0xff]
        %v1946 = vld [vmem:[#allocation2 + $0x80] sm:$0xff]
        %v1947 = vld [vmem:[#allocation2 + $0x88] sm:$0xff]
        %v1948 = vld [vmem:[#allocation2 + $0x90] sm:$0xff]
        %v1949 = vld [vmem:[#allocation2 + $0x98] sm:$0xff]
        %v1950 = vadd.f32 %v1657, %v1836
        %v1951 = vadd.f32 %v1661, %v1836
        %v1952 = vadd.f32 %v1667, %v1836
        %v1953 = vadd.f32 %v1671, %v1836
        %v1954 = vadd.f32 %v1677, %v1836
        %v1955 = vadd.f32 %v1681, %v1836
        %v1956 = vadd.f32 %v1687, %v1836
        %v1957 = vadd.f32 %v1691, %v1836
        %v1958 = vadd.f32 %v1697, %v1836
        %v1959 = vadd.f32 %v1701, %v1836
        %v1960 = vadd.f32 %v1707, %v1836
        %v1961 = vadd.f32 %v1711, %v1836
        %v1962 = vadd.f32 %v1717, %v1836
        %v1963 = vadd.f32 %v1721, %v1836
        %v1964 = vadd.f32 %v1727, %v1836
        %v1965 = vadd.f32 %v1731, %v1836
        %v1966 = vmax.f32 %v1950, 0.0
        %v1967 = vmax.f32 %v1951, 0.0
        %v1968 = vmax.f32 %v1952, 0.0
        %v1969 = vmax.f32 %v1953, 0.0
        %v1970 = vmax.f32 %v1954, 0.0
        %v1971 = vmax.f32 %v1955, 0.0
        %v1972 = vmax.f32 %v1956, 0.0
        %v1973 = vmax.f32 %v1957, 0.0
        %v1974 = vmax.f32 %v1958, 0.0
        %v1975 = vmax.f32 %v1959, 0.0
        %v1976 = vmax.f32 %v1960, 0.0
        %v1977 = vmax.f32 %v1961, 0.0
        %v1978 = vmax.f32 %v1962, 0.0
        %v1979 = vmax.f32 %v1963, 0.0
        %v1980 = vmax.f32 %v1964, 0.0
        %v1981 = vmax.f32 %v1965, 0.0
        %v1982 = vadd.f32 %v1659, %v1934
        %v1983 = vadd.f32 %v1663, %v1935
        %v1984 = vadd.f32 %v1669, %v1936
        %v1985 = vadd.f32 %v1673, %v1937
        %v1986 = vadd.f32 %v1679, %v1938
        %v1987 = vadd.f32 %v1683, %v1939
        %v1988 = vadd.f32 %v1689, %v1940
        %v1989 = vadd.f32 %v1693, %v1941
        %v1990 = vadd.f32 %v1699, %v1942
        %v1991 = vadd.f32 %v1703, %v1943
        %v1992 = vadd.f32 %v1709, %v1944
        %v1993 = vadd.f32 %v1713, %v1945
        %v1994 = vadd.f32 %v1719, %v1946
        %v1995 = vadd.f32 %v1723, %v1947
        %v1996 = vadd.f32 %v1729, %v1948
        %v1997 = vadd.f32 %v1733, %v1949
        %v1998 = vadd.f32 %v1982, %v1836
        %v1999 = vadd.f32 %v1983, %v1836
        %v2000 = vadd.f32 %v1984, %v1836
        %v2001 = vadd.f32 %v1985, %v1836
        %v2002 = vadd.f32 %v1986, %v1836
        %v2003 = vadd.f32 %v1987, %v1836
        %v2004 = vadd.f32 %v1988, %v1836
        %v2005 = vadd.f32 %v1989, %v1836
        %v2006 = vadd.f32 %v1990, %v1836
        %v2007 = vadd.f32 %v1991, %v1836
        %v2008 = vadd.f32 %v1992, %v1836
        %v2009 = vadd.f32 %v1993, %v1836
        %v2010 = vadd.f32 %v1994, %v1836
        %v2011 = vadd.f32 %v1995, %v1836
        %v2012 = vadd.f32 %v1996, %v1836
        %v2013 = vadd.f32 %v1997, %v1836
        %v2014 = vmax.f32 %v1998, 0.0
        %v2015 = vmax.f32 %v1999, 0.0
        %v2016 = vmax.f32 %v2000, 0.0
        %v2017 = vmax.f32 %v2001, 0.0
        %v2018 = vmax.f32 %v2002, 0.0
        %v2019 = vmax.f32 %v2003, 0.0
        %v2020 = vmax.f32 %v2004, 0.0
        %v2021 = vmax.f32 %v2005, 0.0
        %v2022 = vmax.f32 %v2006, 0.0
        %v2023 = vmax.f32 %v2007, 0.0
        %v2024 = vmax.f32 %v2008, 0.0
        %v2025 = vmax.f32 %v2009, 0.0
        %v2026 = vmax.f32 %v2010, 0.0
        %v2027 = vmax.f32 %v2011, 0.0
        %v2028 = vmax.f32 %v2012, 0.0
        %v2029 = vmax.f32 %v2013, 0.0
        %v2030 = vld [vmem:[%s8] sm:$0x1]
        %v2031 = vpack.c.bf16 %v1855, %v1854
        %v2032 = vpack.c.bf16 %v1857, %v1856
        %v2033 = vpack.c.bf16 %v1859, %v1858
        %v2034 = vpack.c.bf16 %v1861, %v1860
        %v2035 = vpack.c.bf16 %v1863, %v1862
        %v2036 = vpack.c.bf16 %v1865, %v1864
        %v2037 = vpack.c.bf16 %v1867, %v1866
        %v2038 = vpack.c.bf16 %v1869, %v1868
        %v2039 = vld [vmem:[%s7] sm:$0xff]
        %v2040 = vld [vmem:[%s7 + $0x8] sm:$0xf]
        %v2041 = vld [vmem:[%s7 + $0xc] sm:$0xff]
        %v2042 = vld [vmem:[%s7 + $0x14] sm:$0xf]
        %v2043 = vld [vmem:[%s7 + $0x18] sm:$0xff]
        %v2044 = vld [vmem:[%s7 + $0x20] sm:$0xf]
        %v2045 = vld [vmem:[%s7 + $0x24] sm:$0xff]
        %v2046 = vld [vmem:[%s7 + $0x2c] sm:$0xf]
        %v2047 = vld [vmem:[%s7 + $0x30] sm:$0xff]
        %v2048 = vld [vmem:[%s7 + $0x38] sm:$0xf]
        %v2049 = vld [vmem:[%s7 + $0x3c] sm:$0xff]
        %v2050 = vld [vmem:[%s7 + $0x44] sm:$0xf]
        %v2051 = vld [vmem:[%s7 + $0x48] sm:$0xff]
        %v2052 = vld [vmem:[%s7 + $0x50] sm:$0xf]
        %v2053 = vld [vmem:[%s7 + $0x54] sm:$0xff]
        %v2054 = vld [vmem:[%s7 + $0x5c] sm:$0xf]
        %v2055 = vld [vmem:[%s7 + $0x60] sm:$0xff]
        %v2056 = vld [vmem:[%s7 + $0x68] sm:$0xf]
        %v2057 = vld [vmem:[%s7 + $0x6c] sm:$0xff]
        %v2058 = vld [vmem:[%s7 + $0x74] sm:$0xf]
        %v2059 = vld [vmem:[%s7 + $0x78] sm:$0xff]
        %v2060 = vld [vmem:[%s7 + $0x80] sm:$0xf]
        %v2061 = vld [vmem:[%s7 + $0x84] sm:$0xff]
        %v2062 = vld [vmem:[%s7 + $0x8c] sm:$0xf]
        %v2063 = vld [vmem:[%s7 + $0x90] sm:$0xff]
        %v2064 = vld [vmem:[%s7 + $0x98] sm:$0xf]
        %v2065 = vld [vmem:[%s7 + $0x9c] sm:$0xff]
        %v2066 = vld [vmem:[%s7 + $0xa4] sm:$0xf]
        %v2067 = vld [vmem:[%s7 + $0xa8] sm:$0xff]
        %v2068 = vld [vmem:[%s7 + $0xb0] sm:$0xf]
        %v2069 = vld [vmem:[%s7 + $0xb4] sm:$0xff]
        %v2070 = vld [vmem:[%s7 + $0xbc] sm:$0xf]
        %v2103 = vunpack.c.l.b16 %v2039
        %v2104 = vunpack.c.h.b16 %v2039
        %v2105 = vunpack.c.l.b16 %v2040
        %v2106 = vunpack.c.l.b16 %v2041
        %v2107 = vunpack.c.h.b16 %v2041
        %v2108 = vunpack.c.l.b16 %v2042
        %v2109 = vunpack.c.l.b16 %v2043
        %v2110 = vunpack.c.h.b16 %v2043
        %v2111 = vunpack.c.l.b16 %v2044
        %v2112 = vunpack.c.l.b16 %v2045
        %v2113 = vunpack.c.h.b16 %v2045
        %v2114 = vunpack.c.l.b16 %v2046
        %v2115 = vunpack.c.l.b16 %v2047
        %v2116 = vunpack.c.h.b16 %v2047
        %v2117 = vunpack.c.l.b16 %v2048
        %v2118 = vunpack.c.l.b16 %v2049
        %v2119 = vunpack.c.h.b16 %v2049
        %v2120 = vunpack.c.l.b16 %v2050
        %v2121 = vunpack.c.l.b16 %v2051
        %v2122 = vunpack.c.h.b16 %v2051
        %v2123 = vunpack.c.l.b16 %v2052
        %v2124 = vunpack.c.l.b16 %v2053
        %v2125 = vunpack.c.h.b16 %v2053
        %v2126 = vunpack.c.l.b16 %v2054
        %v2127 = vunpack.c.l.b16 %v2055
        %v2128 = vunpack.c.h.b16 %v2055
        %v2129 = vunpack.c.l.b16 %v2056
        %v2130 = vunpack.c.l.b16 %v2057
        %v2131 = vunpack.c.h.b16 %v2057
        %v2132 = vunpack.c.l.b16 %v2058
        %v2133 = vunpack.c.l.b16 %v2059
        %v2134 = vunpack.c.h.b16 %v2059
        %v2135 = vunpack.c.l.b16 %v2060
        %v2136 = vunpack.c.l.b16 %v2061
        %v2137 = vunpack.c.h.b16 %v2061
        %v2138 = vunpack.c.l.b16 %v2062
        %v2139 = vunpack.c.l.b16 %v2063
        %v2140 = vunpack.c.h.b16 %v2063
        %v2141 = vunpack.c.l.b16 %v2064
        %v2142 = vunpack.c.l.b16 %v2065
        %v2143 = vunpack.c.h.b16 %v2065
        %v2144 = vunpack.c.l.b16 %v2066
        %v2145 = vunpack.c.l.b16 %v2067
        %v2146 = vunpack.c.h.b16 %v2067
        %v2147 = vunpack.c.l.b16 %v2068
        %v2148 = vunpack.c.l.b16 %v2069
        %v2149 = vunpack.c.h.b16 %v2069
        %v2150 = vunpack.c.l.b16 %v2070
        %v2151 = vpack.c.b16 %v2106, %v2103
        %v2152 = vpack.c.b16 %v2107, %v2104
        %v2153 = vpack.c.b16 %v2108, %v2105
        %v2154 = vpack.c.b16 %v2112, %v2109
        %v2155 = vpack.c.b16 %v2113, %v2110
        %v2156 = vpack.c.b16 %v2114, %v2111
        %v2157 = vpack.c.b16 %v2118, %v2115
        %v2158 = vpack.c.b16 %v2119, %v2116
        %v2159 = vpack.c.b16 %v2120, %v2117
        %v2160 = vpack.c.b16 %v2124, %v2121
        %v2161 = vpack.c.b16 %v2125, %v2122
        %v2162 = vpack.c.b16 %v2126, %v2123
        %v2163 = vpack.c.b16 %v2130, %v2127
        %v2164 = vpack.c.b16 %v2131, %v2128
        %v2165 = vpack.c.b16 %v2132, %v2129
        %v2166 = vpack.c.b16 %v2136, %v2133
        %v2167 = vpack.c.b16 %v2137, %v2134
        %v2168 = vpack.c.b16 %v2138, %v2135
        %v2169 = vpack.c.b16 %v2142, %v2139
        %v2170 = vpack.c.b16 %v2143, %v2140
        %v2171 = vpack.c.b16 %v2144, %v2141
        %v2172 = vpack.c.b16 %v2148, %v2145
        %v2173 = vpack.c.b16 %v2149, %v2146
        %v2174 = vpack.c.b16 %v2150, %v2147
        %2199 = vmatprep.subr.bf16.mxu0 %v2152
        %2200 = vmatpush1.bf16.msra.mxu0 %v2151
        %2201 = vmatprep.subr.bf16.mxu0 %v2155
        %2202 = vmatpush1.bf16.msra.mxu0 %v2154
        %2203 = vmatprep.subr.bf16.mxu0 %v2158
        %2204 = vmatpush1.bf16.msra.mxu0 %v2157
        %2205 = vmatprep.subr.bf16.mxu0 %v2161
        %2206 = vmatpush1.bf16.msra.mxu0 %v2160
        %2207 = vmatprep.subr.bf16.mxu0 %v2164
        %2208 = vmatpush1.bf16.msra.mxu0 %v2163
        %2209 = vmatprep.subr.bf16.mxu0 %v2167
        %2210 = vmatpush1.bf16.msra.mxu0 %v2166
        %2211 = vmatprep.subr.bf16.mxu0 %v2170
        %2212 = vmatpush1.bf16.msra.mxu0 %v2169
        %2213 = vmatprep.subr.bf16.mxu0 %v2173
        %2214 = vmatpush1.bf16.msra.mxu0 %v2172
        %2215 = vmatprep.subr.bf16.mxu0 0
        %2216 = vmatpush1.bf16.msra.mxu0 0
        %2217 = vmatprep.subr.bf16.mxu0 0
        %2218 = vmatpush1.bf16.msra.mxu0 0
        %2219 = vmatprep.subr.bf16.mxu0 0
        %2220 = vmatpush1.bf16.msra.mxu0 0
        %2221 = vmatprep.subr.bf16.mxu0 0
        %2222 = vmatpush1.bf16.msra.mxu0 0
        %2223 = vmatprep.subr.bf16.mxu0 0
        %2224 = vmatpush1.bf16.msra.mxu0 0
        %2225 = vmatprep.subr.bf16.mxu0 0
        %2226 = vmatpush1.bf16.msra.mxu0 0
        %2227 = vmatprep.subr.bf16.mxu0 0
        %2228 = vmatpush1.bf16.msra.mxu0 0
        %2229 = vmatprep.subr.bf16.mxu0 0
        %2230 = vmatpush1.bf16.msra.mxu0 0
        %2231 = vmatprep.mubr.bf16.mxu0 0
        %2232 = vmatmul.mubr.bf16.gmra.mrb[0].mxu0 %v2031
        %v2233 = vpop.f32.mrb[0].mxu0
        %v2234 = vadd.f32 0.0, %v2233
        %v2235 = vpop.f32.mrb[0].mxu0
        %v2236 = vadd.f32 0.0, %v2235
        %v2237 = vpop.f32.mrb[0].mxu0
        %v2238 = vadd.f32 0.0, %v2237
        %v2239 = vpop.f32.mrb[0].mxu0
        %v2240 = vadd.f32 0.0, %v2239
        %2241 = vmatprep.mubr.bf16.mxu0 0
        %2242 = vmatmul.mubr.bf16.gmra.mrb[0].mxu0 %v2032
        %v2243 = vpop.f32.mrb[0].mxu0
        %v2244 = vadd.f32 0.0, %v2243
        %v2245 = vpop.f32.mrb[0].mxu0
        %v2246 = vadd.f32 0.0, %v2245
        %v2247 = vpop.f32.mrb[0].mxu0
        %v2248 = vadd.f32 0.0, %v2247
        %v2249 = vpop.f32.mrb[0].mxu0
        %v2250 = vadd.f32 0.0, %v2249
        %2251 = vmatprep.mubr.bf16.mxu0 0
        %2252 = vmatmul.mubr.bf16.gmra.mrb[0].mxu0 %v2033
        %v2253 = vpop.f32.mrb[0].mxu0
        %v2254 = vadd.f32 0.0, %v2253
        %v2255 = vpop.f32.mrb[0].mxu0
        %v2256 = vadd.f32 0.0, %v2255
        %v2257 = vpop.f32.mrb[0].mxu0
        %v2258 = vadd.f32 0.0, %v2257
        %v2259 = vpop.f32.mrb[0].mxu0
        %v2260 = vadd.f32 0.0, %v2259
        %2261 = vmatprep.mubr.bf16.mxu0 0
        %2262 = vmatmul.mubr.bf16.gmra.mrb[0].mxu0 %v2034
        %v2263 = vpop.f32.mrb[0].mxu0
        %v2264 = vadd.f32 0.0, %v2263
        %v2265 = vpop.f32.mrb[0].mxu0
        %v2266 = vadd.f32 0.0, %v2265
        %v2267 = vpop.f32.mrb[0].mxu0
        %v2268 = vadd.f32 0.0, %v2267
        %v2269 = vpop.f32.mrb[0].mxu0
        %v2270 = vadd.f32 0.0, %v2269
        %2271 = vmatprep.mubr.bf16.mxu0 0
        %2272 = vmatmul.mubr.bf16.gmra.mrb[0].mxu0 %v2035
        %v2273 = vpop.f32.mrb[0].mxu0
        %v2274 = vadd.f32 0.0, %v2273
        %v2275 = vpop.f32.mrb[0].mxu0
        %v2276 = vadd.f32 0.0, %v2275
        %v2277 = vpop.f32.mrb[0].mxu0
        %v2278 = vadd.f32 0.0, %v2277
        %v2279 = vpop.f32.mrb[0].mxu0
        %v2280 = vadd.f32 0.0, %v2279
        %2281 = vmatprep.mubr.bf16.mxu0 0
        %2282 = vmatmul.mubr.bf16.gmra.mrb[0].mxu0 %v2036
        %v2283 = vpop.f32.mrb[0].mxu0
        %v2284 = vadd.f32 0.0, %v2283
        %v2285 = vpop.f32.mrb[0].mxu0
        %v2286 = vadd.f32 0.0, %v2285
        %v2287 = vpop.f32.mrb[0].mxu0
        %v2288 = vadd.f32 0.0, %v2287
        %v2289 = vpop.f32.mrb[0].mxu0
        %v2290 = vadd.f32 0.0, %v2289
        %2291 = vmatprep.mubr.bf16.mxu0 0
        %2292 = vmatmul.mubr.bf16.gmra.mrb[0].mxu0 %v2037
        %v2293 = vpop.f32.mrb[0].mxu0
        %v2294 = vadd.f32 0.0, %v2293
        %v2295 = vpop.f32.mrb[0].mxu0
        %v2296 = vadd.f32 0.0, %v2295
        %v2297 = vpop.f32.mrb[0].mxu0
        %v2298 = vadd.f32 0.0, %v2297
        %v2299 = vpop.f32.mrb[0].mxu0
        %v2300 = vadd.f32 0.0, %v2299
        %2301 = vmatprep.mubr.bf16.mxu0 0
        %2302 = vmatmul.mubr.bf16.gmra.mrb[0].mxu0 %v2038
        %v2303 = vpop.f32.mrb[0].mxu0
        %v2304 = vadd.f32 0.0, %v2303
        %v2305 = vpop.f32.mrb[0].mxu0
        %v2306 = vadd.f32 0.0, %v2305
        %v2307 = vpop.f32.mrb[0].mxu0
        %v2308 = vadd.f32 0.0, %v2307
        %v2309 = vpop.f32.mrb[0].mxu0
        %v2310 = vadd.f32 0.0, %v2309
        %2311 = vdwg.mxu0
        %2312 = vmatprep.subr.bf16.mxu0 0
        %2313 = vmatpush1.bf16.msra.mxu0 %v2153
        %2314 = vmatprep.subr.bf16.mxu0 0
        %2315 = vmatpush1.bf16.msra.mxu0 %v2156
        %2316 = vmatprep.subr.bf16.mxu0 0
        %2317 = vmatpush1.bf16.msra.mxu0 %v2159
        %2318 = vmatprep.subr.bf16.mxu0 0
        %2319 = vmatpush1.bf16.msra.mxu0 %v2162
        %2320 = vmatprep.subr.bf16.mxu0 0
        %2321 = vmatpush1.bf16.msra.mxu0 %v2165
        %2322 = vmatprep.subr.bf16.mxu0 0
        %2323 = vmatpush1.bf16.msra.mxu0 %v2168
        %2324 = vmatprep.subr.bf16.mxu0 0
        %2325 = vmatpush1.bf16.msra.mxu0 %v2171
        %2326 = vmatprep.subr.bf16.mxu0 0
        %2327 = vmatpush1.bf16.msra.mxu0 %v2174
        %2328 = vmatprep.subr.bf16.mxu0 0
        %2329 = vmatpush1.bf16.msra.mxu0 0
        %2330 = vmatprep.subr.bf16.mxu0 0
        %2331 = vmatpush1.bf16.msra.mxu0 0
        %2332 = vmatprep.subr.bf16.mxu0 0
        %2333 = vmatpush1.bf16.msra.mxu0 0
        %2334 = vmatprep.subr.bf16.mxu0 0
        %2335 = vmatpush1.bf16.msra.mxu0 0
        %2336 = vmatprep.subr.bf16.mxu0 0
        %2337 = vmatpush1.bf16.msra.mxu0 0
        %2338 = vmatprep.subr.bf16.mxu0 0
        %2339 = vmatpush1.bf16.msra.mxu0 0
        %2340 = vmatprep.subr.bf16.mxu0 0
        %2341 = vmatpush1.bf16.msra.mxu0 0
        %2342 = vmatprep.subr.bf16.mxu0 0
        %2343 = vmatpush1.bf16.msra.mxu0 0
        %2344 = vmatprep.mubr.bf16.mxu0 0
        %2345 = vmatmul.mubr.bf16.gmra.mrb[0].mxu0 %v2031
        %v2346 = vpop.f32.mrb[0].mxu0
        %v2347 = vadd.f32 0.0, %v2346
        %v2348 = vpop.f32.mrb[0].mxu0
        %v2349 = vpop.f32.mrb[0].mxu0
        %v2350 = vadd.f32 0.0, %v2349
        %v2351 = vpop.f32.mrb[0].mxu0
        %2352 = vmatprep.mubr.bf16.mxu0 0
        %2353 = vmatmul.mubr.bf16.gmra.mrb[0].mxu0 %v2032
        %v2354 = vpop.f32.mrb[0].mxu0
        %v2355 = vadd.f32 0.0, %v2354
        %v2356 = vpop.f32.mrb[0].mxu0
        %v2357 = vpop.f32.mrb[0].mxu0
        %v2358 = vadd.f32 0.0, %v2357
        %v2359 = vpop.f32.mrb[0].mxu0
        %2360 = vmatprep.mubr.bf16.mxu0 0
        %2361 = vmatmul.mubr.bf16.gmra.mrb[0].mxu0 %v2033
        %v2362 = vpop.f32.mrb[0].mxu0
        %v2363 = vadd.f32 0.0, %v2362
        %v2364 = vpop.f32.mrb[0].mxu0
        %v2365 = vpop.f32.mrb[0].mxu0
        %v2366 = vadd.f32 0.0, %v2365
        %v2367 = vpop.f32.mrb[0].mxu0
        %2368 = vmatprep.mubr.bf16.mxu0 0
        %2369 = vmatmul.mubr.bf16.gmra.mrb[0].mxu0 %v2034
        %v2370 = vpop.f32.mrb[0].mxu0
        %v2371 = vadd.f32 0.0, %v2370
        %v2372 = vpop.f32.mrb[0].mxu0
        %v2373 = vpop.f32.mrb[0].mxu0
        %v2374 = vadd.f32 0.0, %v2373
        %v2375 = vpop.f32.mrb[0].mxu0
        %2376 = vmatprep.mubr.bf16.mxu0 0
        %2377 = vmatmul.mubr.bf16.gmra.mrb[0].mxu0 %v2035
        %v2378 = vpop.f32.mrb[0].mxu0
        %v2379 = vadd.f32 0.0, %v2378
        %v2380 = vpop.f32.mrb[0].mxu0
        %v2381 = vpop.f32.mrb[0].mxu0
        %v2382 = vadd.f32 0.0, %v2381
        %v2383 = vpop.f32.mrb[0].mxu0
        %2384 = vmatprep.mubr.bf16.mxu0 0
        %2385 = vmatmul.mubr.bf16.gmra.mrb[0].mxu0 %v2036
        %v2386 = vpop.f32.mrb[0].mxu0
        %v2387 = vadd.f32 0.0, %v2386
        %v2388 = vpop.f32.mrb[0].mxu0
        %v2389 = vpop.f32.mrb[0].mxu0
        %v2390 = vadd.f32 0.0, %v2389
        %v2391 = vpop.f32.mrb[0].mxu0
        %2392 = vmatprep.mubr.bf16.mxu0 0
        %2393 = vmatmul.mubr.bf16.gmra.mrb[0].mxu0 %v2037
        %v2394 = vpop.f32.mrb[0].mxu0
        %v2395 = vadd.f32 0.0, %v2394
        %v2396 = vpop.f32.mrb[0].mxu0
        %v2397 = vpop.f32.mrb[0].mxu0
        %v2398 = vadd.f32 0.0, %v2397
        %v2399 = vpop.f32.mrb[0].mxu0
        %2400 = vmatprep.mubr.bf16.mxu0 0
        %2401 = vmatmul.mubr.bf16.gmra.mrb[0].mxu0 %v2038
        %v2402 = vpop.f32.mrb[0].mxu0
        %v2403 = vadd.f32 0.0, %v2402
        %v2404 = vpop.f32.mrb[0].mxu0
        %v2405 = vpop.f32.mrb[0].mxu0
        %v2406 = vadd.f32 0.0, %v2405
        %v2407 = vpop.f32.mrb[0].mxu0
        %2408 = vdwg.mxu0
        %v2409 = vpack.c.bf16 %v1903, %v1902
        %v2410 = vpack.c.bf16 %v1905, %v1904
        %v2411 = vpack.c.bf16 %v1907, %v1906
        %v2412 = vpack.c.bf16 %v1909, %v1908
        %v2413 = vpack.c.bf16 %v1911, %v1910
        %v2414 = vpack.c.bf16 %v1913, %v1912
        %v2415 = vpack.c.bf16 %v1915, %v1914
        %v2416 = vpack.c.bf16 %v1917, %v1916
        %2417 = vmatprep.subr.bf16.mxu0 %v2152
        %2418 = vmatpush1.bf16.msra.mxu0 %v2151
        %2419 = vmatprep.subr.bf16.mxu0 %v2155
        %2420 = vmatpush1.bf16.msra.mxu0 %v2154
        %2421 = vmatprep.subr.bf16.mxu0 %v2158
        %2422 = vmatpush1.bf16.msra.mxu0 %v2157
        %2423 = vmatprep.subr.bf16.mxu0 %v2161
        %2424 = vmatpush1.bf16.msra.mxu0 %v2160
        %2425 = vmatprep.subr.bf16.mxu0 %v2164
        %2426 = vmatpush1.bf16.msra.mxu0 %v2163
        %2427 = vmatprep.subr.bf16.mxu0 %v2167
        %2428 = vmatpush1.bf16.msra.mxu0 %v2166
        %2429 = vmatprep.subr.bf16.mxu0 %v2170
        %2430 = vmatpush1.bf16.msra.mxu0 %v2169
        %2431 = vmatprep.subr.bf16.mxu0 %v2173
        %2432 = vmatpush1.bf16.msra.mxu0 %v2172
        %2433 = vmatprep.subr.bf16.mxu0 0
        %2434 = vmatpush1.bf16.msra.mxu0 0
        %2435 = vmatprep.subr.bf16.mxu0 0
        %2436 = vmatpush1.bf16.msra.mxu0 0
        %2437 = vmatprep.subr.bf16.mxu0 0
        %2438 = vmatpush1.bf16.msra.mxu0 0
        %2439 = vmatprep.subr.bf16.mxu0 0
        %2440 = vmatpush1.bf16.msra.mxu0 0
        %2441 = vmatprep.subr.bf16.mxu0 0
        %2442 = vmatpush1.bf16.msra.mxu0 0
        %2443 = vmatprep.subr.bf16.mxu0 0
        %2444 = vmatpush1.bf16.msra.mxu0 0
        %2445 = vmatprep.subr.bf16.mxu0 0
        %2446 = vmatpush1.bf16.msra.mxu0 0
        %2447 = vmatprep.subr.bf16.mxu0 0
        %2448 = vmatpush1.bf16.msra.mxu0 0
        %2449 = vmatprep.mubr.bf16.mxu0 0
        %2450 = vmatmul.mubr.bf16.gmra.mrb[0].mxu0 %v2409
        %v2451 = vpop.f32.mrb[0].mxu0
        %v2452 = vadd.f32 0.0, %v2451
        %v2453 = vpop.f32.mrb[0].mxu0
        %v2454 = vadd.f32 0.0, %v2453
        %v2455 = vpop.f32.mrb[0].mxu0
        %v2456 = vadd.f32 0.0, %v2455
        %v2457 = vpop.f32.mrb[0].mxu0
        %v2458 = vadd.f32 0.0, %v2457
        %2459 = vmatprep.mubr.bf16.mxu0 0
        %2460 = vmatmul.mubr.bf16.gmra.mrb[0].mxu0 %v2410
        %v2461 = vpop.f32.mrb[0].mxu0
        %v2462 = vadd.f32 0.0, %v2461
        %v2463 = vpop.f32.mrb[0].mxu0
        %v2464 = vadd.f32 0.0, %v2463
        %v2465 = vpop.f32.mrb[0].mxu0
        %v2466 = vadd.f32 0.0, %v2465
        %v2467 = vpop.f32.mrb[0].mxu0
        %v2468 = vadd.f32 0.0, %v2467
        %2469 = vmatprep.mubr.bf16.mxu0 0
        %2470 = vmatmul.mubr.bf16.gmra.mrb[0].mxu0 %v2411
        %v2471 = vpop.f32.mrb[0].mxu0
        %v2472 = vadd.f32 0.0, %v2471
        %v2473 = vpop.f32.mrb[0].mxu0
        %v2474 = vadd.f32 0.0, %v2473
        %v2475 = vpop.f32.mrb[0].mxu0
        %v2476 = vadd.f32 0.0, %v2475
        %v2477 = vpop.f32.mrb[0].mxu0
        %v2478 = vadd.f32 0.0, %v2477
        %2479 = vmatprep.mubr.bf16.mxu0 0
        %2480 = vmatmul.mubr.bf16.gmra.mrb[0].mxu0 %v2412
        %v2481 = vpop.f32.mrb[0].mxu0
        %v2482 = vadd.f32 0.0, %v2481
        %v2483 = vpop.f32.mrb[0].mxu0
        %v2484 = vadd.f32 0.0, %v2483
        %v2485 = vpop.f32.mrb[0].mxu0
        %v2486 = vadd.f32 0.0, %v2485
        %v2487 = vpop.f32.mrb[0].mxu0
        %v2488 = vadd.f32 0.0, %v2487
        %2489 = vmatprep.mubr.bf16.mxu0 0
        %2490 = vmatmul.mubr.bf16.gmra.mrb[0].mxu0 %v2413
        %v2491 = vpop.f32.mrb[0].mxu0
        %v2492 = vadd.f32 0.0, %v2491
        %v2493 = vpop.f32.mrb[0].mxu0
        %v2494 = vadd.f32 0.0, %v2493
        %v2495 = vpop.f32.mrb[0].mxu0
        %v2496 = vadd.f32 0.0, %v2495
        %v2497 = vpop.f32.mrb[0].mxu0
        %v2498 = vadd.f32 0.0, %v2497
        %2499 = vmatprep.mubr.bf16.mxu0 0
        %2500 = vmatmul.mubr.bf16.gmra.mrb[0].mxu0 %v2414
        %v2501 = vpop.f32.mrb[0].mxu0
        %v2502 = vadd.f32 0.0, %v2501
        %v2503 = vpop.f32.mrb[0].mxu0
        %v2504 = vadd.f32 0.0, %v2503
        %v2505 = vpop.f32.mrb[0].mxu0
        %v2506 = vadd.f32 0.0, %v2505
        %v2507 = vpop.f32.mrb[0].mxu0
        %v2508 = vadd.f32 0.0, %v2507
        %2509 = vmatprep.mubr.bf16.mxu0 0
        %2510 = vmatmul.mubr.bf16.gmra.mrb[0].mxu0 %v2415
        %v2511 = vpop.f32.mrb[0].mxu0
        %v2512 = vadd.f32 0.0, %v2511
        %v2513 = vpop.f32.mrb[0].mxu0
        %v2514 = vadd.f32 0.0, %v2513
        %v2515 = vpop.f32.mrb[0].mxu0
        %v2516 = vadd.f32 0.0, %v2515
        %v2517 = vpop.f32.mrb[0].mxu0
        %v2518 = vadd.f32 0.0, %v2517
        %2519 = vmatprep.mubr.bf16.mxu0 0
        %2520 = vmatmul.mubr.bf16.gmra.mrb[0].mxu0 %v2416
        %v2521 = vpop.f32.mrb[0].mxu0
        %v2522 = vadd.f32 0.0, %v2521
        %v2523 = vpop.f32.mrb[0].mxu0
        %v2524 = vadd.f32 0.0, %v2523
        %v2525 = vpop.f32.mrb[0].mxu0
        %v2526 = vadd.f32 0.0, %v2525
        %v2527 = vpop.f32.mrb[0].mxu0
        %v2528 = vadd.f32 0.0, %v2527
        %2529 = vdwg.mxu0
        %2530 = vmatprep.subr.bf16.mxu0 0
        %2531 = vmatpush1.bf16.msra.mxu0 %v2153
        %2532 = vmatprep.subr.bf16.mxu0 0
        %2533 = vmatpush1.bf16.msra.mxu0 %v2156
        %2534 = vmatprep.subr.bf16.mxu0 0
        %2535 = vmatpush1.bf16.msra.mxu0 %v2159
        %2536 = vmatprep.subr.bf16.mxu0 0
        %2537 = vmatpush1.bf16.msra.mxu0 %v2162
        %2538 = vmatprep.subr.bf16.mxu0 0
        %2539 = vmatpush1.bf16.msra.mxu0 %v2165
        %2540 = vmatprep.subr.bf16.mxu0 0
        %2541 = vmatpush1.bf16.msra.mxu0 %v2168
        %2542 = vmatprep.subr.bf16.mxu0 0
        %2543 = vmatpush1.bf16.msra.mxu0 %v2171
        %2544 = vmatprep.subr.bf16.mxu0 0
        %2545 = vmatpush1.bf16.msra.mxu0 %v2174
        %2546 = vmatprep.subr.bf16.mxu0 0
        %2547 = vmatpush1.bf16.msra.mxu0 0
        %2548 = vmatprep.subr.bf16.mxu0 0
        %2549 = vmatpush1.bf16.msra.mxu0 0
        %2550 = vmatprep.subr.bf16.mxu0 0
        %2551 = vmatpush1.bf16.msra.mxu0 0
        %2552 = vmatprep.subr.bf16.mxu0 0
        %2553 = vmatpush1.bf16.msra.mxu0 0
        %2554 = vmatprep.subr.bf16.mxu0 0
        %2555 = vmatpush1.bf16.msra.mxu0 0
        %2556 = vmatprep.subr.bf16.mxu0 0
        %2557 = vmatpush1.bf16.msra.mxu0 0
        %2558 = vmatprep.subr.bf16.mxu0 0
        %2559 = vmatpush1.bf16.msra.mxu0 0
        %2560 = vmatprep.subr.bf16.mxu0 0
        %2561 = vmatpush1.bf16.msra.mxu0 0
        %2562 = vmatprep.mubr.bf16.mxu0 0
        %2563 = vmatmul.mubr.bf16.gmra.mrb[0].mxu0 %v2409
        %v2564 = vpop.f32.mrb[0].mxu0
        %v2565 = vadd.f32 0.0, %v2564
        %v2566 = vpop.f32.mrb[0].mxu0
        %v2567 = vpop.f32.mrb[0].mxu0
        %v2568 = vadd.f32 0.0, %v2567
        %v2569 = vpop.f32.mrb[0].mxu0
        %2570 = vmatprep.mubr.bf16.mxu0 0
        %2571 = vmatmul.mubr.bf16.gmra.mrb[0].mxu0 %v2410
        %v2572 = vpop.f32.mrb[0].mxu0
        %v2573 = vadd.f32 0.0, %v2572
        %v2574 = vpop.f32.mrb[0].mxu0
        %v2575 = vpop.f32.mrb[0].mxu0
        %v2576 = vadd.f32 0.0, %v2575
        %v2577 = vpop.f32.mrb[0].mxu0
        %2578 = vmatprep.mubr.bf16.mxu0 0
        %2579 = vmatmul.mubr.bf16.gmra.mrb[0].mxu0 %v2411
        %v2580 = vpop.f32.mrb[0].mxu0
        %v2581 = vadd.f32 0.0, %v2580
        %v2582 = vpop.f32.mrb[0].mxu0
        %v2583 = vpop.f32.mrb[0].mxu0
        %v2584 = vadd.f32 0.0, %v2583
        %v2585 = vpop.f32.mrb[0].mxu0
        %2586 = vmatprep.mubr.bf16.mxu0 0
        %2587 = vmatmul.mubr.bf16.gmra.mrb[0].mxu0 %v2412
        %v2588 = vpop.f32.mrb[0].mxu0
        %v2589 = vadd.f32 0.0, %v2588
        %v2590 = vpop.f32.mrb[0].mxu0
        %v2591 = vpop.f32.mrb[0].mxu0
        %v2592 = vadd.f32 0.0, %v2591
        %v2593 = vpop.f32.mrb[0].mxu0
        %2594 = vmatprep.mubr.bf16.mxu0 0
        %2595 = vmatmul.mubr.bf16.gmra.mrb[0].mxu0 %v2413
        %v2596 = vpop.f32.mrb[0].mxu0
        %v2597 = vadd.f32 0.0, %v2596
        %v2598 = vpop.f32.mrb[0].mxu0
        %v2599 = vpop.f32.mrb[0].mxu0
        %v2600 = vadd.f32 0.0, %v2599
        %v2601 = vpop.f32.mrb[0].mxu0
        %2602 = vmatprep.mubr.bf16.mxu0 0
        %2603 = vmatmul.mubr.bf16.gmra.mrb[0].mxu0 %v2414
        %v2604 = vpop.f32.mrb[0].mxu0
        %v2605 = vadd.f32 0.0, %v2604
        %v2606 = vpop.f32.mrb[0].mxu0
        %v2607 = vpop.f32.mrb[0].mxu0
        %v2608 = vadd.f32 0.0, %v2607
        %v2609 = vpop.f32.mrb[0].mxu0
        %2610 = vmatprep.mubr.bf16.mxu0 0
        %2611 = vmatmul.mubr.bf16.gmra.mrb[0].mxu0 %v2415
        %v2612 = vpop.f32.mrb[0].mxu0
        %v2613 = vadd.f32 0.0, %v2612
        %v2614 = vpop.f32.mrb[0].mxu0
        %v2615 = vpop.f32.mrb[0].mxu0
        %v2616 = vadd.f32 0.0, %v2615
        %v2617 = vpop.f32.mrb[0].mxu0
        %2618 = vmatprep.mubr.bf16.mxu0 0
        %2619 = vmatmul.mubr.bf16.gmra.mrb[0].mxu0 %v2416
        %v2620 = vpop.f32.mrb[0].mxu0
        %v2621 = vadd.f32 0.0, %v2620
        %v2622 = vpop.f32.mrb[0].mxu0
        %v2623 = vpop.f32.mrb[0].mxu0
        %v2624 = vadd.f32 0.0, %v2623
        %v2625 = vpop.f32.mrb[0].mxu0
        %2626 = vdwg.mxu0
        %v2627 = vpack.c.bf16 %v1967, %v1966
        %v2628 = vpack.c.bf16 %v1969, %v1968
        %v2629 = vpack.c.bf16 %v1971, %v1970
        %v2630 = vpack.c.bf16 %v1973, %v1972
        %v2631 = vpack.c.bf16 %v1975, %v1974
        %v2632 = vpack.c.bf16 %v1977, %v1976
        %v2633 = vpack.c.bf16 %v1979, %v1978
        %v2634 = vpack.c.bf16 %v1981, %v1980
        %2635 = vmatprep.subr.bf16.mxu0 %v2152
        %2636 = vmatpush1.bf16.msra.mxu0 %v2151
        %2637 = vmatprep.subr.bf16.mxu0 %v2155
        %2638 = vmatpush1.bf16.msra.mxu0 %v2154
        %2639 = vmatprep.subr.bf16.mxu0 %v2158
        %2640 = vmatpush1.bf16.msra.mxu0 %v2157
        %2641 = vmatprep.subr.bf16.mxu0 %v2161
        %2642 = vmatpush1.bf16.msra.mxu0 %v2160
        %2643 = vmatprep.subr.bf16.mxu0 %v2164
        %2644 = vmatpush1.bf16.msra.mxu0 %v2163
        %2645 = vmatprep.subr.bf16.mxu0 %v2167
        %2646 = vmatpush1.bf16.msra.mxu0 %v2166
        %2647 = vmatprep.subr.bf16.mxu0 %v2170
        %2648 = vmatpush1.bf16.msra.mxu0 %v2169
        %2649 = vmatprep.subr.bf16.mxu0 %v2173
        %2650 = vmatpush1.bf16.msra.mxu0 %v2172
        %2651 = vmatprep.subr.bf16.mxu0 0
        %2652 = vmatpush1.bf16.msra.mxu0 0
        %2653 = vmatprep.subr.bf16.mxu0 0
        %2654 = vmatpush1.bf16.msra.mxu0 0
        %2655 = vmatprep.subr.bf16.mxu0 0
        %2656 = vmatpush1.bf16.msra.mxu0 0
        %2657 = vmatprep.subr.bf16.mxu0 0
        %2658 = vmatpush1.bf16.msra.mxu0 0
        %2659 = vmatprep.subr.bf16.mxu0 0
        %2660 = vmatpush1.bf16.msra.mxu0 0
        %2661 = vmatprep.subr.bf16.mxu0 0
        %2662 = vmatpush1.bf16.msra.mxu0 0
        %2663 = vmatprep.subr.bf16.mxu0 0
        %2664 = vmatpush1.bf16.msra.mxu0 0
        %2665 = vmatprep.subr.bf16.mxu0 0
        %2666 = vmatpush1.bf16.msra.mxu0 0
        %2667 = vmatprep.mubr.bf16.mxu0 0
        %2668 = vmatmul.mubr.bf16.gmra.mrb[0].mxu0 %v2627
        %v2669 = vpop.f32.mrb[0].mxu0
        %v2670 = vadd.f32 0.0, %v2669
        %v2671 = vpop.f32.mrb[0].mxu0
        %v2672 = vadd.f32 0.0, %v2671
        %v2673 = vpop.f32.mrb[0].mxu0
        %v2674 = vadd.f32 0.0, %v2673
        %v2675 = vpop.f32.mrb[0].mxu0
        %v2676 = vadd.f32 0.0, %v2675
        %2677 = vmatprep.mubr.bf16.mxu0 0
        %2678 = vmatmul.mubr.bf16.gmra.mrb[0].mxu0 %v2628
        %v2679 = vpop.f32.mrb[0].mxu0
        %v2680 = vadd.f32 0.0, %v2679
        %v2681 = vpop.f32.mrb[0].mxu0
        %v2682 = vadd.f32 0.0, %v2681
        %v2683 = vpop.f32.mrb[0].mxu0
        %v2684 = vadd.f32 0.0, %v2683
        %v2685 = vpop.f32.mrb[0].mxu0
        %v2686 = vadd.f32 0.0, %v2685
        %2687 = vmatprep.mubr.bf16.mxu0 0
        %2688 = vmatmul.mubr.bf16.gmra.mrb[0].mxu0 %v2629
        %v2689 = vpop.f32.mrb[0].mxu0
        %v2690 = vadd.f32 0.0, %v2689
        %v2691 = vpop.f32.mrb[0].mxu0
        %v2692 = vadd.f32 0.0, %v2691
        %v2693 = vpop.f32.mrb[0].mxu0
        %v2694 = vadd.f32 0.0, %v2693
        %v2695 = vpop.f32.mrb[0].mxu0
        %v2696 = vadd.f32 0.0, %v2695
        %2697 = vmatprep.mubr.bf16.mxu0 0
        %2698 = vmatmul.mubr.bf16.gmra.mrb[0].mxu0 %v2630
        %v2699 = vpop.f32.mrb[0].mxu0
        %v2700 = vadd.f32 0.0, %v2699
        %v2701 = vpop.f32.mrb[0].mxu0
        %v2702 = vadd.f32 0.0, %v2701
        %v2703 = vpop.f32.mrb[0].mxu0
        %v2704 = vadd.f32 0.0, %v2703
        %v2705 = vpop.f32.mrb[0].mxu0
        %v2706 = vadd.f32 0.0, %v2705
        %2707 = vmatprep.mubr.bf16.mxu0 0
        %2708 = vmatmul.mubr.bf16.gmra.mrb[0].mxu0 %v2631
        %v2709 = vpop.f32.mrb[0].mxu0
        %v2710 = vadd.f32 0.0, %v2709
        %v2711 = vpop.f32.mrb[0].mxu0
        %v2712 = vadd.f32 0.0, %v2711
        %v2713 = vpop.f32.mrb[0].mxu0
        %v2714 = vadd.f32 0.0, %v2713
        %v2715 = vpop.f32.mrb[0].mxu0
        %v2716 = vadd.f32 0.0, %v2715
        %2717 = vmatprep.mubr.bf16.mxu0 0
        %2718 = vmatmul.mubr.bf16.gmra.mrb[0].mxu0 %v2632
        %v2719 = vpop.f32.mrb[0].mxu0
        %v2720 = vadd.f32 0.0, %v2719
        %v2721 = vpop.f32.mrb[0].mxu0
        %v2722 = vadd.f32 0.0, %v2721
        %v2723 = vpop.f32.mrb[0].mxu0
        %v2724 = vadd.f32 0.0, %v2723
        %v2725 = vpop.f32.mrb[0].mxu0
        %v2726 = vadd.f32 0.0, %v2725
        %2727 = vmatprep.mubr.bf16.mxu0 0
        %2728 = vmatmul.mubr.bf16.gmra.mrb[0].mxu0 %v2633
        %v2729 = vpop.f32.mrb[0].mxu0
        %v2730 = vadd.f32 0.0, %v2729
        %v2731 = vpop.f32.mrb[0].mxu0
        %v2732 = vadd.f32 0.0, %v2731
        %v2733 = vpop.f32.mrb[0].mxu0
        %v2734 = vadd.f32 0.0, %v2733
        %v2735 = vpop.f32.mrb[0].mxu0
        %v2736 = vadd.f32 0.0, %v2735
        %2737 = vmatprep.mubr.bf16.mxu0 0
        %2738 = vmatmul.mubr.bf16.gmra.mrb[0].mxu0 %v2634
        %v2739 = vpop.f32.mrb[0].mxu0
        %v2740 = vadd.f32 0.0, %v2739
        %v2741 = vpop.f32.mrb[0].mxu0
        %v2742 = vadd.f32 0.0, %v2741
        %v2743 = vpop.f32.mrb[0].mxu0
        %v2744 = vadd.f32 0.0, %v2743
        %v2745 = vpop.f32.mrb[0].mxu0
        %v2746 = vadd.f32 0.0, %v2745
        %2747 = vdwg.mxu0
        %2748 = vmatprep.subr.bf16.mxu0 0
        %2749 = vmatpush1.bf16.msra.mxu0 %v2153
        %2750 = vmatprep.subr.bf16.mxu0 0
        %2751 = vmatpush1.bf16.msra.mxu0 %v2156
        %2752 = vmatprep.subr.bf16.mxu0 0
        %2753 = vmatpush1.bf16.msra.mxu0 %v2159
        %2754 = vmatprep.subr.bf16.mxu0 0
        %2755 = vmatpush1.bf16.msra.mxu0 %v2162
        %2756 = vmatprep.subr.bf16.mxu0 0
        %2757 = vmatpush1.bf16.msra.mxu0 %v2165
        %2758 = vmatprep.subr.bf16.mxu0 0
        %2759 = vmatpush1.bf16.msra.mxu0 %v2168
        %2760 = vmatprep.subr.bf16.mxu0 0
        %2761 = vmatpush1.bf16.msra.mxu0 %v2171
        %2762 = vmatprep.subr.bf16.mxu0 0
        %2763 = vmatpush1.bf16.msra.mxu0 %v2174
        %2764 = vmatprep.subr.bf16.mxu0 0
        %2765 = vmatpush1.bf16.msra.mxu0 0
        %2766 = vmatprep.subr.bf16.mxu0 0
        %2767 = vmatpush1.bf16.msra.mxu0 0
        %2768 = vmatprep.subr.bf16.mxu0 0
        %2769 = vmatpush1.bf16.msra.mxu0 0
        %2770 = vmatprep.subr.bf16.mxu0 0
        %2771 = vmatpush1.bf16.msra.mxu0 0
        %2772 = vmatprep.subr.bf16.mxu0 0
        %2773 = vmatpush1.bf16.msra.mxu0 0
        %2774 = vmatprep.subr.bf16.mxu0 0
        %2775 = vmatpush1.bf16.msra.mxu0 0
        %2776 = vmatprep.subr.bf16.mxu0 0
        %2777 = vmatpush1.bf16.msra.mxu0 0
        %2778 = vmatprep.subr.bf16.mxu0 0
        %2779 = vmatpush1.bf16.msra.mxu0 0
        %2780 = vmatprep.mubr.bf16.mxu0 0
        %2781 = vmatmul.mubr.bf16.gmra.mrb[0].mxu0 %v2627
        %v2782 = vpop.f32.mrb[0].mxu0
        %v2783 = vadd.f32 0.0, %v2782
        %v2784 = vpop.f32.mrb[0].mxu0
        %v2785 = vpop.f32.mrb[0].mxu0
        %v2786 = vadd.f32 0.0, %v2785
        %v2787 = vpop.f32.mrb[0].mxu0
        %2788 = vmatprep.mubr.bf16.mxu0 0
        %2789 = vmatmul.mubr.bf16.gmra.mrb[0].mxu0 %v2628
        %v2790 = vpop.f32.mrb[0].mxu0
        %v2791 = vadd.f32 0.0, %v2790
        %v2792 = vpop.f32.mrb[0].mxu0
        %v2793 = vpop.f32.mrb[0].mxu0
        %v2794 = vadd.f32 0.0, %v2793
        %v2795 = vpop.f32.mrb[0].mxu0
        %2796 = vmatprep.mubr.bf16.mxu0 0
        %2797 = vmatmul.mubr.bf16.gmra.mrb[0].mxu0 %v2629
        %v2798 = vpop.f32.mrb[0].mxu0
        %v2799 = vadd.f32 0.0, %v2798
        %v2800 = vpop.f32.mrb[0].mxu0
        %v2801 = vpop.f32.mrb[0].mxu0
        %v2802 = vadd.f32 0.0, %v2801
        %v2803 = vpop.f32.mrb[0].mxu0
        %2804 = vmatprep.mubr.bf16.mxu0 0
        %2805 = vmatmul.mubr.bf16.gmra.mrb[0].mxu0 %v2630
        %v2806 = vpop.f32.mrb[0].mxu0
        %v2807 = vadd.f32 0.0, %v2806
        %v2808 = vpop.f32.mrb[0].mxu0
        %v2809 = vpop.f32.mrb[0].mxu0
        %v2810 = vadd.f32 0.0, %v2809
        %v2811 = vpop.f32.mrb[0].mxu0
        %2812 = vmatprep.mubr.bf16.mxu0 0
        %2813 = vmatmul.mubr.bf16.gmra.mrb[0].mxu0 %v2631
        %v2814 = vpop.f32.mrb[0].mxu0
        %v2815 = vadd.f32 0.0, %v2814
        %v2816 = vpop.f32.mrb[0].mxu0
        %v2817 = vpop.f32.mrb[0].mxu0
        %v2818 = vadd.f32 0.0, %v2817
        %v2819 = vpop.f32.mrb[0].mxu0
        %2820 = vmatprep.mubr.bf16.mxu0 0
        %2821 = vmatmul.mubr.bf16.gmra.mrb[0].mxu0 %v2632
        %v2822 = vpop.f32.mrb[0].mxu0
        %v2823 = vadd.f32 0.0, %v2822
        %v2824 = vpop.f32.mrb[0].mxu0
        %v2825 = vpop.f32.mrb[0].mxu0
        %v2826 = vadd.f32 0.0, %v2825
        %v2827 = vpop.f32.mrb[0].mxu0
        %2828 = vmatprep.mubr.bf16.mxu0 0
        %2829 = vmatmul.mubr.bf16.gmra.mrb[0].mxu0 %v2633
        %v2830 = vpop.f32.mrb[0].mxu0
        %v2831 = vadd.f32 0.0, %v2830
        %v2832 = vpop.f32.mrb[0].mxu0
        %v2833 = vpop.f32.mrb[0].mxu0
        %v2834 = vadd.f32 0.0, %v2833
        %v2835 = vpop.f32.mrb[0].mxu0
        %2836 = vmatprep.mubr.bf16.mxu0 0
        %2837 = vmatmul.mubr.bf16.gmra.mrb[0].mxu0 %v2634
        %v2838 = vpop.f32.mrb[0].mxu0
        %v2839 = vadd.f32 0.0, %v2838
        %v2840 = vpop.f32.mrb[0].mxu0
        %v2841 = vpop.f32.mrb[0].mxu0
        %v2842 = vadd.f32 0.0, %v2841
        %v2843 = vpop.f32.mrb[0].mxu0
        %2844 = vdwg.mxu0
        %v2845 = vpack.c.bf16 %v2015, %v2014
        %v2846 = vpack.c.bf16 %v2017, %v2016
        %v2847 = vpack.c.bf16 %v2019, %v2018
        %v2848 = vpack.c.bf16 %v2021, %v2020
        %v2849 = vpack.c.bf16 %v2023, %v2022
        %v2850 = vpack.c.bf16 %v2025, %v2024
        %v2851 = vpack.c.bf16 %v2027, %v2026
        %v2852 = vpack.c.bf16 %v2029, %v2028
        %2853 = vmatprep.subr.bf16.mxu0 %v2152
        %2854 = vmatpush1.bf16.msra.mxu0 %v2151
        %2855 = vmatprep.subr.bf16.mxu0 %v2155
        %2856 = vmatpush1.bf16.msra.mxu0 %v2154
        %2857 = vmatprep.subr.bf16.mxu0 %v2158
        %2858 = vmatpush1.bf16.msra.mxu0 %v2157
        %2859 = vmatprep.subr.bf16.mxu0 %v2161
        %2860 = vmatpush1.bf16.msra.mxu0 %v2160
        %2861 = vmatprep.subr.bf16.mxu0 %v2164
        %2862 = vmatpush1.bf16.msra.mxu0 %v2163
        %2863 = vmatprep.subr.bf16.mxu0 %v2167
        %2864 = vmatpush1.bf16.msra.mxu0 %v2166
        %2865 = vmatprep.subr.bf16.mxu0 %v2170
        %2866 = vmatpush1.bf16.msra.mxu0 %v2169
        %2867 = vmatprep.subr.bf16.mxu0 %v2173
        %2868 = vmatpush1.bf16.msra.mxu0 %v2172
        %2869 = vmatprep.subr.bf16.mxu0 0
        %2870 = vmatpush1.bf16.msra.mxu0 0
        %2871 = vmatprep.subr.bf16.mxu0 0
        %2872 = vmatpush1.bf16.msra.mxu0 0
        %2873 = vmatprep.subr.bf16.mxu0 0
        %2874 = vmatpush1.bf16.msra.mxu0 0
        %2875 = vmatprep.subr.bf16.mxu0 0
        %2876 = vmatpush1.bf16.msra.mxu0 0
        %2877 = vmatprep.subr.bf16.mxu0 0
        %2878 = vmatpush1.bf16.msra.mxu0 0
        %2879 = vmatprep.subr.bf16.mxu0 0
        %2880 = vmatpush1.bf16.msra.mxu0 0
        %2881 = vmatprep.subr.bf16.mxu0 0
        %2882 = vmatpush1.bf16.msra.mxu0 0
        %2883 = vmatprep.subr.bf16.mxu0 0
        %2884 = vmatpush1.bf16.msra.mxu0 0
        %2885 = vmatprep.mubr.bf16.mxu0 0
        %2886 = vmatmul.mubr.bf16.gmra.mrb[0].mxu0 %v2845
        %v2887 = vpop.f32.mrb[0].mxu0
        %v2888 = vadd.f32 0.0, %v2887
        %v2889 = vpop.f32.mrb[0].mxu0
        %v2890 = vadd.f32 0.0, %v2889
        %v2891 = vpop.f32.mrb[0].mxu0
        %v2892 = vadd.f32 0.0, %v2891
        %v2893 = vpop.f32.mrb[0].mxu0
        %v2894 = vadd.f32 0.0, %v2893
        %2895 = vmatprep.mubr.bf16.mxu0 0
        %2896 = vmatmul.mubr.bf16.gmra.mrb[0].mxu0 %v2846
        %v2897 = vpop.f32.mrb[0].mxu0
        %v2898 = vadd.f32 0.0, %v2897
        %v2899 = vpop.f32.mrb[0].mxu0
        %v2900 = vadd.f32 0.0, %v2899
        %v2901 = vpop.f32.mrb[0].mxu0
        %v2902 = vadd.f32 0.0, %v2901
        %v2903 = vpop.f32.mrb[0].mxu0
        %v2904 = vadd.f32 0.0, %v2903
        %2905 = vmatprep.mubr.bf16.mxu0 0
        %2906 = vmatmul.mubr.bf16.gmra.mrb[0].mxu0 %v2847
        %v2907 = vpop.f32.mrb[0].mxu0
        %v2908 = vadd.f32 0.0, %v2907
        %v2909 = vpop.f32.mrb[0].mxu0
        %v2910 = vadd.f32 0.0, %v2909
        %v2911 = vpop.f32.mrb[0].mxu0
        %v2912 = vadd.f32 0.0, %v2911
        %v2913 = vpop.f32.mrb[0].mxu0
        %v2914 = vadd.f32 0.0, %v2913
        %2915 = vmatprep.mubr.bf16.mxu0 0
        %2916 = vmatmul.mubr.bf16.gmra.mrb[0].mxu0 %v2848
        %v2917 = vpop.f32.mrb[0].mxu0
        %v2918 = vadd.f32 0.0, %v2917
        %v2919 = vpop.f32.mrb[0].mxu0
        %v2920 = vadd.f32 0.0, %v2919
        %v2921 = vpop.f32.mrb[0].mxu0
        %v2922 = vadd.f32 0.0, %v2921
        %v2923 = vpop.f32.mrb[0].mxu0
        %v2924 = vadd.f32 0.0, %v2923
        %2925 = vmatprep.mubr.bf16.mxu0 0
        %2926 = vmatmul.mubr.bf16.gmra.mrb[0].mxu0 %v2849
        %v2927 = vpop.f32.mrb[0].mxu0
        %v2928 = vadd.f32 0.0, %v2927
        %v2929 = vpop.f32.mrb[0].mxu0
        %v2930 = vadd.f32 0.0, %v2929
        %v2931 = vpop.f32.mrb[0].mxu0
        %v2932 = vadd.f32 0.0, %v2931
        %v2933 = vpop.f32.mrb[0].mxu0
        %v2934 = vadd.f32 0.0, %v2933
        %2935 = vmatprep.mubr.bf16.mxu0 0
        %2936 = vmatmul.mubr.bf16.gmra.mrb[0].mxu0 %v2850
        %v2937 = vpop.f32.mrb[0].mxu0
        %v2938 = vadd.f32 0.0, %v2937
        %v2939 = vpop.f32.mrb[0].mxu0
        %v2940 = vadd.f32 0.0, %v2939
        %v2941 = vpop.f32.mrb[0].mxu0
        %v2942 = vadd.f32 0.0, %v2941
        %v2943 = vpop.f32.mrb[0].mxu0
        %v2944 = vadd.f32 0.0, %v2943
        %2945 = vmatprep.mubr.bf16.mxu0 0
        %2946 = vmatmul.mubr.bf16.gmra.mrb[0].mxu0 %v2851
        %v2947 = vpop.f32.mrb[0].mxu0
        %v2948 = vadd.f32 0.0, %v2947
        %v2949 = vpop.f32.mrb[0].mxu0
        %v2950 = vadd.f32 0.0, %v2949
        %v2951 = vpop.f32.mrb[0].mxu0
        %v2952 = vadd.f32 0.0, %v2951
        %v2953 = vpop.f32.mrb[0].mxu0
        %v2954 = vadd.f32 0.0, %v2953
        %2955 = vmatprep.mubr.bf16.mxu0 0
        %2956 = vmatmul.mubr.bf16.gmra.mrb[0].mxu0 %v2852
        %v2957 = vpop.f32.mrb[0].mxu0
        %v2958 = vadd.f32 0.0, %v2957
        %v2959 = vpop.f32.mrb[0].mxu0
        %v2960 = vadd.f32 0.0, %v2959
        %v2961 = vpop.f32.mrb[0].mxu0
        %v2962 = vadd.f32 0.0, %v2961
        %v2963 = vpop.f32.mrb[0].mxu0
        %v2964 = vadd.f32 0.0, %v2963
        %2965 = vdwg.mxu0
        %2966 = vmatprep.subr.bf16.mxu0 0
        %2967 = vmatpush1.bf16.msra.mxu0 %v2153
        %2968 = vmatprep.subr.bf16.mxu0 0
        %2969 = vmatpush1.bf16.msra.mxu0 %v2156
        %2970 = vmatprep.subr.bf16.mxu0 0
        %2971 = vmatpush1.bf16.msra.mxu0 %v2159
        %2972 = vmatprep.subr.bf16.mxu0 0
        %2973 = vmatpush1.bf16.msra.mxu0 %v2162
        %2974 = vmatprep.subr.bf16.mxu0 0
        %2975 = vmatpush1.bf16.msra.mxu0 %v2165
        %2976 = vmatprep.subr.bf16.mxu0 0
        %2977 = vmatpush1.bf16.msra.mxu0 %v2168
        %2978 = vmatprep.subr.bf16.mxu0 0
        %2979 = vmatpush1.bf16.msra.mxu0 %v2171
        %2980 = vmatprep.subr.bf16.mxu0 0
        %2981 = vmatpush1.bf16.msra.mxu0 %v2174
        %2982 = vmatprep.subr.bf16.mxu0 0
        %2983 = vmatpush1.bf16.msra.mxu0 0
        %2984 = vmatprep.subr.bf16.mxu0 0
        %2985 = vmatpush1.bf16.msra.mxu0 0
        %2986 = vmatprep.subr.bf16.mxu0 0
        %2987 = vmatpush1.bf16.msra.mxu0 0
        %2988 = vmatprep.subr.bf16.mxu0 0
        %2989 = vmatpush1.bf16.msra.mxu0 0
        %2990 = vmatprep.subr.bf16.mxu0 0
        %2991 = vmatpush1.bf16.msra.mxu0 0
        %2992 = vmatprep.subr.bf16.mxu0 0
        %2993 = vmatpush1.bf16.msra.mxu0 0
        %2994 = vmatprep.subr.bf16.mxu0 0
        %2995 = vmatpush1.bf16.msra.mxu0 0
        %2996 = vmatprep.subr.bf16.mxu0 0
        %2997 = vmatpush1.bf16.msra.mxu0 0
        %2998 = vmatprep.mubr.bf16.mxu0 0
        %2999 = vmatmul.mubr.bf16.gmra.mrb[0].mxu0 %v2845
        %v3000 = vpop.f32.mrb[0].mxu0
        %v3001 = vadd.f32 0.0, %v3000
        %v3002 = vpop.f32.mrb[0].mxu0
        %v3003 = vpop.f32.mrb[0].mxu0
        %v3004 = vadd.f32 0.0, %v3003
        %v3005 = vpop.f32.mrb[0].mxu0
        %3006 = vmatprep.mubr.bf16.mxu0 0
        %3007 = vmatmul.mubr.bf16.gmra.mrb[0].mxu0 %v2846
        %v3008 = vpop.f32.mrb[0].mxu0
        %v3009 = vadd.f32 0.0, %v3008
        %v3010 = vpop.f32.mrb[0].mxu0
        %v3011 = vpop.f32.mrb[0].mxu0
        %v3012 = vadd.f32 0.0, %v3011
        %v3013 = vpop.f32.mrb[0].mxu0
        %3014 = vmatprep.mubr.bf16.mxu0 0
        %3015 = vmatmul.mubr.bf16.gmra.mrb[0].mxu0 %v2847
        %v3016 = vpop.f32.mrb[0].mxu0
        %v3017 = vadd.f32 0.0, %v3016
        %v3018 = vpop.f32.mrb[0].mxu0
        %v3019 = vpop.f32.mrb[0].mxu0
        %v3020 = vadd.f32 0.0, %v3019
        %v3021 = vpop.f32.mrb[0].mxu0
        %3022 = vmatprep.mubr.bf16.mxu0 0
        %3023 = vmatmul.mubr.bf16.gmra.mrb[0].mxu0 %v2848
        %v3024 = vpop.f32.mrb[0].mxu0
        %v3025 = vadd.f32 0.0, %v3024
        %v3026 = vpop.f32.mrb[0].mxu0
        %v3027 = vpop.f32.mrb[0].mxu0
        %v3028 = vadd.f32 0.0, %v3027
        %v3029 = vpop.f32.mrb[0].mxu0
        %3030 = vmatprep.mubr.bf16.mxu0 0
        %3031 = vmatmul.mubr.bf16.gmra.mrb[0].mxu0 %v2849
        %v3032 = vpop.f32.mrb[0].mxu0
        %v3033 = vadd.f32 0.0, %v3032
        %v3034 = vpop.f32.mrb[0].mxu0
        %v3035 = vpop.f32.mrb[0].mxu0
        %v3036 = vadd.f32 0.0, %v3035
        %v3037 = vpop.f32.mrb[0].mxu0
        %3038 = vmatprep.mubr.bf16.mxu0 0
        %3039 = vmatmul.mubr.bf16.gmra.mrb[0].mxu0 %v2850
        %v3040 = vpop.f32.mrb[0].mxu0
        %v3041 = vadd.f32 0.0, %v3040
        %v3042 = vpop.f32.mrb[0].mxu0
        %v3043 = vpop.f32.mrb[0].mxu0
        %v3044 = vadd.f32 0.0, %v3043
        %v3045 = vpop.f32.mrb[0].mxu0
        %3046 = vmatprep.mubr.bf16.mxu0 0
        %3047 = vmatmul.mubr.bf16.gmra.mrb[0].mxu0 %v2851
        %v3048 = vpop.f32.mrb[0].mxu0
        %v3049 = vadd.f32 0.0, %v3048
        %v3050 = vpop.f32.mrb[0].mxu0
        %v3051 = vpop.f32.mrb[0].mxu0
        %v3052 = vadd.f32 0.0, %v3051
        %v3053 = vpop.f32.mrb[0].mxu0
        %3054 = vmatprep.mubr.bf16.mxu0 0
        %3055 = vmatmul.mubr.bf16.gmra.mrb[0].mxu0 %v2852
        %v3056 = vpop.f32.mrb[0].mxu0
        %v3057 = vadd.f32 0.0, %v3056
        %v3058 = vpop.f32.mrb[0].mxu0
        %v3059 = vpop.f32.mrb[0].mxu0
        %v3060 = vadd.f32 0.0, %v3059
        %v3061 = vpop.f32.mrb[0].mxu0
        %3062 = vdwg.mxu0
        %v3064 = vlaneseq
        %v3065 = vshrl.u32 %v3064, 7
        %v3066 = vsub.s32 0, %v3065
        %v3067 = vrot.slane %v2030, %v3066
        %v3069 = vadd.f32 %v2234, %v3067
        %v3070 = vadd.f32 %v2238, %v3067
        %v3071 = vadd.f32 %v2244, %v3067
        %v3072 = vadd.f32 %v2248, %v3067
        %v3073 = vadd.f32 %v2254, %v3067
        %v3074 = vadd.f32 %v2258, %v3067
        %v3075 = vadd.f32 %v2264, %v3067
        %v3076 = vadd.f32 %v2268, %v3067
        %v3077 = vadd.f32 %v2274, %v3067
        %v3078 = vadd.f32 %v2278, %v3067
        %v3079 = vadd.f32 %v2284, %v3067
        %v3080 = vadd.f32 %v2288, %v3067
        %v3081 = vadd.f32 %v2294, %v3067
        %v3082 = vadd.f32 %v2298, %v3067
        %v3083 = vadd.f32 %v2304, %v3067
        %v3084 = vadd.f32 %v2308, %v3067
        %v3085 = vmax.f32 %v3069, 0.0
        %v3086 = vmax.f32 %v3070, 0.0
        %v3087 = vmax.f32 %v3071, 0.0
        %v3088 = vmax.f32 %v3072, 0.0
        %v3089 = vmax.f32 %v3073, 0.0
        %v3090 = vmax.f32 %v3074, 0.0
        %v3091 = vmax.f32 %v3075, 0.0
        %v3092 = vmax.f32 %v3076, 0.0
        %v3093 = vmax.f32 %v3077, 0.0
        %v3094 = vmax.f32 %v3078, 0.0
        %v3095 = vmax.f32 %v3079, 0.0
        %v3096 = vmax.f32 %v3080, 0.0
        %v3097 = vmax.f32 %v3081, 0.0
        %v3098 = vmax.f32 %v3082, 0.0
        %v3099 = vmax.f32 %v3083, 0.0
        %v3100 = vmax.f32 %v3084, 0.0
        %v3101 = vadd.f32 %v2236, %v2565
        %v3102 = vadd.f32 %v2240, %v2568
        %v3103 = vadd.f32 %v2246, %v2573
        %v3104 = vadd.f32 %v2250, %v2576
        %v3105 = vadd.f32 %v2256, %v2581
        %v3106 = vadd.f32 %v2260, %v2584
        %v3107 = vadd.f32 %v2266, %v2589
        %v3108 = vadd.f32 %v2270, %v2592
        %v3109 = vadd.f32 %v2276, %v2597
        %v3110 = vadd.f32 %v2280, %v2600
        %v3111 = vadd.f32 %v2286, %v2605
        %v3112 = vadd.f32 %v2290, %v2608
        %v3113 = vadd.f32 %v2296, %v2613
        %v3114 = vadd.f32 %v2300, %v2616
        %v3115 = vadd.f32 %v2306, %v2621
        %v3116 = vadd.f32 %v2310, %v2624
        %v3117 = vadd.f32 %v3101, %v3067
        %v3118 = vadd.f32 %v3102, %v3067
        %v3119 = vadd.f32 %v3103, %v3067
        %v3120 = vadd.f32 %v3104, %v3067
        %v3121 = vadd.f32 %v3105, %v3067
        %v3122 = vadd.f32 %v3106, %v3067
        %v3123 = vadd.f32 %v3107, %v3067
        %v3124 = vadd.f32 %v3108, %v3067
        %v3125 = vadd.f32 %v3109, %v3067
        %v3126 = vadd.f32 %v3110, %v3067
        %v3127 = vadd.f32 %v3111, %v3067
        %v3128 = vadd.f32 %v3112, %v3067
        %v3129 = vadd.f32 %v3113, %v3067
        %v3130 = vadd.f32 %v3114, %v3067
        %v3131 = vadd.f32 %v3115, %v3067
        %v3132 = vadd.f32 %v3116, %v3067
        %v3133 = vmax.f32 %v3117, 0.0
        %v3134 = vmax.f32 %v3118, 0.0
        %v3135 = vmax.f32 %v3119, 0.0
        %v3136 = vmax.f32 %v3120, 0.0
        %v3137 = vmax.f32 %v3121, 0.0
        %v3138 = vmax.f32 %v3122, 0.0
        %v3139 = vmax.f32 %v3123, 0.0
        %v3140 = vmax.f32 %v3124, 0.0
        %v3141 = vmax.f32 %v3125, 0.0
        %v3142 = vmax.f32 %v3126, 0.0
        %v3143 = vmax.f32 %v3127, 0.0
        %v3144 = vmax.f32 %v3128, 0.0
        %v3145 = vmax.f32 %v3129, 0.0
        %v3146 = vmax.f32 %v3130, 0.0
        %v3147 = vmax.f32 %v3131, 0.0
        %v3148 = vmax.f32 %v3132, 0.0
        %v3149 = vadd.f32 %v2452, %v3067
        %v3150 = vadd.f32 %v2456, %v3067
        %v3151 = vadd.f32 %v2462, %v3067
        %v3152 = vadd.f32 %v2466, %v3067
        %v3153 = vadd.f32 %v2472, %v3067
        %v3154 = vadd.f32 %v2476, %v3067
        %v3155 = vadd.f32 %v2482, %v3067
        %v3156 = vadd.f32 %v2486, %v3067
        %v3157 = vadd.f32 %v2492, %v3067
        %v3158 = vadd.f32 %v2496, %v3067
        %v3159 = vadd.f32 %v2502, %v3067
        %v3160 = vadd.f32 %v2506, %v3067
        %v3161 = vadd.f32 %v2512, %v3067
        %v3162 = vadd.f32 %v2516, %v3067
        %v3163 = vadd.f32 %v2522, %v3067
        %v3164 = vadd.f32 %v2526, %v3067
        %v3165 = vmax.f32 %v3149, 0.0
        %v3166 = vmax.f32 %v3150, 0.0
        %v3167 = vmax.f32 %v3151, 0.0
        %v3168 = vmax.f32 %v3152, 0.0
        %v3169 = vmax.f32 %v3153, 0.0
        %v3170 = vmax.f32 %v3154, 0.0
        %v3171 = vmax.f32 %v3155, 0.0
        %v3172 = vmax.f32 %v3156, 0.0
        %v3173 = vmax.f32 %v3157, 0.0
        %v3174 = vmax.f32 %v3158, 0.0
        %v3175 = vmax.f32 %v3159, 0.0
        %v3176 = vmax.f32 %v3160, 0.0
        %v3177 = vmax.f32 %v3161, 0.0
        %v3178 = vmax.f32 %v3162, 0.0
        %v3179 = vmax.f32 %v3163, 0.0
        %v3180 = vmax.f32 %v3164, 0.0
        %v3181 = vadd.f32 %v2454, %v2783
        %v3182 = vadd.f32 %v2458, %v2786
        %v3183 = vadd.f32 %v2464, %v2791
        %v3184 = vadd.f32 %v2468, %v2794
        %v3185 = vadd.f32 %v2474, %v2799
        %v3186 = vadd.f32 %v2478, %v2802
        %v3187 = vadd.f32 %v2484, %v2807
        %v3188 = vadd.f32 %v2488, %v2810
        %v3189 = vadd.f32 %v2494, %v2815
        %v3190 = vadd.f32 %v2498, %v2818
        %v3191 = vadd.f32 %v2504, %v2823
        %v3192 = vadd.f32 %v2508, %v2826
        %v3193 = vadd.f32 %v2514, %v2831
        %v3194 = vadd.f32 %v2518, %v2834
        %v3195 = vadd.f32 %v2524, %v2839
        %v3196 = vadd.f32 %v2528, %v2842
        %v3197 = vadd.f32 %v3181, %v3067
        %v3198 = vadd.f32 %v3182, %v3067
        %v3199 = vadd.f32 %v3183, %v3067
        %v3200 = vadd.f32 %v3184, %v3067
        %v3201 = vadd.f32 %v3185, %v3067
        %v3202 = vadd.f32 %v3186, %v3067
        %v3203 = vadd.f32 %v3187, %v3067
        %v3204 = vadd.f32 %v3188, %v3067
        %v3205 = vadd.f32 %v3189, %v3067
        %v3206 = vadd.f32 %v3190, %v3067
        %v3207 = vadd.f32 %v3191, %v3067
        %v3208 = vadd.f32 %v3192, %v3067
        %v3209 = vadd.f32 %v3193, %v3067
        %v3210 = vadd.f32 %v3194, %v3067
        %v3211 = vadd.f32 %v3195, %v3067
        %v3212 = vadd.f32 %v3196, %v3067
        %v3213 = vmax.f32 %v3197, 0.0
        %v3214 = vmax.f32 %v3198, 0.0
        %v3215 = vmax.f32 %v3199, 0.0
        %v3216 = vmax.f32 %v3200, 0.0
        %v3217 = vmax.f32 %v3201, 0.0
        %v3218 = vmax.f32 %v3202, 0.0
        %v3219 = vmax.f32 %v3203, 0.0
        %v3220 = vmax.f32 %v3204, 0.0
        %v3221 = vmax.f32 %v3205, 0.0
        %v3222 = vmax.f32 %v3206, 0.0
        %v3223 = vmax.f32 %v3207, 0.0
        %v3224 = vmax.f32 %v3208, 0.0
        %v3225 = vmax.f32 %v3209, 0.0
        %v3226 = vmax.f32 %v3210, 0.0
        %v3227 = vmax.f32 %v3211, 0.0
        %v3228 = vmax.f32 %v3212, 0.0
        %v3229 = vadd.f32 %v2670, %v3067
        %v3230 = vadd.f32 %v2674, %v3067
        %v3231 = vadd.f32 %v2680, %v3067
        %v3232 = vadd.f32 %v2684, %v3067
        %v3233 = vadd.f32 %v2690, %v3067
        %v3234 = vadd.f32 %v2694, %v3067
        %v3235 = vadd.f32 %v2700, %v3067
        %v3236 = vadd.f32 %v2704, %v3067
        %v3237 = vadd.f32 %v2710, %v3067
        %v3238 = vadd.f32 %v2714, %v3067
        %v3239 = vadd.f32 %v2720, %v3067
        %v3240 = vadd.f32 %v2724, %v3067
        %v3241 = vadd.f32 %v2730, %v3067
        %v3242 = vadd.f32 %v2734, %v3067
        %v3243 = vadd.f32 %v2740, %v3067
        %v3244 = vadd.f32 %v2744, %v3067
        %v3245 = vmax.f32 %v3229, 0.0
        %v3246 = vmax.f32 %v3230, 0.0
        %v3247 = vmax.f32 %v3231, 0.0
        %v3248 = vmax.f32 %v3232, 0.0
        %v3249 = vmax.f32 %v3233, 0.0
        %v3250 = vmax.f32 %v3234, 0.0
        %v3251 = vmax.f32 %v3235, 0.0
        %v3252 = vmax.f32 %v3236, 0.0
        %v3253 = vmax.f32 %v3237, 0.0
        %v3254 = vmax.f32 %v3238, 0.0
        %v3255 = vmax.f32 %v3239, 0.0
        %v3256 = vmax.f32 %v3240, 0.0
        %v3257 = vmax.f32 %v3241, 0.0
        %v3258 = vmax.f32 %v3242, 0.0
        %v3259 = vmax.f32 %v3243, 0.0
        %v3260 = vmax.f32 %v3244, 0.0
        %v3261 = vadd.f32 %v2672, %v3001
        %v3262 = vadd.f32 %v2676, %v3004
        %v3263 = vadd.f32 %v2682, %v3009
        %v3264 = vadd.f32 %v2686, %v3012
        %v3265 = vadd.f32 %v2692, %v3017
        %v3266 = vadd.f32 %v2696, %v3020
        %v3267 = vadd.f32 %v2702, %v3025
        %v3268 = vadd.f32 %v2706, %v3028
        %v3269 = vadd.f32 %v2712, %v3033
        %v3270 = vadd.f32 %v2716, %v3036
        %v3271 = vadd.f32 %v2722, %v3041
        %v3272 = vadd.f32 %v2726, %v3044
        %v3273 = vadd.f32 %v2732, %v3049
        %v3274 = vadd.f32 %v2736, %v3052
        %v3275 = vadd.f32 %v2742, %v3057
        %v3276 = vadd.f32 %v2746, %v3060
        %v3277 = vadd.f32 %v3261, %v3067
        %v3278 = vadd.f32 %v3262, %v3067
        %v3279 = vadd.f32 %v3263, %v3067
        %v3280 = vadd.f32 %v3264, %v3067
        %v3281 = vadd.f32 %v3265, %v3067
        %v3282 = vadd.f32 %v3266, %v3067
        %v3283 = vadd.f32 %v3267, %v3067
        %v3284 = vadd.f32 %v3268, %v3067
        %v3285 = vadd.f32 %v3269, %v3067
        %v3286 = vadd.f32 %v3270, %v3067
        %v3287 = vadd.f32 %v3271, %v3067
        %v3288 = vadd.f32 %v3272, %v3067
        %v3289 = vadd.f32 %v3273, %v3067
        %v3290 = vadd.f32 %v3274, %v3067
        %v3291 = vadd.f32 %v3275, %v3067
        %v3292 = vadd.f32 %v3276, %v3067
        %v3293 = vmax.f32 %v3277, 0.0
        %v3294 = vmax.f32 %v3278, 0.0
        %v3295 = vmax.f32 %v3279, 0.0
        %v3296 = vmax.f32 %v3280, 0.0
        %v3297 = vmax.f32 %v3281, 0.0
        %v3298 = vmax.f32 %v3282, 0.0
        %v3299 = vmax.f32 %v3283, 0.0
        %v3300 = vmax.f32 %v3284, 0.0
        %v3301 = vmax.f32 %v3285, 0.0
        %v3302 = vmax.f32 %v3286, 0.0
        %v3303 = vmax.f32 %v3287, 0.0
        %v3304 = vmax.f32 %v3288, 0.0
        %v3305 = vmax.f32 %v3289, 0.0
        %v3306 = vmax.f32 %v3290, 0.0
        %v3307 = vmax.f32 %v3291, 0.0
        %v3308 = vmax.f32 %v3292, 0.0
        %3309 = vst [vmem:[#allocation2 + $0x10] sm:$0xff] %v2347
        %3310 = vst [vmem:[#allocation2 + $0x18] sm:$0xff] %v2350
        %3311 = vst [vmem:[#allocation2 + $0x20] sm:$0xff] %v2355
        %3312 = vst [vmem:[#allocation2 + $0x28] sm:$0xff] %v2358
        %3313 = vst [vmem:[#allocation2 + $0x30] sm:$0xff] %v2363
        %3314 = vst [vmem:[#allocation2 + $0x38] sm:$0xff] %v2366
        %3315 = vst [vmem:[#allocation2 + $0x40] sm:$0xff] %v2371
        %3316 = vst [vmem:[#allocation2 + $0x48] sm:$0xff] %v2374
        %3317 = vst [vmem:[#allocation2 + $0x50] sm:$0xff] %v2379
        %3318 = vst [vmem:[#allocation2 + $0x58] sm:$0xff] %v2382
        %3319 = vst [vmem:[#allocation2 + $0x60] sm:$0xff] %v2387
        %3320 = vst [vmem:[#allocation2 + $0x68] sm:$0xff] %v2390
        %3321 = vst [vmem:[#allocation2 + $0x70] sm:$0xff] %v2395
        %3322 = vst [vmem:[#allocation2 + $0x78] sm:$0xff] %v2398
        %3323 = vst [vmem:[#allocation2 + $0x80] sm:$0xff] %v2403
        %3324 = vst [vmem:[#allocation2 + $0x88] sm:$0xff] %v2406
        %v3325 = vld [vmem:[#allocation2 + $0x20] sm:$0xff]
        %v3326 = vld [vmem:[#allocation2 + $0x28] sm:$0xff]
        %v3327 = vld [vmem:[#allocation2 + $0x30] sm:$0xff]
        %v3328 = vld [vmem:[#allocation2 + $0x38] sm:$0xff]
        %v3329 = vld [vmem:[#allocation2 + $0x40] sm:$0xff]
        %v3330 = vld [vmem:[#allocation2 + $0x48] sm:$0xff]
        %v3331 = vld [vmem:[#allocation2 + $0x50] sm:$0xff]
        %v3332 = vld [vmem:[#allocation2 + $0x58] sm:$0xff]
        %v3333 = vld [vmem:[#allocation2 + $0x60] sm:$0xff]
        %v3334 = vld [vmem:[#allocation2 + $0x68] sm:$0xff]
        %v3335 = vld [vmem:[#allocation2 + $0x70] sm:$0xff]
        %v3336 = vld [vmem:[#allocation2 + $0x78] sm:$0xff]
        %v3337 = vld [vmem:[#allocation2 + $0x80] sm:$0xff]
        %v3338 = vld [vmem:[#allocation2 + $0x88] sm:$0xff]
        %v3339 = vld [vmem:[#allocation2 + $0x90] sm:$0xff]
        %v3340 = vld [vmem:[#allocation2 + $0x98] sm:$0xff]
        %v3341 = vadd.f32 %v2888, %v3067
        %v3342 = vadd.f32 %v2892, %v3067
        %v3343 = vadd.f32 %v2898, %v3067
        %v3344 = vadd.f32 %v2902, %v3067
        %v3345 = vadd.f32 %v2908, %v3067
        %v3346 = vadd.f32 %v2912, %v3067
        %v3347 = vadd.f32 %v2918, %v3067
        %v3348 = vadd.f32 %v2922, %v3067
        %v3349 = vadd.f32 %v2928, %v3067
        %v3350 = vadd.f32 %v2932, %v3067
        %v3351 = vadd.f32 %v2938, %v3067
        %v3352 = vadd.f32 %v2942, %v3067
        %v3353 = vadd.f32 %v2948, %v3067
        %v3354 = vadd.f32 %v2952, %v3067
        %v3355 = vadd.f32 %v2958, %v3067
        %v3356 = vadd.f32 %v2962, %v3067
        %v3357 = vmax.f32 %v3341, 0.0
        %v3358 = vmax.f32 %v3342, 0.0
        %v3359 = vmax.f32 %v3343, 0.0
        %v3360 = vmax.f32 %v3344, 0.0
        %v3361 = vmax.f32 %v3345, 0.0
        %v3362 = vmax.f32 %v3346, 0.0
        %v3363 = vmax.f32 %v3347, 0.0
        %v3364 = vmax.f32 %v3348, 0.0
        %v3365 = vmax.f32 %v3349, 0.0
        %v3366 = vmax.f32 %v3350, 0.0
        %v3367 = vmax.f32 %v3351, 0.0
        %v3368 = vmax.f32 %v3352, 0.0
        %v3369 = vmax.f32 %v3353, 0.0
        %v3370 = vmax.f32 %v3354, 0.0
        %v3371 = vmax.f32 %v3355, 0.0
        %v3372 = vmax.f32 %v3356, 0.0
        %v3373 = vadd.f32 %v2890, %v3325
        %v3374 = vadd.f32 %v2894, %v3326
        %v3375 = vadd.f32 %v2900, %v3327
        %v3376 = vadd.f32 %v2904, %v3328
        %v3377 = vadd.f32 %v2910, %v3329
        %v3378 = vadd.f32 %v2914, %v3330
        %v3379 = vadd.f32 %v2920, %v3331
        %v3380 = vadd.f32 %v2924, %v3332
        %v3381 = vadd.f32 %v2930, %v3333
        %v3382 = vadd.f32 %v2934, %v3334
        %v3383 = vadd.f32 %v2940, %v3335
        %v3384 = vadd.f32 %v2944, %v3336
        %v3385 = vadd.f32 %v2950, %v3337
        %v3386 = vadd.f32 %v2954, %v3338
        %v3387 = vadd.f32 %v2960, %v3339
        %v3388 = vadd.f32 %v2964, %v3340
        %v3389 = vadd.f32 %v3373, %v3067
        %v3390 = vadd.f32 %v3374, %v3067
        %v3391 = vadd.f32 %v3375, %v3067
        %v3392 = vadd.f32 %v3376, %v3067
        %v3393 = vadd.f32 %v3377, %v3067
        %v3394 = vadd.f32 %v3378, %v3067
        %v3395 = vadd.f32 %v3379, %v3067
        %v3396 = vadd.f32 %v3380, %v3067
        %v3397 = vadd.f32 %v3381, %v3067
        %v3398 = vadd.f32 %v3382, %v3067
        %v3399 = vadd.f32 %v3383, %v3067
        %v3400 = vadd.f32 %v3384, %v3067
        %v3401 = vadd.f32 %v3385, %v3067
        %v3402 = vadd.f32 %v3386, %v3067
        %v3403 = vadd.f32 %v3387, %v3067
        %v3404 = vadd.f32 %v3388, %v3067
        %v3405 = vmax.f32 %v3389, 0.0
        %v3406 = vmax.f32 %v3390, 0.0
        %v3407 = vmax.f32 %v3391, 0.0
        %v3408 = vmax.f32 %v3392, 0.0
        %v3409 = vmax.f32 %v3393, 0.0
        %v3410 = vmax.f32 %v3394, 0.0
        %v3411 = vmax.f32 %v3395, 0.0
        %v3412 = vmax.f32 %v3396, 0.0
        %v3413 = vmax.f32 %v3397, 0.0
        %v3414 = vmax.f32 %v3398, 0.0
        %v3415 = vmax.f32 %v3399, 0.0
        %v3416 = vmax.f32 %v3400, 0.0
        %v3417 = vmax.f32 %v3401, 0.0
        %v3418 = vmax.f32 %v3402, 0.0
        %v3419 = vmax.f32 %v3403, 0.0
        %v3420 = vmax.f32 %v3404, 0.0
        %v3421 = vld [vmem:[%s10] sm:$0x1]
        %3422 = vst [vmem:[#allocation2 + $0x10] sm:$0xff] %v3405
        %3423 = vst [vmem:[#allocation2 + $0x18] sm:$0xff] %v3406
        %3424 = vst [vmem:[#allocation2 + $0x20] sm:$0xff] %v3407
        %3425 = vst [vmem:[#allocation2 + $0x28] sm:$0xff] %v3408
        %3426 = vst [vmem:[#allocation2 + $0x30] sm:$0xff] %v3409
        %3427 = vst [vmem:[#allocation2 + $0x38] sm:$0xff] %v3410
        %3428 = vst [vmem:[#allocation2 + $0x40] sm:$0xff] %v3411
        %3429 = vst [vmem:[#allocation2 + $0x48] sm:$0xff] %v3412
        %3430 = vst [vmem:[#allocation2 + $0x50] sm:$0xff] %v3413
        %3431 = vst [vmem:[#allocation2 + $0x58] sm:$0xff] %v3414
        %3432 = vst [vmem:[#allocation2 + $0x60] sm:$0xff] %v3415
        %3433 = vst [vmem:[#allocation2 + $0x68] sm:$0xff] %v3416
        %3434 = vst [vmem:[#allocation2 + $0x70] sm:$0xff] %v3417
        %3435 = vst [vmem:[#allocation2 + $0x78] sm:$0xff] %v3418
        %3436 = vst [vmem:[#allocation2 + $0x80] sm:$0xff] %v3419
        %3437 = vst [vmem:[#allocation2 + $0x88] sm:$0xff] %v3420
        %v3438 = vld [vmem:[#allocation2] sm:$0xff]
        %v3439 = vld [vmem:[#allocation2 + $0x8] sm:$0xff]
        %v3440 = vld [vmem:[#allocation2 + $0x10] sm:$0xff]
        %v3441 = vld [vmem:[#allocation2 + $0x18] sm:$0xff]
        %v3442 = vld [vmem:[#allocation2 + $0x20] sm:$0xff]
        %v3443 = vld [vmem:[#allocation2 + $0x28] sm:$0xff]
        %v3444 = vld [vmem:[#allocation2 + $0x30] sm:$0xff]
        %v3445 = vld [vmem:[#allocation2 + $0x38] sm:$0xff]
        %v3446 = vld [vmem:[#allocation2 + $0x40] sm:$0xff]
        %v3447 = vld [vmem:[#allocation2 + $0x48] sm:$0xff]
        %v3448 = vld [vmem:[#allocation2 + $0x50] sm:$0xff]
        %v3449 = vld [vmem:[#allocation2 + $0x58] sm:$0xff]
        %v3450 = vld [vmem:[#allocation2 + $0x60] sm:$0xff]
        %v3451 = vld [vmem:[#allocation2 + $0x68] sm:$0xff]
        %v3452 = vld [vmem:[#allocation2 + $0x70] sm:$0xff]
        %v3453 = vld [vmem:[#allocation2 + $0x78] sm:$0xff]
        %3454 = vst [vmem:[#allocation2 + $0x10] sm:$0xff] %v3085
        %3455 = vst [vmem:[#allocation2 + $0x18] sm:$0xff] %v3086
        %3456 = vst [vmem:[#allocation2 + $0x20] sm:$0xff] %v3087
        %3457 = vst [vmem:[#allocation2 + $0x28] sm:$0xff] %v3088
        %3458 = vst [vmem:[#allocation2 + $0x30] sm:$0xff] %v3089
        %3459 = vst [vmem:[#allocation2 + $0x38] sm:$0xff] %v3090
        %3460 = vst [vmem:[#allocation2 + $0x40] sm:$0xff] %v3091
        %3461 = vst [vmem:[#allocation2 + $0x48] sm:$0xff] %v3092
        %3462 = vst [vmem:[#allocation2 + $0x50] sm:$0xff] %v3093
        %3463 = vst [vmem:[#allocation2 + $0x58] sm:$0xff] %v3094
        %3464 = vst [vmem:[#allocation2 + $0x60] sm:$0xff] %v3095
        %3465 = vst [vmem:[#allocation2 + $0x68] sm:$0xff] %v3096
        %3466 = vst [vmem:[#allocation2 + $0x70] sm:$0xff] %v3097
        %3467 = vst [vmem:[#allocation2 + $0x78] sm:$0xff] %v3098
        %3468 = vst [vmem:[#allocation2 + $0x80] sm:$0xff] %v3099
        %3469 = vst [vmem:[#allocation2 + $0x88] sm:$0xff] %v3100
        %v3470 = vld [vmem:[#allocation2 + $0x20] sm:$0xff]
        %v3471 = vld [vmem:[#allocation2 + $0x28] sm:$0xff]
        %v3472 = vld [vmem:[#allocation2 + $0x30] sm:$0xff]
        %v3473 = vld [vmem:[#allocation2 + $0x38] sm:$0xff]
        %v3474 = vld [vmem:[#allocation2 + $0x40] sm:$0xff]
        %v3475 = vld [vmem:[#allocation2 + $0x48] sm:$0xff]
        %v3476 = vld [vmem:[#allocation2 + $0x50] sm:$0xff]
        %v3477 = vld [vmem:[#allocation2 + $0x58] sm:$0xff]
        %v3478 = vld [vmem:[#allocation2 + $0x60] sm:$0xff]
        %v3479 = vld [vmem:[#allocation2 + $0x68] sm:$0xff]
        %v3480 = vld [vmem:[#allocation2 + $0x70] sm:$0xff]
        %v3481 = vld [vmem:[#allocation2 + $0x78] sm:$0xff]
        %v3482 = vld [vmem:[#allocation2 + $0x80] sm:$0xff]
        %v3483 = vld [vmem:[#allocation2 + $0x88] sm:$0xff]
        %v3484 = vld [vmem:[#allocation2 + $0x90] sm:$0xff]
        %v3485 = vld [vmem:[#allocation2 + $0x98] sm:$0xff]
        %v3486 = vpack.c.bf16 %v3439, %v3438
        %v3487 = vpack.c.bf16 %v3441, %v3440
        %v3488 = vpack.c.bf16 %v3443, %v3442
        %v3489 = vpack.c.bf16 %v3445, %v3444
        %v3490 = vpack.c.bf16 %v3447, %v3446
        %v3491 = vpack.c.bf16 %v3449, %v3448
        %v3492 = vpack.c.bf16 %v3451, %v3450
        %v3493 = vpack.c.bf16 %v3453, %v3452
        %v3494 = vld [vmem:[%s9] sm:$0xf]
        %v3495 = vld [vmem:[%s9 + $0x4] sm:$0xf]
        %v3496 = vld [vmem:[%s9 + $0x8] sm:$0xf]
        %v3497 = vld [vmem:[%s9 + $0xc] sm:$0xf]
        %v3498 = vld [vmem:[%s9 + $0x10] sm:$0xf]
        %v3499 = vld [vmem:[%s9 + $0x14] sm:$0xf]
        %v3500 = vld [vmem:[%s9 + $0x18] sm:$0xf]
        %v3501 = vld [vmem:[%s9 + $0x1c] sm:$0xf]
        %v3502 = vld [vmem:[%s9 + $0x20] sm:$0xf]
        %v3503 = vld [vmem:[%s9 + $0x24] sm:$0xf]
        %v3504 = vld [vmem:[%s9 + $0x28] sm:$0xf]
        %v3505 = vld [vmem:[%s9 + $0x2c] sm:$0xf]
        %v3506 = vld [vmem:[%s9 + $0x30] sm:$0xf]
        %v3507 = vld [vmem:[%s9 + $0x34] sm:$0xf]
        %v3508 = vld [vmem:[%s9 + $0x38] sm:$0xf]
        %v3509 = vld [vmem:[%s9 + $0x3c] sm:$0xf]
        %v3510 = vpack.c.bf16 %v3086, %v3085
        %v3511 = vpack.c.bf16 %v3088, %v3087
        %v3512 = vpack.c.bf16 %v3090, %v3089
        %v3513 = vpack.c.bf16 %v3092, %v3091
        %v3514 = vpack.c.bf16 %v3094, %v3093
        %v3515 = vpack.c.bf16 %v3096, %v3095
        %v3516 = vpack.c.bf16 %v3098, %v3097
        %v3517 = vpack.c.bf16 %v3100, %v3099
        %s3518 = scalar_lea.vmem %s9, 64
        %v3519 = vld [vmem:[%s3518] sm:$0xf]
        %v3520 = vld [vmem:[%s3518 + $0x4] sm:$0xf]
        %v3521 = vld [vmem:[%s3518 + $0x8] sm:$0xf]
        %v3522 = vld [vmem:[%s3518 + $0xc] sm:$0xf]
        %v3523 = vld [vmem:[%s3518 + $0x10] sm:$0xf]
        %v3524 = vld [vmem:[%s3518 + $0x14] sm:$0xf]
        %v3525 = vld [vmem:[%s3518 + $0x18] sm:$0xf]
        %v3526 = vld [vmem:[%s3518 + $0x1c] sm:$0xf]
        %v3527 = vld [vmem:[%s3518 + $0x20] sm:$0xf]
        %v3528 = vld [vmem:[%s3518 + $0x24] sm:$0xf]
        %v3529 = vld [vmem:[%s3518 + $0x28] sm:$0xf]
        %v3530 = vld [vmem:[%s3518 + $0x2c] sm:$0xf]
        %v3531 = vld [vmem:[%s3518 + $0x30] sm:$0xf]
        %v3532 = vld [vmem:[%s3518 + $0x34] sm:$0xf]
        %v3533 = vld [vmem:[%s3518 + $0x38] sm:$0xf]
        %v3534 = vld [vmem:[%s3518 + $0x3c] sm:$0xf]
        %v3551 = vunpack.c.l.b16 %v3519
        %v3552 = vunpack.c.l.b16 %v3520
        %v3553 = vunpack.c.l.b16 %v3521
        %v3554 = vunpack.c.l.b16 %v3522
        %v3555 = vunpack.c.l.b16 %v3523
        %v3556 = vunpack.c.l.b16 %v3524
        %v3557 = vunpack.c.l.b16 %v3525
        %v3558 = vunpack.c.l.b16 %v3526
        %v3559 = vunpack.c.l.b16 %v3527
        %v3560 = vunpack.c.l.b16 %v3528
        %v3561 = vunpack.c.l.b16 %v3529
        %v3562 = vunpack.c.l.b16 %v3530
        %v3563 = vunpack.c.l.b16 %v3531
        %v3564 = vunpack.c.l.b16 %v3532
        %v3565 = vunpack.c.l.b16 %v3533
        %v3566 = vunpack.c.l.b16 %v3534
        %v3567 = vpack.c.b16 %v3552, %v3551
        %v3568 = vpack.c.b16 %v3554, %v3553
        %v3569 = vpack.c.b16 %v3556, %v3555
        %v3570 = vpack.c.b16 %v3558, %v3557
        %v3571 = vpack.c.b16 %v3560, %v3559
        %v3572 = vpack.c.b16 %v3562, %v3561
        %v3573 = vpack.c.b16 %v3564, %v3563
        %v3574 = vpack.c.b16 %v3566, %v3565
        %3583 = vmatprep.subr.bf16.mxu0 0
        %3584 = vmatpush1.bf16.msra.mxu0 %v3567
        %3585 = vmatprep.subr.bf16.mxu0 0
        %3586 = vmatpush1.bf16.msra.mxu0 %v3568
        %3587 = vmatprep.subr.bf16.mxu0 0
        %3588 = vmatpush1.bf16.msra.mxu0 %v3569
        %3589 = vmatprep.subr.bf16.mxu0 0
        %3590 = vmatpush1.bf16.msra.mxu0 %v3570
        %3591 = vmatprep.subr.bf16.mxu0 0
        %3592 = vmatpush1.bf16.msra.mxu0 %v3571
        %3593 = vmatprep.subr.bf16.mxu0 0
        %3594 = vmatpush1.bf16.msra.mxu0 %v3572
        %3595 = vmatprep.subr.bf16.mxu0 0
        %3596 = vmatpush1.bf16.msra.mxu0 %v3573
        %3597 = vmatprep.subr.bf16.mxu0 0
        %3598 = vmatpush1.bf16.msra.mxu0 %v3574
        %3599 = vmatprep.subr.bf16.mxu0 0
        %3600 = vmatpush1.bf16.msra.mxu0 0
        %3601 = vmatprep.subr.bf16.mxu0 0
        %3602 = vmatpush1.bf16.msra.mxu0 0
        %3603 = vmatprep.subr.bf16.mxu0 0
        %3604 = vmatpush1.bf16.msra.mxu0 0
        %3605 = vmatprep.subr.bf16.mxu0 0
        %3606 = vmatpush1.bf16.msra.mxu0 0
        %3607 = vmatprep.subr.bf16.mxu0 0
        %3608 = vmatpush1.bf16.msra.mxu0 0
        %3609 = vmatprep.subr.bf16.mxu0 0
        %3610 = vmatpush1.bf16.msra.mxu0 0
        %3611 = vmatprep.subr.bf16.mxu0 0
        %3612 = vmatpush1.bf16.msra.mxu0 0
        %3613 = vmatprep.subr.bf16.mxu0 0
        %3614 = vmatpush1.bf16.msra.mxu0 0
        %3615 = vmatprep.mubr.bf16.mxu0 0
        %3616 = vmatmul.mubr.bf16.gmra.mrb[0].mxu0 %v3510
        %v3617 = vpop.f32.mrb[0].mxu0
        %v3618 = vadd.f32 0.0, %v3617
        %v3619 = vpop.f32.mrb[0].mxu0
        %v3620 = vpop.f32.mrb[0].mxu0
        %v3621 = vadd.f32 0.0, %v3620
        %v3622 = vpop.f32.mrb[0].mxu0
        %3623 = vmatprep.mubr.bf16.mxu0 0
        %3624 = vmatmul.mubr.bf16.gmra.mrb[0].mxu0 %v3511
        %v3625 = vpop.f32.mrb[0].mxu0
        %v3626 = vadd.f32 0.0, %v3625
        %v3627 = vpop.f32.mrb[0].mxu0
        %v3628 = vpop.f32.mrb[0].mxu0
        %v3629 = vadd.f32 0.0, %v3628
        %v3630 = vpop.f32.mrb[0].mxu0
        %3631 = vmatprep.mubr.bf16.mxu0 0
        %3632 = vmatmul.mubr.bf16.gmra.mrb[0].mxu0 %v3512
        %v3633 = vpop.f32.mrb[0].mxu0
        %v3634 = vadd.f32 0.0, %v3633
        %v3635 = vpop.f32.mrb[0].mxu0
        %v3636 = vpop.f32.mrb[0].mxu0
        %v3637 = vadd.f32 0.0, %v3636
        %v3638 = vpop.f32.mrb[0].mxu0
        %3639 = vmatprep.mubr.bf16.mxu0 0
        %3640 = vmatmul.mubr.bf16.gmra.mrb[0].mxu0 %v3513
        %v3641 = vpop.f32.mrb[0].mxu0
        %v3642 = vadd.f32 0.0, %v3641
        %v3643 = vpop.f32.mrb[0].mxu0
        %v3644 = vpop.f32.mrb[0].mxu0
        %v3645 = vadd.f32 0.0, %v3644
        %v3646 = vpop.f32.mrb[0].mxu0
        %3647 = vmatprep.mubr.bf16.mxu0 0
        %3648 = vmatmul.mubr.bf16.gmra.mrb[0].mxu0 %v3514
        %v3649 = vpop.f32.mrb[0].mxu0
        %v3650 = vadd.f32 0.0, %v3649
        %v3651 = vpop.f32.mrb[0].mxu0
        %v3652 = vpop.f32.mrb[0].mxu0
        %v3653 = vadd.f32 0.0, %v3652
        %v3654 = vpop.f32.mrb[0].mxu0
        %3655 = vmatprep.mubr.bf16.mxu0 0
        %3656 = vmatmul.mubr.bf16.gmra.mrb[0].mxu0 %v3515
        %v3657 = vpop.f32.mrb[0].mxu0
        %v3658 = vadd.f32 0.0, %v3657
        %v3659 = vpop.f32.mrb[0].mxu0
        %v3660 = vpop.f32.mrb[0].mxu0
        %v3661 = vadd.f32 0.0, %v3660
        %v3662 = vpop.f32.mrb[0].mxu0
        %3663 = vmatprep.mubr.bf16.mxu0 0
        %3664 = vmatmul.mubr.bf16.gmra.mrb[0].mxu0 %v3516
        %v3665 = vpop.f32.mrb[0].mxu0
        %v3666 = vadd.f32 0.0, %v3665
        %v3667 = vpop.f32.mrb[0].mxu0
        %v3668 = vpop.f32.mrb[0].mxu0
        %v3669 = vadd.f32 0.0, %v3668
        %v3670 = vpop.f32.mrb[0].mxu0
        %3671 = vmatprep.mubr.bf16.mxu0 0
        %3672 = vmatmul.mubr.bf16.gmra.mrb[0].mxu0 %v3517
        %v3673 = vpop.f32.mrb[0].mxu0
        %v3674 = vadd.f32 0.0, %v3673
        %v3675 = vpop.f32.mrb[0].mxu0
        %v3676 = vpop.f32.mrb[0].mxu0
        %v3677 = vadd.f32 0.0, %v3676
        %v3678 = vpop.f32.mrb[0].mxu0
        %3679 = vdwg.mxu0
        %v3696 = vunpack.c.l.b16 %v3494
        %v3697 = vunpack.c.l.b16 %v3495
        %v3698 = vunpack.c.l.b16 %v3496
        %v3699 = vunpack.c.l.b16 %v3497
        %v3700 = vunpack.c.l.b16 %v3498
        %v3701 = vunpack.c.l.b16 %v3499
        %v3702 = vunpack.c.l.b16 %v3500
        %v3703 = vunpack.c.l.b16 %v3501
        %v3704 = vunpack.c.l.b16 %v3502
        %v3705 = vunpack.c.l.b16 %v3503
        %v3706 = vunpack.c.l.b16 %v3504
        %v3707 = vunpack.c.l.b16 %v3505
        %v3708 = vunpack.c.l.b16 %v3506
        %v3709 = vunpack.c.l.b16 %v3507
        %v3710 = vunpack.c.l.b16 %v3508
        %v3711 = vunpack.c.l.b16 %v3509
        %v3712 = vpack.c.b16 %v3697, %v3696
        %v3713 = vpack.c.b16 %v3699, %v3698
        %v3714 = vpack.c.b16 %v3701, %v3700
        %v3715 = vpack.c.b16 %v3703, %v3702
        %v3716 = vpack.c.b16 %v3705, %v3704
        %v3717 = vpack.c.b16 %v3707, %v3706
        %v3718 = vpack.c.b16 %v3709, %v3708
        %v3719 = vpack.c.b16 %v3711, %v3710
        %3728 = vmatprep.subr.bf16.mxu0 0
        %3729 = vmatpush1.bf16.msra.mxu0 %v3712
        %3730 = vmatprep.subr.bf16.mxu0 0
        %3731 = vmatpush1.bf16.msra.mxu0 %v3713
        %3732 = vmatprep.subr.bf16.mxu0 0
        %3733 = vmatpush1.bf16.msra.mxu0 %v3714
        %3734 = vmatprep.subr.bf16.mxu0 0
        %3735 = vmatpush1.bf16.msra.mxu0 %v3715
        %3736 = vmatprep.subr.bf16.mxu0 0
        %3737 = vmatpush1.bf16.msra.mxu0 %v3716
        %3738 = vmatprep.subr.bf16.mxu0 0
        %3739 = vmatpush1.bf16.msra.mxu0 %v3717
        %3740 = vmatprep.subr.bf16.mxu0 0
        %3741 = vmatpush1.bf16.msra.mxu0 %v3718
        %3742 = vmatprep.subr.bf16.mxu0 0
        %3743 = vmatpush1.bf16.msra.mxu0 %v3719
        %3744 = vmatprep.subr.bf16.mxu0 0
        %3745 = vmatpush1.bf16.msra.mxu0 0
        %3746 = vmatprep.subr.bf16.mxu0 0
        %3747 = vmatpush1.bf16.msra.mxu0 0
        %3748 = vmatprep.subr.bf16.mxu0 0
        %3749 = vmatpush1.bf16.msra.mxu0 0
        %3750 = vmatprep.subr.bf16.mxu0 0
        %3751 = vmatpush1.bf16.msra.mxu0 0
        %3752 = vmatprep.subr.bf16.mxu0 0
        %3753 = vmatpush1.bf16.msra.mxu0 0
        %3754 = vmatprep.subr.bf16.mxu0 0
        %3755 = vmatpush1.bf16.msra.mxu0 0
        %3756 = vmatprep.subr.bf16.mxu0 0
        %3757 = vmatpush1.bf16.msra.mxu0 0
        %3758 = vmatprep.subr.bf16.mxu0 0
        %3759 = vmatpush1.bf16.msra.mxu0 0
        %3760 = vmatprep.mubr.bf16.mxu0 0
        %3761 = vmatmul.mubr.bf16.gmra.mrb[0].mxu0 %v3486
        %v3762 = vpop.f32.mrb[0].mxu0
        %v3763 = vadd.f32 %v3618, %v3762
        %v3764 = vpop.f32.mrb[0].mxu0
        %v3765 = vpop.f32.mrb[0].mxu0
        %v3766 = vadd.f32 %v3621, %v3765
        %v3767 = vpop.f32.mrb[0].mxu0
        %3768 = vmatprep.mubr.bf16.mxu0 0
        %3769 = vmatmul.mubr.bf16.gmra.mrb[0].mxu0 %v3487
        %v3770 = vpop.f32.mrb[0].mxu0
        %v3771 = vadd.f32 %v3626, %v3770
        %v3772 = vpop.f32.mrb[0].mxu0
        %v3773 = vpop.f32.mrb[0].mxu0
        %v3774 = vadd.f32 %v3629, %v3773
        %v3775 = vpop.f32.mrb[0].mxu0
        %3776 = vmatprep.mubr.bf16.mxu0 0
        %3777 = vmatmul.mubr.bf16.gmra.mrb[0].mxu0 %v3488
        %v3778 = vpop.f32.mrb[0].mxu0
        %v3779 = vadd.f32 %v3634, %v3778
        %v3780 = vpop.f32.mrb[0].mxu0
        %v3781 = vpop.f32.mrb[0].mxu0
        %v3782 = vadd.f32 %v3637, %v3781
        %v3783 = vpop.f32.mrb[0].mxu0
        %3784 = vmatprep.mubr.bf16.mxu0 0
        %3785 = vmatmul.mubr.bf16.gmra.mrb[0].mxu0 %v3489
        %v3786 = vpop.f32.mrb[0].mxu0
        %v3787 = vadd.f32 %v3642, %v3786
        %v3788 = vpop.f32.mrb[0].mxu0
        %v3789 = vpop.f32.mrb[0].mxu0
        %v3790 = vadd.f32 %v3645, %v3789
        %v3791 = vpop.f32.mrb[0].mxu0
        %3792 = vmatprep.mubr.bf16.mxu0 0
        %3793 = vmatmul.mubr.bf16.gmra.mrb[0].mxu0 %v3490
        %v3794 = vpop.f32.mrb[0].mxu0
        %v3795 = vadd.f32 %v3650, %v3794
        %v3796 = vpop.f32.mrb[0].mxu0
        %v3797 = vpop.f32.mrb[0].mxu0
        %v3798 = vadd.f32 %v3653, %v3797
        %v3799 = vpop.f32.mrb[0].mxu0
        %3800 = vmatprep.mubr.bf16.mxu0 0
        %3801 = vmatmul.mubr.bf16.gmra.mrb[0].mxu0 %v3491
        %v3802 = vpop.f32.mrb[0].mxu0
        %v3803 = vadd.f32 %v3658, %v3802
        %v3804 = vpop.f32.mrb[0].mxu0
        %v3805 = vpop.f32.mrb[0].mxu0
        %v3806 = vadd.f32 %v3661, %v3805
        %v3807 = vpop.f32.mrb[0].mxu0
        %3808 = vmatprep.mubr.bf16.mxu0 0
        %3809 = vmatmul.mubr.bf16.gmra.mrb[0].mxu0 %v3492
        %v3810 = vpop.f32.mrb[0].mxu0
        %v3811 = vadd.f32 %v3666, %v3810
        %v3812 = vpop.f32.mrb[0].mxu0
        %v3813 = vpop.f32.mrb[0].mxu0
        %v3814 = vadd.f32 %v3669, %v3813
        %v3815 = vpop.f32.mrb[0].mxu0
        %3816 = vmatprep.mubr.bf16.mxu0 0
        %3817 = vmatmul.mubr.bf16.gmra.mrb[0].mxu0 %v3493
        %v3818 = vpop.f32.mrb[0].mxu0
        %v3819 = vadd.f32 %v3674, %v3818
        %v3820 = vpop.f32.mrb[0].mxu0
        %v3821 = vpop.f32.mrb[0].mxu0
        %v3822 = vadd.f32 %v3677, %v3821
        %v3823 = vpop.f32.mrb[0].mxu0
        %3824 = vdwg.mxu0
        %v3825 = vpack.c.bf16 %v3134, %v3133
        %v3826 = vpack.c.bf16 %v3136, %v3135
        %v3827 = vpack.c.bf16 %v3138, %v3137
        %v3828 = vpack.c.bf16 %v3140, %v3139
        %v3829 = vpack.c.bf16 %v3142, %v3141
        %v3830 = vpack.c.bf16 %v3144, %v3143
        %v3831 = vpack.c.bf16 %v3146, %v3145
        %v3832 = vpack.c.bf16 %v3148, %v3147
        %s3833 = scalar_lea.vmem %s9, 128
        %v3834 = vld [vmem:[%s3833] sm:$0xf]
        %v3835 = vld [vmem:[%s3833 + $0x4] sm:$0xf]
        %v3836 = vld [vmem:[%s3833 + $0x8] sm:$0xf]
        %v3837 = vld [vmem:[%s3833 + $0xc] sm:$0xf]
        %v3838 = vld [vmem:[%s3833 + $0x10] sm:$0xf]
        %v3839 = vld [vmem:[%s3833 + $0x14] sm:$0xf]
        %v3840 = vld [vmem:[%s3833 + $0x18] sm:$0xf]
        %v3841 = vld [vmem:[%s3833 + $0x1c] sm:$0xf]
        %v3842 = vld [vmem:[%s3833 + $0x20] sm:$0xf]
        %v3843 = vld [vmem:[%s3833 + $0x24] sm:$0xf]
        %v3844 = vld [vmem:[%s3833 + $0x28] sm:$0xf]
        %v3845 = vld [vmem:[%s3833 + $0x2c] sm:$0xf]
        %v3846 = vld [vmem:[%s3833 + $0x30] sm:$0xf]
        %v3847 = vld [vmem:[%s3833 + $0x34] sm:$0xf]
        %v3848 = vld [vmem:[%s3833 + $0x38] sm:$0xf]
        %v3849 = vld [vmem:[%s3833 + $0x3c] sm:$0xf]
        %v3866 = vunpack.c.l.b16 %v3834
        %v3867 = vunpack.c.l.b16 %v3835
        %v3868 = vunpack.c.l.b16 %v3836
        %v3869 = vunpack.c.l.b16 %v3837
        %v3870 = vunpack.c.l.b16 %v3838
        %v3871 = vunpack.c.l.b16 %v3839
        %v3872 = vunpack.c.l.b16 %v3840
        %v3873 = vunpack.c.l.b16 %v3841
        %v3874 = vunpack.c.l.b16 %v3842
        %v3875 = vunpack.c.l.b16 %v3843
        %v3876 = vunpack.c.l.b16 %v3844
        %v3877 = vunpack.c.l.b16 %v3845
        %v3878 = vunpack.c.l.b16 %v3846
        %v3879 = vunpack.c.l.b16 %v3847
        %v3880 = vunpack.c.l.b16 %v3848
        %v3881 = vunpack.c.l.b16 %v3849
        %v3882 = vpack.c.b16 %v3867, %v3866
        %v3883 = vpack.c.b16 %v3869, %v3868
        %v3884 = vpack.c.b16 %v3871, %v3870
        %v3885 = vpack.c.b16 %v3873, %v3872
        %v3886 = vpack.c.b16 %v3875, %v3874
        %v3887 = vpack.c.b16 %v3877, %v3876
        %v3888 = vpack.c.b16 %v3879, %v3878
        %v3889 = vpack.c.b16 %v3881, %v3880
        %3898 = vmatprep.subr.bf16.mxu0 0
        %3899 = vmatpush1.bf16.msra.mxu0 %v3882
        %3900 = vmatprep.subr.bf16.mxu0 0
        %3901 = vmatpush1.bf16.msra.mxu0 %v3883
        %3902 = vmatprep.subr.bf16.mxu0 0
        %3903 = vmatpush1.bf16.msra.mxu0 %v3884
        %3904 = vmatprep.subr.bf16.mxu0 0
        %3905 = vmatpush1.bf16.msra.mxu0 %v3885
        %3906 = vmatprep.subr.bf16.mxu0 0
        %3907 = vmatpush1.bf16.msra.mxu0 %v3886
        %3908 = vmatprep.subr.bf16.mxu0 0
        %3909 = vmatpush1.bf16.msra.mxu0 %v3887
        %3910 = vmatprep.subr.bf16.mxu0 0
        %3911 = vmatpush1.bf16.msra.mxu0 %v3888
        %3912 = vmatprep.subr.bf16.mxu0 0
        %3913 = vmatpush1.bf16.msra.mxu0 %v3889
        %3914 = vmatprep.subr.bf16.mxu0 0
        %3915 = vmatpush1.bf16.msra.mxu0 0
        %3916 = vmatprep.subr.bf16.mxu0 0
        %3917 = vmatpush1.bf16.msra.mxu0 0
        %3918 = vmatprep.subr.bf16.mxu0 0
        %3919 = vmatpush1.bf16.msra.mxu0 0
        %3920 = vmatprep.subr.bf16.mxu0 0
        %3921 = vmatpush1.bf16.msra.mxu0 0
        %3922 = vmatprep.subr.bf16.mxu0 0
        %3923 = vmatpush1.bf16.msra.mxu0 0
        %3924 = vmatprep.subr.bf16.mxu0 0
        %3925 = vmatpush1.bf16.msra.mxu0 0
        %3926 = vmatprep.subr.bf16.mxu0 0
        %3927 = vmatpush1.bf16.msra.mxu0 0
        %3928 = vmatprep.subr.bf16.mxu0 0
        %3929 = vmatpush1.bf16.msra.mxu0 0
        %3930 = vmatprep.mubr.bf16.mxu0 0
        %3931 = vmatmul.mubr.bf16.gmra.mrb[0].mxu0 %v3825
        %v3932 = vpop.f32.mrb[0].mxu0
        %v3933 = vadd.f32 0.0, %v3932
        %v3934 = vpop.f32.mrb[0].mxu0
        %v3935 = vpop.f32.mrb[0].mxu0
        %v3936 = vadd.f32 0.0, %v3935
        %v3937 = vpop.f32.mrb[0].mxu0
        %3938 = vmatprep.mubr.bf16.mxu0 0
        %3939 = vmatmul.mubr.bf16.gmra.mrb[0].mxu0 %v3826
        %v3940 = vpop.f32.mrb[0].mxu0
        %v3941 = vadd.f32 0.0, %v3940
        %v3942 = vpop.f32.mrb[0].mxu0
        %v3943 = vpop.f32.mrb[0].mxu0
        %v3944 = vadd.f32 0.0, %v3943
        %v3945 = vpop.f32.mrb[0].mxu0
        %3946 = vmatprep.mubr.bf16.mxu0 0
        %3947 = vmatmul.mubr.bf16.gmra.mrb[0].mxu0 %v3827
        %v3948 = vpop.f32.mrb[0].mxu0
        %v3949 = vadd.f32 0.0, %v3948
        %v3950 = vpop.f32.mrb[0].mxu0
        %v3951 = vpop.f32.mrb[0].mxu0
        %v3952 = vadd.f32 0.0, %v3951
        %v3953 = vpop.f32.mrb[0].mxu0
        %3954 = vmatprep.mubr.bf16.mxu0 0
        %3955 = vmatmul.mubr.bf16.gmra.mrb[0].mxu0 %v3828
        %v3956 = vpop.f32.mrb[0].mxu0
        %v3957 = vadd.f32 0.0, %v3956
        %v3958 = vpop.f32.mrb[0].mxu0
        %v3959 = vpop.f32.mrb[0].mxu0
        %v3960 = vadd.f32 0.0, %v3959
        %v3961 = vpop.f32.mrb[0].mxu0
        %3962 = vmatprep.mubr.bf16.mxu0 0
        %3963 = vmatmul.mubr.bf16.gmra.mrb[0].mxu0 %v3829
        %v3964 = vpop.f32.mrb[0].mxu0
        %v3965 = vadd.f32 0.0, %v3964
        %v3966 = vpop.f32.mrb[0].mxu0
        %v3967 = vpop.f32.mrb[0].mxu0
        %v3968 = vadd.f32 0.0, %v3967
        %v3969 = vpop.f32.mrb[0].mxu0
        %3970 = vmatprep.mubr.bf16.mxu0 0
        %3971 = vmatmul.mubr.bf16.gmra.mrb[0].mxu0 %v3830
        %v3972 = vpop.f32.mrb[0].mxu0
        %v3973 = vadd.f32 0.0, %v3972
        %v3974 = vpop.f32.mrb[0].mxu0
        %v3975 = vpop.f32.mrb[0].mxu0
        %v3976 = vadd.f32 0.0, %v3975
        %v3977 = vpop.f32.mrb[0].mxu0
        %3978 = vmatprep.mubr.bf16.mxu0 0
        %3979 = vmatmul.mubr.bf16.gmra.mrb[0].mxu0 %v3831
        %v3980 = vpop.f32.mrb[0].mxu0
        %v3981 = vadd.f32 0.0, %v3980
        %v3982 = vpop.f32.mrb[0].mxu0
        %v3983 = vpop.f32.mrb[0].mxu0
        %v3984 = vadd.f32 0.0, %v3983
        %v3985 = vpop.f32.mrb[0].mxu0
        %3986 = vmatprep.mubr.bf16.mxu0 0
        %3987 = vmatmul.mubr.bf16.gmra.mrb[0].mxu0 %v3832
        %v3988 = vpop.f32.mrb[0].mxu0
        %v3989 = vadd.f32 0.0, %v3988
        %v3990 = vpop.f32.mrb[0].mxu0
        %v3991 = vpop.f32.mrb[0].mxu0
        %v3992 = vadd.f32 0.0, %v3991
        %v3993 = vpop.f32.mrb[0].mxu0
        %3994 = vdwg.mxu0
        %v3995 = vadd.f32 %v3763, %v3933
        %v3996 = vadd.f32 %v3766, %v3936
        %v3997 = vadd.f32 %v3771, %v3941
        %v3998 = vadd.f32 %v3774, %v3944
        %v3999 = vadd.f32 %v3779, %v3949
        %v4000 = vadd.f32 %v3782, %v3952
        %v4001 = vadd.f32 %v3787, %v3957
        %v4002 = vadd.f32 %v3790, %v3960
        %v4003 = vadd.f32 %v3795, %v3965
        %v4004 = vadd.f32 %v3798, %v3968
        %v4005 = vadd.f32 %v3803, %v3973
        %v4006 = vadd.f32 %v3806, %v3976
        %v4007 = vadd.f32 %v3811, %v3981
        %v4008 = vadd.f32 %v3814, %v3984
        %v4009 = vadd.f32 %v3819, %v3989
        %v4010 = vadd.f32 %v3822, %v3992
        %v4012 = vlaneseq
        %v4013 = vshrl.u32 %v4012, 7
        %v4014 = vsub.s32 0, %v4013
        %v4015 = vrot.slane %v3421, %v4014
        %v4017 = vadd.f32 %v3995, %v4015
        %v4018 = vadd.f32 %v3996, %v4015
        %v4019 = vadd.f32 %v3997, %v4015
        %v4020 = vadd.f32 %v3998, %v4015
        %v4021 = vadd.f32 %v3999, %v4015
        %v4022 = vadd.f32 %v4000, %v4015
        %v4023 = vadd.f32 %v4001, %v4015
        %v4024 = vadd.f32 %v4002, %v4015
        %v4025 = vadd.f32 %v4003, %v4015
        %v4026 = vadd.f32 %v4004, %v4015
        %v4027 = vadd.f32 %v4005, %v4015
        %v4028 = vadd.f32 %v4006, %v4015
        %v4029 = vadd.f32 %v4007, %v4015
        %v4030 = vadd.f32 %v4008, %v4015
        %v4031 = vadd.f32 %v4009, %v4015
        %v4032 = vadd.f32 %v4010, %v4015
        %v4033 = vsub.f32 0.0, %v4017
        %v4034 = vsub.f32 0.0, %v4018
        %v4035 = vsub.f32 0.0, %v4019
        %v4036 = vsub.f32 0.0, %v4020
        %v4037 = vsub.f32 0.0, %v4021
        %v4038 = vsub.f32 0.0, %v4022
        %v4039 = vsub.f32 0.0, %v4023
        %v4040 = vsub.f32 0.0, %v4024
        %v4041 = vsub.f32 0.0, %v4025
        %v4042 = vsub.f32 0.0, %v4026
        %v4043 = vsub.f32 0.0, %v4027
        %v4044 = vsub.f32 0.0, %v4028
        %v4045 = vsub.f32 0.0, %v4029
        %v4046 = vsub.f32 0.0, %v4030
        %v4047 = vsub.f32 0.0, %v4031
        %v4048 = vsub.f32 0.0, %v4032
        %v4049 = vmul.f32 %v4033, 1.442695
        %v4050 = vpow.pop %v4049
        %v4051 = vmul.f32 %v4034, 1.442695
        %v4052 = vpow.pop %v4051
        %v4053 = vmul.f32 %v4035, 1.442695
        %v4054 = vpow.pop %v4053
        %v4055 = vmul.f32 %v4036, 1.442695
        %v4056 = vpow.pop %v4055
        %v4057 = vmul.f32 %v4037, 1.442695
        %v4058 = vpow.pop %v4057
        %v4059 = vmul.f32 %v4038, 1.442695
        %v4060 = vpow.pop %v4059
        %v4061 = vmul.f32 %v4039, 1.442695
        %v4062 = vpow.pop %v4061
        %v4063 = vmul.f32 %v4040, 1.442695
        %v4064 = vpow.pop %v4063
        %v4065 = vmul.f32 %v4041, 1.442695
        %v4066 = vpow.pop %v4065
        %v4067 = vmul.f32 %v4042, 1.442695
        %v4068 = vpow.pop %v4067
        %v4069 = vmul.f32 %v4043, 1.442695
        %v4070 = vpow.pop %v4069
        %v4071 = vmul.f32 %v4044, 1.442695
        %v4072 = vpow.pop %v4071
        %v4073 = vmul.f32 %v4045, 1.442695
        %v4074 = vpow.pop %v4073
        %v4075 = vmul.f32 %v4046, 1.442695
        %v4076 = vpow.pop %v4075
        %v4077 = vmul.f32 %v4047, 1.442695
        %v4078 = vpow.pop %v4077
        %v4079 = vmul.f32 %v4048, 1.442695
        %v4080 = vpow.pop %v4079
        %v4081 = vadd.f32 %v4050, 1.0
        %v4082 = vadd.f32 %v4052, 1.0
        %v4083 = vadd.f32 %v4054, 1.0
        %v4084 = vadd.f32 %v4056, 1.0
        %v4085 = vadd.f32 %v4058, 1.0
        %v4086 = vadd.f32 %v4060, 1.0
        %v4087 = vadd.f32 %v4062, 1.0
        %v4088 = vadd.f32 %v4064, 1.0
        %v4089 = vadd.f32 %v4066, 1.0
        %v4090 = vadd.f32 %v4068, 1.0
        %v4091 = vadd.f32 %v4070, 1.0
        %v4092 = vadd.f32 %v4072, 1.0
        %v4093 = vadd.f32 %v4074, 1.0
        %v4094 = vadd.f32 %v4076, 1.0
        %v4095 = vadd.f32 %v4078, 1.0
        %v4096 = vadd.f32 %v4080, 1.0
        %v4097 = vrcp.pop %v4081
        %v4098 = vrcp.pop %v4082
        %v4099 = vrcp.pop %v4083
        %v4100 = vrcp.pop %v4084
        %v4101 = vrcp.pop %v4085
        %v4102 = vrcp.pop %v4086
        %v4103 = vrcp.pop %v4087
        %v4104 = vrcp.pop %v4088
        %v4105 = vrcp.pop %v4089
        %v4106 = vrcp.pop %v4090
        %v4107 = vrcp.pop %v4091
        %v4108 = vrcp.pop %v4092
        %v4109 = vrcp.pop %v4093
        %v4110 = vrcp.pop %v4094
        %v4111 = vrcp.pop %v4095
        %v4112 = vrcp.pop %v4096
        %vm4113 = vcmask 64512
        %4114 = vst.msk [vmem:[%s376] sm:$0xff] %vm4113, %v4097
        %4115 = vst.msk [vmem:[%s376 + $0x8] sm:$0xff] %vm4113, %v4098
        %4116 = vst.msk [vmem:[%s376 + $0x10] sm:$0xff] %vm4113, %v4099
        %4117 = vst.msk [vmem:[%s376 + $0x18] sm:$0xff] %vm4113, %v4100
        %4118 = vst.msk [vmem:[%s376 + $0x20] sm:$0xff] %vm4113, %v4101
        %4119 = vst.msk [vmem:[%s376 + $0x28] sm:$0xff] %vm4113, %v4102
        %4120 = vst.msk [vmem:[%s376 + $0x30] sm:$0xff] %vm4113, %v4103
        %4121 = vst.msk [vmem:[%s376 + $0x38] sm:$0xff] %vm4113, %v4104
        %4122 = vst.msk [vmem:[%s376 + $0x40] sm:$0xff] %vm4113, %v4105
        %4123 = vst.msk [vmem:[%s376 + $0x48] sm:$0xff] %vm4113, %v4106
        %4124 = vst.msk [vmem:[%s376 + $0x50] sm:$0xff] %vm4113, %v4107
        %4125 = vst.msk [vmem:[%s376 + $0x58] sm:$0xff] %vm4113, %v4108
        %4126 = vst.msk [vmem:[%s376 + $0x60] sm:$0xff] %vm4113, %v4109
        %4127 = vst.msk [vmem:[%s376 + $0x68] sm:$0xff] %vm4113, %v4110
        %4128 = vst.msk [vmem:[%s376 + $0x70] sm:$0xff] %vm4113, %v4111
        %4129 = vst.msk [vmem:[%s376 + $0x78] sm:$0xff] %vm4113, %v4112
        %v4130 = vld [vmem:[%s9] sm:$0xf]
        %v4131 = vld [vmem:[%s9 + $0x4] sm:$0xf]
        %v4132 = vld [vmem:[%s9 + $0x8] sm:$0xf]
        %v4133 = vld [vmem:[%s9 + $0xc] sm:$0xf]
        %v4134 = vld [vmem:[%s9 + $0x10] sm:$0xf]
        %v4135 = vld [vmem:[%s9 + $0x14] sm:$0xf]
        %v4136 = vld [vmem:[%s9 + $0x18] sm:$0xf]
        %v4137 = vld [vmem:[%s9 + $0x1c] sm:$0xf]
        %v4138 = vld [vmem:[%s9 + $0x20] sm:$0xf]
        %v4139 = vld [vmem:[%s9 + $0x24] sm:$0xf]
        %v4140 = vld [vmem:[%s9 + $0x28] sm:$0xf]
        %v4141 = vld [vmem:[%s9 + $0x2c] sm:$0xf]
        %v4142 = vld [vmem:[%s9 + $0x30] sm:$0xf]
        %v4143 = vld [vmem:[%s9 + $0x34] sm:$0xf]
        %v4144 = vld [vmem:[%s9 + $0x38] sm:$0xf]
        %v4145 = vld [vmem:[%s9 + $0x3c] sm:$0xf]
        %v4146 = vld [vmem:[%s3518] sm:$0xf]
        %v4147 = vld [vmem:[%s3518 + $0x4] sm:$0xf]
        %v4148 = vld [vmem:[%s3518 + $0x8] sm:$0xf]
        %v4149 = vld [vmem:[%s3518 + $0xc] sm:$0xf]
        %v4150 = vld [vmem:[%s3518 + $0x10] sm:$0xf]
        %v4151 = vld [vmem:[%s3518 + $0x14] sm:$0xf]
        %v4152 = vld [vmem:[%s3518 + $0x18] sm:$0xf]
        %v4153 = vld [vmem:[%s3518 + $0x1c] sm:$0xf]
        %v4154 = vld [vmem:[%s3518 + $0x20] sm:$0xf]
        %v4155 = vld [vmem:[%s3518 + $0x24] sm:$0xf]
        %v4156 = vld [vmem:[%s3518 + $0x28] sm:$0xf]
        %v4157 = vld [vmem:[%s3518 + $0x2c] sm:$0xf]
        %v4158 = vld [vmem:[%s3518 + $0x30] sm:$0xf]
        %v4159 = vld [vmem:[%s3518 + $0x34] sm:$0xf]
        %v4160 = vld [vmem:[%s3518 + $0x38] sm:$0xf]
        %v4161 = vld [vmem:[%s3518 + $0x3c] sm:$0xf]
        %v4178 = vunpack.c.l.b16 %v4146
        %v4179 = vunpack.c.l.b16 %v4147
        %v4180 = vunpack.c.l.b16 %v4148
        %v4181 = vunpack.c.l.b16 %v4149
        %v4182 = vunpack.c.l.b16 %v4150
        %v4183 = vunpack.c.l.b16 %v4151
        %v4184 = vunpack.c.l.b16 %v4152
        %v4185 = vunpack.c.l.b16 %v4153
        %v4186 = vunpack.c.l.b16 %v4154
        %v4187 = vunpack.c.l.b16 %v4155
        %v4188 = vunpack.c.l.b16 %v4156
        %v4189 = vunpack.c.l.b16 %v4157
        %v4190 = vunpack.c.l.b16 %v4158
        %v4191 = vunpack.c.l.b16 %v4159
        %v4192 = vunpack.c.l.b16 %v4160
        %v4193 = vunpack.c.l.b16 %v4161
        %v4194 = vpack.c.b16 %v4179, %v4178
        %v4195 = vpack.c.b16 %v4181, %v4180
        %v4196 = vpack.c.b16 %v4183, %v4182
        %v4197 = vpack.c.b16 %v4185, %v4184
        %v4198 = vpack.c.b16 %v4187, %v4186
        %v4199 = vpack.c.b16 %v4189, %v4188
        %v4200 = vpack.c.b16 %v4191, %v4190
        %v4201 = vpack.c.b16 %v4193, %v4192
        %4210 = vmatprep.subr.bf16.mxu0 0
        %4211 = vmatpush1.bf16.msra.mxu0 %v4194
        %4212 = vmatprep.subr.bf16.mxu0 0
        %4213 = vmatpush1.bf16.msra.mxu0 %v4195
        %4214 = vmatprep.subr.bf16.mxu0 0
        %4215 = vmatpush1.bf16.msra.mxu0 %v4196
        %4216 = vmatprep.subr.bf16.mxu0 0
        %4217 = vmatpush1.bf16.msra.mxu0 %v4197
        %4218 = vmatprep.subr.bf16.mxu0 0
        %4219 = vmatpush1.bf16.msra.mxu0 %v4198
        %4220 = vmatprep.subr.bf16.mxu0 0
        %4221 = vmatpush1.bf16.msra.mxu0 %v4199
        %4222 = vmatprep.subr.bf16.mxu0 0
        %4223 = vmatpush1.bf16.msra.mxu0 %v4200
        %4224 = vmatprep.subr.bf16.mxu0 0
        %4225 = vmatpush1.bf16.msra.mxu0 %v4201
        %4226 = vmatprep.subr.bf16.mxu0 0
        %4227 = vmatpush1.bf16.msra.mxu0 0
        %4228 = vmatprep.subr.bf16.mxu0 0
        %4229 = vmatpush1.bf16.msra.mxu0 0
        %4230 = vmatprep.subr.bf16.mxu0 0
        %4231 = vmatpush1.bf16.msra.mxu0 0
        %4232 = vmatprep.subr.bf16.mxu0 0
        %4233 = vmatpush1.bf16.msra.mxu0 0
        %4234 = vmatprep.subr.bf16.mxu0 0
        %4235 = vmatpush1.bf16.msra.mxu0 0
        %4236 = vmatprep.subr.bf16.mxu0 0
        %4237 = vmatpush1.bf16.msra.mxu0 0
        %4238 = vmatprep.subr.bf16.mxu0 0
        %4239 = vmatpush1.bf16.msra.mxu0 0
        %4240 = vmatprep.subr.bf16.mxu0 0
        %4241 = vmatpush1.bf16.msra.mxu0 0
        %4242 = vmatprep.mubr.bf16.mxu0 0
        %4243 = vmatmul.mubr.bf16.gmra.mrb[0].mxu0 %v3825
        %v4244 = vpop.f32.mrb[0].mxu0
        %v4245 = vadd.f32 0.0, %v4244
        %v4246 = vpop.f32.mrb[0].mxu0
        %v4247 = vpop.f32.mrb[0].mxu0
        %v4248 = vadd.f32 0.0, %v4247
        %v4249 = vpop.f32.mrb[0].mxu0
        %4250 = vmatprep.mubr.bf16.mxu0 0
        %4251 = vmatmul.mubr.bf16.gmra.mrb[0].mxu0 %v3826
        %v4252 = vpop.f32.mrb[0].mxu0
        %v4253 = vadd.f32 0.0, %v4252
        %v4254 = vpop.f32.mrb[0].mxu0
        %v4255 = vpop.f32.mrb[0].mxu0
        %v4256 = vadd.f32 0.0, %v4255
        %v4257 = vpop.f32.mrb[0].mxu0
        %4258 = vmatprep.mubr.bf16.mxu0 0
        %4259 = vmatmul.mubr.bf16.gmra.mrb[0].mxu0 %v3827
        %v4260 = vpop.f32.mrb[0].mxu0
        %v4261 = vadd.f32 0.0, %v4260
        %v4262 = vpop.f32.mrb[0].mxu0
        %v4263 = vpop.f32.mrb[0].mxu0
        %v4264 = vadd.f32 0.0, %v4263
        %v4265 = vpop.f32.mrb[0].mxu0
        %4266 = vmatprep.mubr.bf16.mxu0 0
        %4267 = vmatmul.mubr.bf16.gmra.mrb[0].mxu0 %v3828
        %v4268 = vpop.f32.mrb[0].mxu0
        %v4269 = vadd.f32 0.0, %v4268
        %v4270 = vpop.f32.mrb[0].mxu0
        %v4271 = vpop.f32.mrb[0].mxu0
        %v4272 = vadd.f32 0.0, %v4271
        %v4273 = vpop.f32.mrb[0].mxu0
        %4274 = vmatprep.mubr.bf16.mxu0 0
        %4275 = vmatmul.mubr.bf16.gmra.mrb[0].mxu0 %v3829
        %v4276 = vpop.f32.mrb[0].mxu0
        %v4277 = vadd.f32 0.0, %v4276
        %v4278 = vpop.f32.mrb[0].mxu0
        %v4279 = vpop.f32.mrb[0].mxu0
        %v4280 = vadd.f32 0.0, %v4279
        %v4281 = vpop.f32.mrb[0].mxu0
        %4282 = vmatprep.mubr.bf16.mxu0 0
        %4283 = vmatmul.mubr.bf16.gmra.mrb[0].mxu0 %v3830
        %v4284 = vpop.f32.mrb[0].mxu0
        %v4285 = vadd.f32 0.0, %v4284
        %v4286 = vpop.f32.mrb[0].mxu0
        %v4287 = vpop.f32.mrb[0].mxu0
        %v4288 = vadd.f32 0.0, %v4287
        %v4289 = vpop.f32.mrb[0].mxu0
        %4290 = vmatprep.mubr.bf16.mxu0 0
        %4291 = vmatmul.mubr.bf16.gmra.mrb[0].mxu0 %v3831
        %v4292 = vpop.f32.mrb[0].mxu0
        %v4293 = vadd.f32 0.0, %v4292
        %v4294 = vpop.f32.mrb[0].mxu0
        %v4295 = vpop.f32.mrb[0].mxu0
        %v4296 = vadd.f32 0.0, %v4295
        %v4297 = vpop.f32.mrb[0].mxu0
        %4298 = vmatprep.mubr.bf16.mxu0 0
        %4299 = vmatmul.mubr.bf16.gmra.mrb[0].mxu0 %v3832
        %v4300 = vpop.f32.mrb[0].mxu0
        %v4301 = vadd.f32 0.0, %v4300
        %v4302 = vpop.f32.mrb[0].mxu0
        %v4303 = vpop.f32.mrb[0].mxu0
        %v4304 = vadd.f32 0.0, %v4303
        %v4305 = vpop.f32.mrb[0].mxu0
        %4306 = vdwg.mxu0
        %v4323 = vunpack.c.l.b16 %v4130
        %v4324 = vunpack.c.l.b16 %v4131
        %v4325 = vunpack.c.l.b16 %v4132
        %v4326 = vunpack.c.l.b16 %v4133
        %v4327 = vunpack.c.l.b16 %v4134
        %v4328 = vunpack.c.l.b16 %v4135
        %v4329 = vunpack.c.l.b16 %v4136
        %v4330 = vunpack.c.l.b16 %v4137
        %v4331 = vunpack.c.l.b16 %v4138
        %v4332 = vunpack.c.l.b16 %v4139
        %v4333 = vunpack.c.l.b16 %v4140
        %v4334 = vunpack.c.l.b16 %v4141
        %v4335 = vunpack.c.l.b16 %v4142
        %v4336 = vunpack.c.l.b16 %v4143
        %v4337 = vunpack.c.l.b16 %v4144
        %v4338 = vunpack.c.l.b16 %v4145
        %v4339 = vpack.c.b16 %v4324, %v4323
        %v4340 = vpack.c.b16 %v4326, %v4325
        %v4341 = vpack.c.b16 %v4328, %v4327
        %v4342 = vpack.c.b16 %v4330, %v4329
        %v4343 = vpack.c.b16 %v4332, %v4331
        %v4344 = vpack.c.b16 %v4334, %v4333
        %v4345 = vpack.c.b16 %v4336, %v4335
        %v4346 = vpack.c.b16 %v4338, %v4337
        %4355 = vmatprep.subr.bf16.mxu0 0
        %4356 = vmatpush1.bf16.msra.mxu0 %v4339
        %4357 = vmatprep.subr.bf16.mxu0 0
        %4358 = vmatpush1.bf16.msra.mxu0 %v4340
        %4359 = vmatprep.subr.bf16.mxu0 0
        %4360 = vmatpush1.bf16.msra.mxu0 %v4341
        %4361 = vmatprep.subr.bf16.mxu0 0
        %4362 = vmatpush1.bf16.msra.mxu0 %v4342
        %4363 = vmatprep.subr.bf16.mxu0 0
        %4364 = vmatpush1.bf16.msra.mxu0 %v4343
        %4365 = vmatprep.subr.bf16.mxu0 0
        %4366 = vmatpush1.bf16.msra.mxu0 %v4344
        %4367 = vmatprep.subr.bf16.mxu0 0
        %4368 = vmatpush1.bf16.msra.mxu0 %v4345
        %4369 = vmatprep.subr.bf16.mxu0 0
        %4370 = vmatpush1.bf16.msra.mxu0 %v4346
        %4371 = vmatprep.subr.bf16.mxu0 0
        %4372 = vmatpush1.bf16.msra.mxu0 0
        %4373 = vmatprep.subr.bf16.mxu0 0
        %4374 = vmatpush1.bf16.msra.mxu0 0
        %4375 = vmatprep.subr.bf16.mxu0 0
        %4376 = vmatpush1.bf16.msra.mxu0 0
        %4377 = vmatprep.subr.bf16.mxu0 0
        %4378 = vmatpush1.bf16.msra.mxu0 0
        %4379 = vmatprep.subr.bf16.mxu0 0
        %4380 = vmatpush1.bf16.msra.mxu0 0
        %4381 = vmatprep.subr.bf16.mxu0 0
        %4382 = vmatpush1.bf16.msra.mxu0 0
        %4383 = vmatprep.subr.bf16.mxu0 0
        %4384 = vmatpush1.bf16.msra.mxu0 0
        %4385 = vmatprep.subr.bf16.mxu0 0
        %4386 = vmatpush1.bf16.msra.mxu0 0
        %4387 = vmatprep.mubr.bf16.mxu0 0
        %4388 = vmatmul.mubr.bf16.gmra.mrb[0].mxu0 %v3510
        %v4389 = vpop.f32.mrb[0].mxu0
        %v4390 = vadd.f32 %v4245, %v4389
        %v4391 = vpop.f32.mrb[0].mxu0
        %v4392 = vpop.f32.mrb[0].mxu0
        %v4393 = vadd.f32 %v4248, %v4392
        %v4394 = vpop.f32.mrb[0].mxu0
        %4395 = vmatprep.mubr.bf16.mxu0 0
        %4396 = vmatmul.mubr.bf16.gmra.mrb[0].mxu0 %v3511
        %v4397 = vpop.f32.mrb[0].mxu0
        %v4398 = vadd.f32 %v4253, %v4397
        %v4399 = vpop.f32.mrb[0].mxu0
        %v4400 = vpop.f32.mrb[0].mxu0
        %v4401 = vadd.f32 %v4256, %v4400
        %v4402 = vpop.f32.mrb[0].mxu0
        %4403 = vmatprep.mubr.bf16.mxu0 0
        %4404 = vmatmul.mubr.bf16.gmra.mrb[0].mxu0 %v3512
        %v4405 = vpop.f32.mrb[0].mxu0
        %v4406 = vadd.f32 %v4261, %v4405
        %v4407 = vpop.f32.mrb[0].mxu0
        %v4408 = vpop.f32.mrb[0].mxu0
        %v4409 = vadd.f32 %v4264, %v4408
        %v4410 = vpop.f32.mrb[0].mxu0
        %4411 = vmatprep.mubr.bf16.mxu0 0
        %4412 = vmatmul.mubr.bf16.gmra.mrb[0].mxu0 %v3513
        %v4413 = vpop.f32.mrb[0].mxu0
        %v4414 = vadd.f32 %v4269, %v4413
        %v4415 = vpop.f32.mrb[0].mxu0
        %v4416 = vpop.f32.mrb[0].mxu0
        %v4417 = vadd.f32 %v4272, %v4416
        %v4418 = vpop.f32.mrb[0].mxu0
        %4419 = vmatprep.mubr.bf16.mxu0 0
        %4420 = vmatmul.mubr.bf16.gmra.mrb[0].mxu0 %v3514
        %v4421 = vpop.f32.mrb[0].mxu0
        %v4422 = vadd.f32 %v4277, %v4421
        %v4423 = vpop.f32.mrb[0].mxu0
        %v4424 = vpop.f32.mrb[0].mxu0
        %v4425 = vadd.f32 %v4280, %v4424
        %v4426 = vpop.f32.mrb[0].mxu0
        %4427 = vmatprep.mubr.bf16.mxu0 0
        %4428 = vmatmul.mubr.bf16.gmra.mrb[0].mxu0 %v3515
        %v4429 = vpop.f32.mrb[0].mxu0
        %v4430 = vadd.f32 %v4285, %v4429
        %v4431 = vpop.f32.mrb[0].mxu0
        %v4432 = vpop.f32.mrb[0].mxu0
        %v4433 = vadd.f32 %v4288, %v4432
        %v4434 = vpop.f32.mrb[0].mxu0
        %4435 = vmatprep.mubr.bf16.mxu0 0
        %4436 = vmatmul.mubr.bf16.gmra.mrb[0].mxu0 %v3516
        %v4437 = vpop.f32.mrb[0].mxu0
        %v4438 = vadd.f32 %v4293, %v4437
        %v4439 = vpop.f32.mrb[0].mxu0
        %v4440 = vpop.f32.mrb[0].mxu0
        %v4441 = vadd.f32 %v4296, %v4440
        %v4442 = vpop.f32.mrb[0].mxu0
        %4443 = vmatprep.mubr.bf16.mxu0 0
        %4444 = vmatmul.mubr.bf16.gmra.mrb[0].mxu0 %v3517
        %v4445 = vpop.f32.mrb[0].mxu0
        %v4446 = vadd.f32 %v4301, %v4445
        %v4447 = vpop.f32.mrb[0].mxu0
        %v4448 = vpop.f32.mrb[0].mxu0
        %v4449 = vadd.f32 %v4304, %v4448
        %v4450 = vpop.f32.mrb[0].mxu0
        %4451 = vdwg.mxu0
        %v4452 = vpack.c.bf16 %v3166, %v3165
        %v4453 = vpack.c.bf16 %v3168, %v3167
        %v4454 = vpack.c.bf16 %v3170, %v3169
        %v4455 = vpack.c.bf16 %v3172, %v3171
        %v4456 = vpack.c.bf16 %v3174, %v3173
        %v4457 = vpack.c.bf16 %v3176, %v3175
        %v4458 = vpack.c.bf16 %v3178, %v3177
        %v4459 = vpack.c.bf16 %v3180, %v3179
        %v4460 = vld [vmem:[%s3833] sm:$0xf]
        %v4461 = vld [vmem:[%s3833 + $0x4] sm:$0xf]
        %v4462 = vld [vmem:[%s3833 + $0x8] sm:$0xf]
        %v4463 = vld [vmem:[%s3833 + $0xc] sm:$0xf]
        %v4464 = vld [vmem:[%s3833 + $0x10] sm:$0xf]
        %v4465 = vld [vmem:[%s3833 + $0x14] sm:$0xf]
        %v4466 = vld [vmem:[%s3833 + $0x18] sm:$0xf]
        %v4467 = vld [vmem:[%s3833 + $0x1c] sm:$0xf]
        %v4468 = vld [vmem:[%s3833 + $0x20] sm:$0xf]
        %v4469 = vld [vmem:[%s3833 + $0x24] sm:$0xf]
        %v4470 = vld [vmem:[%s3833 + $0x28] sm:$0xf]
        %v4471 = vld [vmem:[%s3833 + $0x2c] sm:$0xf]
        %v4472 = vld [vmem:[%s3833 + $0x30] sm:$0xf]
        %v4473 = vld [vmem:[%s3833 + $0x34] sm:$0xf]
        %v4474 = vld [vmem:[%s3833 + $0x38] sm:$0xf]
        %v4475 = vld [vmem:[%s3833 + $0x3c] sm:$0xf]
        %v4492 = vunpack.c.l.b16 %v4460
        %v4493 = vunpack.c.l.b16 %v4461
        %v4494 = vunpack.c.l.b16 %v4462
        %v4495 = vunpack.c.l.b16 %v4463
        %v4496 = vunpack.c.l.b16 %v4464
        %v4497 = vunpack.c.l.b16 %v4465
        %v4498 = vunpack.c.l.b16 %v4466
        %v4499 = vunpack.c.l.b16 %v4467
        %v4500 = vunpack.c.l.b16 %v4468
        %v4501 = vunpack.c.l.b16 %v4469
        %v4502 = vunpack.c.l.b16 %v4470
        %v4503 = vunpack.c.l.b16 %v4471
        %v4504 = vunpack.c.l.b16 %v4472
        %v4505 = vunpack.c.l.b16 %v4473
        %v4506 = vunpack.c.l.b16 %v4474
        %v4507 = vunpack.c.l.b16 %v4475
        %v4508 = vpack.c.b16 %v4493, %v4492
        %v4509 = vpack.c.b16 %v4495, %v4494
        %v4510 = vpack.c.b16 %v4497, %v4496
        %v4511 = vpack.c.b16 %v4499, %v4498
        %v4512 = vpack.c.b16 %v4501, %v4500
        %v4513 = vpack.c.b16 %v4503, %v4502
        %v4514 = vpack.c.b16 %v4505, %v4504
        %v4515 = vpack.c.b16 %v4507, %v4506
        %4524 = vmatprep.subr.bf16.mxu0 0
        %4525 = vmatpush1.bf16.msra.mxu0 %v4508
        %4526 = vmatprep.subr.bf16.mxu0 0
        %4527 = vmatpush1.bf16.msra.mxu0 %v4509
        %4528 = vmatprep.subr.bf16.mxu0 0
        %4529 = vmatpush1.bf16.msra.mxu0 %v4510
        %4530 = vmatprep.subr.bf16.mxu0 0
        %4531 = vmatpush1.bf16.msra.mxu0 %v4511
        %4532 = vmatprep.subr.bf16.mxu0 0
        %4533 = vmatpush1.bf16.msra.mxu0 %v4512
        %4534 = vmatprep.subr.bf16.mxu0 0
        %4535 = vmatpush1.bf16.msra.mxu0 %v4513
        %4536 = vmatprep.subr.bf16.mxu0 0
        %4537 = vmatpush1.bf16.msra.mxu0 %v4514
        %4538 = vmatprep.subr.bf16.mxu0 0
        %4539 = vmatpush1.bf16.msra.mxu0 %v4515
        %4540 = vmatprep.subr.bf16.mxu0 0
        %4541 = vmatpush1.bf16.msra.mxu0 0
        %4542 = vmatprep.subr.bf16.mxu0 0
        %4543 = vmatpush1.bf16.msra.mxu0 0
        %4544 = vmatprep.subr.bf16.mxu0 0
        %4545 = vmatpush1.bf16.msra.mxu0 0
        %4546 = vmatprep.subr.bf16.mxu0 0
        %4547 = vmatpush1.bf16.msra.mxu0 0
        %4548 = vmatprep.subr.bf16.mxu0 0
        %4549 = vmatpush1.bf16.msra.mxu0 0
        %4550 = vmatprep.subr.bf16.mxu0 0
        %4551 = vmatpush1.bf16.msra.mxu0 0
        %4552 = vmatprep.subr.bf16.mxu0 0
        %4553 = vmatpush1.bf16.msra.mxu0 0
        %4554 = vmatprep.subr.bf16.mxu0 0
        %4555 = vmatpush1.bf16.msra.mxu0 0
        %4556 = vmatprep.mubr.bf16.mxu0 0
        %4557 = vmatmul.mubr.bf16.gmra.mrb[0].mxu0 %v4452
        %v4558 = vpop.f32.mrb[0].mxu0
        %v4559 = vadd.f32 0.0, %v4558
        %v4560 = vpop.f32.mrb[0].mxu0
        %v4561 = vpop.f32.mrb[0].mxu0
        %v4562 = vadd.f32 0.0, %v4561
        %v4563 = vpop.f32.mrb[0].mxu0
        %4564 = vmatprep.mubr.bf16.mxu0 0
        %4565 = vmatmul.mubr.bf16.gmra.mrb[0].mxu0 %v4453
        %v4566 = vpop.f32.mrb[0].mxu0
        %v4567 = vadd.f32 0.0, %v4566
        %v4568 = vpop.f32.mrb[0].mxu0
        %v4569 = vpop.f32.mrb[0].mxu0
        %v4570 = vadd.f32 0.0, %v4569
        %v4571 = vpop.f32.mrb[0].mxu0
        %4572 = vmatprep.mubr.bf16.mxu0 0
        %4573 = vmatmul.mubr.bf16.gmra.mrb[0].mxu0 %v4454
        %v4574 = vpop.f32.mrb[0].mxu0
        %v4575 = vadd.f32 0.0, %v4574
        %v4576 = vpop.f32.mrb[0].mxu0
        %v4577 = vpop.f32.mrb[0].mxu0
        %v4578 = vadd.f32 0.0, %v4577
        %v4579 = vpop.f32.mrb[0].mxu0
        %4580 = vmatprep.mubr.bf16.mxu0 0
        %4581 = vmatmul.mubr.bf16.gmra.mrb[0].mxu0 %v4455
        %v4582 = vpop.f32.mrb[0].mxu0
        %v4583 = vadd.f32 0.0, %v4582
        %v4584 = vpop.f32.mrb[0].mxu0
        %v4585 = vpop.f32.mrb[0].mxu0
        %v4586 = vadd.f32 0.0, %v4585
        %v4587 = vpop.f32.mrb[0].mxu0
        %4588 = vmatprep.mubr.bf16.mxu0 0
        %4589 = vmatmul.mubr.bf16.gmra.mrb[0].mxu0 %v4456
        %v4590 = vpop.f32.mrb[0].mxu0
        %v4591 = vadd.f32 0.0, %v4590
        %v4592 = vpop.f32.mrb[0].mxu0
        %v4593 = vpop.f32.mrb[0].mxu0
        %v4594 = vadd.f32 0.0, %v4593
        %v4595 = vpop.f32.mrb[0].mxu0
        %4596 = vmatprep.mubr.bf16.mxu0 0
        %4597 = vmatmul.mubr.bf16.gmra.mrb[0].mxu0 %v4457
        %v4598 = vpop.f32.mrb[0].mxu0
        %v4599 = vadd.f32 0.0, %v4598
        %v4600 = vpop.f32.mrb[0].mxu0
        %v4601 = vpop.f32.mrb[0].mxu0
        %v4602 = vadd.f32 0.0, %v4601
        %v4603 = vpop.f32.mrb[0].mxu0
        %4604 = vmatprep.mubr.bf16.mxu0 0
        %4605 = vmatmul.mubr.bf16.gmra.mrb[0].mxu0 %v4458
        %v4606 = vpop.f32.mrb[0].mxu0
        %v4607 = vadd.f32 0.0, %v4606
        %v4608 = vpop.f32.mrb[0].mxu0
        %v4609 = vpop.f32.mrb[0].mxu0
        %v4610 = vadd.f32 0.0, %v4609
        %v4611 = vpop.f32.mrb[0].mxu0
        %4612 = vmatprep.mubr.bf16.mxu0 0
        %4613 = vmatmul.mubr.bf16.gmra.mrb[0].mxu0 %v4459
        %v4614 = vpop.f32.mrb[0].mxu0
        %v4615 = vadd.f32 0.0, %v4614
        %v4616 = vpop.f32.mrb[0].mxu0
        %v4617 = vpop.f32.mrb[0].mxu0
        %v4618 = vadd.f32 0.0, %v4617
        %v4619 = vpop.f32.mrb[0].mxu0
        %4620 = vdwg.mxu0
        %v4621 = vadd.f32 %v4390, %v4559
        %v4622 = vadd.f32 %v4393, %v4562
        %v4623 = vadd.f32 %v4398, %v4567
        %v4624 = vadd.f32 %v4401, %v4570
        %v4625 = vadd.f32 %v4406, %v4575
        %v4626 = vadd.f32 %v4409, %v4578
        %v4627 = vadd.f32 %v4414, %v4583
        %v4628 = vadd.f32 %v4417, %v4586
        %v4629 = vadd.f32 %v4422, %v4591
        %v4630 = vadd.f32 %v4425, %v4594
        %v4631 = vadd.f32 %v4430, %v4599
        %v4632 = vadd.f32 %v4433, %v4602
        %v4633 = vadd.f32 %v4438, %v4607
        %v4634 = vadd.f32 %v4441, %v4610
        %v4635 = vadd.f32 %v4446, %v4615
        %v4636 = vadd.f32 %v4449, %v4618
        %v4637 = vadd.f32 %v4621, %v4015
        %v4638 = vadd.f32 %v4622, %v4015
        %v4639 = vadd.f32 %v4623, %v4015
        %v4640 = vadd.f32 %v4624, %v4015
        %v4641 = vadd.f32 %v4625, %v4015
        %v4642 = vadd.f32 %v4626, %v4015
        %v4643 = vadd.f32 %v4627, %v4015
        %v4644 = vadd.f32 %v4628, %v4015
        %v4645 = vadd.f32 %v4629, %v4015
        %v4646 = vadd.f32 %v4630, %v4015
        %v4647 = vadd.f32 %v4631, %v4015
        %v4648 = vadd.f32 %v4632, %v4015
        %v4649 = vadd.f32 %v4633, %v4015
        %v4650 = vadd.f32 %v4634, %v4015
        %v4651 = vadd.f32 %v4635, %v4015
        %v4652 = vadd.f32 %v4636, %v4015
        %v4653 = vsub.f32 0.0, %v4637
        %v4654 = vsub.f32 0.0, %v4638
        %v4655 = vsub.f32 0.0, %v4639
        %v4656 = vsub.f32 0.0, %v4640
        %v4657 = vsub.f32 0.0, %v4641
        %v4658 = vsub.f32 0.0, %v4642
        %v4659 = vsub.f32 0.0, %v4643
        %v4660 = vsub.f32 0.0, %v4644
        %v4661 = vsub.f32 0.0, %v4645
        %v4662 = vsub.f32 0.0, %v4646
        %v4663 = vsub.f32 0.0, %v4647
        %v4664 = vsub.f32 0.0, %v4648
        %v4665 = vsub.f32 0.0, %v4649
        %v4666 = vsub.f32 0.0, %v4650
        %v4667 = vsub.f32 0.0, %v4651
        %v4668 = vsub.f32 0.0, %v4652
        %v4669 = vmul.f32 %v4653, 1.442695
        %v4670 = vpow.pop %v4669
        %v4671 = vmul.f32 %v4654, 1.442695
        %v4672 = vpow.pop %v4671
        %v4673 = vmul.f32 %v4655, 1.442695
        %v4674 = vpow.pop %v4673
        %v4675 = vmul.f32 %v4656, 1.442695
        %v4676 = vpow.pop %v4675
        %v4677 = vmul.f32 %v4657, 1.442695
        %v4678 = vpow.pop %v4677
        %v4679 = vmul.f32 %v4658, 1.442695
        %v4680 = vpow.pop %v4679
        %v4681 = vmul.f32 %v4659, 1.442695
        %v4682 = vpow.pop %v4681
        %v4683 = vmul.f32 %v4660, 1.442695
        %v4684 = vpow.pop %v4683
        %v4685 = vmul.f32 %v4661, 1.442695
        %v4686 = vpow.pop %v4685
        %v4687 = vmul.f32 %v4662, 1.442695
        %v4688 = vpow.pop %v4687
        %v4689 = vmul.f32 %v4663, 1.442695
        %v4690 = vpow.pop %v4689
        %v4691 = vmul.f32 %v4664, 1.442695
        %v4692 = vpow.pop %v4691
        %v4693 = vmul.f32 %v4665, 1.442695
        %v4694 = vpow.pop %v4693
        %v4695 = vmul.f32 %v4666, 1.442695
        %v4696 = vpow.pop %v4695
        %v4697 = vmul.f32 %v4667, 1.442695
        %v4698 = vpow.pop %v4697
        %v4699 = vmul.f32 %v4668, 1.442695
        %v4700 = vpow.pop %v4699
        %v4701 = vadd.f32 %v4670, 1.0
        %v4702 = vadd.f32 %v4672, 1.0
        %v4703 = vadd.f32 %v4674, 1.0
        %v4704 = vadd.f32 %v4676, 1.0
        %v4705 = vadd.f32 %v4678, 1.0
        %v4706 = vadd.f32 %v4680, 1.0
        %v4707 = vadd.f32 %v4682, 1.0
        %v4708 = vadd.f32 %v4684, 1.0
        %v4709 = vadd.f32 %v4686, 1.0
        %v4710 = vadd.f32 %v4688, 1.0
        %v4711 = vadd.f32 %v4690, 1.0
        %v4712 = vadd.f32 %v4692, 1.0
        %v4713 = vadd.f32 %v4694, 1.0
        %v4714 = vadd.f32 %v4696, 1.0
        %v4715 = vadd.f32 %v4698, 1.0
        %v4716 = vadd.f32 %v4700, 1.0
        %v4717 = vrcp.pop %v4701
        %v4718 = vrcp.pop %v4702
        %v4719 = vrcp.pop %v4703
        %v4720 = vrcp.pop %v4704
        %v4721 = vrcp.pop %v4705
        %v4722 = vrcp.pop %v4706
        %v4723 = vrcp.pop %v4707
        %v4724 = vrcp.pop %v4708
        %v4725 = vrcp.pop %v4709
        %v4726 = vrcp.pop %v4710
        %v4727 = vrcp.pop %v4711
        %v4728 = vrcp.pop %v4712
        %v4729 = vrcp.pop %v4713
        %v4730 = vrcp.pop %v4714
        %v4731 = vrcp.pop %v4715
        %v4732 = vrcp.pop %v4716
        %s4733 = scalar_lea.vmem %s376, 128 [#allocation3]
        %4734 = vst.msk [vmem:[%s4733] sm:$0xff] %vm4113, %v4717
        %4735 = vst.msk [vmem:[%s4733 + $0x8] sm:$0xff] %vm4113, %v4718
        %4736 = vst.msk [vmem:[%s4733 + $0x10] sm:$0xff] %vm4113, %v4719
        %4737 = vst.msk [vmem:[%s4733 + $0x18] sm:$0xff] %vm4113, %v4720
        %4738 = vst.msk [vmem:[%s4733 + $0x20] sm:$0xff] %vm4113, %v4721
        %4739 = vst.msk [vmem:[%s4733 + $0x28] sm:$0xff] %vm4113, %v4722
        %4740 = vst.msk [vmem:[%s4733 + $0x30] sm:$0xff] %vm4113, %v4723
        %4741 = vst.msk [vmem:[%s4733 + $0x38] sm:$0xff] %vm4113, %v4724
        %4742 = vst.msk [vmem:[%s4733 + $0x40] sm:$0xff] %vm4113, %v4725
        %4743 = vst.msk [vmem:[%s4733 + $0x48] sm:$0xff] %vm4113, %v4726
        %4744 = vst.msk [vmem:[%s4733 + $0x50] sm:$0xff] %vm4113, %v4727
        %4745 = vst.msk [vmem:[%s4733 + $0x58] sm:$0xff] %vm4113, %v4728
        %4746 = vst.msk [vmem:[%s4733 + $0x60] sm:$0xff] %vm4113, %v4729
        %4747 = vst.msk [vmem:[%s4733 + $0x68] sm:$0xff] %vm4113, %v4730
        %4748 = vst.msk [vmem:[%s4733 + $0x70] sm:$0xff] %vm4113, %v4731
        %4749 = vst.msk [vmem:[%s4733 + $0x78] sm:$0xff] %vm4113, %v4732
        %v4750 = vld [vmem:[%s9] sm:$0xf]
        %v4751 = vld [vmem:[%s9 + $0x4] sm:$0xf]
        %v4752 = vld [vmem:[%s9 + $0x8] sm:$0xf]
        %v4753 = vld [vmem:[%s9 + $0xc] sm:$0xf]
        %v4754 = vld [vmem:[%s9 + $0x10] sm:$0xf]
        %v4755 = vld [vmem:[%s9 + $0x14] sm:$0xf]
        %v4756 = vld [vmem:[%s9 + $0x18] sm:$0xf]
        %v4757 = vld [vmem:[%s9 + $0x1c] sm:$0xf]
        %v4758 = vld [vmem:[%s9 + $0x20] sm:$0xf]
        %v4759 = vld [vmem:[%s9 + $0x24] sm:$0xf]
        %v4760 = vld [vmem:[%s9 + $0x28] sm:$0xf]
        %v4761 = vld [vmem:[%s9 + $0x2c] sm:$0xf]
        %v4762 = vld [vmem:[%s9 + $0x30] sm:$0xf]
        %v4763 = vld [vmem:[%s9 + $0x34] sm:$0xf]
        %v4764 = vld [vmem:[%s9 + $0x38] sm:$0xf]
        %v4765 = vld [vmem:[%s9 + $0x3c] sm:$0xf]
        %v4766 = vld [vmem:[%s3518] sm:$0xf]
        %v4767 = vld [vmem:[%s3518 + $0x4] sm:$0xf]
        %v4768 = vld [vmem:[%s3518 + $0x8] sm:$0xf]
        %v4769 = vld [vmem:[%s3518 + $0xc] sm:$0xf]
        %v4770 = vld [vmem:[%s3518 + $0x10] sm:$0xf]
        %v4771 = vld [vmem:[%s3518 + $0x14] sm:$0xf]
        %v4772 = vld [vmem:[%s3518 + $0x18] sm:$0xf]
        %v4773 = vld [vmem:[%s3518 + $0x1c] sm:$0xf]
        %v4774 = vld [vmem:[%s3518 + $0x20] sm:$0xf]
        %v4775 = vld [vmem:[%s3518 + $0x24] sm:$0xf]
        %v4776 = vld [vmem:[%s3518 + $0x28] sm:$0xf]
        %v4777 = vld [vmem:[%s3518 + $0x2c] sm:$0xf]
        %v4778 = vld [vmem:[%s3518 + $0x30] sm:$0xf]
        %v4779 = vld [vmem:[%s3518 + $0x34] sm:$0xf]
        %v4780 = vld [vmem:[%s3518 + $0x38] sm:$0xf]
        %v4781 = vld [vmem:[%s3518 + $0x3c] sm:$0xf]
        %v4798 = vunpack.c.l.b16 %v4766
        %v4799 = vunpack.c.l.b16 %v4767
        %v4800 = vunpack.c.l.b16 %v4768
        %v4801 = vunpack.c.l.b16 %v4769
        %v4802 = vunpack.c.l.b16 %v4770
        %v4803 = vunpack.c.l.b16 %v4771
        %v4804 = vunpack.c.l.b16 %v4772
        %v4805 = vunpack.c.l.b16 %v4773
        %v4806 = vunpack.c.l.b16 %v4774
        %v4807 = vunpack.c.l.b16 %v4775
        %v4808 = vunpack.c.l.b16 %v4776
        %v4809 = vunpack.c.l.b16 %v4777
        %v4810 = vunpack.c.l.b16 %v4778
        %v4811 = vunpack.c.l.b16 %v4779
        %v4812 = vunpack.c.l.b16 %v4780
        %v4813 = vunpack.c.l.b16 %v4781
        %v4814 = vpack.c.b16 %v4799, %v4798
        %v4815 = vpack.c.b16 %v4801, %v4800
        %v4816 = vpack.c.b16 %v4803, %v4802
        %v4817 = vpack.c.b16 %v4805, %v4804
        %v4818 = vpack.c.b16 %v4807, %v4806
        %v4819 = vpack.c.b16 %v4809, %v4808
        %v4820 = vpack.c.b16 %v4811, %v4810
        %v4821 = vpack.c.b16 %v4813, %v4812
        %4830 = vmatprep.subr.bf16.mxu0 0
        %4831 = vmatpush1.bf16.msra.mxu0 %v4814
        %4832 = vmatprep.subr.bf16.mxu0 0
        %4833 = vmatpush1.bf16.msra.mxu0 %v4815
        %4834 = vmatprep.subr.bf16.mxu0 0
        %4835 = vmatpush1.bf16.msra.mxu0 %v4816
        %4836 = vmatprep.subr.bf16.mxu0 0
        %4837 = vmatpush1.bf16.msra.mxu0 %v4817
        %4838 = vmatprep.subr.bf16.mxu0 0
        %4839 = vmatpush1.bf16.msra.mxu0 %v4818
        %4840 = vmatprep.subr.bf16.mxu0 0
        %4841 = vmatpush1.bf16.msra.mxu0 %v4819
        %4842 = vmatprep.subr.bf16.mxu0 0
        %4843 = vmatpush1.bf16.msra.mxu0 %v4820
        %4844 = vmatprep.subr.bf16.mxu0 0
        %4845 = vmatpush1.bf16.msra.mxu0 %v4821
        %4846 = vmatprep.subr.bf16.mxu0 0
        %4847 = vmatpush1.bf16.msra.mxu0 0
        %4848 = vmatprep.subr.bf16.mxu0 0
        %4849 = vmatpush1.bf16.msra.mxu0 0
        %4850 = vmatprep.subr.bf16.mxu0 0
        %4851 = vmatpush1.bf16.msra.mxu0 0
        %4852 = vmatprep.subr.bf16.mxu0 0
        %4853 = vmatpush1.bf16.msra.mxu0 0
        %4854 = vmatprep.subr.bf16.mxu0 0
        %4855 = vmatpush1.bf16.msra.mxu0 0
        %4856 = vmatprep.subr.bf16.mxu0 0
        %4857 = vmatpush1.bf16.msra.mxu0 0
        %4858 = vmatprep.subr.bf16.mxu0 0
        %4859 = vmatpush1.bf16.msra.mxu0 0
        %4860 = vmatprep.subr.bf16.mxu0 0
        %4861 = vmatpush1.bf16.msra.mxu0 0
        %4862 = vmatprep.mubr.bf16.mxu0 0
        %4863 = vmatmul.mubr.bf16.gmra.mrb[0].mxu0 %v4452
        %v4864 = vpop.f32.mrb[0].mxu0
        %v4865 = vadd.f32 0.0, %v4864
        %v4866 = vpop.f32.mrb[0].mxu0
        %v4867 = vpop.f32.mrb[0].mxu0
        %v4868 = vadd.f32 0.0, %v4867
        %v4869 = vpop.f32.mrb[0].mxu0
        %4870 = vmatprep.mubr.bf16.mxu0 0
        %4871 = vmatmul.mubr.bf16.gmra.mrb[0].mxu0 %v4453
        %v4872 = vpop.f32.mrb[0].mxu0
        %v4873 = vadd.f32 0.0, %v4872
        %v4874 = vpop.f32.mrb[0].mxu0
        %v4875 = vpop.f32.mrb[0].mxu0
        %v4876 = vadd.f32 0.0, %v4875
        %v4877 = vpop.f32.mrb[0].mxu0
        %4878 = vmatprep.mubr.bf16.mxu0 0
        %4879 = vmatmul.mubr.bf16.gmra.mrb[0].mxu0 %v4454
        %v4880 = vpop.f32.mrb[0].mxu0
        %v4881 = vadd.f32 0.0, %v4880
        %v4882 = vpop.f32.mrb[0].mxu0
        %v4883 = vpop.f32.mrb[0].mxu0
        %v4884 = vadd.f32 0.0, %v4883
        %v4885 = vpop.f32.mrb[0].mxu0
        %4886 = vmatprep.mubr.bf16.mxu0 0
        %4887 = vmatmul.mubr.bf16.gmra.mrb[0].mxu0 %v4455
        %v4888 = vpop.f32.mrb[0].mxu0
        %v4889 = vadd.f32 0.0, %v4888
        %v4890 = vpop.f32.mrb[0].mxu0
        %v4891 = vpop.f32.mrb[0].mxu0
        %v4892 = vadd.f32 0.0, %v4891
        %v4893 = vpop.f32.mrb[0].mxu0
        %4894 = vmatprep.mubr.bf16.mxu0 0
        %4895 = vmatmul.mubr.bf16.gmra.mrb[0].mxu0 %v4456
        %v4896 = vpop.f32.mrb[0].mxu0
        %v4897 = vadd.f32 0.0, %v4896
        %v4898 = vpop.f32.mrb[0].mxu0
        %v4899 = vpop.f32.mrb[0].mxu0
        %v4900 = vadd.f32 0.0, %v4899
        %v4901 = vpop.f32.mrb[0].mxu0
        %4902 = vmatprep.mubr.bf16.mxu0 0
        %4903 = vmatmul.mubr.bf16.gmra.mrb[0].mxu0 %v4457
        %v4904 = vpop.f32.mrb[0].mxu0
        %v4905 = vadd.f32 0.0, %v4904
        %v4906 = vpop.f32.mrb[0].mxu0
        %v4907 = vpop.f32.mrb[0].mxu0
        %v4908 = vadd.f32 0.0, %v4907
        %v4909 = vpop.f32.mrb[0].mxu0
        %4910 = vmatprep.mubr.bf16.mxu0 0
        %4911 = vmatmul.mubr.bf16.gmra.mrb[0].mxu0 %v4458
        %v4912 = vpop.f32.mrb[0].mxu0
        %v4913 = vadd.f32 0.0, %v4912
        %v4914 = vpop.f32.mrb[0].mxu0
        %v4915 = vpop.f32.mrb[0].mxu0
        %v4916 = vadd.f32 0.0, %v4915
        %v4917 = vpop.f32.mrb[0].mxu0
        %4918 = vmatprep.mubr.bf16.mxu0 0
        %4919 = vmatmul.mubr.bf16.gmra.mrb[0].mxu0 %v4459
        %v4920 = vpop.f32.mrb[0].mxu0
        %v4921 = vadd.f32 0.0, %v4920
        %v4922 = vpop.f32.mrb[0].mxu0
        %v4923 = vpop.f32.mrb[0].mxu0
        %v4924 = vadd.f32 0.0, %v4923
        %v4925 = vpop.f32.mrb[0].mxu0
        %4926 = vdwg.mxu0
        %v4943 = vunpack.c.l.b16 %v4750
        %v4944 = vunpack.c.l.b16 %v4751
        %v4945 = vunpack.c.l.b16 %v4752
        %v4946 = vunpack.c.l.b16 %v4753
        %v4947 = vunpack.c.l.b16 %v4754
        %v4948 = vunpack.c.l.b16 %v4755
        %v4949 = vunpack.c.l.b16 %v4756
        %v4950 = vunpack.c.l.b16 %v4757
        %v4951 = vunpack.c.l.b16 %v4758
        %v4952 = vunpack.c.l.b16 %v4759
        %v4953 = vunpack.c.l.b16 %v4760
        %v4954 = vunpack.c.l.b16 %v4761
        %v4955 = vunpack.c.l.b16 %v4762
        %v4956 = vunpack.c.l.b16 %v4763
        %v4957 = vunpack.c.l.b16 %v4764
        %v4958 = vunpack.c.l.b16 %v4765
        %v4959 = vpack.c.b16 %v4944, %v4943
        %v4960 = vpack.c.b16 %v4946, %v4945
        %v4961 = vpack.c.b16 %v4948, %v4947
        %v4962 = vpack.c.b16 %v4950, %v4949
        %v4963 = vpack.c.b16 %v4952, %v4951
        %v4964 = vpack.c.b16 %v4954, %v4953
        %v4965 = vpack.c.b16 %v4956, %v4955
        %v4966 = vpack.c.b16 %v4958, %v4957
        %4975 = vmatprep.subr.bf16.mxu0 0
        %4976 = vmatpush1.bf16.msra.mxu0 %v4959
        %4977 = vmatprep.subr.bf16.mxu0 0
        %4978 = vmatpush1.bf16.msra.mxu0 %v4960
        %4979 = vmatprep.subr.bf16.mxu0 0
        %4980 = vmatpush1.bf16.msra.mxu0 %v4961
        %4981 = vmatprep.subr.bf16.mxu0 0
        %4982 = vmatpush1.bf16.msra.mxu0 %v4962
        %4983 = vmatprep.subr.bf16.mxu0 0
        %4984 = vmatpush1.bf16.msra.mxu0 %v4963
        %4985 = vmatprep.subr.bf16.mxu0 0
        %4986 = vmatpush1.bf16.msra.mxu0 %v4964
        %4987 = vmatprep.subr.bf16.mxu0 0
        %4988 = vmatpush1.bf16.msra.mxu0 %v4965
        %4989 = vmatprep.subr.bf16.mxu0 0
        %4990 = vmatpush1.bf16.msra.mxu0 %v4966
        %4991 = vmatprep.subr.bf16.mxu0 0
        %4992 = vmatpush1.bf16.msra.mxu0 0
        %4993 = vmatprep.subr.bf16.mxu0 0
        %4994 = vmatpush1.bf16.msra.mxu0 0
        %4995 = vmatprep.subr.bf16.mxu0 0
        %4996 = vmatpush1.bf16.msra.mxu0 0
        %4997 = vmatprep.subr.bf16.mxu0 0
        %4998 = vmatpush1.bf16.msra.mxu0 0
        %4999 = vmatprep.subr.bf16.mxu0 0
        %5000 = vmatpush1.bf16.msra.mxu0 0
        %5001 = vmatprep.subr.bf16.mxu0 0
        %5002 = vmatpush1.bf16.msra.mxu0 0
        %5003 = vmatprep.subr.bf16.mxu0 0
        %5004 = vmatpush1.bf16.msra.mxu0 0
        %5005 = vmatprep.subr.bf16.mxu0 0
        %5006 = vmatpush1.bf16.msra.mxu0 0
        %5007 = vmatprep.mubr.bf16.mxu0 0
        %5008 = vmatmul.mubr.bf16.gmra.mrb[0].mxu0 %v3825
        %v5009 = vpop.f32.mrb[0].mxu0
        %v5010 = vadd.f32 %v4865, %v5009
        %v5011 = vpop.f32.mrb[0].mxu0
        %v5012 = vpop.f32.mrb[0].mxu0
        %v5013 = vadd.f32 %v4868, %v5012
        %v5014 = vpop.f32.mrb[0].mxu0
        %5015 = vmatprep.mubr.bf16.mxu0 0
        %5016 = vmatmul.mubr.bf16.gmra.mrb[0].mxu0 %v3826
        %v5017 = vpop.f32.mrb[0].mxu0
        %v5018 = vadd.f32 %v4873, %v5017
        %v5019 = vpop.f32.mrb[0].mxu0
        %v5020 = vpop.f32.mrb[0].mxu0
        %v5021 = vadd.f32 %v4876, %v5020
        %v5022 = vpop.f32.mrb[0].mxu0
        %5023 = vmatprep.mubr.bf16.mxu0 0
        %5024 = vmatmul.mubr.bf16.gmra.mrb[0].mxu0 %v3827
        %v5025 = vpop.f32.mrb[0].mxu0
        %v5026 = vadd.f32 %v4881, %v5025
        %v5027 = vpop.f32.mrb[0].mxu0
        %v5028 = vpop.f32.mrb[0].mxu0
        %v5029 = vadd.f32 %v4884, %v5028
        %v5030 = vpop.f32.mrb[0].mxu0
        %5031 = vmatprep.mubr.bf16.mxu0 0
        %5032 = vmatmul.mubr.bf16.gmra.mrb[0].mxu0 %v3828
        %v5033 = vpop.f32.mrb[0].mxu0
        %v5034 = vadd.f32 %v4889, %v5033
        %v5035 = vpop.f32.mrb[0].mxu0
        %v5036 = vpop.f32.mrb[0].mxu0
        %v5037 = vadd.f32 %v4892, %v5036
        %v5038 = vpop.f32.mrb[0].mxu0
        %5039 = vmatprep.mubr.bf16.mxu0 0
        %5040 = vmatmul.mubr.bf16.gmra.mrb[0].mxu0 %v3829
        %v5041 = vpop.f32.mrb[0].mxu0
        %v5042 = vadd.f32 %v4897, %v5041
        %v5043 = vpop.f32.mrb[0].mxu0
        %v5044 = vpop.f32.mrb[0].mxu0
        %v5045 = vadd.f32 %v4900, %v5044
        %v5046 = vpop.f32.mrb[0].mxu0
        %5047 = vmatprep.mubr.bf16.mxu0 0
        %5048 = vmatmul.mubr.bf16.gmra.mrb[0].mxu0 %v3830
        %v5049 = vpop.f32.mrb[0].mxu0
        %v5050 = vadd.f32 %v4905, %v5049
        %v5051 = vpop.f32.mrb[0].mxu0
        %v5052 = vpop.f32.mrb[0].mxu0
        %v5053 = vadd.f32 %v4908, %v5052
        %v5054 = vpop.f32.mrb[0].mxu0
        %5055 = vmatprep.mubr.bf16.mxu0 0
        %5056 = vmatmul.mubr.bf16.gmra.mrb[0].mxu0 %v3831
        %v5057 = vpop.f32.mrb[0].mxu0
        %v5058 = vadd.f32 %v4913, %v5057
        %v5059 = vpop.f32.mrb[0].mxu0
        %v5060 = vpop.f32.mrb[0].mxu0
        %v5061 = vadd.f32 %v4916, %v5060
        %v5062 = vpop.f32.mrb[0].mxu0
        %5063 = vmatprep.mubr.bf16.mxu0 0
        %5064 = vmatmul.mubr.bf16.gmra.mrb[0].mxu0 %v3832
        %v5065 = vpop.f32.mrb[0].mxu0
        %v5066 = vadd.f32 %v4921, %v5065
        %v5067 = vpop.f32.mrb[0].mxu0
        %v5068 = vpop.f32.mrb[0].mxu0
        %v5069 = vadd.f32 %v4924, %v5068
        %v5070 = vpop.f32.mrb[0].mxu0
        %5071 = vdwg.mxu0
        %v5072 = vpack.c.bf16 %v3214, %v3213
        %v5073 = vpack.c.bf16 %v3216, %v3215
        %v5074 = vpack.c.bf16 %v3218, %v3217
        %v5075 = vpack.c.bf16 %v3220, %v3219
        %v5076 = vpack.c.bf16 %v3222, %v3221
        %v5077 = vpack.c.bf16 %v3224, %v3223
        %v5078 = vpack.c.bf16 %v3226, %v3225
        %v5079 = vpack.c.bf16 %v3228, %v3227
        %v5080 = vld [vmem:[%s3833] sm:$0xf]
        %v5081 = vld [vmem:[%s3833 + $0x4] sm:$0xf]
        %v5082 = vld [vmem:[%s3833 + $0x8] sm:$0xf]
        %v5083 = vld [vmem:[%s3833 + $0xc] sm:$0xf]
        %v5084 = vld [vmem:[%s3833 + $0x10] sm:$0xf]
        %v5085 = vld [vmem:[%s3833 + $0x14] sm:$0xf]
        %v5086 = vld [vmem:[%s3833 + $0x18] sm:$0xf]
        %v5087 = vld [vmem:[%s3833 + $0x1c] sm:$0xf]
        %v5088 = vld [vmem:[%s3833 + $0x20] sm:$0xf]
        %v5089 = vld [vmem:[%s3833 + $0x24] sm:$0xf]
        %v5090 = vld [vmem:[%s3833 + $0x28] sm:$0xf]
        %v5091 = vld [vmem:[%s3833 + $0x2c] sm:$0xf]
        %v5092 = vld [vmem:[%s3833 + $0x30] sm:$0xf]
        %v5093 = vld [vmem:[%s3833 + $0x34] sm:$0xf]
        %v5094 = vld [vmem:[%s3833 + $0x38] sm:$0xf]
        %v5095 = vld [vmem:[%s3833 + $0x3c] sm:$0xf]
        %v5112 = vunpack.c.l.b16 %v5080
        %v5113 = vunpack.c.l.b16 %v5081
        %v5114 = vunpack.c.l.b16 %v5082
        %v5115 = vunpack.c.l.b16 %v5083
        %v5116 = vunpack.c.l.b16 %v5084
        %v5117 = vunpack.c.l.b16 %v5085
        %v5118 = vunpack.c.l.b16 %v5086
        %v5119 = vunpack.c.l.b16 %v5087
        %v5120 = vunpack.c.l.b16 %v5088
        %v5121 = vunpack.c.l.b16 %v5089
        %v5122 = vunpack.c.l.b16 %v5090
        %v5123 = vunpack.c.l.b16 %v5091
        %v5124 = vunpack.c.l.b16 %v5092
        %v5125 = vunpack.c.l.b16 %v5093
        %v5126 = vunpack.c.l.b16 %v5094
        %v5127 = vunpack.c.l.b16 %v5095
        %v5128 = vpack.c.b16 %v5113, %v5112
        %v5129 = vpack.c.b16 %v5115, %v5114
        %v5130 = vpack.c.b16 %v5117, %v5116
        %v5131 = vpack.c.b16 %v5119, %v5118
        %v5132 = vpack.c.b16 %v5121, %v5120
        %v5133 = vpack.c.b16 %v5123, %v5122
        %v5134 = vpack.c.b16 %v5125, %v5124
        %v5135 = vpack.c.b16 %v5127, %v5126
        %5144 = vmatprep.subr.bf16.mxu0 0
        %5145 = vmatpush1.bf16.msra.mxu0 %v5128
        %5146 = vmatprep.subr.bf16.mxu0 0
        %5147 = vmatpush1.bf16.msra.mxu0 %v5129
        %5148 = vmatprep.subr.bf16.mxu0 0
        %5149 = vmatpush1.bf16.msra.mxu0 %v5130
        %5150 = vmatprep.subr.bf16.mxu0 0
        %5151 = vmatpush1.bf16.msra.mxu0 %v5131
        %5152 = vmatprep.subr.bf16.mxu0 0
        %5153 = vmatpush1.bf16.msra.mxu0 %v5132
        %5154 = vmatprep.subr.bf16.mxu0 0
        %5155 = vmatpush1.bf16.msra.mxu0 %v5133
        %5156 = vmatprep.subr.bf16.mxu0 0
        %5157 = vmatpush1.bf16.msra.mxu0 %v5134
        %5158 = vmatprep.subr.bf16.mxu0 0
        %5159 = vmatpush1.bf16.msra.mxu0 %v5135
        %5160 = vmatprep.subr.bf16.mxu0 0
        %5161 = vmatpush1.bf16.msra.mxu0 0
        %5162 = vmatprep.subr.bf16.mxu0 0
        %5163 = vmatpush1.bf16.msra.mxu0 0
        %5164 = vmatprep.subr.bf16.mxu0 0
        %5165 = vmatpush1.bf16.msra.mxu0 0
        %5166 = vmatprep.subr.bf16.mxu0 0
        %5167 = vmatpush1.bf16.msra.mxu0 0
        %5168 = vmatprep.subr.bf16.mxu0 0
        %5169 = vmatpush1.bf16.msra.mxu0 0
        %5170 = vmatprep.subr.bf16.mxu0 0
        %5171 = vmatpush1.bf16.msra.mxu0 0
        %5172 = vmatprep.subr.bf16.mxu0 0
        %5173 = vmatpush1.bf16.msra.mxu0 0
        %5174 = vmatprep.subr.bf16.mxu0 0
        %5175 = vmatpush1.bf16.msra.mxu0 0
        %5176 = vmatprep.mubr.bf16.mxu0 0
        %5177 = vmatmul.mubr.bf16.gmra.mrb[0].mxu0 %v5072
        %v5178 = vpop.f32.mrb[0].mxu0
        %v5179 = vadd.f32 0.0, %v5178
        %v5180 = vpop.f32.mrb[0].mxu0
        %v5181 = vpop.f32.mrb[0].mxu0
        %v5182 = vadd.f32 0.0, %v5181
        %v5183 = vpop.f32.mrb[0].mxu0
        %5184 = vmatprep.mubr.bf16.mxu0 0
        %5185 = vmatmul.mubr.bf16.gmra.mrb[0].mxu0 %v5073
        %v5186 = vpop.f32.mrb[0].mxu0
        %v5187 = vadd.f32 0.0, %v5186
        %v5188 = vpop.f32.mrb[0].mxu0
        %v5189 = vpop.f32.mrb[0].mxu0
        %v5190 = vadd.f32 0.0, %v5189
        %v5191 = vpop.f32.mrb[0].mxu0
        %5192 = vmatprep.mubr.bf16.mxu0 0
        %5193 = vmatmul.mubr.bf16.gmra.mrb[0].mxu0 %v5074
        %v5194 = vpop.f32.mrb[0].mxu0
        %v5195 = vadd.f32 0.0, %v5194
        %v5196 = vpop.f32.mrb[0].mxu0
        %v5197 = vpop.f32.mrb[0].mxu0
        %v5198 = vadd.f32 0.0, %v5197
        %v5199 = vpop.f32.mrb[0].mxu0
        %5200 = vmatprep.mubr.bf16.mxu0 0
        %5201 = vmatmul.mubr.bf16.gmra.mrb[0].mxu0 %v5075
        %v5202 = vpop.f32.mrb[0].mxu0
        %v5203 = vadd.f32 0.0, %v5202
        %v5204 = vpop.f32.mrb[0].mxu0
        %v5205 = vpop.f32.mrb[0].mxu0
        %v5206 = vadd.f32 0.0, %v5205
        %v5207 = vpop.f32.mrb[0].mxu0
        %5208 = vmatprep.mubr.bf16.mxu0 0
        %5209 = vmatmul.mubr.bf16.gmra.mrb[0].mxu0 %v5076
        %v5210 = vpop.f32.mrb[0].mxu0
        %v5211 = vadd.f32 0.0, %v5210
        %v5212 = vpop.f32.mrb[0].mxu0
        %v5213 = vpop.f32.mrb[0].mxu0
        %v5214 = vadd.f32 0.0, %v5213
        %v5215 = vpop.f32.mrb[0].mxu0
        %5216 = vmatprep.mubr.bf16.mxu0 0
        %5217 = vmatmul.mubr.bf16.gmra.mrb[0].mxu0 %v5077
        %v5218 = vpop.f32.mrb[0].mxu0
        %v5219 = vadd.f32 0.0, %v5218
        %v5220 = vpop.f32.mrb[0].mxu0
        %v5221 = vpop.f32.mrb[0].mxu0
        %v5222 = vadd.f32 0.0, %v5221
        %v5223 = vpop.f32.mrb[0].mxu0
        %5224 = vmatprep.mubr.bf16.mxu0 0
        %5225 = vmatmul.mubr.bf16.gmra.mrb[0].mxu0 %v5078
        %v5226 = vpop.f32.mrb[0].mxu0
        %v5227 = vadd.f32 0.0, %v5226
        %v5228 = vpop.f32.mrb[0].mxu0
        %v5229 = vpop.f32.mrb[0].mxu0
        %v5230 = vadd.f32 0.0, %v5229
        %v5231 = vpop.f32.mrb[0].mxu0
        %5232 = vmatprep.mubr.bf16.mxu0 0
        %5233 = vmatmul.mubr.bf16.gmra.mrb[0].mxu0 %v5079
        %v5234 = vpop.f32.mrb[0].mxu0
        %v5235 = vadd.f32 0.0, %v5234
        %v5236 = vpop.f32.mrb[0].mxu0
        %v5237 = vpop.f32.mrb[0].mxu0
        %v5238 = vadd.f32 0.0, %v5237
        %v5239 = vpop.f32.mrb[0].mxu0
        %5240 = vdwg.mxu0
        %v5241 = vadd.f32 %v5010, %v5179
        %v5242 = vadd.f32 %v5013, %v5182
        %v5243 = vadd.f32 %v5018, %v5187
        %v5244 = vadd.f32 %v5021, %v5190
        %v5245 = vadd.f32 %v5026, %v5195
        %v5246 = vadd.f32 %v5029, %v5198
        %v5247 = vadd.f32 %v5034, %v5203
        %v5248 = vadd.f32 %v5037, %v5206
        %v5249 = vadd.f32 %v5042, %v5211
        %v5250 = vadd.f32 %v5045, %v5214
        %v5251 = vadd.f32 %v5050, %v5219
        %v5252 = vadd.f32 %v5053, %v5222
        %v5253 = vadd.f32 %v5058, %v5227
        %v5254 = vadd.f32 %v5061, %v5230
        %v5255 = vadd.f32 %v5066, %v5235
        %v5256 = vadd.f32 %v5069, %v5238
        %v5257 = vadd.f32 %v5241, %v4015
        %v5258 = vadd.f32 %v5242, %v4015
        %v5259 = vadd.f32 %v5243, %v4015
        %v5260 = vadd.f32 %v5244, %v4015
        %v5261 = vadd.f32 %v5245, %v4015
        %v5262 = vadd.f32 %v5246, %v4015
        %v5263 = vadd.f32 %v5247, %v4015
        %v5264 = vadd.f32 %v5248, %v4015
        %v5265 = vadd.f32 %v5249, %v4015
        %v5266 = vadd.f32 %v5250, %v4015
        %v5267 = vadd.f32 %v5251, %v4015
        %v5268 = vadd.f32 %v5252, %v4015
        %v5269 = vadd.f32 %v5253, %v4015
        %v5270 = vadd.f32 %v5254, %v4015
        %v5271 = vadd.f32 %v5255, %v4015
        %v5272 = vadd.f32 %v5256, %v4015
        %v5273 = vsub.f32 0.0, %v5257
        %v5274 = vsub.f32 0.0, %v5258
        %v5275 = vsub.f32 0.0, %v5259
        %v5276 = vsub.f32 0.0, %v5260
        %v5277 = vsub.f32 0.0, %v5261
        %v5278 = vsub.f32 0.0, %v5262
        %v5279 = vsub.f32 0.0, %v5263
        %v5280 = vsub.f32 0.0, %v5264
        %v5281 = vsub.f32 0.0, %v5265
        %v5282 = vsub.f32 0.0, %v5266
        %v5283 = vsub.f32 0.0, %v5267
        %v5284 = vsub.f32 0.0, %v5268
        %v5285 = vsub.f32 0.0, %v5269
        %v5286 = vsub.f32 0.0, %v5270
        %v5287 = vsub.f32 0.0, %v5271
        %v5288 = vsub.f32 0.0, %v5272
        %v5289 = vmul.f32 %v5273, 1.442695
        %v5290 = vpow.pop %v5289
        %v5291 = vmul.f32 %v5274, 1.442695
        %v5292 = vpow.pop %v5291
        %v5293 = vmul.f32 %v5275, 1.442695
        %v5294 = vpow.pop %v5293
        %v5295 = vmul.f32 %v5276, 1.442695
        %v5296 = vpow.pop %v5295
        %v5297 = vmul.f32 %v5277, 1.442695
        %v5298 = vpow.pop %v5297
        %v5299 = vmul.f32 %v5278, 1.442695
        %v5300 = vpow.pop %v5299
        %v5301 = vmul.f32 %v5279, 1.442695
        %v5302 = vpow.pop %v5301
        %v5303 = vmul.f32 %v5280, 1.442695
        %v5304 = vpow.pop %v5303
        %v5305 = vmul.f32 %v5281, 1.442695
        %v5306 = vpow.pop %v5305
        %v5307 = vmul.f32 %v5282, 1.442695
        %v5308 = vpow.pop %v5307
        %v5309 = vmul.f32 %v5283, 1.442695
        %v5310 = vpow.pop %v5309
        %v5311 = vmul.f32 %v5284, 1.442695
        %v5312 = vpow.pop %v5311
        %v5313 = vmul.f32 %v5285, 1.442695
        %v5314 = vpow.pop %v5313
        %v5315 = vmul.f32 %v5286, 1.442695
        %v5316 = vpow.pop %v5315
        %v5317 = vmul.f32 %v5287, 1.442695
        %v5318 = vpow.pop %v5317
        %v5319 = vmul.f32 %v5288, 1.442695
        %v5320 = vpow.pop %v5319
        %v5321 = vadd.f32 %v5290, 1.0
        %v5322 = vadd.f32 %v5292, 1.0
        %v5323 = vadd.f32 %v5294, 1.0
        %v5324 = vadd.f32 %v5296, 1.0
        %v5325 = vadd.f32 %v5298, 1.0
        %v5326 = vadd.f32 %v5300, 1.0
        %v5327 = vadd.f32 %v5302, 1.0
        %v5328 = vadd.f32 %v5304, 1.0
        %v5329 = vadd.f32 %v5306, 1.0
        %v5330 = vadd.f32 %v5308, 1.0
        %v5331 = vadd.f32 %v5310, 1.0
        %v5332 = vadd.f32 %v5312, 1.0
        %v5333 = vadd.f32 %v5314, 1.0
        %v5334 = vadd.f32 %v5316, 1.0
        %v5335 = vadd.f32 %v5318, 1.0
        %v5336 = vadd.f32 %v5320, 1.0
        %v5337 = vrcp.pop %v5321
        %v5338 = vrcp.pop %v5322
        %v5339 = vrcp.pop %v5323
        %v5340 = vrcp.pop %v5324
        %v5341 = vrcp.pop %v5325
        %v5342 = vrcp.pop %v5326
        %v5343 = vrcp.pop %v5327
        %v5344 = vrcp.pop %v5328
        %v5345 = vrcp.pop %v5329
        %v5346 = vrcp.pop %v5330
        %v5347 = vrcp.pop %v5331
        %v5348 = vrcp.pop %v5332
        %v5349 = vrcp.pop %v5333
        %v5350 = vrcp.pop %v5334
        %v5351 = vrcp.pop %v5335
        %v5352 = vrcp.pop %v5336
        %s5353 = scalar_lea.vmem %s376, 256 [#allocation3]
        %5354 = vst.msk [vmem:[%s5353] sm:$0xff] %vm4113, %v5337
        %5355 = vst.msk [vmem:[%s5353 + $0x8] sm:$0xff] %vm4113, %v5338
        %5356 = vst.msk [vmem:[%s5353 + $0x10] sm:$0xff] %vm4113, %v5339
        %5357 = vst.msk [vmem:[%s5353 + $0x18] sm:$0xff] %vm4113, %v5340
        %5358 = vst.msk [vmem:[%s5353 + $0x20] sm:$0xff] %vm4113, %v5341
        %5359 = vst.msk [vmem:[%s5353 + $0x28] sm:$0xff] %vm4113, %v5342
        %5360 = vst.msk [vmem:[%s5353 + $0x30] sm:$0xff] %vm4113, %v5343
        %5361 = vst.msk [vmem:[%s5353 + $0x38] sm:$0xff] %vm4113, %v5344
        %5362 = vst.msk [vmem:[%s5353 + $0x40] sm:$0xff] %vm4113, %v5345
        %5363 = vst.msk [vmem:[%s5353 + $0x48] sm:$0xff] %vm4113, %v5346
        %5364 = vst.msk [vmem:[%s5353 + $0x50] sm:$0xff] %vm4113, %v5347
        %5365 = vst.msk [vmem:[%s5353 + $0x58] sm:$0xff] %vm4113, %v5348
        %5366 = vst.msk [vmem:[%s5353 + $0x60] sm:$0xff] %vm4113, %v5349
        %5367 = vst.msk [vmem:[%s5353 + $0x68] sm:$0xff] %vm4113, %v5350
        %5368 = vst.msk [vmem:[%s5353 + $0x70] sm:$0xff] %vm4113, %v5351
        %5369 = vst.msk [vmem:[%s5353 + $0x78] sm:$0xff] %vm4113, %v5352
        %v5370 = vld [vmem:[%s9] sm:$0xf]
        %v5371 = vld [vmem:[%s9 + $0x4] sm:$0xf]
        %v5372 = vld [vmem:[%s9 + $0x8] sm:$0xf]
        %v5373 = vld [vmem:[%s9 + $0xc] sm:$0xf]
        %v5374 = vld [vmem:[%s9 + $0x10] sm:$0xf]
        %v5375 = vld [vmem:[%s9 + $0x14] sm:$0xf]
        %v5376 = vld [vmem:[%s9 + $0x18] sm:$0xf]
        %v5377 = vld [vmem:[%s9 + $0x1c] sm:$0xf]
        %v5378 = vld [vmem:[%s9 + $0x20] sm:$0xf]
        %v5379 = vld [vmem:[%s9 + $0x24] sm:$0xf]
        %v5380 = vld [vmem:[%s9 + $0x28] sm:$0xf]
        %v5381 = vld [vmem:[%s9 + $0x2c] sm:$0xf]
        %v5382 = vld [vmem:[%s9 + $0x30] sm:$0xf]
        %v5383 = vld [vmem:[%s9 + $0x34] sm:$0xf]
        %v5384 = vld [vmem:[%s9 + $0x38] sm:$0xf]
        %v5385 = vld [vmem:[%s9 + $0x3c] sm:$0xf]
        %v5386 = vld [vmem:[%s3518] sm:$0xf]
        %v5387 = vld [vmem:[%s3518 + $0x4] sm:$0xf]
        %v5388 = vld [vmem:[%s3518 + $0x8] sm:$0xf]
        %v5389 = vld [vmem:[%s3518 + $0xc] sm:$0xf]
        %v5390 = vld [vmem:[%s3518 + $0x10] sm:$0xf]
        %v5391 = vld [vmem:[%s3518 + $0x14] sm:$0xf]
        %v5392 = vld [vmem:[%s3518 + $0x18] sm:$0xf]
        %v5393 = vld [vmem:[%s3518 + $0x1c] sm:$0xf]
        %v5394 = vld [vmem:[%s3518 + $0x20] sm:$0xf]
        %v5395 = vld [vmem:[%s3518 + $0x24] sm:$0xf]
        %v5396 = vld [vmem:[%s3518 + $0x28] sm:$0xf]
        %v5397 = vld [vmem:[%s3518 + $0x2c] sm:$0xf]
        %v5398 = vld [vmem:[%s3518 + $0x30] sm:$0xf]
        %v5399 = vld [vmem:[%s3518 + $0x34] sm:$0xf]
        %v5400 = vld [vmem:[%s3518 + $0x38] sm:$0xf]
        %v5401 = vld [vmem:[%s3518 + $0x3c] sm:$0xf]
        %v5418 = vunpack.c.l.b16 %v5386
        %v5419 = vunpack.c.l.b16 %v5387
        %v5420 = vunpack.c.l.b16 %v5388
        %v5421 = vunpack.c.l.b16 %v5389
        %v5422 = vunpack.c.l.b16 %v5390
        %v5423 = vunpack.c.l.b16 %v5391
        %v5424 = vunpack.c.l.b16 %v5392
        %v5425 = vunpack.c.l.b16 %v5393
        %v5426 = vunpack.c.l.b16 %v5394
        %v5427 = vunpack.c.l.b16 %v5395
        %v5428 = vunpack.c.l.b16 %v5396
        %v5429 = vunpack.c.l.b16 %v5397
        %v5430 = vunpack.c.l.b16 %v5398
        %v5431 = vunpack.c.l.b16 %v5399
        %v5432 = vunpack.c.l.b16 %v5400
        %v5433 = vunpack.c.l.b16 %v5401
        %v5434 = vpack.c.b16 %v5419, %v5418
        %v5435 = vpack.c.b16 %v5421, %v5420
        %v5436 = vpack.c.b16 %v5423, %v5422
        %v5437 = vpack.c.b16 %v5425, %v5424
        %v5438 = vpack.c.b16 %v5427, %v5426
        %v5439 = vpack.c.b16 %v5429, %v5428
        %v5440 = vpack.c.b16 %v5431, %v5430
        %v5441 = vpack.c.b16 %v5433, %v5432
        %5450 = vmatprep.subr.bf16.mxu0 0
        %5451 = vmatpush1.bf16.msra.mxu0 %v5434
        %5452 = vmatprep.subr.bf16.mxu0 0
        %5453 = vmatpush1.bf16.msra.mxu0 %v5435
        %5454 = vmatprep.subr.bf16.mxu0 0
        %5455 = vmatpush1.bf16.msra.mxu0 %v5436
        %5456 = vmatprep.subr.bf16.mxu0 0
        %5457 = vmatpush1.bf16.msra.mxu0 %v5437
        %5458 = vmatprep.subr.bf16.mxu0 0
        %5459 = vmatpush1.bf16.msra.mxu0 %v5438
        %5460 = vmatprep.subr.bf16.mxu0 0
        %5461 = vmatpush1.bf16.msra.mxu0 %v5439
        %5462 = vmatprep.subr.bf16.mxu0 0
        %5463 = vmatpush1.bf16.msra.mxu0 %v5440
        %5464 = vmatprep.subr.bf16.mxu0 0
        %5465 = vmatpush1.bf16.msra.mxu0 %v5441
        %5466 = vmatprep.subr.bf16.mxu0 0
        %5467 = vmatpush1.bf16.msra.mxu0 0
        %5468 = vmatprep.subr.bf16.mxu0 0
        %5469 = vmatpush1.bf16.msra.mxu0 0
        %5470 = vmatprep.subr.bf16.mxu0 0
        %5471 = vmatpush1.bf16.msra.mxu0 0
        %5472 = vmatprep.subr.bf16.mxu0 0
        %5473 = vmatpush1.bf16.msra.mxu0 0
        %5474 = vmatprep.subr.bf16.mxu0 0
        %5475 = vmatpush1.bf16.msra.mxu0 0
        %5476 = vmatprep.subr.bf16.mxu0 0
        %5477 = vmatpush1.bf16.msra.mxu0 0
        %5478 = vmatprep.subr.bf16.mxu0 0
        %5479 = vmatpush1.bf16.msra.mxu0 0
        %5480 = vmatprep.subr.bf16.mxu0 0
        %5481 = vmatpush1.bf16.msra.mxu0 0
        %5482 = vmatprep.mubr.bf16.mxu0 0
        %5483 = vmatmul.mubr.bf16.gmra.mrb[0].mxu0 %v5072
        %v5484 = vpop.f32.mrb[0].mxu0
        %v5485 = vadd.f32 0.0, %v5484
        %v5486 = vpop.f32.mrb[0].mxu0
        %v5487 = vpop.f32.mrb[0].mxu0
        %v5488 = vadd.f32 0.0, %v5487
        %v5489 = vpop.f32.mrb[0].mxu0
        %5490 = vmatprep.mubr.bf16.mxu0 0
        %5491 = vmatmul.mubr.bf16.gmra.mrb[0].mxu0 %v5073
        %v5492 = vpop.f32.mrb[0].mxu0
        %v5493 = vadd.f32 0.0, %v5492
        %v5494 = vpop.f32.mrb[0].mxu0
        %v5495 = vpop.f32.mrb[0].mxu0
        %v5496 = vadd.f32 0.0, %v5495
        %v5497 = vpop.f32.mrb[0].mxu0
        %5498 = vmatprep.mubr.bf16.mxu0 0
        %5499 = vmatmul.mubr.bf16.gmra.mrb[0].mxu0 %v5074
        %v5500 = vpop.f32.mrb[0].mxu0
        %v5501 = vadd.f32 0.0, %v5500
        %v5502 = vpop.f32.mrb[0].mxu0
        %v5503 = vpop.f32.mrb[0].mxu0
        %v5504 = vadd.f32 0.0, %v5503
        %v5505 = vpop.f32.mrb[0].mxu0
        %5506 = vmatprep.mubr.bf16.mxu0 0
        %5507 = vmatmul.mubr.bf16.gmra.mrb[0].mxu0 %v5075
        %v5508 = vpop.f32.mrb[0].mxu0
        %v5509 = vadd.f32 0.0, %v5508
        %v5510 = vpop.f32.mrb[0].mxu0
        %v5511 = vpop.f32.mrb[0].mxu0
        %v5512 = vadd.f32 0.0, %v5511
        %v5513 = vpop.f32.mrb[0].mxu0
        %5514 = vmatprep.mubr.bf16.mxu0 0
        %5515 = vmatmul.mubr.bf16.gmra.mrb[0].mxu0 %v5076
        %v5516 = vpop.f32.mrb[0].mxu0
        %v5517 = vadd.f32 0.0, %v5516
        %v5518 = vpop.f32.mrb[0].mxu0
        %v5519 = vpop.f32.mrb[0].mxu0
        %v5520 = vadd.f32 0.0, %v5519
        %v5521 = vpop.f32.mrb[0].mxu0
        %5522 = vmatprep.mubr.bf16.mxu0 0
        %5523 = vmatmul.mubr.bf16.gmra.mrb[0].mxu0 %v5077
        %v5524 = vpop.f32.mrb[0].mxu0
        %v5525 = vadd.f32 0.0, %v5524
        %v5526 = vpop.f32.mrb[0].mxu0
        %v5527 = vpop.f32.mrb[0].mxu0
        %v5528 = vadd.f32 0.0, %v5527
        %v5529 = vpop.f32.mrb[0].mxu0
        %5530 = vmatprep.mubr.bf16.mxu0 0
        %5531 = vmatmul.mubr.bf16.gmra.mrb[0].mxu0 %v5078
        %v5532 = vpop.f32.mrb[0].mxu0
        %v5533 = vadd.f32 0.0, %v5532
        %v5534 = vpop.f32.mrb[0].mxu0
        %v5535 = vpop.f32.mrb[0].mxu0
        %v5536 = vadd.f32 0.0, %v5535
        %v5537 = vpop.f32.mrb[0].mxu0
        %5538 = vmatprep.mubr.bf16.mxu0 0
        %5539 = vmatmul.mubr.bf16.gmra.mrb[0].mxu0 %v5079
        %v5540 = vpop.f32.mrb[0].mxu0
        %v5541 = vadd.f32 0.0, %v5540
        %v5542 = vpop.f32.mrb[0].mxu0
        %v5543 = vpop.f32.mrb[0].mxu0
        %v5544 = vadd.f32 0.0, %v5543
        %v5545 = vpop.f32.mrb[0].mxu0
        %5546 = vdwg.mxu0
        %v5563 = vunpack.c.l.b16 %v5370
        %v5564 = vunpack.c.l.b16 %v5371
        %v5565 = vunpack.c.l.b16 %v5372
        %v5566 = vunpack.c.l.b16 %v5373
        %v5567 = vunpack.c.l.b16 %v5374
        %v5568 = vunpack.c.l.b16 %v5375
        %v5569 = vunpack.c.l.b16 %v5376
        %v5570 = vunpack.c.l.b16 %v5377
        %v5571 = vunpack.c.l.b16 %v5378
        %v5572 = vunpack.c.l.b16 %v5379
        %v5573 = vunpack.c.l.b16 %v5380
        %v5574 = vunpack.c.l.b16 %v5381
        %v5575 = vunpack.c.l.b16 %v5382
        %v5576 = vunpack.c.l.b16 %v5383
        %v5577 = vunpack.c.l.b16 %v5384
        %v5578 = vunpack.c.l.b16 %v5385
        %v5579 = vpack.c.b16 %v5564, %v5563
        %v5580 = vpack.c.b16 %v5566, %v5565
        %v5581 = vpack.c.b16 %v5568, %v5567
        %v5582 = vpack.c.b16 %v5570, %v5569
        %v5583 = vpack.c.b16 %v5572, %v5571
        %v5584 = vpack.c.b16 %v5574, %v5573
        %v5585 = vpack.c.b16 %v5576, %v5575
        %v5586 = vpack.c.b16 %v5578, %v5577
        %5595 = vmatprep.subr.bf16.mxu0 0
        %5596 = vmatpush1.bf16.msra.mxu0 %v5579
        %5597 = vmatprep.subr.bf16.mxu0 0
        %5598 = vmatpush1.bf16.msra.mxu0 %v5580
        %5599 = vmatprep.subr.bf16.mxu0 0
        %5600 = vmatpush1.bf16.msra.mxu0 %v5581
        %5601 = vmatprep.subr.bf16.mxu0 0
        %5602 = vmatpush1.bf16.msra.mxu0 %v5582
        %5603 = vmatprep.subr.bf16.mxu0 0
        %5604 = vmatpush1.bf16.msra.mxu0 %v5583
        %5605 = vmatprep.subr.bf16.mxu0 0
        %5606 = vmatpush1.bf16.msra.mxu0 %v5584
        %5607 = vmatprep.subr.bf16.mxu0 0
        %5608 = vmatpush1.bf16.msra.mxu0 %v5585
        %5609 = vmatprep.subr.bf16.mxu0 0
        %5610 = vmatpush1.bf16.msra.mxu0 %v5586
        %5611 = vmatprep.subr.bf16.mxu0 0
        %5612 = vmatpush1.bf16.msra.mxu0 0
        %5613 = vmatprep.subr.bf16.mxu0 0
        %5614 = vmatpush1.bf16.msra.mxu0 0
        %5615 = vmatprep.subr.bf16.mxu0 0
        %5616 = vmatpush1.bf16.msra.mxu0 0
        %5617 = vmatprep.subr.bf16.mxu0 0
        %5618 = vmatpush1.bf16.msra.mxu0 0
        %5619 = vmatprep.subr.bf16.mxu0 0
        %5620 = vmatpush1.bf16.msra.mxu0 0
        %5621 = vmatprep.subr.bf16.mxu0 0
        %5622 = vmatpush1.bf16.msra.mxu0 0
        %5623 = vmatprep.subr.bf16.mxu0 0
        %5624 = vmatpush1.bf16.msra.mxu0 0
        %5625 = vmatprep.subr.bf16.mxu0 0
        %5626 = vmatpush1.bf16.msra.mxu0 0
        %5627 = vmatprep.mubr.bf16.mxu0 0
        %5628 = vmatmul.mubr.bf16.gmra.mrb[0].mxu0 %v4452
        %v5629 = vpop.f32.mrb[0].mxu0
        %v5630 = vadd.f32 %v5485, %v5629
        %v5631 = vpop.f32.mrb[0].mxu0
        %v5632 = vpop.f32.mrb[0].mxu0
        %v5633 = vadd.f32 %v5488, %v5632
        %v5634 = vpop.f32.mrb[0].mxu0
        %5635 = vmatprep.mubr.bf16.mxu0 0
        %5636 = vmatmul.mubr.bf16.gmra.mrb[0].mxu0 %v4453
        %v5637 = vpop.f32.mrb[0].mxu0
        %v5638 = vadd.f32 %v5493, %v5637
        %v5639 = vpop.f32.mrb[0].mxu0
        %v5640 = vpop.f32.mrb[0].mxu0
        %v5641 = vadd.f32 %v5496, %v5640
        %v5642 = vpop.f32.mrb[0].mxu0
        %5643 = vmatprep.mubr.bf16.mxu0 0
        %5644 = vmatmul.mubr.bf16.gmra.mrb[0].mxu0 %v4454
        %v5645 = vpop.f32.mrb[0].mxu0
        %v5646 = vadd.f32 %v5501, %v5645
        %v5647 = vpop.f32.mrb[0].mxu0
        %v5648 = vpop.f32.mrb[0].mxu0
        %v5649 = vadd.f32 %v5504, %v5648
        %v5650 = vpop.f32.mrb[0].mxu0
        %5651 = vmatprep.mubr.bf16.mxu0 0
        %5652 = vmatmul.mubr.bf16.gmra.mrb[0].mxu0 %v4455
        %v5653 = vpop.f32.mrb[0].mxu0
        %v5654 = vadd.f32 %v5509, %v5653
        %v5655 = vpop.f32.mrb[0].mxu0
        %v5656 = vpop.f32.mrb[0].mxu0
        %v5657 = vadd.f32 %v5512, %v5656
        %v5658 = vpop.f32.mrb[0].mxu0
        %5659 = vmatprep.mubr.bf16.mxu0 0
        %5660 = vmatmul.mubr.bf16.gmra.mrb[0].mxu0 %v4456
        %v5661 = vpop.f32.mrb[0].mxu0
        %v5662 = vadd.f32 %v5517, %v5661
        %v5663 = vpop.f32.mrb[0].mxu0
        %v5664 = vpop.f32.mrb[0].mxu0
        %v5665 = vadd.f32 %v5520, %v5664
        %v5666 = vpop.f32.mrb[0].mxu0
        %5667 = vmatprep.mubr.bf16.mxu0 0
        %5668 = vmatmul.mubr.bf16.gmra.mrb[0].mxu0 %v4457
        %v5669 = vpop.f32.mrb[0].mxu0
        %v5670 = vadd.f32 %v5525, %v5669
        %v5671 = vpop.f32.mrb[0].mxu0
        %v5672 = vpop.f32.mrb[0].mxu0
        %v5673 = vadd.f32 %v5528, %v5672
        %v5674 = vpop.f32.mrb[0].mxu0
        %5675 = vmatprep.mubr.bf16.mxu0 0
        %5676 = vmatmul.mubr.bf16.gmra.mrb[0].mxu0 %v4458
        %v5677 = vpop.f32.mrb[0].mxu0
        %v5678 = vadd.f32 %v5533, %v5677
        %v5679 = vpop.f32.mrb[0].mxu0
        %v5680 = vpop.f32.mrb[0].mxu0
        %v5681 = vadd.f32 %v5536, %v5680
        %v5682 = vpop.f32.mrb[0].mxu0
        %5683 = vmatprep.mubr.bf16.mxu0 0
        %5684 = vmatmul.mubr.bf16.gmra.mrb[0].mxu0 %v4459
        %v5685 = vpop.f32.mrb[0].mxu0
        %v5686 = vadd.f32 %v5541, %v5685
        %v5687 = vpop.f32.mrb[0].mxu0
        %v5688 = vpop.f32.mrb[0].mxu0
        %v5689 = vadd.f32 %v5544, %v5688
        %v5690 = vpop.f32.mrb[0].mxu0
        %5691 = vdwg.mxu0
        %v5692 = vpack.c.bf16 %v3246, %v3245
        %v5693 = vpack.c.bf16 %v3248, %v3247
        %v5694 = vpack.c.bf16 %v3250, %v3249
        %v5695 = vpack.c.bf16 %v3252, %v3251
        %v5696 = vpack.c.bf16 %v3254, %v3253
        %v5697 = vpack.c.bf16 %v3256, %v3255
        %v5698 = vpack.c.bf16 %v3258, %v3257
        %v5699 = vpack.c.bf16 %v3260, %v3259
        %v5700 = vld [vmem:[%s3833] sm:$0xf]
        %v5701 = vld [vmem:[%s3833 + $0x4] sm:$0xf]
        %v5702 = vld [vmem:[%s3833 + $0x8] sm:$0xf]
        %v5703 = vld [vmem:[%s3833 + $0xc] sm:$0xf]
        %v5704 = vld [vmem:[%s3833 + $0x10] sm:$0xf]
        %v5705 = vld [vmem:[%s3833 + $0x14] sm:$0xf]
        %v5706 = vld [vmem:[%s3833 + $0x18] sm:$0xf]
        %v5707 = vld [vmem:[%s3833 + $0x1c] sm:$0xf]
        %v5708 = vld [vmem:[%s3833 + $0x20] sm:$0xf]
        %v5709 = vld [vmem:[%s3833 + $0x24] sm:$0xf]
        %v5710 = vld [vmem:[%s3833 + $0x28] sm:$0xf]
        %v5711 = vld [vmem:[%s3833 + $0x2c] sm:$0xf]
        %v5712 = vld [vmem:[%s3833 + $0x30] sm:$0xf]
        %v5713 = vld [vmem:[%s3833 + $0x34] sm:$0xf]
        %v5714 = vld [vmem:[%s3833 + $0x38] sm:$0xf]
        %v5715 = vld [vmem:[%s3833 + $0x3c] sm:$0xf]
        %v5732 = vunpack.c.l.b16 %v5700
        %v5733 = vunpack.c.l.b16 %v5701
        %v5734 = vunpack.c.l.b16 %v5702
        %v5735 = vunpack.c.l.b16 %v5703
        %v5736 = vunpack.c.l.b16 %v5704
        %v5737 = vunpack.c.l.b16 %v5705
        %v5738 = vunpack.c.l.b16 %v5706
        %v5739 = vunpack.c.l.b16 %v5707
        %v5740 = vunpack.c.l.b16 %v5708
        %v5741 = vunpack.c.l.b16 %v5709
        %v5742 = vunpack.c.l.b16 %v5710
        %v5743 = vunpack.c.l.b16 %v5711
        %v5744 = vunpack.c.l.b16 %v5712
        %v5745 = vunpack.c.l.b16 %v5713
        %v5746 = vunpack.c.l.b16 %v5714
        %v5747 = vunpack.c.l.b16 %v5715
        %v5748 = vpack.c.b16 %v5733, %v5732
        %v5749 = vpack.c.b16 %v5735, %v5734
        %v5750 = vpack.c.b16 %v5737, %v5736
        %v5751 = vpack.c.b16 %v5739, %v5738
        %v5752 = vpack.c.b16 %v5741, %v5740
        %v5753 = vpack.c.b16 %v5743, %v5742
        %v5754 = vpack.c.b16 %v5745, %v5744
        %v5755 = vpack.c.b16 %v5747, %v5746
        %5764 = vmatprep.subr.bf16.mxu0 0
        %5765 = vmatpush1.bf16.msra.mxu0 %v5748
        %5766 = vmatprep.subr.bf16.mxu0 0
        %5767 = vmatpush1.bf16.msra.mxu0 %v5749
        %5768 = vmatprep.subr.bf16.mxu0 0
        %5769 = vmatpush1.bf16.msra.mxu0 %v5750
        %5770 = vmatprep.subr.bf16.mxu0 0
        %5771 = vmatpush1.bf16.msra.mxu0 %v5751
        %5772 = vmatprep.subr.bf16.mxu0 0
        %5773 = vmatpush1.bf16.msra.mxu0 %v5752
        %5774 = vmatprep.subr.bf16.mxu0 0
        %5775 = vmatpush1.bf16.msra.mxu0 %v5753
        %5776 = vmatprep.subr.bf16.mxu0 0
        %5777 = vmatpush1.bf16.msra.mxu0 %v5754
        %5778 = vmatprep.subr.bf16.mxu0 0
        %5779 = vmatpush1.bf16.msra.mxu0 %v5755
        %5780 = vmatprep.subr.bf16.mxu0 0
        %5781 = vmatpush1.bf16.msra.mxu0 0
        %5782 = vmatprep.subr.bf16.mxu0 0
        %5783 = vmatpush1.bf16.msra.mxu0 0
        %5784 = vmatprep.subr.bf16.mxu0 0
        %5785 = vmatpush1.bf16.msra.mxu0 0
        %5786 = vmatprep.subr.bf16.mxu0 0
        %5787 = vmatpush1.bf16.msra.mxu0 0
        %5788 = vmatprep.subr.bf16.mxu0 0
        %5789 = vmatpush1.bf16.msra.mxu0 0
        %5790 = vmatprep.subr.bf16.mxu0 0
        %5791 = vmatpush1.bf16.msra.mxu0 0
        %5792 = vmatprep.subr.bf16.mxu0 0
        %5793 = vmatpush1.bf16.msra.mxu0 0
        %5794 = vmatprep.subr.bf16.mxu0 0
        %5795 = vmatpush1.bf16.msra.mxu0 0
        %5796 = vmatprep.mubr.bf16.mxu0 0
        %5797 = vmatmul.mubr.bf16.gmra.mrb[0].mxu0 %v5692
        %v5798 = vpop.f32.mrb[0].mxu0
        %v5799 = vadd.f32 0.0, %v5798
        %v5800 = vpop.f32.mrb[0].mxu0
        %v5801 = vpop.f32.mrb[0].mxu0
        %v5802 = vadd.f32 0.0, %v5801
        %v5803 = vpop.f32.mrb[0].mxu0
        %5804 = vmatprep.mubr.bf16.mxu0 0
        %5805 = vmatmul.mubr.bf16.gmra.mrb[0].mxu0 %v5693
        %v5806 = vpop.f32.mrb[0].mxu0
        %v5807 = vadd.f32 0.0, %v5806
        %v5808 = vpop.f32.mrb[0].mxu0
        %v5809 = vpop.f32.mrb[0].mxu0
        %v5810 = vadd.f32 0.0, %v5809
        %v5811 = vpop.f32.mrb[0].mxu0
        %5812 = vmatprep.mubr.bf16.mxu0 0
        %5813 = vmatmul.mubr.bf16.gmra.mrb[0].mxu0 %v5694
        %v5814 = vpop.f32.mrb[0].mxu0
        %v5815 = vadd.f32 0.0, %v5814
        %v5816 = vpop.f32.mrb[0].mxu0
        %v5817 = vpop.f32.mrb[0].mxu0
        %v5818 = vadd.f32 0.0, %v5817
        %v5819 = vpop.f32.mrb[0].mxu0
        %5820 = vmatprep.mubr.bf16.mxu0 0
        %5821 = vmatmul.mubr.bf16.gmra.mrb[0].mxu0 %v5695
        %v5822 = vpop.f32.mrb[0].mxu0
        %v5823 = vadd.f32 0.0, %v5822
        %v5824 = vpop.f32.mrb[0].mxu0
        %v5825 = vpop.f32.mrb[0].mxu0
        %v5826 = vadd.f32 0.0, %v5825
        %v5827 = vpop.f32.mrb[0].mxu0
        %5828 = vmatprep.mubr.bf16.mxu0 0
        %5829 = vmatmul.mubr.bf16.gmra.mrb[0].mxu0 %v5696
        %v5830 = vpop.f32.mrb[0].mxu0
        %v5831 = vadd.f32 0.0, %v5830
        %v5832 = vpop.f32.mrb[0].mxu0
        %v5833 = vpop.f32.mrb[0].mxu0
        %v5834 = vadd.f32 0.0, %v5833
        %v5835 = vpop.f32.mrb[0].mxu0
        %5836 = vmatprep.mubr.bf16.mxu0 0
        %5837 = vmatmul.mubr.bf16.gmra.mrb[0].mxu0 %v5697
        %v5838 = vpop.f32.mrb[0].mxu0
        %v5839 = vadd.f32 0.0, %v5838
        %v5840 = vpop.f32.mrb[0].mxu0
        %v5841 = vpop.f32.mrb[0].mxu0
        %v5842 = vadd.f32 0.0, %v5841
        %v5843 = vpop.f32.mrb[0].mxu0
        %5844 = vmatprep.mubr.bf16.mxu0 0
        %5845 = vmatmul.mubr.bf16.gmra.mrb[0].mxu0 %v5698
        %v5846 = vpop.f32.mrb[0].mxu0
        %v5847 = vadd.f32 0.0, %v5846
        %v5848 = vpop.f32.mrb[0].mxu0
        %v5849 = vpop.f32.mrb[0].mxu0
        %v5850 = vadd.f32 0.0, %v5849
        %v5851 = vpop.f32.mrb[0].mxu0
        %5852 = vmatprep.mubr.bf16.mxu0 0
        %5853 = vmatmul.mubr.bf16.gmra.mrb[0].mxu0 %v5699
        %v5854 = vpop.f32.mrb[0].mxu0
        %v5855 = vadd.f32 0.0, %v5854
        %v5856 = vpop.f32.mrb[0].mxu0
        %v5857 = vpop.f32.mrb[0].mxu0
        %v5858 = vadd.f32 0.0, %v5857
        %v5859 = vpop.f32.mrb[0].mxu0
        %5860 = vdwg.mxu0
        %v5861 = vadd.f32 %v5630, %v5799
        %v5862 = vadd.f32 %v5633, %v5802
        %v5863 = vadd.f32 %v5638, %v5807
        %v5864 = vadd.f32 %v5641, %v5810
        %v5865 = vadd.f32 %v5646, %v5815
        %v5866 = vadd.f32 %v5649, %v5818
        %v5867 = vadd.f32 %v5654, %v5823
        %v5868 = vadd.f32 %v5657, %v5826
        %v5869 = vadd.f32 %v5662, %v5831
        %v5870 = vadd.f32 %v5665, %v5834
        %v5871 = vadd.f32 %v5670, %v5839
        %v5872 = vadd.f32 %v5673, %v5842
        %v5873 = vadd.f32 %v5678, %v5847
        %v5874 = vadd.f32 %v5681, %v5850
        %v5875 = vadd.f32 %v5686, %v5855
        %v5876 = vadd.f32 %v5689, %v5858
        %v5877 = vadd.f32 %v5861, %v4015
        %v5878 = vadd.f32 %v5862, %v4015
        %v5879 = vadd.f32 %v5863, %v4015
        %v5880 = vadd.f32 %v5864, %v4015
        %v5881 = vadd.f32 %v5865, %v4015
        %v5882 = vadd.f32 %v5866, %v4015
        %v5883 = vadd.f32 %v5867, %v4015
        %v5884 = vadd.f32 %v5868, %v4015
        %v5885 = vadd.f32 %v5869, %v4015
        %v5886 = vadd.f32 %v5870, %v4015
        %v5887 = vadd.f32 %v5871, %v4015
        %v5888 = vadd.f32 %v5872, %v4015
        %v5889 = vadd.f32 %v5873, %v4015
        %v5890 = vadd.f32 %v5874, %v4015
        %v5891 = vadd.f32 %v5875, %v4015
        %v5892 = vadd.f32 %v5876, %v4015
        %v5893 = vsub.f32 0.0, %v5877
        %v5894 = vsub.f32 0.0, %v5878
        %v5895 = vsub.f32 0.0, %v5879
        %v5896 = vsub.f32 0.0, %v5880
        %v5897 = vsub.f32 0.0, %v5881
        %v5898 = vsub.f32 0.0, %v5882
        %v5899 = vsub.f32 0.0, %v5883
        %v5900 = vsub.f32 0.0, %v5884
        %v5901 = vsub.f32 0.0, %v5885
        %v5902 = vsub.f32 0.0, %v5886
        %v5903 = vsub.f32 0.0, %v5887
        %v5904 = vsub.f32 0.0, %v5888
        %v5905 = vsub.f32 0.0, %v5889
        %v5906 = vsub.f32 0.0, %v5890
        %v5907 = vsub.f32 0.0, %v5891
        %v5908 = vsub.f32 0.0, %v5892
        %v5909 = vmul.f32 %v5893, 1.442695
        %v5910 = vpow.pop %v5909
        %v5911 = vmul.f32 %v5894, 1.442695
        %v5912 = vpow.pop %v5911
        %v5913 = vmul.f32 %v5895, 1.442695
        %v5914 = vpow.pop %v5913
        %v5915 = vmul.f32 %v5896, 1.442695
        %v5916 = vpow.pop %v5915
        %v5917 = vmul.f32 %v5897, 1.442695
        %v5918 = vpow.pop %v5917
        %v5919 = vmul.f32 %v5898, 1.442695
        %v5920 = vpow.pop %v5919
        %v5921 = vmul.f32 %v5899, 1.442695
        %v5922 = vpow.pop %v5921
        %v5923 = vmul.f32 %v5900, 1.442695
        %v5924 = vpow.pop %v5923
        %v5925 = vmul.f32 %v5901, 1.442695
        %v5926 = vpow.pop %v5925
        %v5927 = vmul.f32 %v5902, 1.442695
        %v5928 = vpow.pop %v5927
        %v5929 = vmul.f32 %v5903, 1.442695
        %v5930 = vpow.pop %v5929
        %v5931 = vmul.f32 %v5904, 1.442695
        %v5932 = vpow.pop %v5931
        %v5933 = vmul.f32 %v5905, 1.442695
        %v5934 = vpow.pop %v5933
        %v5935 = vmul.f32 %v5906, 1.442695
        %v5936 = vpow.pop %v5935
        %v5937 = vmul.f32 %v5907, 1.442695
        %v5938 = vpow.pop %v5937
        %v5939 = vmul.f32 %v5908, 1.442695
        %v5940 = vpow.pop %v5939
        %v5941 = vadd.f32 %v5910, 1.0
        %v5942 = vadd.f32 %v5912, 1.0
        %v5943 = vadd.f32 %v5914, 1.0
        %v5944 = vadd.f32 %v5916, 1.0
        %v5945 = vadd.f32 %v5918, 1.0
        %v5946 = vadd.f32 %v5920, 1.0
        %v5947 = vadd.f32 %v5922, 1.0
        %v5948 = vadd.f32 %v5924, 1.0
        %v5949 = vadd.f32 %v5926, 1.0
        %v5950 = vadd.f32 %v5928, 1.0
        %v5951 = vadd.f32 %v5930, 1.0
        %v5952 = vadd.f32 %v5932, 1.0
        %v5953 = vadd.f32 %v5934, 1.0
        %v5954 = vadd.f32 %v5936, 1.0
        %v5955 = vadd.f32 %v5938, 1.0
        %v5956 = vadd.f32 %v5940, 1.0
        %v5957 = vrcp.pop %v5941
        %v5958 = vrcp.pop %v5942
        %v5959 = vrcp.pop %v5943
        %v5960 = vrcp.pop %v5944
        %v5961 = vrcp.pop %v5945
        %v5962 = vrcp.pop %v5946
        %v5963 = vrcp.pop %v5947
        %v5964 = vrcp.pop %v5948
        %v5965 = vrcp.pop %v5949
        %v5966 = vrcp.pop %v5950
        %v5967 = vrcp.pop %v5951
        %v5968 = vrcp.pop %v5952
        %v5969 = vrcp.pop %v5953
        %v5970 = vrcp.pop %v5954
        %v5971 = vrcp.pop %v5955
        %v5972 = vrcp.pop %v5956
        %s5973 = scalar_lea.vmem %s376, 384 [#allocation3]
        %5974 = vst.msk [vmem:[%s5973] sm:$0xff] %vm4113, %v5957
        %5975 = vst.msk [vmem:[%s5973 + $0x8] sm:$0xff] %vm4113, %v5958
        %5976 = vst.msk [vmem:[%s5973 + $0x10] sm:$0xff] %vm4113, %v5959
        %5977 = vst.msk [vmem:[%s5973 + $0x18] sm:$0xff] %vm4113, %v5960
        %5978 = vst.msk [vmem:[%s5973 + $0x20] sm:$0xff] %vm4113, %v5961
        %5979 = vst.msk [vmem:[%s5973 + $0x28] sm:$0xff] %vm4113, %v5962
        %5980 = vst.msk [vmem:[%s5973 + $0x30] sm:$0xff] %vm4113, %v5963
        %5981 = vst.msk [vmem:[%s5973 + $0x38] sm:$0xff] %vm4113, %v5964
        %5982 = vst.msk [vmem:[%s5973 + $0x40] sm:$0xff] %vm4113, %v5965
        %5983 = vst.msk [vmem:[%s5973 + $0x48] sm:$0xff] %vm4113, %v5966
        %5984 = vst.msk [vmem:[%s5973 + $0x50] sm:$0xff] %vm4113, %v5967
        %5985 = vst.msk [vmem:[%s5973 + $0x58] sm:$0xff] %vm4113, %v5968
        %5986 = vst.msk [vmem:[%s5973 + $0x60] sm:$0xff] %vm4113, %v5969
        %5987 = vst.msk [vmem:[%s5973 + $0x68] sm:$0xff] %vm4113, %v5970
        %5988 = vst.msk [vmem:[%s5973 + $0x70] sm:$0xff] %vm4113, %v5971
        %5989 = vst.msk [vmem:[%s5973 + $0x78] sm:$0xff] %vm4113, %v5972
        %v5990 = vld [vmem:[%s9] sm:$0xf]
        %v5991 = vld [vmem:[%s9 + $0x4] sm:$0xf]
        %v5992 = vld [vmem:[%s9 + $0x8] sm:$0xf]
        %v5993 = vld [vmem:[%s9 + $0xc] sm:$0xf]
        %v5994 = vld [vmem:[%s9 + $0x10] sm:$0xf]
        %v5995 = vld [vmem:[%s9 + $0x14] sm:$0xf]
        %v5996 = vld [vmem:[%s9 + $0x18] sm:$0xf]
        %v5997 = vld [vmem:[%s9 + $0x1c] sm:$0xf]
        %v5998 = vld [vmem:[%s9 + $0x20] sm:$0xf]
        %v5999 = vld [vmem:[%s9 + $0x24] sm:$0xf]
        %v6000 = vld [vmem:[%s9 + $0x28] sm:$0xf]
        %v6001 = vld [vmem:[%s9 + $0x2c] sm:$0xf]
        %v6002 = vld [vmem:[%s9 + $0x30] sm:$0xf]
        %v6003 = vld [vmem:[%s9 + $0x34] sm:$0xf]
        %v6004 = vld [vmem:[%s9 + $0x38] sm:$0xf]
        %v6005 = vld [vmem:[%s9 + $0x3c] sm:$0xf]
        %v6006 = vld [vmem:[%s3518] sm:$0xf]
        %v6007 = vld [vmem:[%s3518 + $0x4] sm:$0xf]
        %v6008 = vld [vmem:[%s3518 + $0x8] sm:$0xf]
        %v6009 = vld [vmem:[%s3518 + $0xc] sm:$0xf]
        %v6010 = vld [vmem:[%s3518 + $0x10] sm:$0xf]
        %v6011 = vld [vmem:[%s3518 + $0x14] sm:$0xf]
        %v6012 = vld [vmem:[%s3518 + $0x18] sm:$0xf]
        %v6013 = vld [vmem:[%s3518 + $0x1c] sm:$0xf]
        %v6014 = vld [vmem:[%s3518 + $0x20] sm:$0xf]
        %v6015 = vld [vmem:[%s3518 + $0x24] sm:$0xf]
        %v6016 = vld [vmem:[%s3518 + $0x28] sm:$0xf]
        %v6017 = vld [vmem:[%s3518 + $0x2c] sm:$0xf]
        %v6018 = vld [vmem:[%s3518 + $0x30] sm:$0xf]
        %v6019 = vld [vmem:[%s3518 + $0x34] sm:$0xf]
        %v6020 = vld [vmem:[%s3518 + $0x38] sm:$0xf]
        %v6021 = vld [vmem:[%s3518 + $0x3c] sm:$0xf]
        %v6038 = vunpack.c.l.b16 %v6006
        %v6039 = vunpack.c.l.b16 %v6007
        %v6040 = vunpack.c.l.b16 %v6008
        %v6041 = vunpack.c.l.b16 %v6009
        %v6042 = vunpack.c.l.b16 %v6010
        %v6043 = vunpack.c.l.b16 %v6011
        %v6044 = vunpack.c.l.b16 %v6012
        %v6045 = vunpack.c.l.b16 %v6013
        %v6046 = vunpack.c.l.b16 %v6014
        %v6047 = vunpack.c.l.b16 %v6015
        %v6048 = vunpack.c.l.b16 %v6016
        %v6049 = vunpack.c.l.b16 %v6017
        %v6050 = vunpack.c.l.b16 %v6018
        %v6051 = vunpack.c.l.b16 %v6019
        %v6052 = vunpack.c.l.b16 %v6020
        %v6053 = vunpack.c.l.b16 %v6021
        %v6054 = vpack.c.b16 %v6039, %v6038
        %v6055 = vpack.c.b16 %v6041, %v6040
        %v6056 = vpack.c.b16 %v6043, %v6042
        %v6057 = vpack.c.b16 %v6045, %v6044
        %v6058 = vpack.c.b16 %v6047, %v6046
        %v6059 = vpack.c.b16 %v6049, %v6048
        %v6060 = vpack.c.b16 %v6051, %v6050
        %v6061 = vpack.c.b16 %v6053, %v6052
        %6070 = vmatprep.subr.bf16.mxu0 0
        %6071 = vmatpush1.bf16.msra.mxu0 %v6054
        %6072 = vmatprep.subr.bf16.mxu0 0
        %6073 = vmatpush1.bf16.msra.mxu0 %v6055
        %6074 = vmatprep.subr.bf16.mxu0 0
        %6075 = vmatpush1.bf16.msra.mxu0 %v6056
        %6076 = vmatprep.subr.bf16.mxu0 0
        %6077 = vmatpush1.bf16.msra.mxu0 %v6057
        %6078 = vmatprep.subr.bf16.mxu0 0
        %6079 = vmatpush1.bf16.msra.mxu0 %v6058
        %6080 = vmatprep.subr.bf16.mxu0 0
        %6081 = vmatpush1.bf16.msra.mxu0 %v6059
        %6082 = vmatprep.subr.bf16.mxu0 0
        %6083 = vmatpush1.bf16.msra.mxu0 %v6060
        %6084 = vmatprep.subr.bf16.mxu0 0
        %6085 = vmatpush1.bf16.msra.mxu0 %v6061
        %6086 = vmatprep.subr.bf16.mxu0 0
        %6087 = vmatpush1.bf16.msra.mxu0 0
        %6088 = vmatprep.subr.bf16.mxu0 0
        %6089 = vmatpush1.bf16.msra.mxu0 0
        %6090 = vmatprep.subr.bf16.mxu0 0
        %6091 = vmatpush1.bf16.msra.mxu0 0
        %6092 = vmatprep.subr.bf16.mxu0 0
        %6093 = vmatpush1.bf16.msra.mxu0 0
        %6094 = vmatprep.subr.bf16.mxu0 0
        %6095 = vmatpush1.bf16.msra.mxu0 0
        %6096 = vmatprep.subr.bf16.mxu0 0
        %6097 = vmatpush1.bf16.msra.mxu0 0
        %6098 = vmatprep.subr.bf16.mxu0 0
        %6099 = vmatpush1.bf16.msra.mxu0 0
        %6100 = vmatprep.subr.bf16.mxu0 0
        %6101 = vmatpush1.bf16.msra.mxu0 0
        %6102 = vmatprep.mubr.bf16.mxu0 0
        %6103 = vmatmul.mubr.bf16.gmra.mrb[0].mxu0 %v5692
        %v6104 = vpop.f32.mrb[0].mxu0
        %v6105 = vadd.f32 0.0, %v6104
        %v6106 = vpop.f32.mrb[0].mxu0
        %v6107 = vpop.f32.mrb[0].mxu0
        %v6108 = vadd.f32 0.0, %v6107
        %v6109 = vpop.f32.mrb[0].mxu0
        %6110 = vmatprep.mubr.bf16.mxu0 0
        %6111 = vmatmul.mubr.bf16.gmra.mrb[0].mxu0 %v5693
        %v6112 = vpop.f32.mrb[0].mxu0
        %v6113 = vadd.f32 0.0, %v6112
        %v6114 = vpop.f32.mrb[0].mxu0
        %v6115 = vpop.f32.mrb[0].mxu0
        %v6116 = vadd.f32 0.0, %v6115
        %v6117 = vpop.f32.mrb[0].mxu0
        %6118 = vmatprep.mubr.bf16.mxu0 0
        %6119 = vmatmul.mubr.bf16.gmra.mrb[0].mxu0 %v5694
        %v6120 = vpop.f32.mrb[0].mxu0
        %v6121 = vadd.f32 0.0, %v6120
        %v6122 = vpop.f32.mrb[0].mxu0
        %v6123 = vpop.f32.mrb[0].mxu0
        %v6124 = vadd.f32 0.0, %v6123
        %v6125 = vpop.f32.mrb[0].mxu0
        %6126 = vmatprep.mubr.bf16.mxu0 0
        %6127 = vmatmul.mubr.bf16.gmra.mrb[0].mxu0 %v5695
        %v6128 = vpop.f32.mrb[0].mxu0
        %v6129 = vadd.f32 0.0, %v6128
        %v6130 = vpop.f32.mrb[0].mxu0
        %v6131 = vpop.f32.mrb[0].mxu0
        %v6132 = vadd.f32 0.0, %v6131
        %v6133 = vpop.f32.mrb[0].mxu0
        %6134 = vmatprep.mubr.bf16.mxu0 0
        %6135 = vmatmul.mubr.bf16.gmra.mrb[0].mxu0 %v5696
        %v6136 = vpop.f32.mrb[0].mxu0
        %v6137 = vadd.f32 0.0, %v6136
        %v6138 = vpop.f32.mrb[0].mxu0
        %v6139 = vpop.f32.mrb[0].mxu0
        %v6140 = vadd.f32 0.0, %v6139
        %v6141 = vpop.f32.mrb[0].mxu0
        %6142 = vmatprep.mubr.bf16.mxu0 0
        %6143 = vmatmul.mubr.bf16.gmra.mrb[0].mxu0 %v5697
        %v6144 = vpop.f32.mrb[0].mxu0
        %v6145 = vadd.f32 0.0, %v6144
        %v6146 = vpop.f32.mrb[0].mxu0
        %v6147 = vpop.f32.mrb[0].mxu0
        %v6148 = vadd.f32 0.0, %v6147
        %v6149 = vpop.f32.mrb[0].mxu0
        %6150 = vmatprep.mubr.bf16.mxu0 0
        %6151 = vmatmul.mubr.bf16.gmra.mrb[0].mxu0 %v5698
        %v6152 = vpop.f32.mrb[0].mxu0
        %v6153 = vadd.f32 0.0, %v6152
        %v6154 = vpop.f32.mrb[0].mxu0
        %v6155 = vpop.f32.mrb[0].mxu0
        %v6156 = vadd.f32 0.0, %v6155
        %v6157 = vpop.f32.mrb[0].mxu0
        %6158 = vmatprep.mubr.bf16.mxu0 0
        %6159 = vmatmul.mubr.bf16.gmra.mrb[0].mxu0 %v5699
        %v6160 = vpop.f32.mrb[0].mxu0
        %v6161 = vadd.f32 0.0, %v6160
        %v6162 = vpop.f32.mrb[0].mxu0
        %v6163 = vpop.f32.mrb[0].mxu0
        %v6164 = vadd.f32 0.0, %v6163
        %v6165 = vpop.f32.mrb[0].mxu0
        %6166 = vdwg.mxu0
        %v6183 = vunpack.c.l.b16 %v5990
        %v6184 = vunpack.c.l.b16 %v5991
        %v6185 = vunpack.c.l.b16 %v5992
        %v6186 = vunpack.c.l.b16 %v5993
        %v6187 = vunpack.c.l.b16 %v5994
        %v6188 = vunpack.c.l.b16 %v5995
        %v6189 = vunpack.c.l.b16 %v5996
        %v6190 = vunpack.c.l.b16 %v5997
        %v6191 = vunpack.c.l.b16 %v5998
        %v6192 = vunpack.c.l.b16 %v5999
        %v6193 = vunpack.c.l.b16 %v6000
        %v6194 = vunpack.c.l.b16 %v6001
        %v6195 = vunpack.c.l.b16 %v6002
        %v6196 = vunpack.c.l.b16 %v6003
        %v6197 = vunpack.c.l.b16 %v6004
        %v6198 = vunpack.c.l.b16 %v6005
        %v6199 = vpack.c.b16 %v6184, %v6183
        %v6200 = vpack.c.b16 %v6186, %v6185
        %v6201 = vpack.c.b16 %v6188, %v6187
        %v6202 = vpack.c.b16 %v6190, %v6189
        %v6203 = vpack.c.b16 %v6192, %v6191
        %v6204 = vpack.c.b16 %v6194, %v6193
        %v6205 = vpack.c.b16 %v6196, %v6195
        %v6206 = vpack.c.b16 %v6198, %v6197
        %6215 = vmatprep.subr.bf16.mxu0 0
        %6216 = vmatpush1.bf16.msra.mxu0 %v6199
        %6217 = vmatprep.subr.bf16.mxu0 0
        %6218 = vmatpush1.bf16.msra.mxu0 %v6200
        %6219 = vmatprep.subr.bf16.mxu0 0
        %6220 = vmatpush1.bf16.msra.mxu0 %v6201
        %6221 = vmatprep.subr.bf16.mxu0 0
        %6222 = vmatpush1.bf16.msra.mxu0 %v6202
        %6223 = vmatprep.subr.bf16.mxu0 0
        %6224 = vmatpush1.bf16.msra.mxu0 %v6203
        %6225 = vmatprep.subr.bf16.mxu0 0
        %6226 = vmatpush1.bf16.msra.mxu0 %v6204
        %6227 = vmatprep.subr.bf16.mxu0 0
        %6228 = vmatpush1.bf16.msra.mxu0 %v6205
        %6229 = vmatprep.subr.bf16.mxu0 0
        %6230 = vmatpush1.bf16.msra.mxu0 %v6206
        %6231 = vmatprep.subr.bf16.mxu0 0
        %6232 = vmatpush1.bf16.msra.mxu0 0
        %6233 = vmatprep.subr.bf16.mxu0 0
        %6234 = vmatpush1.bf16.msra.mxu0 0
        %6235 = vmatprep.subr.bf16.mxu0 0
        %6236 = vmatpush1.bf16.msra.mxu0 0
        %6237 = vmatprep.subr.bf16.mxu0 0
        %6238 = vmatpush1.bf16.msra.mxu0 0
        %6239 = vmatprep.subr.bf16.mxu0 0
        %6240 = vmatpush1.bf16.msra.mxu0 0
        %6241 = vmatprep.subr.bf16.mxu0 0
        %6242 = vmatpush1.bf16.msra.mxu0 0
        %6243 = vmatprep.subr.bf16.mxu0 0
        %6244 = vmatpush1.bf16.msra.mxu0 0
        %6245 = vmatprep.subr.bf16.mxu0 0
        %6246 = vmatpush1.bf16.msra.mxu0 0
        %6247 = vmatprep.mubr.bf16.mxu0 0
        %6248 = vmatmul.mubr.bf16.gmra.mrb[0].mxu0 %v5072
        %v6249 = vpop.f32.mrb[0].mxu0
        %v6250 = vadd.f32 %v6105, %v6249
        %v6251 = vpop.f32.mrb[0].mxu0
        %v6252 = vpop.f32.mrb[0].mxu0
        %v6253 = vadd.f32 %v6108, %v6252
        %v6254 = vpop.f32.mrb[0].mxu0
        %6255 = vmatprep.mubr.bf16.mxu0 0
        %6256 = vmatmul.mubr.bf16.gmra.mrb[0].mxu0 %v5073
        %v6257 = vpop.f32.mrb[0].mxu0
        %v6258 = vadd.f32 %v6113, %v6257
        %v6259 = vpop.f32.mrb[0].mxu0
        %v6260 = vpop.f32.mrb[0].mxu0
        %v6261 = vadd.f32 %v6116, %v6260
        %v6262 = vpop.f32.mrb[0].mxu0
        %6263 = vmatprep.mubr.bf16.mxu0 0
        %6264 = vmatmul.mubr.bf16.gmra.mrb[0].mxu0 %v5074
        %v6265 = vpop.f32.mrb[0].mxu0
        %v6266 = vadd.f32 %v6121, %v6265
        %v6267 = vpop.f32.mrb[0].mxu0
        %v6268 = vpop.f32.mrb[0].mxu0
        %v6269 = vadd.f32 %v6124, %v6268
        %v6270 = vpop.f32.mrb[0].mxu0
        %6271 = vmatprep.mubr.bf16.mxu0 0
        %6272 = vmatmul.mubr.bf16.gmra.mrb[0].mxu0 %v5075
        %v6273 = vpop.f32.mrb[0].mxu0
        %v6274 = vadd.f32 %v6129, %v6273
        %v6275 = vpop.f32.mrb[0].mxu0
        %v6276 = vpop.f32.mrb[0].mxu0
        %v6277 = vadd.f32 %v6132, %v6276
        %v6278 = vpop.f32.mrb[0].mxu0
        %6279 = vmatprep.mubr.bf16.mxu0 0
        %6280 = vmatmul.mubr.bf16.gmra.mrb[0].mxu0 %v5076
        %v6281 = vpop.f32.mrb[0].mxu0
        %v6282 = vadd.f32 %v6137, %v6281
        %v6283 = vpop.f32.mrb[0].mxu0
        %v6284 = vpop.f32.mrb[0].mxu0
        %v6285 = vadd.f32 %v6140, %v6284
        %v6286 = vpop.f32.mrb[0].mxu0
        %6287 = vmatprep.mubr.bf16.mxu0 0
        %6288 = vmatmul.mubr.bf16.gmra.mrb[0].mxu0 %v5077
        %v6289 = vpop.f32.mrb[0].mxu0
        %v6290 = vadd.f32 %v6145, %v6289
        %v6291 = vpop.f32.mrb[0].mxu0
        %v6292 = vpop.f32.mrb[0].mxu0
        %v6293 = vadd.f32 %v6148, %v6292
        %v6294 = vpop.f32.mrb[0].mxu0
        %6295 = vmatprep.mubr.bf16.mxu0 0
        %6296 = vmatmul.mubr.bf16.gmra.mrb[0].mxu0 %v5078
        %v6297 = vpop.f32.mrb[0].mxu0
        %v6298 = vadd.f32 %v6153, %v6297
        %v6299 = vpop.f32.mrb[0].mxu0
        %v6300 = vpop.f32.mrb[0].mxu0
        %v6301 = vadd.f32 %v6156, %v6300
        %v6302 = vpop.f32.mrb[0].mxu0
        %6303 = vmatprep.mubr.bf16.mxu0 0
        %6304 = vmatmul.mubr.bf16.gmra.mrb[0].mxu0 %v5079
        %v6305 = vpop.f32.mrb[0].mxu0
        %v6306 = vadd.f32 %v6161, %v6305
        %v6307 = vpop.f32.mrb[0].mxu0
        %v6308 = vpop.f32.mrb[0].mxu0
        %v6309 = vadd.f32 %v6164, %v6308
        %v6310 = vpop.f32.mrb[0].mxu0
        %6311 = vdwg.mxu0
        %v6312 = vpack.c.bf16 %v3294, %v3293
        %v6313 = vpack.c.bf16 %v3296, %v3295
        %v6314 = vpack.c.bf16 %v3298, %v3297
        %v6315 = vpack.c.bf16 %v3300, %v3299
        %v6316 = vpack.c.bf16 %v3302, %v3301
        %v6317 = vpack.c.bf16 %v3304, %v3303
        %v6318 = vpack.c.bf16 %v3306, %v3305
        %v6319 = vpack.c.bf16 %v3308, %v3307
        %v6320 = vld [vmem:[%s3833] sm:$0xf]
        %v6321 = vld [vmem:[%s3833 + $0x4] sm:$0xf]
        %v6322 = vld [vmem:[%s3833 + $0x8] sm:$0xf]
        %v6323 = vld [vmem:[%s3833 + $0xc] sm:$0xf]
        %v6324 = vld [vmem:[%s3833 + $0x10] sm:$0xf]
        %v6325 = vld [vmem:[%s3833 + $0x14] sm:$0xf]
        %v6326 = vld [vmem:[%s3833 + $0x18] sm:$0xf]
        %v6327 = vld [vmem:[%s3833 + $0x1c] sm:$0xf]
        %v6328 = vld [vmem:[%s3833 + $0x20] sm:$0xf]
        %v6329 = vld [vmem:[%s3833 + $0x24] sm:$0xf]
        %v6330 = vld [vmem:[%s3833 + $0x28] sm:$0xf]
        %v6331 = vld [vmem:[%s3833 + $0x2c] sm:$0xf]
        %v6332 = vld [vmem:[%s3833 + $0x30] sm:$0xf]
        %v6333 = vld [vmem:[%s3833 + $0x34] sm:$0xf]
        %v6334 = vld [vmem:[%s3833 + $0x38] sm:$0xf]
        %v6335 = vld [vmem:[%s3833 + $0x3c] sm:$0xf]
        %v6352 = vunpack.c.l.b16 %v6320
        %v6353 = vunpack.c.l.b16 %v6321
        %v6354 = vunpack.c.l.b16 %v6322
        %v6355 = vunpack.c.l.b16 %v6323
        %v6356 = vunpack.c.l.b16 %v6324
        %v6357 = vunpack.c.l.b16 %v6325
        %v6358 = vunpack.c.l.b16 %v6326
        %v6359 = vunpack.c.l.b16 %v6327
        %v6360 = vunpack.c.l.b16 %v6328
        %v6361 = vunpack.c.l.b16 %v6329
        %v6362 = vunpack.c.l.b16 %v6330
        %v6363 = vunpack.c.l.b16 %v6331
        %v6364 = vunpack.c.l.b16 %v6332
        %v6365 = vunpack.c.l.b16 %v6333
        %v6366 = vunpack.c.l.b16 %v6334
        %v6367 = vunpack.c.l.b16 %v6335
        %v6368 = vpack.c.b16 %v6353, %v6352
        %v6369 = vpack.c.b16 %v6355, %v6354
        %v6370 = vpack.c.b16 %v6357, %v6356
        %v6371 = vpack.c.b16 %v6359, %v6358
        %v6372 = vpack.c.b16 %v6361, %v6360
        %v6373 = vpack.c.b16 %v6363, %v6362
        %v6374 = vpack.c.b16 %v6365, %v6364
        %v6375 = vpack.c.b16 %v6367, %v6366
        %6384 = vmatprep.subr.bf16.mxu0 0
        %6385 = vmatpush1.bf16.msra.mxu0 %v6368
        %6386 = vmatprep.subr.bf16.mxu0 0
        %6387 = vmatpush1.bf16.msra.mxu0 %v6369
        %6388 = vmatprep.subr.bf16.mxu0 0
        %6389 = vmatpush1.bf16.msra.mxu0 %v6370
        %6390 = vmatprep.subr.bf16.mxu0 0
        %6391 = vmatpush1.bf16.msra.mxu0 %v6371
        %6392 = vmatprep.subr.bf16.mxu0 0
        %6393 = vmatpush1.bf16.msra.mxu0 %v6372
        %6394 = vmatprep.subr.bf16.mxu0 0
        %6395 = vmatpush1.bf16.msra.mxu0 %v6373
        %6396 = vmatprep.subr.bf16.mxu0 0
        %6397 = vmatpush1.bf16.msra.mxu0 %v6374
        %6398 = vmatprep.subr.bf16.mxu0 0
        %6399 = vmatpush1.bf16.msra.mxu0 %v6375
        %6400 = vmatprep.subr.bf16.mxu0 0
        %6401 = vmatpush1.bf16.msra.mxu0 0
        %6402 = vmatprep.subr.bf16.mxu0 0
        %6403 = vmatpush1.bf16.msra.mxu0 0
        %6404 = vmatprep.subr.bf16.mxu0 0
        %6405 = vmatpush1.bf16.msra.mxu0 0
        %6406 = vmatprep.subr.bf16.mxu0 0
        %6407 = vmatpush1.bf16.msra.mxu0 0
        %6408 = vmatprep.subr.bf16.mxu0 0
        %6409 = vmatpush1.bf16.msra.mxu0 0
        %6410 = vmatprep.subr.bf16.mxu0 0
        %6411 = vmatpush1.bf16.msra.mxu0 0
        %6412 = vmatprep.subr.bf16.mxu0 0
        %6413 = vmatpush1.bf16.msra.mxu0 0
        %6414 = vmatprep.subr.bf16.mxu0 0
        %6415 = vmatpush1.bf16.msra.mxu0 0
        %6416 = vmatprep.mubr.bf16.mxu0 0
        %6417 = vmatmul.mubr.bf16.gmra.mrb[0].mxu0 %v6312
        %v6418 = vpop.f32.mrb[0].mxu0
        %v6419 = vadd.f32 0.0, %v6418
        %v6420 = vpop.f32.mrb[0].mxu0
        %v6421 = vpop.f32.mrb[0].mxu0
        %v6422 = vadd.f32 0.0, %v6421
        %v6423 = vpop.f32.mrb[0].mxu0
        %6424 = vmatprep.mubr.bf16.mxu0 0
        %6425 = vmatmul.mubr.bf16.gmra.mrb[0].mxu0 %v6313
        %v6426 = vpop.f32.mrb[0].mxu0
        %v6427 = vadd.f32 0.0, %v6426
        %v6428 = vpop.f32.mrb[0].mxu0
        %v6429 = vpop.f32.mrb[0].mxu0
        %v6430 = vadd.f32 0.0, %v6429
        %v6431 = vpop.f32.mrb[0].mxu0
        %6432 = vmatprep.mubr.bf16.mxu0 0
        %6433 = vmatmul.mubr.bf16.gmra.mrb[0].mxu0 %v6314
        %v6434 = vpop.f32.mrb[0].mxu0
        %v6435 = vadd.f32 0.0, %v6434
        %v6436 = vpop.f32.mrb[0].mxu0
        %v6437 = vpop.f32.mrb[0].mxu0
        %v6438 = vadd.f32 0.0, %v6437
        %v6439 = vpop.f32.mrb[0].mxu0
        %6440 = vmatprep.mubr.bf16.mxu0 0
        %6441 = vmatmul.mubr.bf16.gmra.mrb[0].mxu0 %v6315
        %v6442 = vpop.f32.mrb[0].mxu0
        %v6443 = vadd.f32 0.0, %v6442
        %v6444 = vpop.f32.mrb[0].mxu0
        %v6445 = vpop.f32.mrb[0].mxu0
        %v6446 = vadd.f32 0.0, %v6445
        %v6447 = vpop.f32.mrb[0].mxu0
        %6448 = vmatprep.mubr.bf16.mxu0 0
        %6449 = vmatmul.mubr.bf16.gmra.mrb[0].mxu0 %v6316
        %v6450 = vpop.f32.mrb[0].mxu0
        %v6451 = vadd.f32 0.0, %v6450
        %v6452 = vpop.f32.mrb[0].mxu0
        %v6453 = vpop.f32.mrb[0].mxu0
        %v6454 = vadd.f32 0.0, %v6453
        %v6455 = vpop.f32.mrb[0].mxu0
        %6456 = vmatprep.mubr.bf16.mxu0 0
        %6457 = vmatmul.mubr.bf16.gmra.mrb[0].mxu0 %v6317
        %v6458 = vpop.f32.mrb[0].mxu0
        %v6459 = vadd.f32 0.0, %v6458
        %v6460 = vpop.f32.mrb[0].mxu0
        %v6461 = vpop.f32.mrb[0].mxu0
        %v6462 = vadd.f32 0.0, %v6461
        %v6463 = vpop.f32.mrb[0].mxu0
        %6464 = vmatprep.mubr.bf16.mxu0 0
        %6465 = vmatmul.mubr.bf16.gmra.mrb[0].mxu0 %v6318
        %v6466 = vpop.f32.mrb[0].mxu0
        %v6467 = vadd.f32 0.0, %v6466
        %v6468 = vpop.f32.mrb[0].mxu0
        %v6469 = vpop.f32.mrb[0].mxu0
        %v6470 = vadd.f32 0.0, %v6469
        %v6471 = vpop.f32.mrb[0].mxu0
        %6472 = vmatprep.mubr.bf16.mxu0 0
        %6473 = vmatmul.mubr.bf16.gmra.mrb[0].mxu0 %v6319
        %v6474 = vpop.f32.mrb[0].mxu0
        %v6475 = vadd.f32 0.0, %v6474
        %v6476 = vpop.f32.mrb[0].mxu0
        %v6477 = vpop.f32.mrb[0].mxu0
        %v6478 = vadd.f32 0.0, %v6477
        %v6479 = vpop.f32.mrb[0].mxu0
        %6480 = vdwg.mxu0
        %v6481 = vadd.f32 %v6250, %v6419
        %v6482 = vadd.f32 %v6253, %v6422
        %v6483 = vadd.f32 %v6258, %v6427
        %v6484 = vadd.f32 %v6261, %v6430
        %v6485 = vadd.f32 %v6266, %v6435
        %v6486 = vadd.f32 %v6269, %v6438
        %v6487 = vadd.f32 %v6274, %v6443
        %v6488 = vadd.f32 %v6277, %v6446
        %v6489 = vadd.f32 %v6282, %v6451
        %v6490 = vadd.f32 %v6285, %v6454
        %v6491 = vadd.f32 %v6290, %v6459
        %v6492 = vadd.f32 %v6293, %v6462
        %v6493 = vadd.f32 %v6298, %v6467
        %v6494 = vadd.f32 %v6301, %v6470
        %v6495 = vadd.f32 %v6306, %v6475
        %v6496 = vadd.f32 %v6309, %v6478
        %v6497 = vadd.f32 %v6481, %v4015
        %v6498 = vadd.f32 %v6482, %v4015
        %v6499 = vadd.f32 %v6483, %v4015
        %v6500 = vadd.f32 %v6484, %v4015
        %v6501 = vadd.f32 %v6485, %v4015
        %v6502 = vadd.f32 %v6486, %v4015
        %v6503 = vadd.f32 %v6487, %v4015
        %v6504 = vadd.f32 %v6488, %v4015
        %v6505 = vadd.f32 %v6489, %v4015
        %v6506 = vadd.f32 %v6490, %v4015
        %v6507 = vadd.f32 %v6491, %v4015
        %v6508 = vadd.f32 %v6492, %v4015
        %v6509 = vadd.f32 %v6493, %v4015
        %v6510 = vadd.f32 %v6494, %v4015
        %v6511 = vadd.f32 %v6495, %v4015
        %v6512 = vadd.f32 %v6496, %v4015
        %v6513 = vsub.f32 0.0, %v6497
        %v6514 = vsub.f32 0.0, %v6498
        %v6515 = vsub.f32 0.0, %v6499
        %v6516 = vsub.f32 0.0, %v6500
        %v6517 = vsub.f32 0.0, %v6501
        %v6518 = vsub.f32 0.0, %v6502
        %v6519 = vsub.f32 0.0, %v6503
        %v6520 = vsub.f32 0.0, %v6504
        %v6521 = vsub.f32 0.0, %v6505
        %v6522 = vsub.f32 0.0, %v6506
        %v6523 = vsub.f32 0.0, %v6507
        %v6524 = vsub.f32 0.0, %v6508
        %v6525 = vsub.f32 0.0, %v6509
        %v6526 = vsub.f32 0.0, %v6510
        %v6527 = vsub.f32 0.0, %v6511
        %v6528 = vsub.f32 0.0, %v6512
        %v6529 = vmul.f32 %v6513, 1.442695
        %v6530 = vpow.pop %v6529
        %v6531 = vmul.f32 %v6514, 1.442695
        %v6532 = vpow.pop %v6531
        %v6533 = vmul.f32 %v6515, 1.442695
        %v6534 = vpow.pop %v6533
        %v6535 = vmul.f32 %v6516, 1.442695
        %v6536 = vpow.pop %v6535
        %v6537 = vmul.f32 %v6517, 1.442695
        %v6538 = vpow.pop %v6537
        %v6539 = vmul.f32 %v6518, 1.442695
        %v6540 = vpow.pop %v6539
        %v6541 = vmul.f32 %v6519, 1.442695
        %v6542 = vpow.pop %v6541
        %v6543 = vmul.f32 %v6520, 1.442695
        %v6544 = vpow.pop %v6543
        %v6545 = vmul.f32 %v6521, 1.442695
        %v6546 = vpow.pop %v6545
        %v6547 = vmul.f32 %v6522, 1.442695
        %v6548 = vpow.pop %v6547
        %v6549 = vmul.f32 %v6523, 1.442695
        %v6550 = vpow.pop %v6549
        %v6551 = vmul.f32 %v6524, 1.442695
        %v6552 = vpow.pop %v6551
        %v6553 = vmul.f32 %v6525, 1.442695
        %v6554 = vpow.pop %v6553
        %v6555 = vmul.f32 %v6526, 1.442695
        %v6556 = vpow.pop %v6555
        %v6557 = vmul.f32 %v6527, 1.442695
        %v6558 = vpow.pop %v6557
        %v6559 = vmul.f32 %v6528, 1.442695
        %v6560 = vpow.pop %v6559
        %v6561 = vadd.f32 %v6530, 1.0
        %v6562 = vadd.f32 %v6532, 1.0
        %v6563 = vadd.f32 %v6534, 1.0
        %v6564 = vadd.f32 %v6536, 1.0
        %v6565 = vadd.f32 %v6538, 1.0
        %v6566 = vadd.f32 %v6540, 1.0
        %v6567 = vadd.f32 %v6542, 1.0
        %v6568 = vadd.f32 %v6544, 1.0
        %v6569 = vadd.f32 %v6546, 1.0
        %v6570 = vadd.f32 %v6548, 1.0
        %v6571 = vadd.f32 %v6550, 1.0
        %v6572 = vadd.f32 %v6552, 1.0
        %v6573 = vadd.f32 %v6554, 1.0
        %v6574 = vadd.f32 %v6556, 1.0
        %v6575 = vadd.f32 %v6558, 1.0
        %v6576 = vadd.f32 %v6560, 1.0
        %v6577 = vrcp.pop %v6561
        %v6578 = vrcp.pop %v6562
        %v6579 = vrcp.pop %v6563
        %v6580 = vrcp.pop %v6564
        %v6581 = vrcp.pop %v6565
        %v6582 = vrcp.pop %v6566
        %v6583 = vrcp.pop %v6567
        %v6584 = vrcp.pop %v6568
        %v6585 = vrcp.pop %v6569
        %v6586 = vrcp.pop %v6570
        %v6587 = vrcp.pop %v6571
        %v6588 = vrcp.pop %v6572
        %v6589 = vrcp.pop %v6573
        %v6590 = vrcp.pop %v6574
        %v6591 = vrcp.pop %v6575
        %v6592 = vrcp.pop %v6576
        %s6593 = scalar_lea.vmem %s376, 512 [#allocation3]
        %6594 = vst.msk [vmem:[%s6593] sm:$0xff] %vm4113, %v6577
        %6595 = vst.msk [vmem:[%s6593 + $0x8] sm:$0xff] %vm4113, %v6578
        %6596 = vst.msk [vmem:[%s6593 + $0x10] sm:$0xff] %vm4113, %v6579
        %6597 = vst.msk [vmem:[%s6593 + $0x18] sm:$0xff] %vm4113, %v6580
        %6598 = vst.msk [vmem:[%s6593 + $0x20] sm:$0xff] %vm4113, %v6581
        %6599 = vst.msk [vmem:[%s6593 + $0x28] sm:$0xff] %vm4113, %v6582
        %6600 = vst.msk [vmem:[%s6593 + $0x30] sm:$0xff] %vm4113, %v6583
        %6601 = vst.msk [vmem:[%s6593 + $0x38] sm:$0xff] %vm4113, %v6584
        %6602 = vst.msk [vmem:[%s6593 + $0x40] sm:$0xff] %vm4113, %v6585
        %6603 = vst.msk [vmem:[%s6593 + $0x48] sm:$0xff] %vm4113, %v6586
        %6604 = vst.msk [vmem:[%s6593 + $0x50] sm:$0xff] %vm4113, %v6587
        %6605 = vst.msk [vmem:[%s6593 + $0x58] sm:$0xff] %vm4113, %v6588
        %6606 = vst.msk [vmem:[%s6593 + $0x60] sm:$0xff] %vm4113, %v6589
        %6607 = vst.msk [vmem:[%s6593 + $0x68] sm:$0xff] %vm4113, %v6590
        %6608 = vst.msk [vmem:[%s6593 + $0x70] sm:$0xff] %vm4113, %v6591
        %6609 = vst.msk [vmem:[%s6593 + $0x78] sm:$0xff] %vm4113, %v6592
        %v6610 = vld [vmem:[%s9] sm:$0xf]
        %v6611 = vld [vmem:[%s9 + $0x4] sm:$0xf]
        %v6612 = vld [vmem:[%s9 + $0x8] sm:$0xf]
        %v6613 = vld [vmem:[%s9 + $0xc] sm:$0xf]
        %v6614 = vld [vmem:[%s9 + $0x10] sm:$0xf]
        %v6615 = vld [vmem:[%s9 + $0x14] sm:$0xf]
        %v6616 = vld [vmem:[%s9 + $0x18] sm:$0xf]
        %v6617 = vld [vmem:[%s9 + $0x1c] sm:$0xf]
        %v6618 = vld [vmem:[%s9 + $0x20] sm:$0xf]
        %v6619 = vld [vmem:[%s9 + $0x24] sm:$0xf]
        %v6620 = vld [vmem:[%s9 + $0x28] sm:$0xf]
        %v6621 = vld [vmem:[%s9 + $0x2c] sm:$0xf]
        %v6622 = vld [vmem:[%s9 + $0x30] sm:$0xf]
        %v6623 = vld [vmem:[%s9 + $0x34] sm:$0xf]
        %v6624 = vld [vmem:[%s9 + $0x38] sm:$0xf]
        %v6625 = vld [vmem:[%s9 + $0x3c] sm:$0xf]
        %v6626 = vld [vmem:[%s3518] sm:$0xf]
        %v6627 = vld [vmem:[%s3518 + $0x4] sm:$0xf]
        %v6628 = vld [vmem:[%s3518 + $0x8] sm:$0xf]
        %v6629 = vld [vmem:[%s3518 + $0xc] sm:$0xf]
        %v6630 = vld [vmem:[%s3518 + $0x10] sm:$0xf]
        %v6631 = vld [vmem:[%s3518 + $0x14] sm:$0xf]
        %v6632 = vld [vmem:[%s3518 + $0x18] sm:$0xf]
        %v6633 = vld [vmem:[%s3518 + $0x1c] sm:$0xf]
        %v6634 = vld [vmem:[%s3518 + $0x20] sm:$0xf]
        %v6635 = vld [vmem:[%s3518 + $0x24] sm:$0xf]
        %v6636 = vld [vmem:[%s3518 + $0x28] sm:$0xf]
        %v6637 = vld [vmem:[%s3518 + $0x2c] sm:$0xf]
        %v6638 = vld [vmem:[%s3518 + $0x30] sm:$0xf]
        %v6639 = vld [vmem:[%s3518 + $0x34] sm:$0xf]
        %v6640 = vld [vmem:[%s3518 + $0x38] sm:$0xf]
        %v6641 = vld [vmem:[%s3518 + $0x3c] sm:$0xf]
        %v6658 = vunpack.c.l.b16 %v6626
        %v6659 = vunpack.c.l.b16 %v6627
        %v6660 = vunpack.c.l.b16 %v6628
        %v6661 = vunpack.c.l.b16 %v6629
        %v6662 = vunpack.c.l.b16 %v6630
        %v6663 = vunpack.c.l.b16 %v6631
        %v6664 = vunpack.c.l.b16 %v6632
        %v6665 = vunpack.c.l.b16 %v6633
        %v6666 = vunpack.c.l.b16 %v6634
        %v6667 = vunpack.c.l.b16 %v6635
        %v6668 = vunpack.c.l.b16 %v6636
        %v6669 = vunpack.c.l.b16 %v6637
        %v6670 = vunpack.c.l.b16 %v6638
        %v6671 = vunpack.c.l.b16 %v6639
        %v6672 = vunpack.c.l.b16 %v6640
        %v6673 = vunpack.c.l.b16 %v6641
        %v6674 = vpack.c.b16 %v6659, %v6658
        %v6675 = vpack.c.b16 %v6661, %v6660
        %v6676 = vpack.c.b16 %v6663, %v6662
        %v6677 = vpack.c.b16 %v6665, %v6664
        %v6678 = vpack.c.b16 %v6667, %v6666
        %v6679 = vpack.c.b16 %v6669, %v6668
        %v6680 = vpack.c.b16 %v6671, %v6670
        %v6681 = vpack.c.b16 %v6673, %v6672
        %6690 = vmatprep.subr.bf16.mxu0 0
        %6691 = vmatpush1.bf16.msra.mxu0 %v6674
        %6692 = vmatprep.subr.bf16.mxu0 0
        %6693 = vmatpush1.bf16.msra.mxu0 %v6675
        %6694 = vmatprep.subr.bf16.mxu0 0
        %6695 = vmatpush1.bf16.msra.mxu0 %v6676
        %6696 = vmatprep.subr.bf16.mxu0 0
        %6697 = vmatpush1.bf16.msra.mxu0 %v6677
        %6698 = vmatprep.subr.bf16.mxu0 0
        %6699 = vmatpush1.bf16.msra.mxu0 %v6678
        %6700 = vmatprep.subr.bf16.mxu0 0
        %6701 = vmatpush1.bf16.msra.mxu0 %v6679
        %6702 = vmatprep.subr.bf16.mxu0 0
        %6703 = vmatpush1.bf16.msra.mxu0 %v6680
        %6704 = vmatprep.subr.bf16.mxu0 0
        %6705 = vmatpush1.bf16.msra.mxu0 %v6681
        %6706 = vmatprep.subr.bf16.mxu0 0
        %6707 = vmatpush1.bf16.msra.mxu0 0
        %6708 = vmatprep.subr.bf16.mxu0 0
        %6709 = vmatpush1.bf16.msra.mxu0 0
        %6710 = vmatprep.subr.bf16.mxu0 0
        %6711 = vmatpush1.bf16.msra.mxu0 0
        %6712 = vmatprep.subr.bf16.mxu0 0
        %6713 = vmatpush1.bf16.msra.mxu0 0
        %6714 = vmatprep.subr.bf16.mxu0 0
        %6715 = vmatpush1.bf16.msra.mxu0 0
        %6716 = vmatprep.subr.bf16.mxu0 0
        %6717 = vmatpush1.bf16.msra.mxu0 0
        %6718 = vmatprep.subr.bf16.mxu0 0
        %6719 = vmatpush1.bf16.msra.mxu0 0
        %6720 = vmatprep.subr.bf16.mxu0 0
        %6721 = vmatpush1.bf16.msra.mxu0 0
        %6722 = vmatprep.mubr.bf16.mxu0 0
        %6723 = vmatmul.mubr.bf16.gmra.mrb[0].mxu0 %v6312
        %v6724 = vpop.f32.mrb[0].mxu0
        %v6725 = vadd.f32 0.0, %v6724
        %v6726 = vpop.f32.mrb[0].mxu0
        %v6727 = vpop.f32.mrb[0].mxu0
        %v6728 = vadd.f32 0.0, %v6727
        %v6729 = vpop.f32.mrb[0].mxu0
        %6730 = vmatprep.mubr.bf16.mxu0 0
        %6731 = vmatmul.mubr.bf16.gmra.mrb[0].mxu0 %v6313
        %v6732 = vpop.f32.mrb[0].mxu0
        %v6733 = vadd.f32 0.0, %v6732
        %v6734 = vpop.f32.mrb[0].mxu0
        %v6735 = vpop.f32.mrb[0].mxu0
        %v6736 = vadd.f32 0.0, %v6735
        %v6737 = vpop.f32.mrb[0].mxu0
        %6738 = vmatprep.mubr.bf16.mxu0 0
        %6739 = vmatmul.mubr.bf16.gmra.mrb[0].mxu0 %v6314
        %v6740 = vpop.f32.mrb[0].mxu0
        %v6741 = vadd.f32 0.0, %v6740
        %v6742 = vpop.f32.mrb[0].mxu0
        %v6743 = vpop.f32.mrb[0].mxu0
        %v6744 = vadd.f32 0.0, %v6743
        %v6745 = vpop.f32.mrb[0].mxu0
        %6746 = vmatprep.mubr.bf16.mxu0 0
        %6747 = vmatmul.mubr.bf16.gmra.mrb[0].mxu0 %v6315
        %v6748 = vpop.f32.mrb[0].mxu0
        %v6749 = vadd.f32 0.0, %v6748
        %v6750 = vpop.f32.mrb[0].mxu0
        %v6751 = vpop.f32.mrb[0].mxu0
        %v6752 = vadd.f32 0.0, %v6751
        %v6753 = vpop.f32.mrb[0].mxu0
        %6754 = vmatprep.mubr.bf16.mxu0 0
        %6755 = vmatmul.mubr.bf16.gmra.mrb[0].mxu0 %v6316
        %v6756 = vpop.f32.mrb[0].mxu0
        %v6757 = vadd.f32 0.0, %v6756
        %v6758 = vpop.f32.mrb[0].mxu0
        %v6759 = vpop.f32.mrb[0].mxu0
        %v6760 = vadd.f32 0.0, %v6759
        %v6761 = vpop.f32.mrb[0].mxu0
        %6762 = vmatprep.mubr.bf16.mxu0 0
        %6763 = vmatmul.mubr.bf16.gmra.mrb[0].mxu0 %v6317
        %v6764 = vpop.f32.mrb[0].mxu0
        %v6765 = vadd.f32 0.0, %v6764
        %v6766 = vpop.f32.mrb[0].mxu0
        %v6767 = vpop.f32.mrb[0].mxu0
        %v6768 = vadd.f32 0.0, %v6767
        %v6769 = vpop.f32.mrb[0].mxu0
        %6770 = vmatprep.mubr.bf16.mxu0 0
        %6771 = vmatmul.mubr.bf16.gmra.mrb[0].mxu0 %v6318
        %v6772 = vpop.f32.mrb[0].mxu0
        %v6773 = vadd.f32 0.0, %v6772
        %v6774 = vpop.f32.mrb[0].mxu0
        %v6775 = vpop.f32.mrb[0].mxu0
        %v6776 = vadd.f32 0.0, %v6775
        %v6777 = vpop.f32.mrb[0].mxu0
        %6778 = vmatprep.mubr.bf16.mxu0 0
        %6779 = vmatmul.mubr.bf16.gmra.mrb[0].mxu0 %v6319
        %v6780 = vpop.f32.mrb[0].mxu0
        %v6781 = vadd.f32 0.0, %v6780
        %v6782 = vpop.f32.mrb[0].mxu0
        %v6783 = vpop.f32.mrb[0].mxu0
        %v6784 = vadd.f32 0.0, %v6783
        %v6785 = vpop.f32.mrb[0].mxu0
        %6786 = vdwg.mxu0
        %v6803 = vunpack.c.l.b16 %v6610
        %v6804 = vunpack.c.l.b16 %v6611
        %v6805 = vunpack.c.l.b16 %v6612
        %v6806 = vunpack.c.l.b16 %v6613
        %v6807 = vunpack.c.l.b16 %v6614
        %v6808 = vunpack.c.l.b16 %v6615
        %v6809 = vunpack.c.l.b16 %v6616
        %v6810 = vunpack.c.l.b16 %v6617
        %v6811 = vunpack.c.l.b16 %v6618
        %v6812 = vunpack.c.l.b16 %v6619
        %v6813 = vunpack.c.l.b16 %v6620
        %v6814 = vunpack.c.l.b16 %v6621
        %v6815 = vunpack.c.l.b16 %v6622
        %v6816 = vunpack.c.l.b16 %v6623
        %v6817 = vunpack.c.l.b16 %v6624
        %v6818 = vunpack.c.l.b16 %v6625
        %v6819 = vpack.c.b16 %v6804, %v6803
        %v6820 = vpack.c.b16 %v6806, %v6805
        %v6821 = vpack.c.b16 %v6808, %v6807
        %v6822 = vpack.c.b16 %v6810, %v6809
        %v6823 = vpack.c.b16 %v6812, %v6811
        %v6824 = vpack.c.b16 %v6814, %v6813
        %v6825 = vpack.c.b16 %v6816, %v6815
        %v6826 = vpack.c.b16 %v6818, %v6817
        %6835 = vmatprep.subr.bf16.mxu0 0
        %6836 = vmatpush1.bf16.msra.mxu0 %v6819
        %6837 = vmatprep.subr.bf16.mxu0 0
        %6838 = vmatpush1.bf16.msra.mxu0 %v6820
        %6839 = vmatprep.subr.bf16.mxu0 0
        %6840 = vmatpush1.bf16.msra.mxu0 %v6821
        %6841 = vmatprep.subr.bf16.mxu0 0
        %6842 = vmatpush1.bf16.msra.mxu0 %v6822
        %6843 = vmatprep.subr.bf16.mxu0 0
        %6844 = vmatpush1.bf16.msra.mxu0 %v6823
        %6845 = vmatprep.subr.bf16.mxu0 0
        %6846 = vmatpush1.bf16.msra.mxu0 %v6824
        %6847 = vmatprep.subr.bf16.mxu0 0
        %6848 = vmatpush1.bf16.msra.mxu0 %v6825
        %6849 = vmatprep.subr.bf16.mxu0 0
        %6850 = vmatpush1.bf16.msra.mxu0 %v6826
        %6851 = vmatprep.subr.bf16.mxu0 0
        %6852 = vmatpush1.bf16.msra.mxu0 0
        %6853 = vmatprep.subr.bf16.mxu0 0
        %6854 = vmatpush1.bf16.msra.mxu0 0
        %6855 = vmatprep.subr.bf16.mxu0 0
        %6856 = vmatpush1.bf16.msra.mxu0 0
        %6857 = vmatprep.subr.bf16.mxu0 0
        %6858 = vmatpush1.bf16.msra.mxu0 0
        %6859 = vmatprep.subr.bf16.mxu0 0
        %6860 = vmatpush1.bf16.msra.mxu0 0
        %6861 = vmatprep.subr.bf16.mxu0 0
        %6862 = vmatpush1.bf16.msra.mxu0 0
        %6863 = vmatprep.subr.bf16.mxu0 0
        %6864 = vmatpush1.bf16.msra.mxu0 0
        %6865 = vmatprep.subr.bf16.mxu0 0
        %6866 = vmatpush1.bf16.msra.mxu0 0
        %6867 = vmatprep.mubr.bf16.mxu0 0
        %6868 = vmatmul.mubr.bf16.gmra.mrb[0].mxu0 %v5692
        %v6869 = vpop.f32.mrb[0].mxu0
        %v6870 = vadd.f32 %v6725, %v6869
        %v6871 = vpop.f32.mrb[0].mxu0
        %v6872 = vpop.f32.mrb[0].mxu0
        %v6873 = vadd.f32 %v6728, %v6872
        %v6874 = vpop.f32.mrb[0].mxu0
        %6875 = vmatprep.mubr.bf16.mxu0 0
        %6876 = vmatmul.mubr.bf16.gmra.mrb[0].mxu0 %v5693
        %v6877 = vpop.f32.mrb[0].mxu0
        %v6878 = vadd.f32 %v6733, %v6877
        %v6879 = vpop.f32.mrb[0].mxu0
        %v6880 = vpop.f32.mrb[0].mxu0
        %v6881 = vadd.f32 %v6736, %v6880
        %v6882 = vpop.f32.mrb[0].mxu0
        %6883 = vmatprep.mubr.bf16.mxu0 0
        %6884 = vmatmul.mubr.bf16.gmra.mrb[0].mxu0 %v5694
        %v6885 = vpop.f32.mrb[0].mxu0
        %v6886 = vadd.f32 %v6741, %v6885
        %v6887 = vpop.f32.mrb[0].mxu0
        %v6888 = vpop.f32.mrb[0].mxu0
        %v6889 = vadd.f32 %v6744, %v6888
        %v6890 = vpop.f32.mrb[0].mxu0
        %6891 = vmatprep.mubr.bf16.mxu0 0
        %6892 = vmatmul.mubr.bf16.gmra.mrb[0].mxu0 %v5695
        %v6893 = vpop.f32.mrb[0].mxu0
        %v6894 = vadd.f32 %v6749, %v6893
        %v6895 = vpop.f32.mrb[0].mxu0
        %v6896 = vpop.f32.mrb[0].mxu0
        %v6897 = vadd.f32 %v6752, %v6896
        %v6898 = vpop.f32.mrb[0].mxu0
        %6899 = vmatprep.mubr.bf16.mxu0 0
        %6900 = vmatmul.mubr.bf16.gmra.mrb[0].mxu0 %v5696
        %v6901 = vpop.f32.mrb[0].mxu0
        %v6902 = vadd.f32 %v6757, %v6901
        %v6903 = vpop.f32.mrb[0].mxu0
        %v6904 = vpop.f32.mrb[0].mxu0
        %v6905 = vadd.f32 %v6760, %v6904
        %v6906 = vpop.f32.mrb[0].mxu0
        %6907 = vmatprep.mubr.bf16.mxu0 0
        %6908 = vmatmul.mubr.bf16.gmra.mrb[0].mxu0 %v5697
        %v6909 = vpop.f32.mrb[0].mxu0
        %v6910 = vadd.f32 %v6765, %v6909
        %v6911 = vpop.f32.mrb[0].mxu0
        %v6912 = vpop.f32.mrb[0].mxu0
        %v6913 = vadd.f32 %v6768, %v6912
        %v6914 = vpop.f32.mrb[0].mxu0
        %6915 = vmatprep.mubr.bf16.mxu0 0
        %6916 = vmatmul.mubr.bf16.gmra.mrb[0].mxu0 %v5698
        %v6917 = vpop.f32.mrb[0].mxu0
        %v6918 = vadd.f32 %v6773, %v6917
        %v6919 = vpop.f32.mrb[0].mxu0
        %v6920 = vpop.f32.mrb[0].mxu0
        %v6921 = vadd.f32 %v6776, %v6920
        %v6922 = vpop.f32.mrb[0].mxu0
        %6923 = vmatprep.mubr.bf16.mxu0 0
        %6924 = vmatmul.mubr.bf16.gmra.mrb[0].mxu0 %v5699
        %v6925 = vpop.f32.mrb[0].mxu0
        %v6926 = vadd.f32 %v6781, %v6925
        %v6927 = vpop.f32.mrb[0].mxu0
        %v6928 = vpop.f32.mrb[0].mxu0
        %v6929 = vadd.f32 %v6784, %v6928
        %v6930 = vpop.f32.mrb[0].mxu0
        %6931 = vdwg.mxu0
        %v6932 = vpack.c.bf16 %v3358, %v3357
        %v6933 = vpack.c.bf16 %v3360, %v3359
        %v6934 = vpack.c.bf16 %v3362, %v3361
        %v6935 = vpack.c.bf16 %v3364, %v3363
        %v6936 = vpack.c.bf16 %v3366, %v3365
        %v6937 = vpack.c.bf16 %v3368, %v3367
        %v6938 = vpack.c.bf16 %v3370, %v3369
        %v6939 = vpack.c.bf16 %v3372, %v3371
        %v6940 = vld [vmem:[%s3833] sm:$0xf]
        %v6941 = vld [vmem:[%s3833 + $0x4] sm:$0xf]
        %v6942 = vld [vmem:[%s3833 + $0x8] sm:$0xf]
        %v6943 = vld [vmem:[%s3833 + $0xc] sm:$0xf]
        %v6944 = vld [vmem:[%s3833 + $0x10] sm:$0xf]
        %v6945 = vld [vmem:[%s3833 + $0x14] sm:$0xf]
        %v6946 = vld [vmem:[%s3833 + $0x18] sm:$0xf]
        %v6947 = vld [vmem:[%s3833 + $0x1c] sm:$0xf]
        %v6948 = vld [vmem:[%s3833 + $0x20] sm:$0xf]
        %v6949 = vld [vmem:[%s3833 + $0x24] sm:$0xf]
        %v6950 = vld [vmem:[%s3833 + $0x28] sm:$0xf]
        %v6951 = vld [vmem:[%s3833 + $0x2c] sm:$0xf]
        %v6952 = vld [vmem:[%s3833 + $0x30] sm:$0xf]
        %v6953 = vld [vmem:[%s3833 + $0x34] sm:$0xf]
        %v6954 = vld [vmem:[%s3833 + $0x38] sm:$0xf]
        %v6955 = vld [vmem:[%s3833 + $0x3c] sm:$0xf]
        %v6972 = vunpack.c.l.b16 %v6940
        %v6973 = vunpack.c.l.b16 %v6941
        %v6974 = vunpack.c.l.b16 %v6942
        %v6975 = vunpack.c.l.b16 %v6943
        %v6976 = vunpack.c.l.b16 %v6944
        %v6977 = vunpack.c.l.b16 %v6945
        %v6978 = vunpack.c.l.b16 %v6946
        %v6979 = vunpack.c.l.b16 %v6947
        %v6980 = vunpack.c.l.b16 %v6948
        %v6981 = vunpack.c.l.b16 %v6949
        %v6982 = vunpack.c.l.b16 %v6950
        %v6983 = vunpack.c.l.b16 %v6951
        %v6984 = vunpack.c.l.b16 %v6952
        %v6985 = vunpack.c.l.b16 %v6953
        %v6986 = vunpack.c.l.b16 %v6954
        %v6987 = vunpack.c.l.b16 %v6955
        %v6988 = vpack.c.b16 %v6973, %v6972
        %v6989 = vpack.c.b16 %v6975, %v6974
        %v6990 = vpack.c.b16 %v6977, %v6976
        %v6991 = vpack.c.b16 %v6979, %v6978
        %v6992 = vpack.c.b16 %v6981, %v6980
        %v6993 = vpack.c.b16 %v6983, %v6982
        %v6994 = vpack.c.b16 %v6985, %v6984
        %v6995 = vpack.c.b16 %v6987, %v6986
        %7004 = vmatprep.subr.bf16.mxu0 0
        %7005 = vmatpush1.bf16.msra.mxu0 %v6988
        %7006 = vmatprep.subr.bf16.mxu0 0
        %7007 = vmatpush1.bf16.msra.mxu0 %v6989
        %7008 = vmatprep.subr.bf16.mxu0 0
        %7009 = vmatpush1.bf16.msra.mxu0 %v6990
        %7010 = vmatprep.subr.bf16.mxu0 0
        %7011 = vmatpush1.bf16.msra.mxu0 %v6991
        %7012 = vmatprep.subr.bf16.mxu0 0
        %7013 = vmatpush1.bf16.msra.mxu0 %v6992
        %7014 = vmatprep.subr.bf16.mxu0 0
        %7015 = vmatpush1.bf16.msra.mxu0 %v6993
        %7016 = vmatprep.subr.bf16.mxu0 0
        %7017 = vmatpush1.bf16.msra.mxu0 %v6994
        %7018 = vmatprep.subr.bf16.mxu0 0
        %7019 = vmatpush1.bf16.msra.mxu0 %v6995
        %7020 = vmatprep.subr.bf16.mxu0 0
        %7021 = vmatpush1.bf16.msra.mxu0 0
        %7022 = vmatprep.subr.bf16.mxu0 0
        %7023 = vmatpush1.bf16.msra.mxu0 0
        %7024 = vmatprep.subr.bf16.mxu0 0
        %7025 = vmatpush1.bf16.msra.mxu0 0
        %7026 = vmatprep.subr.bf16.mxu0 0
        %7027 = vmatpush1.bf16.msra.mxu0 0
        %7028 = vmatprep.subr.bf16.mxu0 0
        %7029 = vmatpush1.bf16.msra.mxu0 0
        %7030 = vmatprep.subr.bf16.mxu0 0
        %7031 = vmatpush1.bf16.msra.mxu0 0
        %7032 = vmatprep.subr.bf16.mxu0 0
        %7033 = vmatpush1.bf16.msra.mxu0 0
        %7034 = vmatprep.subr.bf16.mxu0 0
        %7035 = vmatpush1.bf16.msra.mxu0 0
        %7036 = vmatprep.mubr.bf16.mxu0 0
        %7037 = vmatmul.mubr.bf16.gmra.mrb[0].mxu0 %v6932
        %v7038 = vpop.f32.mrb[0].mxu0
        %v7039 = vadd.f32 0.0, %v7038
        %v7040 = vpop.f32.mrb[0].mxu0
        %v7041 = vpop.f32.mrb[0].mxu0
        %v7042 = vadd.f32 0.0, %v7041
        %v7043 = vpop.f32.mrb[0].mxu0
        %7044 = vmatprep.mubr.bf16.mxu0 0
        %7045 = vmatmul.mubr.bf16.gmra.mrb[0].mxu0 %v6933
        %v7046 = vpop.f32.mrb[0].mxu0
        %v7047 = vadd.f32 0.0, %v7046
        %v7048 = vpop.f32.mrb[0].mxu0
        %v7049 = vpop.f32.mrb[0].mxu0
        %v7050 = vadd.f32 0.0, %v7049
        %v7051 = vpop.f32.mrb[0].mxu0
        %7052 = vmatprep.mubr.bf16.mxu0 0
        %7053 = vmatmul.mubr.bf16.gmra.mrb[0].mxu0 %v6934
        %v7054 = vpop.f32.mrb[0].mxu0
        %v7055 = vadd.f32 0.0, %v7054
        %v7056 = vpop.f32.mrb[0].mxu0
        %v7057 = vpop.f32.mrb[0].mxu0
        %v7058 = vadd.f32 0.0, %v7057
        %v7059 = vpop.f32.mrb[0].mxu0
        %7060 = vmatprep.mubr.bf16.mxu0 0
        %7061 = vmatmul.mubr.bf16.gmra.mrb[0].mxu0 %v6935
        %v7062 = vpop.f32.mrb[0].mxu0
        %v7063 = vadd.f32 0.0, %v7062
        %v7064 = vpop.f32.mrb[0].mxu0
        %v7065 = vpop.f32.mrb[0].mxu0
        %v7066 = vadd.f32 0.0, %v7065
        %v7067 = vpop.f32.mrb[0].mxu0
        %7068 = vmatprep.mubr.bf16.mxu0 0
        %7069 = vmatmul.mubr.bf16.gmra.mrb[0].mxu0 %v6936
        %v7070 = vpop.f32.mrb[0].mxu0
        %v7071 = vadd.f32 0.0, %v7070
        %v7072 = vpop.f32.mrb[0].mxu0
        %v7073 = vpop.f32.mrb[0].mxu0
        %v7074 = vadd.f32 0.0, %v7073
        %v7075 = vpop.f32.mrb[0].mxu0
        %7076 = vmatprep.mubr.bf16.mxu0 0
        %7077 = vmatmul.mubr.bf16.gmra.mrb[0].mxu0 %v6937
        %v7078 = vpop.f32.mrb[0].mxu0
        %v7079 = vadd.f32 0.0, %v7078
        %v7080 = vpop.f32.mrb[0].mxu0
        %v7081 = vpop.f32.mrb[0].mxu0
        %v7082 = vadd.f32 0.0, %v7081
        %v7083 = vpop.f32.mrb[0].mxu0
        %7084 = vmatprep.mubr.bf16.mxu0 0
        %7085 = vmatmul.mubr.bf16.gmra.mrb[0].mxu0 %v6938
        %v7086 = vpop.f32.mrb[0].mxu0
        %v7087 = vadd.f32 0.0, %v7086
        %v7088 = vpop.f32.mrb[0].mxu0
        %v7089 = vpop.f32.mrb[0].mxu0
        %v7090 = vadd.f32 0.0, %v7089
        %v7091 = vpop.f32.mrb[0].mxu0
        %7092 = vmatprep.mubr.bf16.mxu0 0
        %7093 = vmatmul.mubr.bf16.gmra.mrb[0].mxu0 %v6939
        %v7094 = vpop.f32.mrb[0].mxu0
        %v7095 = vadd.f32 0.0, %v7094
        %v7096 = vpop.f32.mrb[0].mxu0
        %v7097 = vpop.f32.mrb[0].mxu0
        %v7098 = vadd.f32 0.0, %v7097
        %v7099 = vpop.f32.mrb[0].mxu0
        %7100 = vdwg.mxu0
        %v7101 = vadd.f32 %v6870, %v7039
        %v7102 = vadd.f32 %v6873, %v7042
        %v7103 = vadd.f32 %v6878, %v7047
        %v7104 = vadd.f32 %v6881, %v7050
        %v7105 = vadd.f32 %v6886, %v7055
        %v7106 = vadd.f32 %v6889, %v7058
        %v7107 = vadd.f32 %v6894, %v7063
        %v7108 = vadd.f32 %v6897, %v7066
        %v7109 = vadd.f32 %v6902, %v7071
        %v7110 = vadd.f32 %v6905, %v7074
        %v7111 = vadd.f32 %v6910, %v7079
        %v7112 = vadd.f32 %v6913, %v7082
        %v7113 = vadd.f32 %v6918, %v7087
        %v7114 = vadd.f32 %v6921, %v7090
        %v7115 = vadd.f32 %v6926, %v7095
        %v7116 = vadd.f32 %v6929, %v7098
        %v7117 = vadd.f32 %v7101, %v4015
        %v7118 = vadd.f32 %v7102, %v4015
        %v7119 = vadd.f32 %v7103, %v4015
        %v7120 = vadd.f32 %v7104, %v4015
        %v7121 = vadd.f32 %v7105, %v4015
        %v7122 = vadd.f32 %v7106, %v4015
        %v7123 = vadd.f32 %v7107, %v4015
        %v7124 = vadd.f32 %v7108, %v4015
        %v7125 = vadd.f32 %v7109, %v4015
        %v7126 = vadd.f32 %v7110, %v4015
        %v7127 = vadd.f32 %v7111, %v4015
        %v7128 = vadd.f32 %v7112, %v4015
        %v7129 = vadd.f32 %v7113, %v4015
        %v7130 = vadd.f32 %v7114, %v4015
        %v7131 = vadd.f32 %v7115, %v4015
        %v7132 = vadd.f32 %v7116, %v4015
        %v7133 = vsub.f32 0.0, %v7117
        %v7134 = vsub.f32 0.0, %v7118
        %v7135 = vsub.f32 0.0, %v7119
        %v7136 = vsub.f32 0.0, %v7120
        %v7137 = vsub.f32 0.0, %v7121
        %v7138 = vsub.f32 0.0, %v7122
        %v7139 = vsub.f32 0.0, %v7123
        %v7140 = vsub.f32 0.0, %v7124
        %v7141 = vsub.f32 0.0, %v7125
        %v7142 = vsub.f32 0.0, %v7126
        %v7143 = vsub.f32 0.0, %v7127
        %v7144 = vsub.f32 0.0, %v7128
        %v7145 = vsub.f32 0.0, %v7129
        %v7146 = vsub.f32 0.0, %v7130
        %v7147 = vsub.f32 0.0, %v7131
        %v7148 = vsub.f32 0.0, %v7132
        %v7149 = vmul.f32 %v7133, 1.442695
        %v7150 = vpow.pop %v7149
        %v7151 = vmul.f32 %v7134, 1.442695
        %v7152 = vpow.pop %v7151
        %v7153 = vmul.f32 %v7135, 1.442695
        %v7154 = vpow.pop %v7153
        %v7155 = vmul.f32 %v7136, 1.442695
        %v7156 = vpow.pop %v7155
        %v7157 = vmul.f32 %v7137, 1.442695
        %v7158 = vpow.pop %v7157
        %v7159 = vmul.f32 %v7138, 1.442695
        %v7160 = vpow.pop %v7159
        %v7161 = vmul.f32 %v7139, 1.442695
        %v7162 = vpow.pop %v7161
        %v7163 = vmul.f32 %v7140, 1.442695
        %v7164 = vpow.pop %v7163
        %v7165 = vmul.f32 %v7141, 1.442695
        %v7166 = vpow.pop %v7165
        %v7167 = vmul.f32 %v7142, 1.442695
        %v7168 = vpow.pop %v7167
        %v7169 = vmul.f32 %v7143, 1.442695
        %v7170 = vpow.pop %v7169
        %v7171 = vmul.f32 %v7144, 1.442695
        %v7172 = vpow.pop %v7171
        %v7173 = vmul.f32 %v7145, 1.442695
        %v7174 = vpow.pop %v7173
        %v7175 = vmul.f32 %v7146, 1.442695
        %v7176 = vpow.pop %v7175
        %v7177 = vmul.f32 %v7147, 1.442695
        %v7178 = vpow.pop %v7177
        %v7179 = vmul.f32 %v7148, 1.442695
        %v7180 = vpow.pop %v7179
        %v7181 = vadd.f32 %v7150, 1.0
        %v7182 = vadd.f32 %v7152, 1.0
        %v7183 = vadd.f32 %v7154, 1.0
        %v7184 = vadd.f32 %v7156, 1.0
        %v7185 = vadd.f32 %v7158, 1.0
        %v7186 = vadd.f32 %v7160, 1.0
        %v7187 = vadd.f32 %v7162, 1.0
        %v7188 = vadd.f32 %v7164, 1.0
        %v7189 = vadd.f32 %v7166, 1.0
        %v7190 = vadd.f32 %v7168, 1.0
        %v7191 = vadd.f32 %v7170, 1.0
        %v7192 = vadd.f32 %v7172, 1.0
        %v7193 = vadd.f32 %v7174, 1.0
        %v7194 = vadd.f32 %v7176, 1.0
        %v7195 = vadd.f32 %v7178, 1.0
        %v7196 = vadd.f32 %v7180, 1.0
        %v7197 = vrcp.pop %v7181
        %v7198 = vrcp.pop %v7182
        %v7199 = vrcp.pop %v7183
        %v7200 = vrcp.pop %v7184
        %v7201 = vrcp.pop %v7185
        %v7202 = vrcp.pop %v7186
        %v7203 = vrcp.pop %v7187
        %v7204 = vrcp.pop %v7188
        %v7205 = vrcp.pop %v7189
        %v7206 = vrcp.pop %v7190
        %v7207 = vrcp.pop %v7191
        %v7208 = vrcp.pop %v7192
        %v7209 = vrcp.pop %v7193
        %v7210 = vrcp.pop %v7194
        %v7211 = vrcp.pop %v7195
        %v7212 = vrcp.pop %v7196
        %s7213 = scalar_lea.vmem %s376, 640 [#allocation3]
        %7214 = vst.msk [vmem:[%s7213] sm:$0xff] %vm4113, %v7197
        %7215 = vst.msk [vmem:[%s7213 + $0x8] sm:$0xff] %vm4113, %v7198
        %7216 = vst.msk [vmem:[%s7213 + $0x10] sm:$0xff] %vm4113, %v7199
        %7217 = vst.msk [vmem:[%s7213 + $0x18] sm:$0xff] %vm4113, %v7200
        %7218 = vst.msk [vmem:[%s7213 + $0x20] sm:$0xff] %vm4113, %v7201
        %7219 = vst.msk [vmem:[%s7213 + $0x28] sm:$0xff] %vm4113, %v7202
        %7220 = vst.msk [vmem:[%s7213 + $0x30] sm:$0xff] %vm4113, %v7203
        %7221 = vst.msk [vmem:[%s7213 + $0x38] sm:$0xff] %vm4113, %v7204
        %7222 = vst.msk [vmem:[%s7213 + $0x40] sm:$0xff] %vm4113, %v7205
        %7223 = vst.msk [vmem:[%s7213 + $0x48] sm:$0xff] %vm4113, %v7206
        %7224 = vst.msk [vmem:[%s7213 + $0x50] sm:$0xff] %vm4113, %v7207
        %7225 = vst.msk [vmem:[%s7213 + $0x58] sm:$0xff] %vm4113, %v7208
        %7226 = vst.msk [vmem:[%s7213 + $0x60] sm:$0xff] %vm4113, %v7209
        %7227 = vst.msk [vmem:[%s7213 + $0x68] sm:$0xff] %vm4113, %v7210
        %7228 = vst.msk [vmem:[%s7213 + $0x70] sm:$0xff] %vm4113, %v7211
        %7229 = vst.msk [vmem:[%s7213 + $0x78] sm:$0xff] %vm4113, %v7212
        %v7230 = vld [vmem:[%s9] sm:$0xf]
        %v7231 = vld [vmem:[%s9 + $0x4] sm:$0xf]
        %v7232 = vld [vmem:[%s9 + $0x8] sm:$0xf]
        %v7233 = vld [vmem:[%s9 + $0xc] sm:$0xf]
        %v7234 = vld [vmem:[%s9 + $0x10] sm:$0xf]
        %v7235 = vld [vmem:[%s9 + $0x14] sm:$0xf]
        %v7236 = vld [vmem:[%s9 + $0x18] sm:$0xf]
        %v7237 = vld [vmem:[%s9 + $0x1c] sm:$0xf]
        %v7238 = vld [vmem:[%s9 + $0x20] sm:$0xf]
        %v7239 = vld [vmem:[%s9 + $0x24] sm:$0xf]
        %v7240 = vld [vmem:[%s9 + $0x28] sm:$0xf]
        %v7241 = vld [vmem:[%s9 + $0x2c] sm:$0xf]
        %v7242 = vld [vmem:[%s9 + $0x30] sm:$0xf]
        %v7243 = vld [vmem:[%s9 + $0x34] sm:$0xf]
        %v7244 = vld [vmem:[%s9 + $0x38] sm:$0xf]
        %v7245 = vld [vmem:[%s9 + $0x3c] sm:$0xf]
        %v7246 = vld [vmem:[%s3518] sm:$0xf]
        %v7247 = vld [vmem:[%s3518 + $0x4] sm:$0xf]
        %v7248 = vld [vmem:[%s3518 + $0x8] sm:$0xf]
        %v7249 = vld [vmem:[%s3518 + $0xc] sm:$0xf]
        %v7250 = vld [vmem:[%s3518 + $0x10] sm:$0xf]
        %v7251 = vld [vmem:[%s3518 + $0x14] sm:$0xf]
        %v7252 = vld [vmem:[%s3518 + $0x18] sm:$0xf]
        %v7253 = vld [vmem:[%s3518 + $0x1c] sm:$0xf]
        %v7254 = vld [vmem:[%s3518 + $0x20] sm:$0xf]
        %v7255 = vld [vmem:[%s3518 + $0x24] sm:$0xf]
        %v7256 = vld [vmem:[%s3518 + $0x28] sm:$0xf]
        %v7257 = vld [vmem:[%s3518 + $0x2c] sm:$0xf]
        %v7258 = vld [vmem:[%s3518 + $0x30] sm:$0xf]
        %v7259 = vld [vmem:[%s3518 + $0x34] sm:$0xf]
        %v7260 = vld [vmem:[%s3518 + $0x38] sm:$0xf]
        %v7261 = vld [vmem:[%s3518 + $0x3c] sm:$0xf]
        %v7278 = vunpack.c.l.b16 %v7246
        %v7279 = vunpack.c.l.b16 %v7247
        %v7280 = vunpack.c.l.b16 %v7248
        %v7281 = vunpack.c.l.b16 %v7249
        %v7282 = vunpack.c.l.b16 %v7250
        %v7283 = vunpack.c.l.b16 %v7251
        %v7284 = vunpack.c.l.b16 %v7252
        %v7285 = vunpack.c.l.b16 %v7253
        %v7286 = vunpack.c.l.b16 %v7254
        %v7287 = vunpack.c.l.b16 %v7255
        %v7288 = vunpack.c.l.b16 %v7256
        %v7289 = vunpack.c.l.b16 %v7257
        %v7290 = vunpack.c.l.b16 %v7258
        %v7291 = vunpack.c.l.b16 %v7259
        %v7292 = vunpack.c.l.b16 %v7260
        %v7293 = vunpack.c.l.b16 %v7261
        %v7294 = vpack.c.b16 %v7279, %v7278
        %v7295 = vpack.c.b16 %v7281, %v7280
        %v7296 = vpack.c.b16 %v7283, %v7282
        %v7297 = vpack.c.b16 %v7285, %v7284
        %v7298 = vpack.c.b16 %v7287, %v7286
        %v7299 = vpack.c.b16 %v7289, %v7288
        %v7300 = vpack.c.b16 %v7291, %v7290
        %v7301 = vpack.c.b16 %v7293, %v7292
        %7310 = vmatprep.subr.bf16.mxu0 0
        %7311 = vmatpush1.bf16.msra.mxu0 %v7294
        %7312 = vmatprep.subr.bf16.mxu0 0
        %7313 = vmatpush1.bf16.msra.mxu0 %v7295
        %7314 = vmatprep.subr.bf16.mxu0 0
        %7315 = vmatpush1.bf16.msra.mxu0 %v7296
        %7316 = vmatprep.subr.bf16.mxu0 0
        %7317 = vmatpush1.bf16.msra.mxu0 %v7297
        %7318 = vmatprep.subr.bf16.mxu0 0
        %7319 = vmatpush1.bf16.msra.mxu0 %v7298
        %7320 = vmatprep.subr.bf16.mxu0 0
        %7321 = vmatpush1.bf16.msra.mxu0 %v7299
        %7322 = vmatprep.subr.bf16.mxu0 0
        %7323 = vmatpush1.bf16.msra.mxu0 %v7300
        %7324 = vmatprep.subr.bf16.mxu0 0
        %7325 = vmatpush1.bf16.msra.mxu0 %v7301
        %7326 = vmatprep.subr.bf16.mxu0 0
        %7327 = vmatpush1.bf16.msra.mxu0 0
        %7328 = vmatprep.subr.bf16.mxu0 0
        %7329 = vmatpush1.bf16.msra.mxu0 0
        %7330 = vmatprep.subr.bf16.mxu0 0
        %7331 = vmatpush1.bf16.msra.mxu0 0
        %7332 = vmatprep.subr.bf16.mxu0 0
        %7333 = vmatpush1.bf16.msra.mxu0 0
        %7334 = vmatprep.subr.bf16.mxu0 0
        %7335 = vmatpush1.bf16.msra.mxu0 0
        %7336 = vmatprep.subr.bf16.mxu0 0
        %7337 = vmatpush1.bf16.msra.mxu0 0
        %7338 = vmatprep.subr.bf16.mxu0 0
        %7339 = vmatpush1.bf16.msra.mxu0 0
        %7340 = vmatprep.subr.bf16.mxu0 0
        %7341 = vmatpush1.bf16.msra.mxu0 0
        %7342 = vmatprep.mubr.bf16.mxu0 0
        %7343 = vmatmul.mubr.bf16.gmra.mrb[0].mxu0 %v6932
        %v7344 = vpop.f32.mrb[0].mxu0
        %v7345 = vadd.f32 0.0, %v7344
        %v7346 = vpop.f32.mrb[0].mxu0
        %v7347 = vpop.f32.mrb[0].mxu0
        %v7348 = vadd.f32 0.0, %v7347
        %v7349 = vpop.f32.mrb[0].mxu0
        %7350 = vmatprep.mubr.bf16.mxu0 0
        %7351 = vmatmul.mubr.bf16.gmra.mrb[0].mxu0 %v6933
        %v7352 = vpop.f32.mrb[0].mxu0
        %v7353 = vadd.f32 0.0, %v7352
        %v7354 = vpop.f32.mrb[0].mxu0
        %v7355 = vpop.f32.mrb[0].mxu0
        %v7356 = vadd.f32 0.0, %v7355
        %v7357 = vpop.f32.mrb[0].mxu0
        %7358 = vmatprep.mubr.bf16.mxu0 0
        %7359 = vmatmul.mubr.bf16.gmra.mrb[0].mxu0 %v6934
        %v7360 = vpop.f32.mrb[0].mxu0
        %v7361 = vadd.f32 0.0, %v7360
        %v7362 = vpop.f32.mrb[0].mxu0
        %v7363 = vpop.f32.mrb[0].mxu0
        %v7364 = vadd.f32 0.0, %v7363
        %v7365 = vpop.f32.mrb[0].mxu0
        %7366 = vmatprep.mubr.bf16.mxu0 0
        %7367 = vmatmul.mubr.bf16.gmra.mrb[0].mxu0 %v6935
        %v7368 = vpop.f32.mrb[0].mxu0
        %v7369 = vadd.f32 0.0, %v7368
        %v7370 = vpop.f32.mrb[0].mxu0
        %v7371 = vpop.f32.mrb[0].mxu0
        %v7372 = vadd.f32 0.0, %v7371
        %v7373 = vpop.f32.mrb[0].mxu0
        %7374 = vmatprep.mubr.bf16.mxu0 0
        %7375 = vmatmul.mubr.bf16.gmra.mrb[0].mxu0 %v6936
        %v7376 = vpop.f32.mrb[0].mxu0
        %v7377 = vadd.f32 0.0, %v7376
        %v7378 = vpop.f32.mrb[0].mxu0
        %v7379 = vpop.f32.mrb[0].mxu0
        %v7380 = vadd.f32 0.0, %v7379
        %v7381 = vpop.f32.mrb[0].mxu0
        %7382 = vmatprep.mubr.bf16.mxu0 0
        %7383 = vmatmul.mubr.bf16.gmra.mrb[0].mxu0 %v6937
        %v7384 = vpop.f32.mrb[0].mxu0
        %v7385 = vadd.f32 0.0, %v7384
        %v7386 = vpop.f32.mrb[0].mxu0
        %v7387 = vpop.f32.mrb[0].mxu0
        %v7388 = vadd.f32 0.0, %v7387
        %v7389 = vpop.f32.mrb[0].mxu0
        %7390 = vmatprep.mubr.bf16.mxu0 0
        %7391 = vmatmul.mubr.bf16.gmra.mrb[0].mxu0 %v6938
        %v7392 = vpop.f32.mrb[0].mxu0
        %v7393 = vadd.f32 0.0, %v7392
        %v7394 = vpop.f32.mrb[0].mxu0
        %v7395 = vpop.f32.mrb[0].mxu0
        %v7396 = vadd.f32 0.0, %v7395
        %v7397 = vpop.f32.mrb[0].mxu0
        %7398 = vmatprep.mubr.bf16.mxu0 0
        %7399 = vmatmul.mubr.bf16.gmra.mrb[0].mxu0 %v6939
        %v7400 = vpop.f32.mrb[0].mxu0
        %v7401 = vadd.f32 0.0, %v7400
        %v7402 = vpop.f32.mrb[0].mxu0
        %v7403 = vpop.f32.mrb[0].mxu0
        %v7404 = vadd.f32 0.0, %v7403
        %v7405 = vpop.f32.mrb[0].mxu0
        %7406 = vdwg.mxu0
        %v7423 = vunpack.c.l.b16 %v7230
        %v7424 = vunpack.c.l.b16 %v7231
        %v7425 = vunpack.c.l.b16 %v7232
        %v7426 = vunpack.c.l.b16 %v7233
        %v7427 = vunpack.c.l.b16 %v7234
        %v7428 = vunpack.c.l.b16 %v7235
        %v7429 = vunpack.c.l.b16 %v7236
        %v7430 = vunpack.c.l.b16 %v7237
        %v7431 = vunpack.c.l.b16 %v7238
        %v7432 = vunpack.c.l.b16 %v7239
        %v7433 = vunpack.c.l.b16 %v7240
        %v7434 = vunpack.c.l.b16 %v7241
        %v7435 = vunpack.c.l.b16 %v7242
        %v7436 = vunpack.c.l.b16 %v7243
        %v7437 = vunpack.c.l.b16 %v7244
        %v7438 = vunpack.c.l.b16 %v7245
        %v7439 = vpack.c.b16 %v7424, %v7423
        %v7440 = vpack.c.b16 %v7426, %v7425
        %v7441 = vpack.c.b16 %v7428, %v7427
        %v7442 = vpack.c.b16 %v7430, %v7429
        %v7443 = vpack.c.b16 %v7432, %v7431
        %v7444 = vpack.c.b16 %v7434, %v7433
        %v7445 = vpack.c.b16 %v7436, %v7435
        %v7446 = vpack.c.b16 %v7438, %v7437
        %7455 = vmatprep.subr.bf16.mxu0 0
        %7456 = vmatpush1.bf16.msra.mxu0 %v7439
        %7457 = vmatprep.subr.bf16.mxu0 0
        %7458 = vmatpush1.bf16.msra.mxu0 %v7440
        %7459 = vmatprep.subr.bf16.mxu0 0
        %7460 = vmatpush1.bf16.msra.mxu0 %v7441
        %7461 = vmatprep.subr.bf16.mxu0 0
        %7462 = vmatpush1.bf16.msra.mxu0 %v7442
        %7463 = vmatprep.subr.bf16.mxu0 0
        %7464 = vmatpush1.bf16.msra.mxu0 %v7443
        %7465 = vmatprep.subr.bf16.mxu0 0
        %7466 = vmatpush1.bf16.msra.mxu0 %v7444
        %7467 = vmatprep.subr.bf16.mxu0 0
        %7468 = vmatpush1.bf16.msra.mxu0 %v7445
        %7469 = vmatprep.subr.bf16.mxu0 0
        %7470 = vmatpush1.bf16.msra.mxu0 %v7446
        %7471 = vmatprep.subr.bf16.mxu0 0
        %7472 = vmatpush1.bf16.msra.mxu0 0
        %7473 = vmatprep.subr.bf16.mxu0 0
        %7474 = vmatpush1.bf16.msra.mxu0 0
        %7475 = vmatprep.subr.bf16.mxu0 0
        %7476 = vmatpush1.bf16.msra.mxu0 0
        %7477 = vmatprep.subr.bf16.mxu0 0
        %7478 = vmatpush1.bf16.msra.mxu0 0
        %7479 = vmatprep.subr.bf16.mxu0 0
        %7480 = vmatpush1.bf16.msra.mxu0 0
        %7481 = vmatprep.subr.bf16.mxu0 0
        %7482 = vmatpush1.bf16.msra.mxu0 0
        %7483 = vmatprep.subr.bf16.mxu0 0
        %7484 = vmatpush1.bf16.msra.mxu0 0
        %7485 = vmatprep.subr.bf16.mxu0 0
        %7486 = vmatpush1.bf16.msra.mxu0 0
        %7487 = vmatprep.mubr.bf16.mxu0 0
        %7488 = vmatmul.mubr.bf16.gmra.mrb[0].mxu0 %v6312
        %v7489 = vpop.f32.mrb[0].mxu0
        %v7490 = vadd.f32 %v7345, %v7489
        %v7491 = vpop.f32.mrb[0].mxu0
        %v7492 = vpop.f32.mrb[0].mxu0
        %v7493 = vadd.f32 %v7348, %v7492
        %v7494 = vpop.f32.mrb[0].mxu0
        %7495 = vmatprep.mubr.bf16.mxu0 0
        %7496 = vmatmul.mubr.bf16.gmra.mrb[0].mxu0 %v6313
        %v7497 = vpop.f32.mrb[0].mxu0
        %v7498 = vadd.f32 %v7353, %v7497
        %v7499 = vpop.f32.mrb[0].mxu0
        %v7500 = vpop.f32.mrb[0].mxu0
        %v7501 = vadd.f32 %v7356, %v7500
        %v7502 = vpop.f32.mrb[0].mxu0
        %7503 = vmatprep.mubr.bf16.mxu0 0
        %7504 = vmatmul.mubr.bf16.gmra.mrb[0].mxu0 %v6314
        %v7505 = vpop.f32.mrb[0].mxu0
        %v7506 = vadd.f32 %v7361, %v7505
        %v7507 = vpop.f32.mrb[0].mxu0
        %v7508 = vpop.f32.mrb[0].mxu0
        %v7509 = vadd.f32 %v7364, %v7508
        %v7510 = vpop.f32.mrb[0].mxu0
        %7511 = vmatprep.mubr.bf16.mxu0 0
        %7512 = vmatmul.mubr.bf16.gmra.mrb[0].mxu0 %v6315
        %v7513 = vpop.f32.mrb[0].mxu0
        %v7514 = vadd.f32 %v7369, %v7513
        %v7515 = vpop.f32.mrb[0].mxu0
        %v7516 = vpop.f32.mrb[0].mxu0
        %v7517 = vadd.f32 %v7372, %v7516
        %v7518 = vpop.f32.mrb[0].mxu0
        %7519 = vmatprep.mubr.bf16.mxu0 0
        %7520 = vmatmul.mubr.bf16.gmra.mrb[0].mxu0 %v6316
        %v7521 = vpop.f32.mrb[0].mxu0
        %v7522 = vadd.f32 %v7377, %v7521
        %v7523 = vpop.f32.mrb[0].mxu0
        %v7524 = vpop.f32.mrb[0].mxu0
        %v7525 = vadd.f32 %v7380, %v7524
        %v7526 = vpop.f32.mrb[0].mxu0
        %7527 = vmatprep.mubr.bf16.mxu0 0
        %7528 = vmatmul.mubr.bf16.gmra.mrb[0].mxu0 %v6317
        %v7529 = vpop.f32.mrb[0].mxu0
        %v7530 = vadd.f32 %v7385, %v7529
        %v7531 = vpop.f32.mrb[0].mxu0
        %v7532 = vpop.f32.mrb[0].mxu0
        %v7533 = vadd.f32 %v7388, %v7532
        %v7534 = vpop.f32.mrb[0].mxu0
        %7535 = vmatprep.mubr.bf16.mxu0 0
        %7536 = vmatmul.mubr.bf16.gmra.mrb[0].mxu0 %v6318
        %v7537 = vpop.f32.mrb[0].mxu0
        %v7538 = vadd.f32 %v7393, %v7537
        %v7539 = vpop.f32.mrb[0].mxu0
        %v7540 = vpop.f32.mrb[0].mxu0
        %v7541 = vadd.f32 %v7396, %v7540
        %v7542 = vpop.f32.mrb[0].mxu0
        %7543 = vmatprep.mubr.bf16.mxu0 0
        %7544 = vmatmul.mubr.bf16.gmra.mrb[0].mxu0 %v6319
        %v7545 = vpop.f32.mrb[0].mxu0
        %v7546 = vadd.f32 %v7401, %v7545
        %v7547 = vpop.f32.mrb[0].mxu0
        %v7548 = vpop.f32.mrb[0].mxu0
        %v7549 = vadd.f32 %v7404, %v7548
        %v7550 = vpop.f32.mrb[0].mxu0
        %7551 = vdwg.mxu0
        %v7552 = vpack.c.bf16 %v3406, %v3405
        %v7553 = vpack.c.bf16 %v3408, %v3407
        %v7554 = vpack.c.bf16 %v3410, %v3409
        %v7555 = vpack.c.bf16 %v3412, %v3411
        %v7556 = vpack.c.bf16 %v3414, %v3413
        %v7557 = vpack.c.bf16 %v3416, %v3415
        %v7558 = vpack.c.bf16 %v3418, %v3417
        %v7559 = vpack.c.bf16 %v3420, %v3419
        %v7560 = vld [vmem:[%s3833] sm:$0xf]
        %v7561 = vld [vmem:[%s3833 + $0x4] sm:$0xf]
        %v7562 = vld [vmem:[%s3833 + $0x8] sm:$0xf]
        %v7563 = vld [vmem:[%s3833 + $0xc] sm:$0xf]
        %v7564 = vld [vmem:[%s3833 + $0x10] sm:$0xf]
        %v7565 = vld [vmem:[%s3833 + $0x14] sm:$0xf]
        %v7566 = vld [vmem:[%s3833 + $0x18] sm:$0xf]
        %v7567 = vld [vmem:[%s3833 + $0x1c] sm:$0xf]
        %v7568 = vld [vmem:[%s3833 + $0x20] sm:$0xf]
        %v7569 = vld [vmem:[%s3833 + $0x24] sm:$0xf]
        %v7570 = vld [vmem:[%s3833 + $0x28] sm:$0xf]
        %v7571 = vld [vmem:[%s3833 + $0x2c] sm:$0xf]
        %v7572 = vld [vmem:[%s3833 + $0x30] sm:$0xf]
        %v7573 = vld [vmem:[%s3833 + $0x34] sm:$0xf]
        %v7574 = vld [vmem:[%s3833 + $0x38] sm:$0xf]
        %v7575 = vld [vmem:[%s3833 + $0x3c] sm:$0xf]
        %v7592 = vunpack.c.l.b16 %v7560
        %v7593 = vunpack.c.l.b16 %v7561
        %v7594 = vunpack.c.l.b16 %v7562
        %v7595 = vunpack.c.l.b16 %v7563
        %v7596 = vunpack.c.l.b16 %v7564
        %v7597 = vunpack.c.l.b16 %v7565
        %v7598 = vunpack.c.l.b16 %v7566
        %v7599 = vunpack.c.l.b16 %v7567
        %v7600 = vunpack.c.l.b16 %v7568
        %v7601 = vunpack.c.l.b16 %v7569
        %v7602 = vunpack.c.l.b16 %v7570
        %v7603 = vunpack.c.l.b16 %v7571
        %v7604 = vunpack.c.l.b16 %v7572
        %v7605 = vunpack.c.l.b16 %v7573
        %v7606 = vunpack.c.l.b16 %v7574
        %v7607 = vunpack.c.l.b16 %v7575
        %v7608 = vpack.c.b16 %v7593, %v7592
        %v7609 = vpack.c.b16 %v7595, %v7594
        %v7610 = vpack.c.b16 %v7597, %v7596
        %v7611 = vpack.c.b16 %v7599, %v7598
        %v7612 = vpack.c.b16 %v7601, %v7600
        %v7613 = vpack.c.b16 %v7603, %v7602
        %v7614 = vpack.c.b16 %v7605, %v7604
        %v7615 = vpack.c.b16 %v7607, %v7606
        %7624 = vmatprep.subr.bf16.mxu0 0
        %7625 = vmatpush1.bf16.msra.mxu0 %v7608
        %7626 = vmatprep.subr.bf16.mxu0 0
        %7627 = vmatpush1.bf16.msra.mxu0 %v7609
        %7628 = vmatprep.subr.bf16.mxu0 0
        %7629 = vmatpush1.bf16.msra.mxu0 %v7610
        %7630 = vmatprep.subr.bf16.mxu0 0
        %7631 = vmatpush1.bf16.msra.mxu0 %v7611
        %7632 = vmatprep.subr.bf16.mxu0 0
        %7633 = vmatpush1.bf16.msra.mxu0 %v7612
        %7634 = vmatprep.subr.bf16.mxu0 0
        %7635 = vmatpush1.bf16.msra.mxu0 %v7613
        %7636 = vmatprep.subr.bf16.mxu0 0
        %7637 = vmatpush1.bf16.msra.mxu0 %v7614
        %7638 = vmatprep.subr.bf16.mxu0 0
        %7639 = vmatpush1.bf16.msra.mxu0 %v7615
        %7640 = vmatprep.subr.bf16.mxu0 0
        %7641 = vmatpush1.bf16.msra.mxu0 0
        %7642 = vmatprep.subr.bf16.mxu0 0
        %7643 = vmatpush1.bf16.msra.mxu0 0
        %7644 = vmatprep.subr.bf16.mxu0 0
        %7645 = vmatpush1.bf16.msra.mxu0 0
        %7646 = vmatprep.subr.bf16.mxu0 0
        %7647 = vmatpush1.bf16.msra.mxu0 0
        %7648 = vmatprep.subr.bf16.mxu0 0
        %7649 = vmatpush1.bf16.msra.mxu0 0
        %7650 = vmatprep.subr.bf16.mxu0 0
        %7651 = vmatpush1.bf16.msra.mxu0 0
        %7652 = vmatprep.subr.bf16.mxu0 0
        %7653 = vmatpush1.bf16.msra.mxu0 0
        %7654 = vmatprep.subr.bf16.mxu0 0
        %7655 = vmatpush1.bf16.msra.mxu0 0
        %7656 = vmatprep.mubr.bf16.mxu0 0
        %7657 = vmatmul.mubr.bf16.gmra.mrb[0].mxu0 %v7552
        %v7658 = vpop.f32.mrb[0].mxu0
        %v7659 = vadd.f32 0.0, %v7658
        %v7660 = vpop.f32.mrb[0].mxu0
        %v7661 = vpop.f32.mrb[0].mxu0
        %v7662 = vadd.f32 0.0, %v7661
        %v7663 = vpop.f32.mrb[0].mxu0
        %7664 = vmatprep.mubr.bf16.mxu0 0
        %7665 = vmatmul.mubr.bf16.gmra.mrb[0].mxu0 %v7553
        %v7666 = vpop.f32.mrb[0].mxu0
        %v7667 = vadd.f32 0.0, %v7666
        %v7668 = vpop.f32.mrb[0].mxu0
        %v7669 = vpop.f32.mrb[0].mxu0
        %v7670 = vadd.f32 0.0, %v7669
        %v7671 = vpop.f32.mrb[0].mxu0
        %7672 = vmatprep.mubr.bf16.mxu0 0
        %7673 = vmatmul.mubr.bf16.gmra.mrb[0].mxu0 %v7554
        %v7674 = vpop.f32.mrb[0].mxu0
        %v7675 = vadd.f32 0.0, %v7674
        %v7676 = vpop.f32.mrb[0].mxu0
        %v7677 = vpop.f32.mrb[0].mxu0
        %v7678 = vadd.f32 0.0, %v7677
        %v7679 = vpop.f32.mrb[0].mxu0
        %7680 = vmatprep.mubr.bf16.mxu0 0
        %7681 = vmatmul.mubr.bf16.gmra.mrb[0].mxu0 %v7555
        %v7682 = vpop.f32.mrb[0].mxu0
        %v7683 = vadd.f32 0.0, %v7682
        %v7684 = vpop.f32.mrb[0].mxu0
        %v7685 = vpop.f32.mrb[0].mxu0
        %v7686 = vadd.f32 0.0, %v7685
        %v7687 = vpop.f32.mrb[0].mxu0
        %7688 = vmatprep.mubr.bf16.mxu0 0
        %7689 = vmatmul.mubr.bf16.gmra.mrb[0].mxu0 %v7556
        %v7690 = vpop.f32.mrb[0].mxu0
        %v7691 = vadd.f32 0.0, %v7690
        %v7692 = vpop.f32.mrb[0].mxu0
        %v7693 = vpop.f32.mrb[0].mxu0
        %v7694 = vadd.f32 0.0, %v7693
        %v7695 = vpop.f32.mrb[0].mxu0
        %7696 = vmatprep.mubr.bf16.mxu0 0
        %7697 = vmatmul.mubr.bf16.gmra.mrb[0].mxu0 %v7557
        %v7698 = vpop.f32.mrb[0].mxu0
        %v7699 = vadd.f32 0.0, %v7698
        %v7700 = vpop.f32.mrb[0].mxu0
        %v7701 = vpop.f32.mrb[0].mxu0
        %v7702 = vadd.f32 0.0, %v7701
        %v7703 = vpop.f32.mrb[0].mxu0
        %7704 = vmatprep.mubr.bf16.mxu0 0
        %7705 = vmatmul.mubr.bf16.gmra.mrb[0].mxu0 %v7558
        %v7706 = vpop.f32.mrb[0].mxu0
        %v7707 = vadd.f32 0.0, %v7706
        %v7708 = vpop.f32.mrb[0].mxu0
        %v7709 = vpop.f32.mrb[0].mxu0
        %v7710 = vadd.f32 0.0, %v7709
        %v7711 = vpop.f32.mrb[0].mxu0
        %7712 = vmatprep.mubr.bf16.mxu0 0
        %7713 = vmatmul.mubr.bf16.gmra.mrb[0].mxu0 %v7559
        %v7714 = vpop.f32.mrb[0].mxu0
        %v7715 = vadd.f32 0.0, %v7714
        %v7716 = vpop.f32.mrb[0].mxu0
        %v7717 = vpop.f32.mrb[0].mxu0
        %v7718 = vadd.f32 0.0, %v7717
        %v7719 = vpop.f32.mrb[0].mxu0
        %7720 = vdwg.mxu0
        %v7721 = vadd.f32 %v7490, %v7659
        %v7722 = vadd.f32 %v7493, %v7662
        %v7723 = vadd.f32 %v7498, %v7667
        %v7724 = vadd.f32 %v7501, %v7670
        %v7725 = vadd.f32 %v7506, %v7675
        %v7726 = vadd.f32 %v7509, %v7678
        %v7727 = vadd.f32 %v7514, %v7683
        %v7728 = vadd.f32 %v7517, %v7686
        %v7729 = vadd.f32 %v7522, %v7691
        %v7730 = vadd.f32 %v7525, %v7694
        %v7731 = vadd.f32 %v7530, %v7699
        %v7732 = vadd.f32 %v7533, %v7702
        %v7733 = vadd.f32 %v7538, %v7707
        %v7734 = vadd.f32 %v7541, %v7710
        %v7735 = vadd.f32 %v7546, %v7715
        %v7736 = vadd.f32 %v7549, %v7718
        %v7737 = vadd.f32 %v7721, %v4015
        %v7738 = vadd.f32 %v7722, %v4015
        %v7739 = vadd.f32 %v7723, %v4015
        %v7740 = vadd.f32 %v7724, %v4015
        %v7741 = vadd.f32 %v7725, %v4015
        %v7742 = vadd.f32 %v7726, %v4015
        %v7743 = vadd.f32 %v7727, %v4015
        %v7744 = vadd.f32 %v7728, %v4015
        %v7745 = vadd.f32 %v7729, %v4015
        %v7746 = vadd.f32 %v7730, %v4015
        %v7747 = vadd.f32 %v7731, %v4015
        %v7748 = vadd.f32 %v7732, %v4015
        %v7749 = vadd.f32 %v7733, %v4015
        %v7750 = vadd.f32 %v7734, %v4015
        %v7751 = vadd.f32 %v7735, %v4015
        %v7752 = vadd.f32 %v7736, %v4015
        %v7753 = vsub.f32 0.0, %v7737
        %v7754 = vsub.f32 0.0, %v7738
        %v7755 = vsub.f32 0.0, %v7739
        %v7756 = vsub.f32 0.0, %v7740
        %v7757 = vsub.f32 0.0, %v7741
        %v7758 = vsub.f32 0.0, %v7742
        %v7759 = vsub.f32 0.0, %v7743
        %v7760 = vsub.f32 0.0, %v7744
        %v7761 = vsub.f32 0.0, %v7745
        %v7762 = vsub.f32 0.0, %v7746
        %v7763 = vsub.f32 0.0, %v7747
        %v7764 = vsub.f32 0.0, %v7748
        %v7765 = vsub.f32 0.0, %v7749
        %v7766 = vsub.f32 0.0, %v7750
        %v7767 = vsub.f32 0.0, %v7751
        %v7768 = vsub.f32 0.0, %v7752
        %v7769 = vmul.f32 %v7753, 1.442695
        %v7770 = vpow.pop %v7769
        %v7771 = vmul.f32 %v7754, 1.442695
        %v7772 = vpow.pop %v7771
        %v7773 = vmul.f32 %v7755, 1.442695
        %v7774 = vpow.pop %v7773
        %v7775 = vmul.f32 %v7756, 1.442695
        %v7776 = vpow.pop %v7775
        %v7777 = vmul.f32 %v7757, 1.442695
        %v7778 = vpow.pop %v7777
        %v7779 = vmul.f32 %v7758, 1.442695
        %v7780 = vpow.pop %v7779
        %v7781 = vmul.f32 %v7759, 1.442695
        %v7782 = vpow.pop %v7781
        %v7783 = vmul.f32 %v7760, 1.442695
        %v7784 = vpow.pop %v7783
        %v7785 = vmul.f32 %v7761, 1.442695
        %v7786 = vpow.pop %v7785
        %v7787 = vmul.f32 %v7762, 1.442695
        %v7788 = vpow.pop %v7787
        %v7789 = vmul.f32 %v7763, 1.442695
        %v7790 = vpow.pop %v7789
        %v7791 = vmul.f32 %v7764, 1.442695
        %v7792 = vpow.pop %v7791
        %v7793 = vmul.f32 %v7765, 1.442695
        %v7794 = vpow.pop %v7793
        %v7795 = vmul.f32 %v7766, 1.442695
        %v7796 = vpow.pop %v7795
        %v7797 = vmul.f32 %v7767, 1.442695
        %v7798 = vpow.pop %v7797
        %v7799 = vmul.f32 %v7768, 1.442695
        %v7800 = vpow.pop %v7799
        %v7801 = vadd.f32 %v7770, 1.0
        %v7802 = vadd.f32 %v7772, 1.0
        %v7803 = vadd.f32 %v7774, 1.0
        %v7804 = vadd.f32 %v7776, 1.0
        %v7805 = vadd.f32 %v7778, 1.0
        %v7806 = vadd.f32 %v7780, 1.0
        %v7807 = vadd.f32 %v7782, 1.0
        %v7808 = vadd.f32 %v7784, 1.0
        %v7809 = vadd.f32 %v7786, 1.0
        %v7810 = vadd.f32 %v7788, 1.0
        %v7811 = vadd.f32 %v7790, 1.0
        %v7812 = vadd.f32 %v7792, 1.0
        %v7813 = vadd.f32 %v7794, 1.0
        %v7814 = vadd.f32 %v7796, 1.0
        %v7815 = vadd.f32 %v7798, 1.0
        %v7816 = vadd.f32 %v7800, 1.0
        %v7817 = vrcp.pop %v7801
        %v7818 = vrcp.pop %v7802
        %v7819 = vrcp.pop %v7803
        %v7820 = vrcp.pop %v7804
        %v7821 = vrcp.pop %v7805
        %v7822 = vrcp.pop %v7806
        %v7823 = vrcp.pop %v7807
        %v7824 = vrcp.pop %v7808
        %v7825 = vrcp.pop %v7809
        %v7826 = vrcp.pop %v7810
        %v7827 = vrcp.pop %v7811
        %v7828 = vrcp.pop %v7812
        %v7829 = vrcp.pop %v7813
        %v7830 = vrcp.pop %v7814
        %v7831 = vrcp.pop %v7815
        %v7832 = vrcp.pop %v7816
        %s7833 = scalar_lea.vmem %s376, 768 [#allocation3]
        %7834 = vst.msk [vmem:[%s7833] sm:$0xff] %vm4113, %v7817
        %7835 = vst.msk [vmem:[%s7833 + $0x8] sm:$0xff] %vm4113, %v7818
        %7836 = vst.msk [vmem:[%s7833 + $0x10] sm:$0xff] %vm4113, %v7819
        %7837 = vst.msk [vmem:[%s7833 + $0x18] sm:$0xff] %vm4113, %v7820
        %7838 = vst.msk [vmem:[%s7833 + $0x20] sm:$0xff] %vm4113, %v7821
        %7839 = vst.msk [vmem:[%s7833 + $0x28] sm:$0xff] %vm4113, %v7822
        %7840 = vst.msk [vmem:[%s7833 + $0x30] sm:$0xff] %vm4113, %v7823
        %7841 = vst.msk [vmem:[%s7833 + $0x38] sm:$0xff] %vm4113, %v7824
        %7842 = vst.msk [vmem:[%s7833 + $0x40] sm:$0xff] %vm4113, %v7825
        %7843 = vst.msk [vmem:[%s7833 + $0x48] sm:$0xff] %vm4113, %v7826
        %7844 = vst.msk [vmem:[%s7833 + $0x50] sm:$0xff] %vm4113, %v7827
        %7845 = vst.msk [vmem:[%s7833 + $0x58] sm:$0xff] %vm4113, %v7828
        %7846 = vst.msk [vmem:[%s7833 + $0x60] sm:$0xff] %vm4113, %v7829
        %7847 = vst.msk [vmem:[%s7833 + $0x68] sm:$0xff] %vm4113, %v7830
        %7848 = vst.msk [vmem:[%s7833 + $0x70] sm:$0xff] %vm4113, %v7831
        %7849 = vst.msk [vmem:[%s7833 + $0x78] sm:$0xff] %vm4113, %v7832
        %v7850 = vld [vmem:[%s9] sm:$0xf]
        %v7851 = vld [vmem:[%s9 + $0x4] sm:$0xf]
        %v7852 = vld [vmem:[%s9 + $0x8] sm:$0xf]
        %v7853 = vld [vmem:[%s9 + $0xc] sm:$0xf]
        %v7854 = vld [vmem:[%s9 + $0x10] sm:$0xf]
        %v7855 = vld [vmem:[%s9 + $0x14] sm:$0xf]
        %v7856 = vld [vmem:[%s9 + $0x18] sm:$0xf]
        %v7857 = vld [vmem:[%s9 + $0x1c] sm:$0xf]
        %v7858 = vld [vmem:[%s9 + $0x20] sm:$0xf]
        %v7859 = vld [vmem:[%s9 + $0x24] sm:$0xf]
        %v7860 = vld [vmem:[%s9 + $0x28] sm:$0xf]
        %v7861 = vld [vmem:[%s9 + $0x2c] sm:$0xf]
        %v7862 = vld [vmem:[%s9 + $0x30] sm:$0xf]
        %v7863 = vld [vmem:[%s9 + $0x34] sm:$0xf]
        %v7864 = vld [vmem:[%s9 + $0x38] sm:$0xf]
        %v7865 = vld [vmem:[%s9 + $0x3c] sm:$0xf]
        %v7866 = vld [vmem:[%s3518] sm:$0xf]
        %v7867 = vld [vmem:[%s3518 + $0x4] sm:$0xf]
        %v7868 = vld [vmem:[%s3518 + $0x8] sm:$0xf]
        %v7869 = vld [vmem:[%s3518 + $0xc] sm:$0xf]
        %v7870 = vld [vmem:[%s3518 + $0x10] sm:$0xf]
        %v7871 = vld [vmem:[%s3518 + $0x14] sm:$0xf]
        %v7872 = vld [vmem:[%s3518 + $0x18] sm:$0xf]
        %v7873 = vld [vmem:[%s3518 + $0x1c] sm:$0xf]
        %v7874 = vld [vmem:[%s3518 + $0x20] sm:$0xf]
        %v7875 = vld [vmem:[%s3518 + $0x24] sm:$0xf]
        %v7876 = vld [vmem:[%s3518 + $0x28] sm:$0xf]
        %v7877 = vld [vmem:[%s3518 + $0x2c] sm:$0xf]
        %v7878 = vld [vmem:[%s3518 + $0x30] sm:$0xf]
        %v7879 = vld [vmem:[%s3518 + $0x34] sm:$0xf]
        %v7880 = vld [vmem:[%s3518 + $0x38] sm:$0xf]
        %v7881 = vld [vmem:[%s3518 + $0x3c] sm:$0xf]
        %v7898 = vunpack.c.l.b16 %v7866
        %v7899 = vunpack.c.l.b16 %v7867
        %v7900 = vunpack.c.l.b16 %v7868
        %v7901 = vunpack.c.l.b16 %v7869
        %v7902 = vunpack.c.l.b16 %v7870
        %v7903 = vunpack.c.l.b16 %v7871
        %v7904 = vunpack.c.l.b16 %v7872
        %v7905 = vunpack.c.l.b16 %v7873
        %v7906 = vunpack.c.l.b16 %v7874
        %v7907 = vunpack.c.l.b16 %v7875
        %v7908 = vunpack.c.l.b16 %v7876
        %v7909 = vunpack.c.l.b16 %v7877
        %v7910 = vunpack.c.l.b16 %v7878
        %v7911 = vunpack.c.l.b16 %v7879
        %v7912 = vunpack.c.l.b16 %v7880
        %v7913 = vunpack.c.l.b16 %v7881
        %v7914 = vpack.c.b16 %v7899, %v7898
        %v7915 = vpack.c.b16 %v7901, %v7900
        %v7916 = vpack.c.b16 %v7903, %v7902
        %v7917 = vpack.c.b16 %v7905, %v7904
        %v7918 = vpack.c.b16 %v7907, %v7906
        %v7919 = vpack.c.b16 %v7909, %v7908
        %v7920 = vpack.c.b16 %v7911, %v7910
        %v7921 = vpack.c.b16 %v7913, %v7912
        %7930 = vmatprep.subr.bf16.mxu0 0
        %7931 = vmatpush1.bf16.msra.mxu0 %v7914
        %7932 = vmatprep.subr.bf16.mxu0 0
        %7933 = vmatpush1.bf16.msra.mxu0 %v7915
        %7934 = vmatprep.subr.bf16.mxu0 0
        %7935 = vmatpush1.bf16.msra.mxu0 %v7916
        %7936 = vmatprep.subr.bf16.mxu0 0
        %7937 = vmatpush1.bf16.msra.mxu0 %v7917
        %7938 = vmatprep.subr.bf16.mxu0 0
        %7939 = vmatpush1.bf16.msra.mxu0 %v7918
        %7940 = vmatprep.subr.bf16.mxu0 0
        %7941 = vmatpush1.bf16.msra.mxu0 %v7919
        %7942 = vmatprep.subr.bf16.mxu0 0
        %7943 = vmatpush1.bf16.msra.mxu0 %v7920
        %7944 = vmatprep.subr.bf16.mxu0 0
        %7945 = vmatpush1.bf16.msra.mxu0 %v7921
        %7946 = vmatprep.subr.bf16.mxu0 0
        %7947 = vmatpush1.bf16.msra.mxu0 0
        %7948 = vmatprep.subr.bf16.mxu0 0
        %7949 = vmatpush1.bf16.msra.mxu0 0
        %7950 = vmatprep.subr.bf16.mxu0 0
        %7951 = vmatpush1.bf16.msra.mxu0 0
        %7952 = vmatprep.subr.bf16.mxu0 0
        %7953 = vmatpush1.bf16.msra.mxu0 0
        %7954 = vmatprep.subr.bf16.mxu0 0
        %7955 = vmatpush1.bf16.msra.mxu0 0
        %7956 = vmatprep.subr.bf16.mxu0 0
        %7957 = vmatpush1.bf16.msra.mxu0 0
        %7958 = vmatprep.subr.bf16.mxu0 0
        %7959 = vmatpush1.bf16.msra.mxu0 0
        %7960 = vmatprep.subr.bf16.mxu0 0
        %7961 = vmatpush1.bf16.msra.mxu0 0
        %7962 = vmatprep.mubr.bf16.mxu0 0
        %7963 = vmatmul.mubr.bf16.gmra.mrb[0].mxu0 %v7552
        %v7964 = vpop.f32.mrb[0].mxu0
        %v7965 = vadd.f32 0.0, %v7964
        %v7966 = vpop.f32.mrb[0].mxu0
        %v7967 = vpop.f32.mrb[0].mxu0
        %v7968 = vadd.f32 0.0, %v7967
        %v7969 = vpop.f32.mrb[0].mxu0
        %7970 = vmatprep.mubr.bf16.mxu0 0
        %7971 = vmatmul.mubr.bf16.gmra.mrb[0].mxu0 %v7553
        %v7972 = vpop.f32.mrb[0].mxu0
        %v7973 = vadd.f32 0.0, %v7972
        %v7974 = vpop.f32.mrb[0].mxu0
        %v7975 = vpop.f32.mrb[0].mxu0
        %v7976 = vadd.f32 0.0, %v7975
        %v7977 = vpop.f32.mrb[0].mxu0
        %7978 = vmatprep.mubr.bf16.mxu0 0
        %7979 = vmatmul.mubr.bf16.gmra.mrb[0].mxu0 %v7554
        %v7980 = vpop.f32.mrb[0].mxu0
        %v7981 = vadd.f32 0.0, %v7980
        %v7982 = vpop.f32.mrb[0].mxu0
        %v7983 = vpop.f32.mrb[0].mxu0
        %v7984 = vadd.f32 0.0, %v7983
        %v7985 = vpop.f32.mrb[0].mxu0
        %7986 = vmatprep.mubr.bf16.mxu0 0
        %7987 = vmatmul.mubr.bf16.gmra.mrb[0].mxu0 %v7555
        %v7988 = vpop.f32.mrb[0].mxu0
        %v7989 = vadd.f32 0.0, %v7988
        %v7990 = vpop.f32.mrb[0].mxu0
        %v7991 = vpop.f32.mrb[0].mxu0
        %v7992 = vadd.f32 0.0, %v7991
        %v7993 = vpop.f32.mrb[0].mxu0
        %7994 = vmatprep.mubr.bf16.mxu0 0
        %7995 = vmatmul.mubr.bf16.gmra.mrb[0].mxu0 %v7556
        %v7996 = vpop.f32.mrb[0].mxu0
        %v7997 = vadd.f32 0.0, %v7996
        %v7998 = vpop.f32.mrb[0].mxu0
        %v7999 = vpop.f32.mrb[0].mxu0
        %v8000 = vadd.f32 0.0, %v7999
        %v8001 = vpop.f32.mrb[0].mxu0
        %8002 = vmatprep.mubr.bf16.mxu0 0
        %8003 = vmatmul.mubr.bf16.gmra.mrb[0].mxu0 %v7557
        %v8004 = vpop.f32.mrb[0].mxu0
        %v8005 = vadd.f32 0.0, %v8004
        %v8006 = vpop.f32.mrb[0].mxu0
        %v8007 = vpop.f32.mrb[0].mxu0
        %v8008 = vadd.f32 0.0, %v8007
        %v8009 = vpop.f32.mrb[0].mxu0
        %8010 = vmatprep.mubr.bf16.mxu0 0
        %8011 = vmatmul.mubr.bf16.gmra.mrb[0].mxu0 %v7558
        %v8012 = vpop.f32.mrb[0].mxu0
        %v8013 = vadd.f32 0.0, %v8012
        %v8014 = vpop.f32.mrb[0].mxu0
        %v8015 = vpop.f32.mrb[0].mxu0
        %v8016 = vadd.f32 0.0, %v8015
        %v8017 = vpop.f32.mrb[0].mxu0
        %8018 = vmatprep.mubr.bf16.mxu0 0
        %8019 = vmatmul.mubr.bf16.gmra.mrb[0].mxu0 %v7559
        %v8020 = vpop.f32.mrb[0].mxu0
        %v8021 = vadd.f32 0.0, %v8020
        %v8022 = vpop.f32.mrb[0].mxu0
        %v8023 = vpop.f32.mrb[0].mxu0
        %v8024 = vadd.f32 0.0, %v8023
        %v8025 = vpop.f32.mrb[0].mxu0
        %8026 = vdwg.mxu0
        %v8043 = vunpack.c.l.b16 %v7850
        %v8044 = vunpack.c.l.b16 %v7851
        %v8045 = vunpack.c.l.b16 %v7852
        %v8046 = vunpack.c.l.b16 %v7853
        %v8047 = vunpack.c.l.b16 %v7854
        %v8048 = vunpack.c.l.b16 %v7855
        %v8049 = vunpack.c.l.b16 %v7856
        %v8050 = vunpack.c.l.b16 %v7857
        %v8051 = vunpack.c.l.b16 %v7858
        %v8052 = vunpack.c.l.b16 %v7859
        %v8053 = vunpack.c.l.b16 %v7860
        %v8054 = vunpack.c.l.b16 %v7861
        %v8055 = vunpack.c.l.b16 %v7862
        %v8056 = vunpack.c.l.b16 %v7863
        %v8057 = vunpack.c.l.b16 %v7864
        %v8058 = vunpack.c.l.b16 %v7865
        %v8059 = vpack.c.b16 %v8044, %v8043
        %v8060 = vpack.c.b16 %v8046, %v8045
        %v8061 = vpack.c.b16 %v8048, %v8047
        %v8062 = vpack.c.b16 %v8050, %v8049
        %v8063 = vpack.c.b16 %v8052, %v8051
        %v8064 = vpack.c.b16 %v8054, %v8053
        %v8065 = vpack.c.b16 %v8056, %v8055
        %v8066 = vpack.c.b16 %v8058, %v8057
        %8075 = vmatprep.subr.bf16.mxu0 0
        %8076 = vmatpush1.bf16.msra.mxu0 %v8059
        %8077 = vmatprep.subr.bf16.mxu0 0
        %8078 = vmatpush1.bf16.msra.mxu0 %v8060
        %8079 = vmatprep.subr.bf16.mxu0 0
        %8080 = vmatpush1.bf16.msra.mxu0 %v8061
        %8081 = vmatprep.subr.bf16.mxu0 0
        %8082 = vmatpush1.bf16.msra.mxu0 %v8062
        %8083 = vmatprep.subr.bf16.mxu0 0
        %8084 = vmatpush1.bf16.msra.mxu0 %v8063
        %8085 = vmatprep.subr.bf16.mxu0 0
        %8086 = vmatpush1.bf16.msra.mxu0 %v8064
        %8087 = vmatprep.subr.bf16.mxu0 0
        %8088 = vmatpush1.bf16.msra.mxu0 %v8065
        %8089 = vmatprep.subr.bf16.mxu0 0
        %8090 = vmatpush1.bf16.msra.mxu0 %v8066
        %8091 = vmatprep.subr.bf16.mxu0 0
        %8092 = vmatpush1.bf16.msra.mxu0 0
        %8093 = vmatprep.subr.bf16.mxu0 0
        %8094 = vmatpush1.bf16.msra.mxu0 0
        %8095 = vmatprep.subr.bf16.mxu0 0
        %8096 = vmatpush1.bf16.msra.mxu0 0
        %8097 = vmatprep.subr.bf16.mxu0 0
        %8098 = vmatpush1.bf16.msra.mxu0 0
        %8099 = vmatprep.subr.bf16.mxu0 0
        %8100 = vmatpush1.bf16.msra.mxu0 0
        %8101 = vmatprep.subr.bf16.mxu0 0
        %8102 = vmatpush1.bf16.msra.mxu0 0
        %8103 = vmatprep.subr.bf16.mxu0 0
        %8104 = vmatpush1.bf16.msra.mxu0 0
        %8105 = vmatprep.subr.bf16.mxu0 0
        %8106 = vmatpush1.bf16.msra.mxu0 0
        %8107 = vmatprep.mubr.bf16.mxu0 0
        %8108 = vmatmul.mubr.bf16.gmra.mrb[0].mxu0 %v6932
        %v8109 = vpop.f32.mrb[0].mxu0
        %v8110 = vadd.f32 %v7965, %v8109
        %v8111 = vpop.f32.mrb[0].mxu0
        %v8112 = vpop.f32.mrb[0].mxu0
        %v8113 = vadd.f32 %v7968, %v8112
        %v8114 = vpop.f32.mrb[0].mxu0
        %8115 = vmatprep.mubr.bf16.mxu0 0
        %8116 = vmatmul.mubr.bf16.gmra.mrb[0].mxu0 %v6933
        %v8117 = vpop.f32.mrb[0].mxu0
        %v8118 = vadd.f32 %v7973, %v8117
        %v8119 = vpop.f32.mrb[0].mxu0
        %v8120 = vpop.f32.mrb[0].mxu0
        %v8121 = vadd.f32 %v7976, %v8120
        %v8122 = vpop.f32.mrb[0].mxu0
        %8123 = vmatprep.mubr.bf16.mxu0 0
        %8124 = vmatmul.mubr.bf16.gmra.mrb[0].mxu0 %v6934
        %v8125 = vpop.f32.mrb[0].mxu0
        %v8126 = vadd.f32 %v7981, %v8125
        %v8127 = vpop.f32.mrb[0].mxu0
        %v8128 = vpop.f32.mrb[0].mxu0
        %v8129 = vadd.f32 %v7984, %v8128
        %v8130 = vpop.f32.mrb[0].mxu0
        %8131 = vmatprep.mubr.bf16.mxu0 0
        %8132 = vmatmul.mubr.bf16.gmra.mrb[0].mxu0 %v6935
        %v8133 = vpop.f32.mrb[0].mxu0
        %v8134 = vadd.f32 %v7989, %v8133
        %v8135 = vpop.f32.mrb[0].mxu0
        %v8136 = vpop.f32.mrb[0].mxu0
        %v8137 = vadd.f32 %v7992, %v8136
        %v8138 = vpop.f32.mrb[0].mxu0
        %8139 = vmatprep.mubr.bf16.mxu0 0
        %8140 = vmatmul.mubr.bf16.gmra.mrb[0].mxu0 %v6936
        %v8141 = vpop.f32.mrb[0].mxu0
        %v8142 = vadd.f32 %v7997, %v8141
        %v8143 = vpop.f32.mrb[0].mxu0
        %v8144 = vpop.f32.mrb[0].mxu0
        %v8145 = vadd.f32 %v8000, %v8144
        %v8146 = vpop.f32.mrb[0].mxu0
        %8147 = vmatprep.mubr.bf16.mxu0 0
        %8148 = vmatmul.mubr.bf16.gmra.mrb[0].mxu0 %v6937
        %v8149 = vpop.f32.mrb[0].mxu0
        %v8150 = vadd.f32 %v8005, %v8149
        %v8151 = vpop.f32.mrb[0].mxu0
        %v8152 = vpop.f32.mrb[0].mxu0
        %v8153 = vadd.f32 %v8008, %v8152
        %v8154 = vpop.f32.mrb[0].mxu0
        %8155 = vmatprep.mubr.bf16.mxu0 0
        %8156 = vmatmul.mubr.bf16.gmra.mrb[0].mxu0 %v6938
        %v8157 = vpop.f32.mrb[0].mxu0
        %v8158 = vadd.f32 %v8013, %v8157
        %v8159 = vpop.f32.mrb[0].mxu0
        %v8160 = vpop.f32.mrb[0].mxu0
        %v8161 = vadd.f32 %v8016, %v8160
        %v8162 = vpop.f32.mrb[0].mxu0
        %8163 = vmatprep.mubr.bf16.mxu0 0
        %8164 = vmatmul.mubr.bf16.gmra.mrb[0].mxu0 %v6939
        %v8165 = vpop.f32.mrb[0].mxu0
        %v8166 = vadd.f32 %v8021, %v8165
        %v8167 = vpop.f32.mrb[0].mxu0
        %v8168 = vpop.f32.mrb[0].mxu0
        %v8169 = vadd.f32 %v8024, %v8168
        %v8170 = vpop.f32.mrb[0].mxu0
        %8171 = vdwg.mxu0
        %v8172 = vpack.c.bf16 %v3471, %v3470
        %v8173 = vpack.c.bf16 %v3473, %v3472
        %v8174 = vpack.c.bf16 %v3475, %v3474
        %v8175 = vpack.c.bf16 %v3477, %v3476
        %v8176 = vpack.c.bf16 %v3479, %v3478
        %v8177 = vpack.c.bf16 %v3481, %v3480
        %v8178 = vpack.c.bf16 %v3483, %v3482
        %v8179 = vpack.c.bf16 %v3485, %v3484
        %v8180 = vld [vmem:[%s3833] sm:$0xf]
        %v8181 = vld [vmem:[%s3833 + $0x4] sm:$0xf]
        %v8182 = vld [vmem:[%s3833 + $0x8] sm:$0xf]
        %v8183 = vld [vmem:[%s3833 + $0xc] sm:$0xf]
        %v8184 = vld [vmem:[%s3833 + $0x10] sm:$0xf]
        %v8185 = vld [vmem:[%s3833 + $0x14] sm:$0xf]
        %v8186 = vld [vmem:[%s3833 + $0x18] sm:$0xf]
        %v8187 = vld [vmem:[%s3833 + $0x1c] sm:$0xf]
        %v8188 = vld [vmem:[%s3833 + $0x20] sm:$0xf]
        %v8189 = vld [vmem:[%s3833 + $0x24] sm:$0xf]
        %v8190 = vld [vmem:[%s3833 + $0x28] sm:$0xf]
        %v8191 = vld [vmem:[%s3833 + $0x2c] sm:$0xf]
        %v8192 = vld [vmem:[%s3833 + $0x30] sm:$0xf]
        %v8193 = vld [vmem:[%s3833 + $0x34] sm:$0xf]
        %v8194 = vld [vmem:[%s3833 + $0x38] sm:$0xf]
        %v8195 = vld [vmem:[%s3833 + $0x3c] sm:$0xf]
        %v8212 = vunpack.c.l.b16 %v8180
        %v8213 = vunpack.c.l.b16 %v8181
        %v8214 = vunpack.c.l.b16 %v8182
        %v8215 = vunpack.c.l.b16 %v8183
        %v8216 = vunpack.c.l.b16 %v8184
        %v8217 = vunpack.c.l.b16 %v8185
        %v8218 = vunpack.c.l.b16 %v8186
        %v8219 = vunpack.c.l.b16 %v8187
        %v8220 = vunpack.c.l.b16 %v8188
        %v8221 = vunpack.c.l.b16 %v8189
        %v8222 = vunpack.c.l.b16 %v8190
        %v8223 = vunpack.c.l.b16 %v8191
        %v8224 = vunpack.c.l.b16 %v8192
        %v8225 = vunpack.c.l.b16 %v8193
        %v8226 = vunpack.c.l.b16 %v8194
        %v8227 = vunpack.c.l.b16 %v8195
        %v8228 = vpack.c.b16 %v8213, %v8212
        %v8229 = vpack.c.b16 %v8215, %v8214
        %v8230 = vpack.c.b16 %v8217, %v8216
        %v8231 = vpack.c.b16 %v8219, %v8218
        %v8232 = vpack.c.b16 %v8221, %v8220
        %v8233 = vpack.c.b16 %v8223, %v8222
        %v8234 = vpack.c.b16 %v8225, %v8224
        %v8235 = vpack.c.b16 %v8227, %v8226
        %8244 = vmatprep.subr.bf16.mxu0 0
        %8245 = vmatpush1.bf16.msra.mxu0 %v8228
        %8246 = vmatprep.subr.bf16.mxu0 0
        %8247 = vmatpush1.bf16.msra.mxu0 %v8229
        %8248 = vmatprep.subr.bf16.mxu0 0
        %8249 = vmatpush1.bf16.msra.mxu0 %v8230
        %8250 = vmatprep.subr.bf16.mxu0 0
        %8251 = vmatpush1.bf16.msra.mxu0 %v8231
        %8252 = vmatprep.subr.bf16.mxu0 0
        %8253 = vmatpush1.bf16.msra.mxu0 %v8232
        %8254 = vmatprep.subr.bf16.mxu0 0
        %8255 = vmatpush1.bf16.msra.mxu0 %v8233
        %8256 = vmatprep.subr.bf16.mxu0 0
        %8257 = vmatpush1.bf16.msra.mxu0 %v8234
        %8258 = vmatprep.subr.bf16.mxu0 0
        %8259 = vmatpush1.bf16.msra.mxu0 %v8235
        %8260 = vmatprep.subr.bf16.mxu0 0
        %8261 = vmatpush1.bf16.msra.mxu0 0
        %8262 = vmatprep.subr.bf16.mxu0 0
        %8263 = vmatpush1.bf16.msra.mxu0 0
        %8264 = vmatprep.subr.bf16.mxu0 0
        %8265 = vmatpush1.bf16.msra.mxu0 0
        %8266 = vmatprep.subr.bf16.mxu0 0
        %8267 = vmatpush1.bf16.msra.mxu0 0
        %8268 = vmatprep.subr.bf16.mxu0 0
        %8269 = vmatpush1.bf16.msra.mxu0 0
        %8270 = vmatprep.subr.bf16.mxu0 0
        %8271 = vmatpush1.bf16.msra.mxu0 0
        %8272 = vmatprep.subr.bf16.mxu0 0
        %8273 = vmatpush1.bf16.msra.mxu0 0
        %8274 = vmatprep.subr.bf16.mxu0 0
        %8275 = vmatpush1.bf16.msra.mxu0 0
        %8276 = vmatprep.mubr.bf16.mxu0 0
        %8277 = vmatmul.mubr.bf16.gmra.mrb[0].mxu0 %v8172
        %v8278 = vpop.f32.mrb[0].mxu0
        %v8279 = vadd.f32 0.0, %v8278
        %v8280 = vpop.f32.mrb[0].mxu0
        %v8281 = vpop.f32.mrb[0].mxu0
        %v8282 = vadd.f32 0.0, %v8281
        %v8283 = vpop.f32.mrb[0].mxu0
        %8284 = vmatprep.mubr.bf16.mxu0 0
        %8285 = vmatmul.mubr.bf16.gmra.mrb[0].mxu0 %v8173
        %v8286 = vpop.f32.mrb[0].mxu0
        %v8287 = vadd.f32 0.0, %v8286
        %v8288 = vpop.f32.mrb[0].mxu0
        %v8289 = vpop.f32.mrb[0].mxu0
        %v8290 = vadd.f32 0.0, %v8289
        %v8291 = vpop.f32.mrb[0].mxu0
        %8292 = vmatprep.mubr.bf16.mxu0 0
        %8293 = vmatmul.mubr.bf16.gmra.mrb[0].mxu0 %v8174
        %v8294 = vpop.f32.mrb[0].mxu0
        %v8295 = vadd.f32 0.0, %v8294
        %v8296 = vpop.f32.mrb[0].mxu0
        %v8297 = vpop.f32.mrb[0].mxu0
        %v8298 = vadd.f32 0.0, %v8297
        %v8299 = vpop.f32.mrb[0].mxu0
        %8300 = vmatprep.mubr.bf16.mxu0 0
        %8301 = vmatmul.mubr.bf16.gmra.mrb[0].mxu0 %v8175
        %v8302 = vpop.f32.mrb[0].mxu0
        %v8303 = vadd.f32 0.0, %v8302
        %v8304 = vpop.f32.mrb[0].mxu0
        %v8305 = vpop.f32.mrb[0].mxu0
        %v8306 = vadd.f32 0.0, %v8305
        %v8307 = vpop.f32.mrb[0].mxu0
        %8308 = vmatprep.mubr.bf16.mxu0 0
        %8309 = vmatmul.mubr.bf16.gmra.mrb[0].mxu0 %v8176
        %v8310 = vpop.f32.mrb[0].mxu0
        %v8311 = vadd.f32 0.0, %v8310
        %v8312 = vpop.f32.mrb[0].mxu0
        %v8313 = vpop.f32.mrb[0].mxu0
        %v8314 = vadd.f32 0.0, %v8313
        %v8315 = vpop.f32.mrb[0].mxu0
        %8316 = vmatprep.mubr.bf16.mxu0 0
        %8317 = vmatmul.mubr.bf16.gmra.mrb[0].mxu0 %v8177
        %v8318 = vpop.f32.mrb[0].mxu0
        %v8319 = vadd.f32 0.0, %v8318
        %v8320 = vpop.f32.mrb[0].mxu0
        %v8321 = vpop.f32.mrb[0].mxu0
        %v8322 = vadd.f32 0.0, %v8321
        %v8323 = vpop.f32.mrb[0].mxu0
        %8324 = vmatprep.mubr.bf16.mxu0 0
        %8325 = vmatmul.mubr.bf16.gmra.mrb[0].mxu0 %v8178
        %v8326 = vpop.f32.mrb[0].mxu0
        %v8327 = vadd.f32 0.0, %v8326
        %v8328 = vpop.f32.mrb[0].mxu0
        %v8329 = vpop.f32.mrb[0].mxu0
        %v8330 = vadd.f32 0.0, %v8329
        %v8331 = vpop.f32.mrb[0].mxu0
        %8332 = vmatprep.mubr.bf16.mxu0 0
        %8333 = vmatmul.mubr.bf16.gmra.mrb[0].mxu0 %v8179
        %v8334 = vpop.f32.mrb[0].mxu0
        %v8335 = vadd.f32 0.0, %v8334
        %v8336 = vpop.f32.mrb[0].mxu0
        %v8337 = vpop.f32.mrb[0].mxu0
        %v8338 = vadd.f32 0.0, %v8337
        %v8339 = vpop.f32.mrb[0].mxu0
        %8340 = vdwg.mxu0
        %v8341 = vadd.f32 %v8110, %v8279
        %v8342 = vadd.f32 %v8113, %v8282
        %v8343 = vadd.f32 %v8118, %v8287
        %v8344 = vadd.f32 %v8121, %v8290
        %v8345 = vadd.f32 %v8126, %v8295
        %v8346 = vadd.f32 %v8129, %v8298
        %v8347 = vadd.f32 %v8134, %v8303
        %v8348 = vadd.f32 %v8137, %v8306
        %v8349 = vadd.f32 %v8142, %v8311
        %v8350 = vadd.f32 %v8145, %v8314
        %v8351 = vadd.f32 %v8150, %v8319
        %v8352 = vadd.f32 %v8153, %v8322
        %v8353 = vadd.f32 %v8158, %v8327
        %v8354 = vadd.f32 %v8161, %v8330
        %v8355 = vadd.f32 %v8166, %v8335
        %v8356 = vadd.f32 %v8169, %v8338
        %v8357 = vadd.f32 %v8341, %v4015
        %v8358 = vadd.f32 %v8342, %v4015
        %v8359 = vadd.f32 %v8343, %v4015
        %v8360 = vadd.f32 %v8344, %v4015
        %v8361 = vadd.f32 %v8345, %v4015
        %v8362 = vadd.f32 %v8346, %v4015
        %v8363 = vadd.f32 %v8347, %v4015
        %v8364 = vadd.f32 %v8348, %v4015
        %v8365 = vadd.f32 %v8349, %v4015
        %v8366 = vadd.f32 %v8350, %v4015
        %v8367 = vadd.f32 %v8351, %v4015
        %v8368 = vadd.f32 %v8352, %v4015
        %v8369 = vadd.f32 %v8353, %v4015
        %v8370 = vadd.f32 %v8354, %v4015
        %v8371 = vadd.f32 %v8355, %v4015
        %v8372 = vadd.f32 %v8356, %v4015
        %v8373 = vsub.f32 0.0, %v8357
        %v8374 = vsub.f32 0.0, %v8358
        %v8375 = vsub.f32 0.0, %v8359
        %v8376 = vsub.f32 0.0, %v8360
        %v8377 = vsub.f32 0.0, %v8361
        %v8378 = vsub.f32 0.0, %v8362
        %v8379 = vsub.f32 0.0, %v8363
        %v8380 = vsub.f32 0.0, %v8364
        %v8381 = vsub.f32 0.0, %v8365
        %v8382 = vsub.f32 0.0, %v8366
        %v8383 = vsub.f32 0.0, %v8367
        %v8384 = vsub.f32 0.0, %v8368
        %v8385 = vsub.f32 0.0, %v8369
        %v8386 = vsub.f32 0.0, %v8370
        %v8387 = vsub.f32 0.0, %v8371
        %v8388 = vsub.f32 0.0, %v8372
        %v8389 = vmul.f32 %v8373, 1.442695
        %v8390 = vpow.pop %v8389
        %v8391 = vmul.f32 %v8374, 1.442695
        %v8392 = vpow.pop %v8391
        %v8393 = vmul.f32 %v8375, 1.442695
        %v8394 = vpow.pop %v8393
        %v8395 = vmul.f32 %v8376, 1.442695
        %v8396 = vpow.pop %v8395
        %v8397 = vmul.f32 %v8377, 1.442695
        %v8398 = vpow.pop %v8397
        %v8399 = vmul.f32 %v8378, 1.442695
        %v8400 = vpow.pop %v8399
        %v8401 = vmul.f32 %v8379, 1.442695
        %v8402 = vpow.pop %v8401
        %v8403 = vmul.f32 %v8380, 1.442695
        %v8404 = vpow.pop %v8403
        %v8405 = vmul.f32 %v8381, 1.442695
        %v8406 = vpow.pop %v8405
        %v8407 = vmul.f32 %v8382, 1.442695
        %v8408 = vpow.pop %v8407
        %v8409 = vmul.f32 %v8383, 1.442695
        %v8410 = vpow.pop %v8409
        %v8411 = vmul.f32 %v8384, 1.442695
        %v8412 = vpow.pop %v8411
        %v8413 = vmul.f32 %v8385, 1.442695
        %v8414 = vpow.pop %v8413
        %v8415 = vmul.f32 %v8386, 1.442695
        %v8416 = vpow.pop %v8415
        %v8417 = vmul.f32 %v8387, 1.442695
        %v8418 = vpow.pop %v8417
        %v8419 = vmul.f32 %v8388, 1.442695
        %v8420 = vpow.pop %v8419
        %v8421 = vadd.f32 %v8390, 1.0
        %v8422 = vadd.f32 %v8392, 1.0
        %v8423 = vadd.f32 %v8394, 1.0
        %v8424 = vadd.f32 %v8396, 1.0
        %v8425 = vadd.f32 %v8398, 1.0
        %v8426 = vadd.f32 %v8400, 1.0
        %v8427 = vadd.f32 %v8402, 1.0
        %v8428 = vadd.f32 %v8404, 1.0
        %v8429 = vadd.f32 %v8406, 1.0
        %v8430 = vadd.f32 %v8408, 1.0
        %v8431 = vadd.f32 %v8410, 1.0
        %v8432 = vadd.f32 %v8412, 1.0
        %v8433 = vadd.f32 %v8414, 1.0
        %v8434 = vadd.f32 %v8416, 1.0
        %v8435 = vadd.f32 %v8418, 1.0
        %v8436 = vadd.f32 %v8420, 1.0
        %v8437 = vrcp.pop %v8421
        %v8438 = vrcp.pop %v8422
        %v8439 = vrcp.pop %v8423
        %v8440 = vrcp.pop %v8424
        %v8441 = vrcp.pop %v8425
        %v8442 = vrcp.pop %v8426
        %v8443 = vrcp.pop %v8427
        %v8444 = vrcp.pop %v8428
        %v8445 = vrcp.pop %v8429
        %v8446 = vrcp.pop %v8430
        %v8447 = vrcp.pop %v8431
        %v8448 = vrcp.pop %v8432
        %v8449 = vrcp.pop %v8433
        %v8450 = vrcp.pop %v8434
        %v8451 = vrcp.pop %v8435
        %v8452 = vrcp.pop %v8436
        %s8453 = scalar_lea.vmem %s376, 896 [#allocation3]
        %8454 = vst.msk [vmem:[%s8453] sm:$0xff] %vm4113, %v8437
        %8455 = vst.msk [vmem:[%s8453 + $0x8] sm:$0xff] %vm4113, %v8438
        %8456 = vst.msk [vmem:[%s8453 + $0x10] sm:$0xff] %vm4113, %v8439
        %8457 = vst.msk [vmem:[%s8453 + $0x18] sm:$0xff] %vm4113, %v8440
        %8458 = vst.msk [vmem:[%s8453 + $0x20] sm:$0xff] %vm4113, %v8441
        %8459 = vst.msk [vmem:[%s8453 + $0x28] sm:$0xff] %vm4113, %v8442
        %8460 = vst.msk [vmem:[%s8453 + $0x30] sm:$0xff] %vm4113, %v8443
        %8461 = vst.msk [vmem:[%s8453 + $0x38] sm:$0xff] %vm4113, %v8444
        %8462 = vst.msk [vmem:[%s8453 + $0x40] sm:$0xff] %vm4113, %v8445
        %8463 = vst.msk [vmem:[%s8453 + $0x48] sm:$0xff] %vm4113, %v8446
        %8464 = vst.msk [vmem:[%s8453 + $0x50] sm:$0xff] %vm4113, %v8447
        %8465 = vst.msk [vmem:[%s8453 + $0x58] sm:$0xff] %vm4113, %v8448
        %8466 = vst.msk [vmem:[%s8453 + $0x60] sm:$0xff] %vm4113, %v8449
        %8467 = vst.msk [vmem:[%s8453 + $0x68] sm:$0xff] %vm4113, %v8450
        %8468 = vst.msk [vmem:[%s8453 + $0x70] sm:$0xff] %vm4113, %v8451
        %8469 = vst.msk [vmem:[%s8453 + $0x78] sm:$0xff] %vm4113, %v8452
        %s8470 = sand.u32 %s266, 1
        %s8471 = sand.u32 %s266, 1
        %s8472 = smul.addr %s8471, 1024
        %s8473 = scalar_lea.vmem [#allocation3], %s8472
        // Predicated region
        $region65: #{decoder_forward.1} parent=63 // pred_check
          %p8474 = pneg %p276
        $region66: #{decoder_forward.1} parent=63 // pred_check_branch
          %8476 = sbr.rel (%p8474) target = $region68
        $region67: #{decoder_forward.1} parent=63 // pred_region
          %s8477 = smul.u32 16, %s22
          %s8478 = smul.addr %s8477, 8
          %s8479 = scalar_lea.vmem %s11, %s8478
          // Predicated region
          $region69: #{decoder_forward.1} parent=67 // pred_check
            _
          $region70: #{decoder_forward.1} parent=67 // pred_check_branch
            %8481 = sbr.rel (0) target = $region72
          $region71: #{decoder_forward.1} parent=67 // pred_region
            // Predicated region
            $region73: #{decoder_forward.1} parent=71 // pred_check
              _
            $region74: #{decoder_forward.1} parent=71 // pred_check_branch
              %8483 = sbr.rel (0) target = $region76
            $region75: #{decoder_forward.1} parent=71 // pred_region
              // Predicated region
              $region88: #{decoder_forward.1} parent=75 // pred_check
                _
              $region89: #{decoder_forward.1} parent=75 // pred_check_branch
                %8752 = sbr.rel (0) target = $region91
              $region90: #{decoder_forward.1} parent=75 // pred_region
                loop: start=0, step=1, limit=1
                $region92: #{decoder_forward.1} parent=90 // loop_pre_header
                  _
                $region93: #{decoder_forward.1} parent=90 // loop_header
                  %s8754 = sphi 0, %s8758
                  %p8755 = scmp.ge.s32.totalorder %s8754, 1
                  %s8759 = sphi %s8473, %s8473
                  %s8760 = sphi %s8479, %s8479
                $region94: #{decoder_forward.1} parent=90 // loop_header_branch
                  %8757 = sbr.rel (%p8755) target = $region98
                $region95: #{decoder_forward.1} parent=90 // loop_body
                  %v8761 = vld [vmem:[%s8759] sm:$0xff]
                  %8762 = vst [vmem:[%s8760] sm:$0xff] %v8761
                  %v8763 = vld [vmem:[%s8759 + $0x8] sm:$0xff]
                  %8764 = vst [vmem:[%s8760 + $0x8] sm:$0xff] %v8763
                  %v8765 = vld [vmem:[%s8759 + $0x10] sm:$0xff]
                  %8766 = vst [vmem:[%s8760 + $0x10] sm:$0xff] %v8765
                  %v8767 = vld [vmem:[%s8759 + $0x18] sm:$0xff]
                  %8768 = vst [vmem:[%s8760 + $0x18] sm:$0xff] %v8767
                  %v8769 = vld [vmem:[%s8759 + $0x20] sm:$0xff]
                  %8770 = vst [vmem:[%s8760 + $0x20] sm:$0xff] %v8769
                  %v8771 = vld [vmem:[%s8759 + $0x28] sm:$0xff]
                  %8772 = vst [vmem:[%s8760 + $0x28] sm:$0xff] %v8771
                  %v8773 = vld [vmem:[%s8759 + $0x30] sm:$0xff]
                  %8774 = vst [vmem:[%s8760 + $0x30] sm:$0xff] %v8773
                  %v8775 = vld [vmem:[%s8759 + $0x38] sm:$0xff]
                  %8776 = vst [vmem:[%s8760 + $0x38] sm:$0xff] %v8775
                  %v8777 = vld [vmem:[%s8759 + $0x40] sm:$0xff]
                  %8778 = vst [vmem:[%s8760 + $0x40] sm:$0xff] %v8777
                  %v8779 = vld [vmem:[%s8759 + $0x48] sm:$0xff]
                  %8780 = vst [vmem:[%s8760 + $0x48] sm:$0xff] %v8779
                  %v8781 = vld [vmem:[%s8759 + $0x50] sm:$0xff]
                  %8782 = vst [vmem:[%s8760 + $0x50] sm:$0xff] %v8781
                  %v8783 = vld [vmem:[%s8759 + $0x58] sm:$0xff]
                  %8784 = vst [vmem:[%s8760 + $0x58] sm:$0xff] %v8783
                  %v8785 = vld [vmem:[%s8759 + $0x60] sm:$0xff]
                  %8786 = vst [vmem:[%s8760 + $0x60] sm:$0xff] %v8785
                  %v8787 = vld [vmem:[%s8759 + $0x68] sm:$0xff]
                  %8788 = vst [vmem:[%s8760 + $0x68] sm:$0xff] %v8787
                  %v8789 = vld [vmem:[%s8759 + $0x70] sm:$0xff]
                  %8790 = vst [vmem:[%s8760 + $0x70] sm:$0xff] %v8789
                  %v8791 = vld [vmem:[%s8759 + $0x78] sm:$0xff]
                  %8792 = vst [vmem:[%s8760 + $0x78] sm:$0xff] %v8791
                  %v8793 = vld [vmem:[%s8759 + $0x80] sm:$0xff]
                  %8794 = vst [vmem:[%s8760 + $0x100] sm:$0xff] %v8793
                  %v8795 = vld [vmem:[%s8759 + $0x88] sm:$0xff]
                  %8796 = vst [vmem:[%s8760 + $0x108] sm:$0xff] %v8795
                  %v8797 = vld [vmem:[%s8759 + $0x90] sm:$0xff]
                  %8798 = vst [vmem:[%s8760 + $0x110] sm:$0xff] %v8797
                  %v8799 = vld [vmem:[%s8759 + $0x98] sm:$0xff]
                  %8800 = vst [vmem:[%s8760 + $0x118] sm:$0xff] %v8799
                  %v8801 = vld [vmem:[%s8759 + $0xa0] sm:$0xff]
                  %8802 = vst [vmem:[%s8760 + $0x120] sm:$0xff] %v8801
                  %v8803 = vld [vmem:[%s8759 + $0xa8] sm:$0xff]
                  %8804 = vst [vmem:[%s8760 + $0x128] sm:$0xff] %v8803
                  %v8805 = vld [vmem:[%s8759 + $0xb0] sm:$0xff]
                  %8806 = vst [vmem:[%s8760 + $0x130] sm:$0xff] %v8805
                  %v8807 = vld [vmem:[%s8759 + $0xb8] sm:$0xff]
                  %8808 = vst [vmem:[%s8760 + $0x138] sm:$0xff] %v8807
                  %v8809 = vld [vmem:[%s8759 + $0xc0] sm:$0xff]
                  %8810 = vst [vmem:[%s8760 + $0x140] sm:$0xff] %v8809
                  %v8811 = vld [vmem:[%s8759 + $0xc8] sm:$0xff]
                  %8812 = vst [vmem:[%s8760 + $0x148] sm:$0xff] %v8811
                  %v8813 = vld [vmem:[%s8759 + $0xd0] sm:$0xff]
                  %8814 = vst [vmem:[%s8760 + $0x150] sm:$0xff] %v8813
                  %v8815 = vld [vmem:[%s8759 + $0xd8] sm:$0xff]
                  %8816 = vst [vmem:[%s8760 + $0x158] sm:$0xff] %v8815
                  %v8817 = vld [vmem:[%s8759 + $0xe0] sm:$0xff]
                  %8818 = vst [vmem:[%s8760 + $0x160] sm:$0xff] %v8817
                  %v8819 = vld [vmem:[%s8759 + $0xe8] sm:$0xff]
                  %8820 = vst [vmem:[%s8760 + $0x168] sm:$0xff] %v8819
                  %v8821 = vld [vmem:[%s8759 + $0xf0] sm:$0xff]
                  %8822 = vst [vmem:[%s8760 + $0x170] sm:$0xff] %v8821
                  %v8823 = vld [vmem:[%s8759 + $0xf8] sm:$0xff]
                  %8824 = vst [vmem:[%s8760 + $0x178] sm:$0xff] %v8823
                  %v8825 = vld [vmem:[%s8759 + $0x100] sm:$0xff]
                  %8826 = vst [vmem:[%s8760 + $0x200] sm:$0xff] %v8825
                  %v8827 = vld [vmem:[%s8759 + $0x108] sm:$0xff]
                  %8828 = vst [vmem:[%s8760 + $0x208] sm:$0xff] %v8827
                  %v8829 = vld [vmem:[%s8759 + $0x110] sm:$0xff]
                  %8830 = vst [vmem:[%s8760 + $0x210] sm:$0xff] %v8829
                  %v8831 = vld [vmem:[%s8759 + $0x118] sm:$0xff]
                  %8832 = vst [vmem:[%s8760 + $0x218] sm:$0xff] %v8831
                  %v8833 = vld [vmem:[%s8759 + $0x120] sm:$0xff]
                  %8834 = vst [vmem:[%s8760 + $0x220] sm:$0xff] %v8833
                  %v8835 = vld [vmem:[%s8759 + $0x128] sm:$0xff]
                  %8836 = vst [vmem:[%s8760 + $0x228] sm:$0xff] %v8835
                  %v8837 = vld [vmem:[%s8759 + $0x130] sm:$0xff]
                  %8838 = vst [vmem:[%s8760 + $0x230] sm:$0xff] %v8837
                  %v8839 = vld [vmem:[%s8759 + $0x138] sm:$0xff]
                  %8840 = vst [vmem:[%s8760 + $0x238] sm:$0xff] %v8839
                  %v8841 = vld [vmem:[%s8759 + $0x140] sm:$0xff]
                  %8842 = vst [vmem:[%s8760 + $0x240] sm:$0xff] %v8841
                  %v8843 = vld [vmem:[%s8759 + $0x148] sm:$0xff]
                  %8844 = vst [vmem:[%s8760 + $0x248] sm:$0xff] %v8843
                  %v8845 = vld [vmem:[%s8759 + $0x150] sm:$0xff]
                  %8846 = vst [vmem:[%s8760 + $0x250] sm:$0xff] %v8845
                  %v8847 = vld [vmem:[%s8759 + $0x158] sm:$0xff]
                  %8848 = vst [vmem:[%s8760 + $0x258] sm:$0xff] %v8847
                  %v8849 = vld [vmem:[%s8759 + $0x160] sm:$0xff]
                  %8850 = vst [vmem:[%s8760 + $0x260] sm:$0xff] %v8849
                  %v8851 = vld [vmem:[%s8759 + $0x168] sm:$0xff]
                  %8852 = vst [vmem:[%s8760 + $0x268] sm:$0xff] %v8851
                  %v8853 = vld [vmem:[%s8759 + $0x170] sm:$0xff]
                  %8854 = vst [vmem:[%s8760 + $0x270] sm:$0xff] %v8853
                  %v8855 = vld [vmem:[%s8759 + $0x178] sm:$0xff]
                  %8856 = vst [vmem:[%s8760 + $0x278] sm:$0xff] %v8855
                  %v8857 = vld [vmem:[%s8759 + $0x180] sm:$0xff]
                  %8858 = vst [vmem:[%s8760 + $0x300] sm:$0xff] %v8857
                  %v8859 = vld [vmem:[%s8759 + $0x188] sm:$0xff]
                  %8860 = vst [vmem:[%s8760 + $0x308] sm:$0xff] %v8859
                  %v8861 = vld [vmem:[%s8759 + $0x190] sm:$0xff]
                  %8862 = vst [vmem:[%s8760 + $0x310] sm:$0xff] %v8861
                  %v8863 = vld [vmem:[%s8759 + $0x198] sm:$0xff]
                  %8864 = vst [vmem:[%s8760 + $0x318] sm:$0xff] %v8863
                  %v8865 = vld [vmem:[%s8759 + $0x1a0] sm:$0xff]
                  %8866 = vst [vmem:[%s8760 + $0x320] sm:$0xff] %v8865
                  %v8867 = vld [vmem:[%s8759 + $0x1a8] sm:$0xff]
                  %8868 = vst [vmem:[%s8760 + $0x328] sm:$0xff] %v8867
                  %v8869 = vld [vmem:[%s8759 + $0x1b0] sm:$0xff]
                  %8870 = vst [vmem:[%s8760 + $0x330] sm:$0xff] %v8869
                  %v8871 = vld [vmem:[%s8759 + $0x1b8] sm:$0xff]
                  %8872 = vst [vmem:[%s8760 + $0x338] sm:$0xff] %v8871
                  %v8873 = vld [vmem:[%s8759 + $0x1c0] sm:$0xff]
                  %8874 = vst [vmem:[%s8760 + $0x340] sm:$0xff] %v8873
                  %v8875 = vld [vmem:[%s8759 + $0x1c8] sm:$0xff]
                  %8876 = vst [vmem:[%s8760 + $0x348] sm:$0xff] %v8875
                  %v8877 = vld [vmem:[%s8759 + $0x1d0] sm:$0xff]
                  %8878 = vst [vmem:[%s8760 + $0x350] sm:$0xff] %v8877
                  %v8879 = vld [vmem:[%s8759 + $0x1d8] sm:$0xff]
                  %8880 = vst [vmem:[%s8760 + $0x358] sm:$0xff] %v8879
                  %v8881 = vld [vmem:[%s8759 + $0x1e0] sm:$0xff]
                  %8882 = vst [vmem:[%s8760 + $0x360] sm:$0xff] %v8881
                  %v8883 = vld [vmem:[%s8759 + $0x1e8] sm:$0xff]
                  %8884 = vst [vmem:[%s8760 + $0x368] sm:$0xff] %v8883
                  %v8885 = vld [vmem:[%s8759 + $0x1f0] sm:$0xff]
                  %8886 = vst [vmem:[%s8760 + $0x370] sm:$0xff] %v8885
                  %v8887 = vld [vmem:[%s8759 + $0x1f8] sm:$0xff]
                  %8888 = vst [vmem:[%s8760 + $0x378] sm:$0xff] %v8887
                  %v8889 = vld [vmem:[%s8759 + $0x200] sm:$0xff]
                  %8890 = vst [vmem:[%s8760 + $0x400] sm:$0xff] %v8889
                  %v8891 = vld [vmem:[%s8759 + $0x208] sm:$0xff]
                  %8892 = vst [vmem:[%s8760 + $0x408] sm:$0xff] %v8891
                  %v8893 = vld [vmem:[%s8759 + $0x210] sm:$0xff]
                  %8894 = vst [vmem:[%s8760 + $0x410] sm:$0xff] %v8893
                  %v8895 = vld [vmem:[%s8759 + $0x218] sm:$0xff]
                  %8896 = vst [vmem:[%s8760 + $0x418] sm:$0xff] %v8895
                  %v8897 = vld [vmem:[%s8759 + $0x220] sm:$0xff]
                  %8898 = vst [vmem:[%s8760 + $0x420] sm:$0xff] %v8897
                  %v8899 = vld [vmem:[%s8759 + $0x228] sm:$0xff]
                  %8900 = vst [vmem:[%s8760 + $0x428] sm:$0xff] %v8899
                  %v8901 = vld [vmem:[%s8759 + $0x230] sm:$0xff]
                  %8902 = vst [vmem:[%s8760 + $0x430] sm:$0xff] %v8901
                  %v8903 = vld [vmem:[%s8759 + $0x238] sm:$0xff]
                  %8904 = vst [vmem:[%s8760 + $0x438] sm:$0xff] %v8903
                  %v8905 = vld [vmem:[%s8759 + $0x240] sm:$0xff]
                  %8906 = vst [vmem:[%s8760 + $0x440] sm:$0xff] %v8905
                  %v8907 = vld [vmem:[%s8759 + $0x248] sm:$0xff]
                  %8908 = vst [vmem:[%s8760 + $0x448] sm:$0xff] %v8907
                  %v8909 = vld [vmem:[%s8759 + $0x250] sm:$0xff]
                  %8910 = vst [vmem:[%s8760 + $0x450] sm:$0xff] %v8909
                  %v8911 = vld [vmem:[%s8759 + $0x258] sm:$0xff]
                  %8912 = vst [vmem:[%s8760 + $0x458] sm:$0xff] %v8911
                  %v8913 = vld [vmem:[%s8759 + $0x260] sm:$0xff]
                  %8914 = vst [vmem:[%s8760 + $0x460] sm:$0xff] %v8913
                  %v8915 = vld [vmem:[%s8759 + $0x268] sm:$0xff]
                  %8916 = vst [vmem:[%s8760 + $0x468] sm:$0xff] %v8915
                  %v8917 = vld [vmem:[%s8759 + $0x270] sm:$0xff]
                  %8918 = vst [vmem:[%s8760 + $0x470] sm:$0xff] %v8917
                  %v8919 = vld [vmem:[%s8759 + $0x278] sm:$0xff]
                  %8920 = vst [vmem:[%s8760 + $0x478] sm:$0xff] %v8919
                  %v8921 = vld [vmem:[%s8759 + $0x280] sm:$0xff]
                  %8922 = vst [vmem:[%s8760 + $0x500] sm:$0xff] %v8921
                  %v8923 = vld [vmem:[%s8759 + $0x288] sm:$0xff]
                  %8924 = vst [vmem:[%s8760 + $0x508] sm:$0xff] %v8923
                  %v8925 = vld [vmem:[%s8759 + $0x290] sm:$0xff]
                  %8926 = vst [vmem:[%s8760 + $0x510] sm:$0xff] %v8925
                  %v8927 = vld [vmem:[%s8759 + $0x298] sm:$0xff]
                  %8928 = vst [vmem:[%s8760 + $0x518] sm:$0xff] %v8927
                  %v8929 = vld [vmem:[%s8759 + $0x2a0] sm:$0xff]
                  %8930 = vst [vmem:[%s8760 + $0x520] sm:$0xff] %v8929
                  %v8931 = vld [vmem:[%s8759 + $0x2a8] sm:$0xff]
                  %8932 = vst [vmem:[%s8760 + $0x528] sm:$0xff] %v8931
                  %v8933 = vld [vmem:[%s8759 + $0x2b0] sm:$0xff]
                  %8934 = vst [vmem:[%s8760 + $0x530] sm:$0xff] %v8933
                  %v8935 = vld [vmem:[%s8759 + $0x2b8] sm:$0xff]
                  %8936 = vst [vmem:[%s8760 + $0x538] sm:$0xff] %v8935
                  %v8937 = vld [vmem:[%s8759 + $0x2c0] sm:$0xff]
                  %8938 = vst [vmem:[%s8760 + $0x540] sm:$0xff] %v8937
                  %v8939 = vld [vmem:[%s8759 + $0x2c8] sm:$0xff]
                  %8940 = vst [vmem:[%s8760 + $0x548] sm:$0xff] %v8939
                  %v8941 = vld [vmem:[%s8759 + $0x2d0] sm:$0xff]
                  %8942 = vst [vmem:[%s8760 + $0x550] sm:$0xff] %v8941
                  %v8943 = vld [vmem:[%s8759 + $0x2d8] sm:$0xff]
                  %8944 = vst [vmem:[%s8760 + $0x558] sm:$0xff] %v8943
                  %v8945 = vld [vmem:[%s8759 + $0x2e0] sm:$0xff]
                  %8946 = vst [vmem:[%s8760 + $0x560] sm:$0xff] %v8945
                  %v8947 = vld [vmem:[%s8759 + $0x2e8] sm:$0xff]
                  %8948 = vst [vmem:[%s8760 + $0x568] sm:$0xff] %v8947
                  %v8949 = vld [vmem:[%s8759 + $0x2f0] sm:$0xff]
                  %8950 = vst [vmem:[%s8760 + $0x570] sm:$0xff] %v8949
                  %v8951 = vld [vmem:[%s8759 + $0x2f8] sm:$0xff]
                  %8952 = vst [vmem:[%s8760 + $0x578] sm:$0xff] %v8951
                  %v8953 = vld [vmem:[%s8759 + $0x300] sm:$0xff]
                  %8954 = vst [vmem:[%s8760 + $0x600] sm:$0xff] %v8953
                  %v8955 = vld [vmem:[%s8759 + $0x308] sm:$0xff]
                  %8956 = vst [vmem:[%s8760 + $0x608] sm:$0xff] %v8955
                  %v8957 = vld [vmem:[%s8759 + $0x310] sm:$0xff]
                  %8958 = vst [vmem:[%s8760 + $0x610] sm:$0xff] %v8957
                  %v8959 = vld [vmem:[%s8759 + $0x318] sm:$0xff]
                  %8960 = vst [vmem:[%s8760 + $0x618] sm:$0xff] %v8959
                  %v8961 = vld [vmem:[%s8759 + $0x320] sm:$0xff]
                  %8962 = vst [vmem:[%s8760 + $0x620] sm:$0xff] %v8961
                  %v8963 = vld [vmem:[%s8759 + $0x328] sm:$0xff]
                  %8964 = vst [vmem:[%s8760 + $0x628] sm:$0xff] %v8963
                  %v8965 = vld [vmem:[%s8759 + $0x330] sm:$0xff]
                  %8966 = vst [vmem:[%s8760 + $0x630] sm:$0xff] %v8965
                  %v8967 = vld [vmem:[%s8759 + $0x338] sm:$0xff]
                  %8968 = vst [vmem:[%s8760 + $0x638] sm:$0xff] %v8967
                  %v8969 = vld [vmem:[%s8759 + $0x340] sm:$0xff]
                  %8970 = vst [vmem:[%s8760 + $0x640] sm:$0xff] %v8969
                  %v8971 = vld [vmem:[%s8759 + $0x348] sm:$0xff]
                  %8972 = vst [vmem:[%s8760 + $0x648] sm:$0xff] %v8971
                  %v8973 = vld [vmem:[%s8759 + $0x350] sm:$0xff]
                  %8974 = vst [vmem:[%s8760 + $0x650] sm:$0xff] %v8973
                  %v8975 = vld [vmem:[%s8759 + $0x358] sm:$0xff]
                  %8976 = vst [vmem:[%s8760 + $0x658] sm:$0xff] %v8975
                  %v8977 = vld [vmem:[%s8759 + $0x360] sm:$0xff]
                  %8978 = vst [vmem:[%s8760 + $0x660] sm:$0xff] %v8977
                  %v8979 = vld [vmem:[%s8759 + $0x368] sm:$0xff]
                  %8980 = vst [vmem:[%s8760 + $0x668] sm:$0xff] %v8979
                  %v8981 = vld [vmem:[%s8759 + $0x370] sm:$0xff]
                  %8982 = vst [vmem:[%s8760 + $0x670] sm:$0xff] %v8981
                  %v8983 = vld [vmem:[%s8759 + $0x378] sm:$0xff]
                  %8984 = vst [vmem:[%s8760 + $0x678] sm:$0xff] %v8983
                  %v8985 = vld [vmem:[%s8759 + $0x380] sm:$0xff]
                  %8986 = vst [vmem:[%s8760 + $0x700] sm:$0xff] %v8985
                  %v8987 = vld [vmem:[%s8759 + $0x388] sm:$0xff]
                  %8988 = vst [vmem:[%s8760 + $0x708] sm:$0xff] %v8987
                  %v8989 = vld [vmem:[%s8759 + $0x390] sm:$0xff]
                  %8990 = vst [vmem:[%s8760 + $0x710] sm:$0xff] %v8989
                  %v8991 = vld [vmem:[%s8759 + $0x398] sm:$0xff]
                  %8992 = vst [vmem:[%s8760 + $0x718] sm:$0xff] %v8991
                  %v8993 = vld [vmem:[%s8759 + $0x3a0] sm:$0xff]
                  %8994 = vst [vmem:[%s8760 + $0x720] sm:$0xff] %v8993
                  %v8995 = vld [vmem:[%s8759 + $0x3a8] sm:$0xff]
                  %8996 = vst [vmem:[%s8760 + $0x728] sm:$0xff] %v8995
                  %v8997 = vld [vmem:[%s8759 + $0x3b0] sm:$0xff]
                  %8998 = vst [vmem:[%s8760 + $0x730] sm:$0xff] %v8997
                  %v8999 = vld [vmem:[%s8759 + $0x3b8] sm:$0xff]
                  %9000 = vst [vmem:[%s8760 + $0x738] sm:$0xff] %v8999
                  %v9001 = vld [vmem:[%s8759 + $0x3c0] sm:$0xff]
                  %9002 = vst [vmem:[%s8760 + $0x740] sm:$0xff] %v9001
                  %v9003 = vld [vmem:[%s8759 + $0x3c8] sm:$0xff]
                  %9004 = vst [vmem:[%s8760 + $0x748] sm:$0xff] %v9003
                  %v9005 = vld [vmem:[%s8759 + $0x3d0] sm:$0xff]
                  %9006 = vst [vmem:[%s8760 + $0x750] sm:$0xff] %v9005
                  %v9007 = vld [vmem:[%s8759 + $0x3d8] sm:$0xff]
                  %9008 = vst [vmem:[%s8760 + $0x758] sm:$0xff] %v9007
                  %v9009 = vld [vmem:[%s8759 + $0x3e0] sm:$0xff]
                  %9010 = vst [vmem:[%s8760 + $0x760] sm:$0xff] %v9009
                  %v9011 = vld [vmem:[%s8759 + $0x3e8] sm:$0xff]
                  %9012 = vst [vmem:[%s8760 + $0x768] sm:$0xff] %v9011
                  %v9013 = vld [vmem:[%s8759 + $0x3f0] sm:$0xff]
                  %9014 = vst [vmem:[%s8760 + $0x770] sm:$0xff] %v9013
                  %v9015 = vld [vmem:[%s8759 + $0x3f8] sm:$0xff]
                  %9016 = vst [vmem:[%s8760 + $0x778] sm:$0xff] %v9015
                $region96: #{decoder_forward.1} parent=90 // loop_footer
                  %s8758 = sadd.s32 1, %s8754
                $region97: #{decoder_forward.1} parent=90 // loop_footer_branch
                  %8753 = sbr.rel target = $region93
                $region98: #{decoder_forward.1} parent=90 // loop_exit
                  _
              $region91: #{decoder_forward.1} parent=75 // pred_fallthru
                _
              // Predicated region
              $region99: #{decoder_forward.1} parent=75 // pred_check
                _
              $region100: #{decoder_forward.1} parent=75 // pred_check_branch
                %9018 = sbr.rel target = $region102
              $region101: #{decoder_forward.1} parent=75 // pred_region
                _
              $region102: #{decoder_forward.1} parent=75 // pred_fallthru
                _
            $region76: #{decoder_forward.1} parent=71 // pred_fallthru
              _
            // Predicated region
            $region77: #{decoder_forward.1} parent=71 // pred_check
              _
            $region78: #{decoder_forward.1} parent=71 // pred_check_branch
              %8485 = sbr.rel target = $region80
            $region79: #{decoder_forward.1} parent=71 // pred_region
              loop: start=0, step=1, limit=1
              $region81: #{decoder_forward.1} parent=79 // loop_pre_header
                _
              $region82: #{decoder_forward.1} parent=79 // loop_header
                %s8488 = sphi 0, %s8492
                %p8489 = scmp.ge.s32.totalorder %s8488, 1
                %s8493 = sphi %s8473, %s8473
                %s8494 = sphi %s8479, %s8479
              $region83: #{decoder_forward.1} parent=79 // loop_header_branch
                %8491 = sbr.rel (%p8489) target = $region87
              $region84: #{decoder_forward.1} parent=79 // loop_body
                %v8495 = vld [vmem:[%s8493] sm:$0xff]
                %8496 = vst [vmem:[%s8494] sm:$0xff] %v8495
                %v8497 = vld [vmem:[%s8493 + $0x8] sm:$0xff]
                %8498 = vst [vmem:[%s8494 + $0x8] sm:$0xff] %v8497
                %v8499 = vld [vmem:[%s8493 + $0x10] sm:$0xff]
                %8500 = vst [vmem:[%s8494 + $0x10] sm:$0xff] %v8499
                %v8501 = vld [vmem:[%s8493 + $0x18] sm:$0xff]
                %8502 = vst [vmem:[%s8494 + $0x18] sm:$0xff] %v8501
                %v8503 = vld [vmem:[%s8493 + $0x20] sm:$0xff]
                %8504 = vst [vmem:[%s8494 + $0x20] sm:$0xff] %v8503
                %v8505 = vld [vmem:[%s8493 + $0x28] sm:$0xff]
                %8506 = vst [vmem:[%s8494 + $0x28] sm:$0xff] %v8505
                %v8507 = vld [vmem:[%s8493 + $0x30] sm:$0xff]
                %8508 = vst [vmem:[%s8494 + $0x30] sm:$0xff] %v8507
                %v8509 = vld [vmem:[%s8493 + $0x38] sm:$0xff]
                %8510 = vst [vmem:[%s8494 + $0x38] sm:$0xff] %v8509
                %v8511 = vld [vmem:[%s8493 + $0x40] sm:$0xff]
                %8512 = vst [vmem:[%s8494 + $0x40] sm:$0xff] %v8511
                %v8513 = vld [vmem:[%s8493 + $0x48] sm:$0xff]
                %8514 = vst [vmem:[%s8494 + $0x48] sm:$0xff] %v8513
                %v8515 = vld [vmem:[%s8493 + $0x50] sm:$0xff]
                %8516 = vst [vmem:[%s8494 + $0x50] sm:$0xff] %v8515
                %v8517 = vld [vmem:[%s8493 + $0x58] sm:$0xff]
                %8518 = vst [vmem:[%s8494 + $0x58] sm:$0xff] %v8517
                %v8519 = vld [vmem:[%s8493 + $0x60] sm:$0xff]
                %8520 = vst [vmem:[%s8494 + $0x60] sm:$0xff] %v8519
                %v8521 = vld [vmem:[%s8493 + $0x68] sm:$0xff]
                %8522 = vst [vmem:[%s8494 + $0x68] sm:$0xff] %v8521
                %v8523 = vld [vmem:[%s8493 + $0x70] sm:$0xff]
                %8524 = vst [vmem:[%s8494 + $0x70] sm:$0xff] %v8523
                %v8525 = vld [vmem:[%s8493 + $0x78] sm:$0xff]
                %8526 = vst [vmem:[%s8494 + $0x78] sm:$0xff] %v8525
                %v8527 = vld [vmem:[%s8493 + $0x80] sm:$0xff]
                %8528 = vst [vmem:[%s8494 + $0x100] sm:$0xff] %v8527
                %v8529 = vld [vmem:[%s8493 + $0x88] sm:$0xff]
                %8530 = vst [vmem:[%s8494 + $0x108] sm:$0xff] %v8529
                %v8531 = vld [vmem:[%s8493 + $0x90] sm:$0xff]
                %8532 = vst [vmem:[%s8494 + $0x110] sm:$0xff] %v8531
                %v8533 = vld [vmem:[%s8493 + $0x98] sm:$0xff]
                %8534 = vst [vmem:[%s8494 + $0x118] sm:$0xff] %v8533
                %v8535 = vld [vmem:[%s8493 + $0xa0] sm:$0xff]
                %8536 = vst [vmem:[%s8494 + $0x120] sm:$0xff] %v8535
                %v8537 = vld [vmem:[%s8493 + $0xa8] sm:$0xff]
                %8538 = vst [vmem:[%s8494 + $0x128] sm:$0xff] %v8537
                %v8539 = vld [vmem:[%s8493 + $0xb0] sm:$0xff]
                %8540 = vst [vmem:[%s8494 + $0x130] sm:$0xff] %v8539
                %v8541 = vld [vmem:[%s8493 + $0xb8] sm:$0xff]
                %8542 = vst [vmem:[%s8494 + $0x138] sm:$0xff] %v8541
                %v8543 = vld [vmem:[%s8493 + $0xc0] sm:$0xff]
                %8544 = vst [vmem:[%s8494 + $0x140] sm:$0xff] %v8543
                %v8545 = vld [vmem:[%s8493 + $0xc8] sm:$0xff]
                %8546 = vst [vmem:[%s8494 + $0x148] sm:$0xff] %v8545
                %v8547 = vld [vmem:[%s8493 + $0xd0] sm:$0xff]
                %8548 = vst [vmem:[%s8494 + $0x150] sm:$0xff] %v8547
                %v8549 = vld [vmem:[%s8493 + $0xd8] sm:$0xff]
                %8550 = vst [vmem:[%s8494 + $0x158] sm:$0xff] %v8549
                %v8551 = vld [vmem:[%s8493 + $0xe0] sm:$0xff]
                %8552 = vst [vmem:[%s8494 + $0x160] sm:$0xff] %v8551
                %v8553 = vld [vmem:[%s8493 + $0xe8] sm:$0xff]
                %8554 = vst [vmem:[%s8494 + $0x168] sm:$0xff] %v8553
                %v8555 = vld [vmem:[%s8493 + $0xf0] sm:$0xff]
                %8556 = vst [vmem:[%s8494 + $0x170] sm:$0xff] %v8555
                %v8557 = vld [vmem:[%s8493 + $0xf8] sm:$0xff]
                %8558 = vst [vmem:[%s8494 + $0x178] sm:$0xff] %v8557
                %v8559 = vld [vmem:[%s8493 + $0x100] sm:$0xff]
                %8560 = vst [vmem:[%s8494 + $0x200] sm:$0xff] %v8559
                %v8561 = vld [vmem:[%s8493 + $0x108] sm:$0xff]
                %8562 = vst [vmem:[%s8494 + $0x208] sm:$0xff] %v8561
                %v8563 = vld [vmem:[%s8493 + $0x110] sm:$0xff]
                %8564 = vst [vmem:[%s8494 + $0x210] sm:$0xff] %v8563
                %v8565 = vld [vmem:[%s8493 + $0x118] sm:$0xff]
                %8566 = vst [vmem:[%s8494 + $0x218] sm:$0xff] %v8565
                %v8567 = vld [vmem:[%s8493 + $0x120] sm:$0xff]
                %8568 = vst [vmem:[%s8494 + $0x220] sm:$0xff] %v8567
                %v8569 = vld [vmem:[%s8493 + $0x128] sm:$0xff]
                %8570 = vst [vmem:[%s8494 + $0x228] sm:$0xff] %v8569
                %v8571 = vld [vmem:[%s8493 + $0x130] sm:$0xff]
                %8572 = vst [vmem:[%s8494 + $0x230] sm:$0xff] %v8571
                %v8573 = vld [vmem:[%s8493 + $0x138] sm:$0xff]
                %8574 = vst [vmem:[%s8494 + $0x238] sm:$0xff] %v8573
                %v8575 = vld [vmem:[%s8493 + $0x140] sm:$0xff]
                %8576 = vst [vmem:[%s8494 + $0x240] sm:$0xff] %v8575
                %v8577 = vld [vmem:[%s8493 + $0x148] sm:$0xff]
                %8578 = vst [vmem:[%s8494 + $0x248] sm:$0xff] %v8577
                %v8579 = vld [vmem:[%s8493 + $0x150] sm:$0xff]
                %8580 = vst [vmem:[%s8494 + $0x250] sm:$0xff] %v8579
                %v8581 = vld [vmem:[%s8493 + $0x158] sm:$0xff]
                %8582 = vst [vmem:[%s8494 + $0x258] sm:$0xff] %v8581
                %v8583 = vld [vmem:[%s8493 + $0x160] sm:$0xff]
                %8584 = vst [vmem:[%s8494 + $0x260] sm:$0xff] %v8583
                %v8585 = vld [vmem:[%s8493 + $0x168] sm:$0xff]
                %8586 = vst [vmem:[%s8494 + $0x268] sm:$0xff] %v8585
                %v8587 = vld [vmem:[%s8493 + $0x170] sm:$0xff]
                %8588 = vst [vmem:[%s8494 + $0x270] sm:$0xff] %v8587
                %v8589 = vld [vmem:[%s8493 + $0x178] sm:$0xff]
                %8590 = vst [vmem:[%s8494 + $0x278] sm:$0xff] %v8589
                %v8591 = vld [vmem:[%s8493 + $0x180] sm:$0xff]
                %8592 = vst [vmem:[%s8494 + $0x300] sm:$0xff] %v8591
                %v8593 = vld [vmem:[%s8493 + $0x188] sm:$0xff]
                %8594 = vst [vmem:[%s8494 + $0x308] sm:$0xff] %v8593
                %v8595 = vld [vmem:[%s8493 + $0x190] sm:$0xff]
                %8596 = vst [vmem:[%s8494 + $0x310] sm:$0xff] %v8595
                %v8597 = vld [vmem:[%s8493 + $0x198] sm:$0xff]
                %8598 = vst [vmem:[%s8494 + $0x318] sm:$0xff] %v8597
                %v8599 = vld [vmem:[%s8493 + $0x1a0] sm:$0xff]
                %8600 = vst [vmem:[%s8494 + $0x320] sm:$0xff] %v8599
                %v8601 = vld [vmem:[%s8493 + $0x1a8] sm:$0xff]
                %8602 = vst [vmem:[%s8494 + $0x328] sm:$0xff] %v8601
                %v8603 = vld [vmem:[%s8493 + $0x1b0] sm:$0xff]
                %8604 = vst [vmem:[%s8494 + $0x330] sm:$0xff] %v8603
                %v8605 = vld [vmem:[%s8493 + $0x1b8] sm:$0xff]
                %8606 = vst [vmem:[%s8494 + $0x338] sm:$0xff] %v8605
                %v8607 = vld [vmem:[%s8493 + $0x1c0] sm:$0xff]
                %8608 = vst [vmem:[%s8494 + $0x340] sm:$0xff] %v8607
                %v8609 = vld [vmem:[%s8493 + $0x1c8] sm:$0xff]
                %8610 = vst [vmem:[%s8494 + $0x348] sm:$0xff] %v8609
                %v8611 = vld [vmem:[%s8493 + $0x1d0] sm:$0xff]
                %8612 = vst [vmem:[%s8494 + $0x350] sm:$0xff] %v8611
                %v8613 = vld [vmem:[%s8493 + $0x1d8] sm:$0xff]
                %8614 = vst [vmem:[%s8494 + $0x358] sm:$0xff] %v8613
                %v8615 = vld [vmem:[%s8493 + $0x1e0] sm:$0xff]
                %8616 = vst [vmem:[%s8494 + $0x360] sm:$0xff] %v8615
                %v8617 = vld [vmem:[%s8493 + $0x1e8] sm:$0xff]
                %8618 = vst [vmem:[%s8494 + $0x368] sm:$0xff] %v8617
                %v8619 = vld [vmem:[%s8493 + $0x1f0] sm:$0xff]
                %8620 = vst [vmem:[%s8494 + $0x370] sm:$0xff] %v8619
                %v8621 = vld [vmem:[%s8493 + $0x1f8] sm:$0xff]
                %8622 = vst [vmem:[%s8494 + $0x378] sm:$0xff] %v8621
                %v8623 = vld [vmem:[%s8493 + $0x200] sm:$0xff]
                %8624 = vst [vmem:[%s8494 + $0x400] sm:$0xff] %v8623
                %v8625 = vld [vmem:[%s8493 + $0x208] sm:$0xff]
                %8626 = vst [vmem:[%s8494 + $0x408] sm:$0xff] %v8625
                %v8627 = vld [vmem:[%s8493 + $0x210] sm:$0xff]
                %8628 = vst [vmem:[%s8494 + $0x410] sm:$0xff] %v8627
                %v8629 = vld [vmem:[%s8493 + $0x218] sm:$0xff]
                %8630 = vst [vmem:[%s8494 + $0x418] sm:$0xff] %v8629
                %v8631 = vld [vmem:[%s8493 + $0x220] sm:$0xff]
                %8632 = vst [vmem:[%s8494 + $0x420] sm:$0xff] %v8631
                %v8633 = vld [vmem:[%s8493 + $0x228] sm:$0xff]
                %8634 = vst [vmem:[%s8494 + $0x428] sm:$0xff] %v8633
                %v8635 = vld [vmem:[%s8493 + $0x230] sm:$0xff]
                %8636 = vst [vmem:[%s8494 + $0x430] sm:$0xff] %v8635
                %v8637 = vld [vmem:[%s8493 + $0x238] sm:$0xff]
                %8638 = vst [vmem:[%s8494 + $0x438] sm:$0xff] %v8637
                %v8639 = vld [vmem:[%s8493 + $0x240] sm:$0xff]
                %8640 = vst [vmem:[%s8494 + $0x440] sm:$0xff] %v8639
                %v8641 = vld [vmem:[%s8493 + $0x248] sm:$0xff]
                %8642 = vst [vmem:[%s8494 + $0x448] sm:$0xff] %v8641
                %v8643 = vld [vmem:[%s8493 + $0x250] sm:$0xff]
                %8644 = vst [vmem:[%s8494 + $0x450] sm:$0xff] %v8643
                %v8645 = vld [vmem:[%s8493 + $0x258] sm:$0xff]
                %8646 = vst [vmem:[%s8494 + $0x458] sm:$0xff] %v8645
                %v8647 = vld [vmem:[%s8493 + $0x260] sm:$0xff]
                %8648 = vst [vmem:[%s8494 + $0x460] sm:$0xff] %v8647
                %v8649 = vld [vmem:[%s8493 + $0x268] sm:$0xff]
                %8650 = vst [vmem:[%s8494 + $0x468] sm:$0xff] %v8649
                %v8651 = vld [vmem:[%s8493 + $0x270] sm:$0xff]
                %8652 = vst [vmem:[%s8494 + $0x470] sm:$0xff] %v8651
                %v8653 = vld [vmem:[%s8493 + $0x278] sm:$0xff]
                %8654 = vst [vmem:[%s8494 + $0x478] sm:$0xff] %v8653
                %v8655 = vld [vmem:[%s8493 + $0x280] sm:$0xff]
                %8656 = vst [vmem:[%s8494 + $0x500] sm:$0xff] %v8655
                %v8657 = vld [vmem:[%s8493 + $0x288] sm:$0xff]
                %8658 = vst [vmem:[%s8494 + $0x508] sm:$0xff] %v8657
                %v8659 = vld [vmem:[%s8493 + $0x290] sm:$0xff]
                %8660 = vst [vmem:[%s8494 + $0x510] sm:$0xff] %v8659
                %v8661 = vld [vmem:[%s8493 + $0x298] sm:$0xff]
                %8662 = vst [vmem:[%s8494 + $0x518] sm:$0xff] %v8661
                %v8663 = vld [vmem:[%s8493 + $0x2a0] sm:$0xff]
                %8664 = vst [vmem:[%s8494 + $0x520] sm:$0xff] %v8663
                %v8665 = vld [vmem:[%s8493 + $0x2a8] sm:$0xff]
                %8666 = vst [vmem:[%s8494 + $0x528] sm:$0xff] %v8665
                %v8667 = vld [vmem:[%s8493 + $0x2b0] sm:$0xff]
                %8668 = vst [vmem:[%s8494 + $0x530] sm:$0xff] %v8667
                %v8669 = vld [vmem:[%s8493 + $0x2b8] sm:$0xff]
                %8670 = vst [vmem:[%s8494 + $0x538] sm:$0xff] %v8669
                %v8671 = vld [vmem:[%s8493 + $0x2c0] sm:$0xff]
                %8672 = vst [vmem:[%s8494 + $0x540] sm:$0xff] %v8671
                %v8673 = vld [vmem:[%s8493 + $0x2c8] sm:$0xff]
                %8674 = vst [vmem:[%s8494 + $0x548] sm:$0xff] %v8673
                %v8675 = vld [vmem:[%s8493 + $0x2d0] sm:$0xff]
                %8676 = vst [vmem:[%s8494 + $0x550] sm:$0xff] %v8675
                %v8677 = vld [vmem:[%s8493 + $0x2d8] sm:$0xff]
                %8678 = vst [vmem:[%s8494 + $0x558] sm:$0xff] %v8677
                %v8679 = vld [vmem:[%s8493 + $0x2e0] sm:$0xff]
                %8680 = vst [vmem:[%s8494 + $0x560] sm:$0xff] %v8679
                %v8681 = vld [vmem:[%s8493 + $0x2e8] sm:$0xff]
                %8682 = vst [vmem:[%s8494 + $0x568] sm:$0xff] %v8681
                %v8683 = vld [vmem:[%s8493 + $0x2f0] sm:$0xff]
                %8684 = vst [vmem:[%s8494 + $0x570] sm:$0xff] %v8683
                %v8685 = vld [vmem:[%s8493 + $0x2f8] sm:$0xff]
                %8686 = vst [vmem:[%s8494 + $0x578] sm:$0xff] %v8685
                %v8687 = vld [vmem:[%s8493 + $0x300] sm:$0xff]
                %8688 = vst [vmem:[%s8494 + $0x600] sm:$0xff] %v8687
                %v8689 = vld [vmem:[%s8493 + $0x308] sm:$0xff]
                %8690 = vst [vmem:[%s8494 + $0x608] sm:$0xff] %v8689
                %v8691 = vld [vmem:[%s8493 + $0x310] sm:$0xff]
                %8692 = vst [vmem:[%s8494 + $0x610] sm:$0xff] %v8691
                %v8693 = vld [vmem:[%s8493 + $0x318] sm:$0xff]
                %8694 = vst [vmem:[%s8494 + $0x618] sm:$0xff] %v8693
                %v8695 = vld [vmem:[%s8493 + $0x320] sm:$0xff]
                %8696 = vst [vmem:[%s8494 + $0x620] sm:$0xff] %v8695
                %v8697 = vld [vmem:[%s8493 + $0x328] sm:$0xff]
                %8698 = vst [vmem:[%s8494 + $0x628] sm:$0xff] %v8697
                %v8699 = vld [vmem:[%s8493 + $0x330] sm:$0xff]
                %8700 = vst [vmem:[%s8494 + $0x630] sm:$0xff] %v8699
                %v8701 = vld [vmem:[%s8493 + $0x338] sm:$0xff]
                %8702 = vst [vmem:[%s8494 + $0x638] sm:$0xff] %v8701
                %v8703 = vld [vmem:[%s8493 + $0x340] sm:$0xff]
                %8704 = vst [vmem:[%s8494 + $0x640] sm:$0xff] %v8703
                %v8705 = vld [vmem:[%s8493 + $0x348] sm:$0xff]
                %8706 = vst [vmem:[%s8494 + $0x648] sm:$0xff] %v8705
                %v8707 = vld [vmem:[%s8493 + $0x350] sm:$0xff]
                %8708 = vst [vmem:[%s8494 + $0x650] sm:$0xff] %v8707
                %v8709 = vld [vmem:[%s8493 + $0x358] sm:$0xff]
                %8710 = vst [vmem:[%s8494 + $0x658] sm:$0xff] %v8709
                %v8711 = vld [vmem:[%s8493 + $0x360] sm:$0xff]
                %8712 = vst [vmem:[%s8494 + $0x660] sm:$0xff] %v8711
                %v8713 = vld [vmem:[%s8493 + $0x368] sm:$0xff]
                %8714 = vst [vmem:[%s8494 + $0x668] sm:$0xff] %v8713
                %v8715 = vld [vmem:[%s8493 + $0x370] sm:$0xff]
                %8716 = vst [vmem:[%s8494 + $0x670] sm:$0xff] %v8715
                %v8717 = vld [vmem:[%s8493 + $0x378] sm:$0xff]
                %8718 = vst [vmem:[%s8494 + $0x678] sm:$0xff] %v8717
                %v8719 = vld [vmem:[%s8493 + $0x380] sm:$0xff]
                %8720 = vst [vmem:[%s8494 + $0x700] sm:$0xff] %v8719
                %v8721 = vld [vmem:[%s8493 + $0x388] sm:$0xff]
                %8722 = vst [vmem:[%s8494 + $0x708] sm:$0xff] %v8721
                %v8723 = vld [vmem:[%s8493 + $0x390] sm:$0xff]
                %8724 = vst [vmem:[%s8494 + $0x710] sm:$0xff] %v8723
                %v8725 = vld [vmem:[%s8493 + $0x398] sm:$0xff]
                %8726 = vst [vmem:[%s8494 + $0x718] sm:$0xff] %v8725
                %v8727 = vld [vmem:[%s8493 + $0x3a0] sm:$0xff]
                %8728 = vst [vmem:[%s8494 + $0x720] sm:$0xff] %v8727
                %v8729 = vld [vmem:[%s8493 + $0x3a8] sm:$0xff]
                %8730 = vst [vmem:[%s8494 + $0x728] sm:$0xff] %v8729
                %v8731 = vld [vmem:[%s8493 + $0x3b0] sm:$0xff]
                %8732 = vst [vmem:[%s8494 + $0x730] sm:$0xff] %v8731
                %v8733 = vld [vmem:[%s8493 + $0x3b8] sm:$0xff]
                %8734 = vst [vmem:[%s8494 + $0x738] sm:$0xff] %v8733
                %v8735 = vld [vmem:[%s8493 + $0x3c0] sm:$0xff]
                %8736 = vst [vmem:[%s8494 + $0x740] sm:$0xff] %v8735
                %v8737 = vld [vmem:[%s8493 + $0x3c8] sm:$0xff]
                %8738 = vst [vmem:[%s8494 + $0x748] sm:$0xff] %v8737
                %v8739 = vld [vmem:[%s8493 + $0x3d0] sm:$0xff]
                %8740 = vst [vmem:[%s8494 + $0x750] sm:$0xff] %v8739
                %v8741 = vld [vmem:[%s8493 + $0x3d8] sm:$0xff]
                %8742 = vst [vmem:[%s8494 + $0x758] sm:$0xff] %v8741
                %v8743 = vld [vmem:[%s8493 + $0x3e0] sm:$0xff]
                %8744 = vst [vmem:[%s8494 + $0x760] sm:$0xff] %v8743
                %v8745 = vld [vmem:[%s8493 + $0x3e8] sm:$0xff]
                %8746 = vst [vmem:[%s8494 + $0x768] sm:$0xff] %v8745
                %v8747 = vld [vmem:[%s8493 + $0x3f0] sm:$0xff]
                %8748 = vst [vmem:[%s8494 + $0x770] sm:$0xff] %v8747
                %v8749 = vld [vmem:[%s8493 + $0x3f8] sm:$0xff]
                %8750 = vst [vmem:[%s8494 + $0x778] sm:$0xff] %v8749
              $region85: #{decoder_forward.1} parent=79 // loop_footer
                %s8492 = sadd.s32 1, %s8488
              $region86: #{decoder_forward.1} parent=79 // loop_footer_branch
                %8487 = sbr.rel target = $region82
              $region87: #{decoder_forward.1} parent=79 // loop_exit
                _
            $region80: #{decoder_forward.1} parent=71 // pred_fallthru
              _
          $region72: #{decoder_forward.1} parent=67 // pred_fallthru
            _
          %9019 = vnop
        $region68: #{decoder_forward.1} parent=63 // pred_fallthru
          _
      $region64: #{decoder_forward.1} parent=5 // pred_fallthru
        _
      %p9020 = scmp.le.s32.totalorder 2, %s17
      // Predicated region
      $region103: #{decoder_forward.1} parent=5 // pred_check
        %p9021 = pneg %p9020
      $region104: #{decoder_forward.1} parent=5 // pred_check_branch
        %9023 = sbr.rel (%p9021) target = $region106
      $region105: #{decoder_forward.1} parent=5 // pred_region
        %s9024 = ssub.s32 %s17, 2
        // Predicated region
        $region107: #{decoder_forward.1} parent=105 // pred_check
          %p9025 = pneg %p282
        $region108: #{decoder_forward.1} parent=105 // pred_check_branch
          %9027 = sbr.rel (%p9025) target = $region110
        $region109: #{decoder_forward.1} parent=105 // pred_region
          %s9028 = sand.u32 %s267, 1
          %s9029 = sand.u32 %s267, 1
          %s9030 = smul.addr %s9029, 1024
          %s9031 = scalar_lea.vmem [#allocation3], %s9030
        $region110: #{decoder_forward.1} parent=105 // pred_fallthru
          _
      $region106: #{decoder_forward.1} parent=5 // pred_fallthru
        _
    $region6: #{decoder_forward.1} parent=1 // loop_footer
      %s21 = sadd.s32 1, %s17
    $region7: #{decoder_forward.1} parent=1 // loop_footer_branch
      %16 = sbr.rel target = $region3
    $region8: #{decoder_forward.1} parent=1 // loop_exit
      _

</llo_original>
